<compile_context>
chip_gen: v6e
topology: v6e:2x2x1
jax: 0.10.0
libtpu: 0.0.40
codegen_flags: <defaults>
</compile_context>

<pallas_src>
import functools
import math

import jax
import jax.numpy as jnp
from jax import lax
from jax.experimental import pallas as pl
from jax.experimental.pallas import tpu as pltpu

F32 = jnp.float32
BF16 = jnp.bfloat16

# ----------------------------- small, lane-dense config ------------------------
B = 2
IMG_C, IMG_HW, PATCH = 3, 32, 16
NUM_PATCHES = (IMG_HW // PATCH) ** 2          # 4
NUM_TOKENS = NUM_PATCHES + 1                  # 5 = cls + patches
T_PAD = 8                                     # image tokens padded to a full sublane tile
PATCH_DIM = IMG_C * PATCH * PATCH             # 768

D, HEADS, DH = 128, 4, 32                     # shared vision/text width (lane-dense)
DEPTH_V, MLP_V = 2, 4 * D
DEPTH_T, MLP_T = 2, 4 * D
VOCAB, SEQ, MAX_POS = 128, 8, 40
SD_NUM, SD_DIM = 16, 128
BOS_ID, PAD_ID = 1, 0
PROMPT_LEN = 2                                # len(tokenizer(prompt).input_ids) - 1 (synthetic)
TEMPERATURE = 0.04
LABEL_SMOOTH = 0.1
NEG = -10000.0                                # HF-style additive mask value

ROWS = HEADS * B * 8                          # stacked (head, batch, pos) rows = 64


# ----------------------------- in-kernel math helpers --------------------------
def _mm(a, b):                                   # a @ b, f32 accumulation
    return lax.dot_general(a, b, (((1,), (0,)), ((), ())),
                           preferred_element_type=jnp.float32)


def _mm_t(a, b):                                 # a @ b.T, f32 accumulation
    return lax.dot_general(a, b, (((1,), (1,)), ((), ())),
                           preferred_element_type=jnp.float32)


def _mmb(a, w):                                  # f32 activation x bf16 weight
    return _mm(a.astype(BF16), w)


def _ln(x, g, b, eps):
    mu = jnp.mean(x, axis=-1, keepdims=True)
    var = jnp.mean(jnp.square(x - mu), axis=-1, keepdims=True)
    return (x - mu) * lax.rsqrt(var + eps) * g + b


def _gelu(x):
    # TODO(synk): BLIP/BERT use exact erf GELU; tanh approximation used for robust lowering.
    c = jnp.float32(0.7978845608028654)          # sqrt(2/pi)
    return 0.5 * x * (1.0 + jnp.tanh(c * (x + 0.044715 * x * x * x)))


def _softmax_rows(s):
    s = s - jnp.max(s, axis=-1, keepdims=True)
    p = jnp.exp(s)
    return p * pl.reciprocal(jnp.sum(p, axis=-1, keepdims=True), approx=True)


def _stack_heads(x):
    # (R, HEADS*DH) -> (HEADS*R, DH); block h holds head h for every (batch, pos) row.
    return jnp.concatenate([x[:, h * DH:(h + 1) * DH] for h in range(HEADS)], axis=0)


def _unstack_heads(x, rows):
    # (HEADS*rows, DH) -> (rows, HEADS*DH)
    return jnp.concatenate([x[h * rows:(h + 1) * rows, :] for h in range(HEADS)], axis=1)


def _attention(q, k, v, w_out, b_out, mask):
    # q/k/v: (B*8, D) f32.  One (head,batch)-block-diagonal masked softmax for all
    # heads and all batch elements, then one fused output projection.
    rows = q.shape[0]
    q_st = _stack_heads(q).astype(BF16)          # (ROWS, DH)
    k_st = _stack_heads(k).astype(BF16)
    v_st = _stack_heads(v).astype(BF16)
    s = _mm_t(q_st, k_st) * (DH ** -0.5) + mask  # (ROWS, ROWS) f32
    p = _softmax_rows(s)
    ctx = _unstack_heads(_mm(p.astype(BF16), v_st), rows)   # (rows, D) f32
    return _mmb(ctx, w_out) + b_out


# ----------------------------- fused BLIP kernel --------------------------------
_IN = (
    # ViT
    'patches', 'patch_w', 'vit_add',
    'v_ln1_g', 'v_ln1_b', 'v_qkv_w', 'v_qkv_b', 'v_proj_w', 'v_proj_b',
    'v_ln2_g', 'v_ln2_b', 'v_fc1_w', 'v_fc1_b', 'v_fc2_w', 'v_fc2_b',
    'v_norm_g', 'v_norm_b', 'space_dict',
    # text decoder
    'ids', 'labels', 'att_cols', 'word_emb', 'pos_type', 'emb_ln_g', 'emb_ln_b',
    'sq_w', 'sq_b', 'sk_w', 'sk_b', 'sv_w', 'sv_b', 'so_w', 'so_b', 'sln_g', 'sln_b',
    'cq_w', 'cq_b', 'ck_w', 'ck_b', 'cv_w', 'cv_b', 'co_w', 'co_b', 'cln_g', 'cln_b',
    'i_w', 'i_b', 'o_w', 'o_b', 'oln_g', 'oln_b',
    'tr_w', 'tr_b', 'tr_ln_g', 'tr_ln_b', 'dec_w', 'dec_b', 'sd_w', 'sd_b',
)
_OUT = ('vis_feat', 'lang_feat', 'logits', 'losses')


def _blip_kernel(*refs, temperature):
    r = dict(zip(_IN, refs[:len(_IN)]))
    o = dict(zip(_OUT, refs[len(_IN):]))

    # ---- attention masks: built once, reused by every layer --------------------
    ri = lax.broadcasted_iota(jnp.int32, (ROWS, ROWS), 0)
    ci = lax.broadcasted_iota(jnp.int32, (ROWS, ROWS), 1)
    pos_r = jnp.bitwise_and(ri, 7)
    pos_c = jnp.bitwise_and(ci, 7)
    same_blk = (ri - pos_r) == (ci - pos_c)       # same (head, batch) block of 8 rows
    # image keys: only the real cls+patch tokens are valid (image_atts is all ones)
    img_mask = jnp.where(jnp.logical_and(same_blk, pos_c < NUM_TOKENS), 0.0, NEG)
    # text self-attention: causal + caption padding (key columns in stacked order)
    key_ok = r['att_cols'][...] > 0.5             # (1, ROWS)
    self_ok = jnp.logical_and(jnp.logical_and(same_blk, pos_r >= pos_c), key_ok)
    self_mask = jnp.where(self_ok, 0.0, NEG)

    # ---- ViT tower: whole batch as one (B*T_PAD, D) slab ------------------------
    x = _mm(r['patches'][...], r['patch_w'][...]) + r['vit_add'][...]
    for l in range(DEPTH_V):
        h = _ln(x, r['v_ln1_g'][l], r['v_ln1_b'][l], 1e-6)
        qkv = _mmb(h, r['v_qkv_w'][l]) + r['v_qkv_b'][l]          # (16, 3D)
        x = x + _attention(qkv[:, 0:D], qkv[:, D:2 * D], qkv[:, 2 * D:3 * D],
                           r['v_proj_w'][l], r['v_proj_b'][l], img_mask)
        h = _ln(x, r['v_ln2_g'][l], r['v_ln2_b'][l], 1e-6)
        h = _gelu(_mmb(h, r['v_fc1_w'][l]) + r['v_fc1_b'][l])
        x = x + _mmb(h, r['v_fc2_w'][l]) + r['v_fc2_b'][l]
        o['vis_feat'][l] = x
    enc = _ln(x, r['v_norm_g'][...], r['v_norm_b'][...], 1e-6)    # image_embeds (VMEM only)

    # ---- FDT image feature: softmax(cls @ dict^T / T) @ dict --------------------
    if temperature != 0:
        sd = r['space_dict'][...]
        cls_img = jnp.concatenate(
            [enc[b * T_PAD:b * T_PAD + 1, :] for b in range(B)], axis=0)   # (B, D)
        pq = _softmax_rows(_mm_t(cls_img, sd) * (1.0 / temperature))
        sd_img = _mm(pq, sd)                                                # (B, SD_DIM)

    # ---- BERT-LM decoder: whole batch as one (B*SEQ, D) slab --------------------
    ids = r['ids'][...]                                                     # (B*SEQ, 1)
    viota = lax.broadcasted_iota(jnp.int32, (B * SEQ, VOCAB), 1)
    onehot = jnp.where(viota == ids, 1.0, 0.0).astype(BF16)
    h = _mm(onehot, r['word_emb'][...]) + r['pos_type'][...]                # embeddings
    h = _ln(h, r['emb_ln_g'][...], r['emb_ln_b'][...], 1e-12)

    for l in range(DEPTH_T):
        # causal self-attention
        q = _mmb(h, r['sq_w'][l]) + r['sq_b'][l]
        k = _mmb(h, r['sk_w'][l]) + r['sk_b'][l]
        v = _mmb(h, r['sv_w'][l]) + r['sv_b'][l]
        h = _ln(h + _attention(q, k, v, r['so_w'][l], r['so_b'][l], self_mask),
                r['sln_g'][l], r['sln_b'][l], 1e-12)
        # cross-attention to image tokens
        q = _mmb(h, r['cq_w'][l]) + r['cq_b'][l]
        k = _mmb(enc, r['ck_w'][l]) + r['ck_b'][l]
        v = _mmb(enc, r['cv_w'][l]) + r['cv_b'][l]
        h = _ln(h + _attention(q, k, v, r['co_w'][l], r['co_b'][l], img_mask),
                r['cln_g'][l], r['cln_b'][l], 1e-12)
        # FFN
        ff = _gelu(_mmb(h, r['i_w'][l]) + r['i_b'][l])
        h = _ln(h + _mmb(ff, r['o_w'][l]) + r['o_b'][l],
                r['oln_g'][l], r['oln_b'][l], 1e-12)
        o['lang_feat'][l] = h

    # ---- LM head + shifted label-smoothed cross entropy -------------------------
    t = _gelu(_mmb(h, r['tr_w'][...]) + r['tr_b'][...])
    t = _ln(t, r['tr_ln_g'][...], r['tr_ln_b'][...], 1e-12)
    logits = _mmb(t, r['dec_w'][...]) + r['dec_b'][...]                     # (B*SEQ, VOCAB)
    o['logits'][...] = logits

    z = logits - jnp.max(logits, axis=-1, keepdims=True)
    logp = z - jnp.log(jnp.sum(jnp.exp(z), axis=-1, keepdims=True))
    lab = r['labels'][...]                                                  # (B*SEQ, 1)
    valid = lab != -100
    safe = jnp.where(valid, lab, 0)
    tgt = jnp.where(viota == safe, 1.0 - LABEL_SMOOTH, 0.0) + LABEL_SMOOTH / VOCAB
    nll = jnp.where(valid, -jnp.sum(tgt * logp, axis=-1, keepdims=True), 0.0)
    loss_lm = jnp.sum(nll) / jnp.maximum(jnp.sum(valid.astype(F32)), 1.0)
    o['losses'][0] = loss_lm

    # ---- FDT cosine embedding loss (target = +1) --------------------------------
    if temperature != 0:
        cls_txt = jnp.concatenate(
            [h[b * SEQ:b * SEQ + 1, :] for b in range(B)], axis=0)          # (B, D)
        sd_txt = _mmb(cls_txt, r['sd_w'][...]) + r['sd_b'][...]             # (B, SD_DIM)
        a_n = sd_img / (jnp.sqrt(jnp.sum(sd_img * sd_img, -1, keepdims=True)) + 1e-10)
        b_n = sd_txt / (jnp.sqrt(jnp.sum(sd_txt * sd_txt, -1, keepdims=True)) + 1e-10)
        # pre-normalisation + CosineEmbeddingLoss's own normalisation, as in the reference
        cos = jnp.sum(a_n * b_n, -1, keepdims=True) / jnp.maximum(
            jnp.sqrt(jnp.sum(a_n * a_n, -1, keepdims=True)) *
            jnp.sqrt(jnp.sum(b_n * b_n, -1, keepdims=True)), 1e-8)
        o['losses'][1] = jnp.mean(1.0 - cos)
    else:
        o['losses'][1] = loss_lm


# ----------------------------- wrapper ------------------------------------------
def _vmem_spec():
    return pl.BlockSpec(memory_space=pltpu.MemorySpace.VMEM)


def _patchify(image):
    Bx = image.shape[0]
    g = IMG_HW // PATCH
    x = image.reshape(Bx, IMG_C, g, PATCH, g, PATCH)
    x = x.transpose(0, 2, 4, 1, 3, 5).reshape(Bx, NUM_PATCHES, PATCH_DIM).astype(F32)
    patches = jnp.zeros((Bx, T_PAD, PATCH_DIM), F32)
    patches = patches.at[:, 1:1 + NUM_PATCHES, :].set(x)        # row 0 = CLS slot, tail = pad
    return patches.reshape(Bx * T_PAD, PATCH_DIM).astype(BF16)


def _cost_estimate(args, out_shapes):
    nbytes = sum(int(a.size) * jnp.dtype(a.dtype).itemsize for a in args)
    nbytes += sum(int(math.prod(s.shape)) * jnp.dtype(s.dtype).itemsize for s in out_shapes)
    rows_v, rows_t = B * T_PAD, B * SEQ
    flops = 2 * rows_v * PATCH_DIM * D
    flops += DEPTH_V * (2 * rows_v * (3 * D * D + D * D + 2 * D * MLP_V) + 4 * ROWS * ROWS * DH)
    flops += 2 * rows_t * VOCAB * D
    flops += DEPTH_T * (2 * rows_t * (8 * D * D + 2 * D * MLP_T) + 8 * ROWS * ROWS * DH)
    flops += 2 * rows_t * (D * D + D * VOCAB)
    transc = (DEPTH_V + 2 * DEPTH_T) * ROWS * ROWS + rows_t * VOCAB \
        + (DEPTH_V * rows_v + DEPTH_T * rows_t) * MLP_V
    return pl.CostEstimate(flops=int(flops), transcendentals=int(transc),
                           bytes_accessed=int(nbytes))


def blip_decoder_forward(params, image, caption_ids, caption_mask,
                         temperature=0.0, train=False):
    pv, pt = params['vit'], params['text']
    Bx, S = caption_ids.shape

    # host/XLA-side glue: patch extraction, token prep, tiny layout plumbing
    patches = _patchify(image)
    add = jnp.zeros((T_PAD, D), F32)
    add = add.at[0, :].set(pv['cls'][0])                        # CLS token
    add = add.at[1:1 + NUM_PATCHES, :].add(pv['patch_b'][0])    # conv bias (patch rows only)
    add = add.at[:NUM_TOKENS, :].add(pv['pos'])                 # positional embedding
    vit_add = jnp.tile(add[None], (Bx, 1, 1)).reshape(Bx * T_PAD, D)

    input_ids = caption_ids.at[:, 0].set(BOS_ID)
    targets = jnp.where(input_ids == PAD_ID, -100, input_ids)
    targets = targets.at[:, :PROMPT_LEN].set(-100)
    # shift left so row t carries the label predicted from position t
    shifted = jnp.concatenate(
        [targets[:, 1:], jnp.full((Bx, 1), -100, targets.dtype)], axis=1)

    pos_type = pt['pos_emb'][:S] + pt['type_emb'][0][None, :]
    pos_type = jnp.tile(pos_type[None], (Bx, 1, 1)).reshape(Bx * S, D)
    att_cols = jnp.tile(caption_mask.astype(F32).reshape(1, Bx * S), (1, HEADS))

    bf = lambda a: a.astype(BF16)
    inputs = dict(
        patches=patches, patch_w=bf(pv['patch_w']), vit_add=vit_add,
        v_ln1_g=pv['ln1_g'], v_ln1_b=pv['ln1_b'],
        v_qkv_w=bf(pv['qkv_w']), v_qkv_b=pv['qkv_b'],
        v_proj_w=bf(pv['proj_w']), v_proj_b=pv['proj_b'],
        v_ln2_g=pv['ln2_g'], v_ln2_b=pv['ln2_b'],
        v_fc1_w=bf(pv['fc1_w']), v_fc1_b=pv['fc1_b'],
        v_fc2_w=bf(pv['fc2_w']), v_fc2_b=pv['fc2_b'],
        v_norm_g=pv['norm_g'], v_norm_b=pv['norm_b'],
        space_dict=params['space_dict'],
        ids=input_ids.reshape(Bx * S, 1).astype(jnp.int32),
        labels=shifted.reshape(Bx * S, 1).astype(jnp.int32),
        att_cols=att_cols,
        word_emb=bf(pt['word_emb']), pos_type=pos_type,
        emb_ln_g=pt['emb_ln_g'], emb_ln_b=pt['emb_ln_b'],
        sq_w=bf(pt['sq_w']), sq_b=pt['sq_b'], sk_w=bf(pt['sk_w']), sk_b=pt['sk_b'],
        sv_w=bf(pt['sv_w']), sv_b=pt['sv_b'], so_w=bf(pt['so_w']), so_b=pt['so_b'],
        sln_g=pt['sln_g'], sln_b=pt['sln_b'],
        cq_w=bf(pt['cq_w']), cq_b=pt['cq_b'], ck_w=bf(pt['ck_w']), ck_b=pt['ck_b'],
        cv_w=bf(pt['cv_w']), cv_b=pt['cv_b'], co_w=bf(pt['co_w']), co_b=pt['co_b'],
        cln_g=pt['cln_g'], cln_b=pt['cln_b'],
        i_w=bf(pt['i_w']), i_b=pt['i_b'], o_w=bf(pt['o_w']), o_b=pt['o_b'],
        oln_g=pt['oln_g'], oln_b=pt['oln_b'],
        tr_w=bf(pt['tr_w']), tr_b=pt['tr_b'],
        tr_ln_g=pt['tr_ln_g'], tr_ln_b=pt['tr_ln_b'],
        dec_w=bf(pt['dec_w']), dec_b=pt['dec_b'],
        sd_w=bf(pt['sd_w']), sd_b=pt['sd_b'],
    )
    args = [inputs[k] for k in _IN]

    out_shapes = (
        jax.ShapeDtypeStruct((DEPTH_V, Bx * T_PAD, D), F32),    # per-layer ViT features
        jax.ShapeDtypeStruct((DEPTH_T, Bx * S, D), F32),        # per-layer text features
        jax.ShapeDtypeStruct((Bx * S, VOCAB), F32),             # LM logits
        jax.ShapeDtypeStruct((2,), F32),                        # [loss_lm, loss_fdt]
    )
    out_specs = (_vmem_spec(), _vmem_spec(), _vmem_spec(),
                 pl.BlockSpec(memory_space=pltpu.MemorySpace.SMEM))

    vis_feat, lang_feat, logits, losses = pl.pallas_call(
        functools.partial(_blip_kernel, temperature=float(temperature)),
        out_shape=out_shapes,
        in_specs=[_vmem_spec() for _ in args],
        out_specs=out_specs,
        cost_estimate=_cost_estimate(args, out_shapes),
    )(*args)

    logits = logits.reshape(Bx, S, VOCAB)
    if not train:
        return logits
    vis_feat_all = vis_feat.reshape(DEPTH_V, Bx, T_PAD, D)[:, :, :NUM_TOKENS, :]
    lang_feat_all = lang_feat.reshape(DEPTH_T, Bx, S, D)
    return losses[0], losses[1], vis_feat_all, lang_feat_all


# ----------------------------- deterministic params ------------------------------
def init_params(key):
    ks = iter(jax.random.split(key, 64))

    def w(shape, scale=0.02):
        return jax.random.normal(next(ks), shape, F32) * scale

    def zeros(*s):
        return jnp.zeros(s, F32)

    def ones(*s):
        return jnp.ones(s, F32)

    L = DEPTH_V
    vit = dict(
        patch_w=w((PATCH_DIM, D)), patch_b=zeros(1, D),
        cls=w((1, D)), pos=w((NUM_TOKENS, D)),
        ln1_g=ones(L, 1, D), ln1_b=zeros(L, 1, D),
        qkv_w=w((L, D, 3 * D)), qkv_b=zeros(L, 1, 3 * D),
        proj_w=w((L, D, D)), proj_b=zeros(L, 1, D),
        ln2_g=ones(L, 1, D), ln2_b=zeros(L, 1, D),
        fc1_w=w((L, D, MLP_V)), fc1_b=zeros(L, 1, MLP_V),
        fc2_w=w((L, MLP_V, D)), fc2_b=zeros(L, 1, D),
        norm_g=ones(1, D), norm_b=zeros(1, D))

    Lt = DEPTH_T
    text = dict(
        word_emb=w((VOCAB, D)), pos_emb=w((MAX_POS, D)), type_emb=w((2, D)),
        emb_ln_g=ones(1, D), emb_ln_b=zeros(1, D),
        sq_w=w((Lt, D, D)), sq_b=zeros(Lt, 1, D),
        sk_w=w((Lt, D, D)), sk_b=zeros(Lt, 1, D),
        sv_w=w((Lt, D, D)), sv_b=zeros(Lt, 1, D),
        so_w=w((Lt, D, D)), so_b=zeros(Lt, 1, D),
        sln_g=ones(Lt, 1, D), sln_b=zeros(Lt, 1, D),
        cq_w=w((Lt, D, D)), cq_b=zeros(Lt, 1, D),
        ck_w=w((Lt, D, D)), ck_b=zeros(Lt, 1, D),
        cv_w=w((Lt, D, D)), cv_b=zeros(Lt, 1, D),
        co_w=w((Lt, D, D)), co_b=zeros(Lt, 1, D),
        cln_g=ones(Lt, 1, D), cln_b=zeros(Lt, 1, D),
        i_w=w((Lt, D, MLP_T)), i_b=zeros(Lt, 1, MLP_T),
        o_w=w((Lt, MLP_T, D)), o_b=zeros(Lt, 1, D),
        oln_g=ones(Lt, 1, D), oln_b=zeros(Lt, 1, D),
        tr_w=w((D, D)), tr_b=zeros(1, D),
        tr_ln_g=ones(1, D), tr_ln_b=zeros(1, D),
        dec_w=w((D, VOCAB)), dec_b=zeros(1, VOCAB),
        sd_w=w((D, SD_DIM)), sd_b=zeros(1, SD_DIM))

    space_dict = jax.random.normal(next(ks), (SD_NUM, SD_DIM), F32)  # nn.Parameter(torch.randn)
    return dict(vit=vit, text=text, space_dict=space_dict)


# ----------------------------- main ----------------------------------------------
if __name__ == "__main__":
    root = jax.random.PRNGKey(0)
    kp, ki, kc = jax.random.split(root, 3)
    params = init_params(kp)

    image = jax.random.normal(ki, (B, IMG_C, IMG_HW, IMG_HW), F32)
    caption_ids = jax.random.randint(kc, (B, SEQ), 3, VOCAB, dtype=jnp.int32)
    caption_ids = caption_ids.at[1, SEQ - 2:].set(PAD_ID)        # some padding
    caption_mask = (caption_ids != PAD_ID).astype(jnp.int32)

    fwd = jax.jit(functools.partial(blip_decoder_forward,
                                    temperature=TEMPERATURE, train=True))
    out = fwd(params, image, caption_ids, caption_mask)
    jax.block_until_ready(out)
    print("KERNEL_OK")
</pallas_src>

<mosaic_0001>
module attributes {stable_mosaic.version = 11 : i64} {
  func.func @_blip_kernel(%arg0: memref<16x768xbf16, #tpu.memory_space<vmem>>, %arg1: memref<768x128xbf16, #tpu.memory_space<vmem>>, %arg2: memref<16x128xf32, #tpu.memory_space<vmem>>, %arg3: memref<2x1x128xf32, #tpu.memory_space<vmem>>, %arg4: memref<2x1x128xf32, #tpu.memory_space<vmem>>, %arg5: memref<2x128x384xbf16, #tpu.memory_space<vmem>>, %arg6: memref<2x1x384xf32, #tpu.memory_space<vmem>>, %arg7: memref<2x128x128xbf16, #tpu.memory_space<vmem>>, %arg8: memref<2x1x128xf32, #tpu.memory_space<vmem>>, %arg9: memref<2x1x128xf32, #tpu.memory_space<vmem>>, %arg10: memref<2x1x128xf32, #tpu.memory_space<vmem>>, %arg11: memref<2x128x512xbf16, #tpu.memory_space<vmem>>, %arg12: memref<2x1x512xf32, #tpu.memory_space<vmem>>, %arg13: memref<2x512x128xbf16, #tpu.memory_space<vmem>>, %arg14: memref<2x1x128xf32, #tpu.memory_space<vmem>>, %arg15: memref<1x128xf32, #tpu.memory_space<vmem>>, %arg16: memref<1x128xf32, #tpu.memory_space<vmem>>, %arg17: memref<16x128xf32, #tpu.memory_space<vmem>>, %arg18: memref<16x1xi32, #tpu.memory_space<vmem>>, %arg19: memref<16x1xi32, #tpu.memory_space<vmem>>, %arg20: memref<1x64xf32, #tpu.memory_space<vmem>>, %arg21: memref<128x128xbf16, #tpu.memory_space<vmem>>, %arg22: memref<16x128xf32, #tpu.memory_space<vmem>>, %arg23: memref<1x128xf32, #tpu.memory_space<vmem>>, %arg24: memref<1x128xf32, #tpu.memory_space<vmem>>, %arg25: memref<2x128x128xbf16, #tpu.memory_space<vmem>>, %arg26: memref<2x1x128xf32, #tpu.memory_space<vmem>>, %arg27: memref<2x128x128xbf16, #tpu.memory_space<vmem>>, %arg28: memref<2x1x128xf32, #tpu.memory_space<vmem>>, %arg29: memref<2x128x128xbf16, #tpu.memory_space<vmem>>, %arg30: memref<2x1x128xf32, #tpu.memory_space<vmem>>, %arg31: memref<2x128x128xbf16, #tpu.memory_space<vmem>>, %arg32: memref<2x1x128xf32, #tpu.memory_space<vmem>>, %arg33: memref<2x1x128xf32, #tpu.memory_space<vmem>>, %arg34: memref<2x1x128xf32, #tpu.memory_space<vmem>>, %arg35: memref<2x128x128xbf16, #tpu.memory_space<vmem>>, %arg36: memref<2x1x128xf32, #tpu.memory_space<vmem>>, %arg37: memref<2x128x128xbf16, #tpu.memory_space<vmem>>, %arg38: memref<2x1x128xf32, #tpu.memory_space<vmem>>, %arg39: memref<2x128x128xbf16, #tpu.memory_space<vmem>>, %arg40: memref<2x1x128xf32, #tpu.memory_space<vmem>>, %arg41: memref<2x128x128xbf16, #tpu.memory_space<vmem>>, %arg42: memref<2x1x128xf32, #tpu.memory_space<vmem>>, %arg43: memref<2x1x128xf32, #tpu.memory_space<vmem>>, %arg44: memref<2x1x128xf32, #tpu.memory_space<vmem>>, %arg45: memref<2x128x512xbf16, #tpu.memory_space<vmem>>, %arg46: memref<2x1x512xf32, #tpu.memory_space<vmem>>, %arg47: memref<2x512x128xbf16, #tpu.memory_space<vmem>>, %arg48: memref<2x1x128xf32, #tpu.memory_space<vmem>>, %arg49: memref<2x1x128xf32, #tpu.memory_space<vmem>>, %arg50: memref<2x1x128xf32, #tpu.memory_space<vmem>>, %arg51: memref<128x128xbf16, #tpu.memory_space<vmem>>, %arg52: memref<1x128xf32, #tpu.memory_space<vmem>>, %arg53: memref<1x128xf32, #tpu.memory_space<vmem>>, %arg54: memref<1x128xf32, #tpu.memory_space<vmem>>, %arg55: memref<128x128xbf16, #tpu.memory_space<vmem>>, %arg56: memref<1x128xf32, #tpu.memory_space<vmem>>, %arg57: memref<128x128xbf16, #tpu.memory_space<vmem>>, %arg58: memref<1x128xf32, #tpu.memory_space<vmem>>, %arg59: memref<2x16x128xf32, #tpu.memory_space<vmem>>, %arg60: memref<2x16x128xf32, #tpu.memory_space<vmem>>, %arg61: memref<16x128xf32, #tpu.memory_space<vmem>>, %arg62: memref<2xf32, #tpu.memory_space<smem>>) attributes {dimension_semantics = [], scalar_prefetch = 0 : i64, scratch_operands = 0 : i64, tpu.core_type = #tpu.core_type<tc>} {
    %0 = tpu.iota {dimensions = array<i32: 0>} : vector<64x64xi32>
    %1 = tpu.iota {dimensions = array<i32: 1>} : vector<64x64xi32>
    %c7_i32 = arith.constant 7 : i32
    %2 = vector.broadcast %c7_i32 : i32 to vector<64x64xi32>
    %3 = arith.andi %0, %2 : vector<64x64xi32>
    %c7_i32_0 = arith.constant 7 : i32
    %4 = vector.broadcast %c7_i32_0 : i32 to vector<64x64xi32>
    %5 = arith.andi %1, %4 : vector<64x64xi32>
    %6 = arith.subi %0, %3 : vector<64x64xi32>
    %7 = arith.subi %1, %5 : vector<64x64xi32>
    %8 = arith.cmpi eq, %6, %7 : vector<64x64xi32>
    %c5_i32 = arith.constant 5 : i32
    %9 = vector.broadcast %c5_i32 : i32 to vector<64x64xi32>
    %10 = arith.cmpi slt, %5, %9 : vector<64x64xi32>
    %11 = arith.andi %8, %10 : vector<64x64xi1>
    %cst = arith.constant 0.000000e+00 : f32
    %cst_1 = arith.constant -1.000000e+04 : f32
    %12 = vector.broadcast %cst : f32 to vector<64x64xf32>
    %13 = vector.broadcast %cst_1 : f32 to vector<64x64xf32>
    %14 = arith.select %11, %12, %13 : vector<64x64xi1>, vector<64x64xf32>
    %c0 = arith.constant 0 : index
    %c0_2 = arith.constant 0 : index
    %15 = vector.load %arg20[%c0, %c0_2] : memref<1x64xf32, #tpu.memory_space<vmem>>, vector<1x64xf32>
    %cst_3 = arith.constant 5.000000e-01 : f32
    %16 = vector.broadcast %cst_3 : f32 to vector<1x64xf32>
    %17 = arith.cmpf ogt, %15, %16 : vector<1x64xf32>
    %18 = arith.cmpi sge, %3, %5 : vector<64x64xi32>
    %19 = arith.andi %8, %18 : vector<64x64xi1>
    %20 = vector.broadcast %17 : vector<1x64xi1> to vector<64x64xi1>
    %21 = arith.andi %19, %20 : vector<64x64xi1>
    %cst_4 = arith.constant 0.000000e+00 : f32
    %cst_5 = arith.constant -1.000000e+04 : f32
    %22 = vector.broadcast %cst_4 : f32 to vector<64x64xf32>
    %23 = vector.broadcast %cst_5 : f32 to vector<64x64xf32>
    %24 = arith.select %21, %22, %23 : vector<64x64xi1>, vector<64x64xf32>
    %c0_6 = arith.constant 0 : index
    %c0_7 = arith.constant 0 : index
    %25 = vector.load %arg0[%c0_6, %c0_7] : memref<16x768xbf16, #tpu.memory_space<vmem>>, vector<16x768xbf16>
    %c0_8 = arith.constant 0 : index
    %c0_9 = arith.constant 0 : index
    %26 = vector.load %arg1[%c0_8, %c0_9] : memref<768x128xbf16, #tpu.memory_space<vmem>>, vector<768x128xbf16>
    %cst_10 = arith.constant dense<0.000000e+00> : vector<16x128xf32>
    %27 = tpu.matmul %25, %26, %cst_10 {dimension_numbers = #tpu.dot_dimension_numbers<[1], [0], [0], [1], [0, 0, 1, 1], [], []>} : vector<16x768xbf16>, vector<768x128xbf16>, vector<16x128xf32> -> vector<16x128xf32>
    %c0_11 = arith.constant 0 : index
    %c0_12 = arith.constant 0 : index
    %28 = vector.load %arg2[%c0_11, %c0_12] : memref<16x128xf32, #tpu.memory_space<vmem>>, vector<16x128xf32>
    %29 = arith.addf %27, %28 : vector<16x128xf32>
    %c0_13 = arith.constant 0 : index
    %c0_14 = arith.constant 0 : index
    %c0_15 = arith.constant 0 : index
    %30 = vector.load %arg3[%c0_13, %c0_14, %c0_15] : memref<2x1x128xf32, #tpu.memory_space<vmem>>, vector<1x1x128xf32>
    %31 = vector.shape_cast %30 : vector<1x1x128xf32> to vector<1x128xf32>
    %c0_16 = arith.constant 0 : index
    %c0_17 = arith.constant 0 : index
    %c0_18 = arith.constant 0 : index
    %32 = vector.load %arg4[%c0_16, %c0_17, %c0_18] : memref<2x1x128xf32, #tpu.memory_space<vmem>>, vector<1x1x128xf32>
    %33 = vector.shape_cast %32 : vector<1x1x128xf32> to vector<1x128xf32>
    %cst_19 = arith.constant dense<0.000000e+00> : vector<16xf32>
    %34 = vector.multi_reduction <add>, %29, %cst_19 [1] : vector<16x128xf32> to vector<16xf32>
    %35 = vector.shape_cast %34 : vector<16xf32> to vector<16x1xf32>
    %cst_20 = arith.constant 1.280000e+02 : f32
    %36 = vector.broadcast %cst_20 : f32 to vector<16x1xf32>
    %37 = arith.divf %35, %36 : vector<16x1xf32>
    %38 = vector.broadcast %37 : vector<16x1xf32> to vector<16x128xf32>
    %39 = arith.subf %29, %38 : vector<16x128xf32>
    %40 = arith.mulf %39, %39 : vector<16x128xf32>
    %cst_21 = arith.constant dense<0.000000e+00> : vector<16xf32>
    %41 = vector.multi_reduction <add>, %40, %cst_21 [1] : vector<16x128xf32> to vector<16xf32>
    %42 = vector.shape_cast %41 : vector<16xf32> to vector<16x1xf32>
    %cst_22 = arith.constant 1.280000e+02 : f32
    %43 = vector.broadcast %cst_22 : f32 to vector<16x1xf32>
    %44 = arith.divf %42, %43 : vector<16x1xf32>
    %45 = vector.broadcast %37 : vector<16x1xf32> to vector<16x128xf32>
    %46 = arith.subf %29, %45 : vector<16x128xf32>
    %cst_23 = arith.constant 9.99999997E-7 : f32
    %47 = vector.broadcast %cst_23 : f32 to vector<16x1xf32>
    %48 = arith.addf %44, %47 : vector<16x1xf32>
    %49 = math.rsqrt %48 : vector<16x1xf32>
    %50 = vector.broadcast %49 : vector<16x1xf32> to vector<16x128xf32>
    %51 = arith.mulf %46, %50 : vector<16x128xf32>
    %52 = vector.broadcast %31 : vector<1x128xf32> to vector<16x128xf32>
    %53 = arith.mulf %51, %52 : vector<16x128xf32>
    %54 = vector.broadcast %33 : vector<1x128xf32> to vector<16x128xf32>
    %55 = arith.addf %53, %54 : vector<16x128xf32>
    %c0_24 = arith.constant 0 : index
    %c0_25 = arith.constant 0 : index
    %c0_26 = arith.constant 0 : index
    %56 = vector.load %arg5[%c0_24, %c0_25, %c0_26] : memref<2x128x384xbf16, #tpu.memory_space<vmem>>, vector<1x128x384xbf16>
    %57 = vector.shape_cast %56 : vector<1x128x384xbf16> to vector<128x384xbf16>
    %58 = arith.truncf %55 : vector<16x128xf32> to vector<16x128xbf16>
    %cst_27 = arith.constant dense<0.000000e+00> : vector<16x384xf32>
    %59 = tpu.matmul %58, %57, %cst_27 {dimension_numbers = #tpu.dot_dimension_numbers<[1], [0], [0], [1], [0, 0, 1, 1], [], []>} : vector<16x128xbf16>, vector<128x384xbf16>, vector<16x384xf32> -> vector<16x384xf32>
    %c0_28 = arith.constant 0 : index
    %c0_29 = arith.constant 0 : index
    %c0_30 = arith.constant 0 : index
    %60 = vector.load %arg6[%c0_28, %c0_29, %c0_30] : memref<2x1x384xf32, #tpu.memory_space<vmem>>, vector<1x1x384xf32>
    %61 = vector.shape_cast %60 : vector<1x1x384xf32> to vector<1x384xf32>
    %62 = vector.broadcast %61 : vector<1x384xf32> to vector<16x384xf32>
    %63 = arith.addf %59, %62 : vector<16x384xf32>
    %64 = vector.extract_strided_slice %63 {offsets = [0, 0], sizes = [16, 128], strides = [1, 1]} : vector<16x384xf32> to vector<16x128xf32>
    %65 = vector.extract_strided_slice %63 {offsets = [0, 128], sizes = [16, 128], strides = [1, 1]} : vector<16x384xf32> to vector<16x128xf32>
    %66 = vector.extract_strided_slice %63 {offsets = [0, 256], sizes = [16, 128], strides = [1, 1]} : vector<16x384xf32> to vector<16x128xf32>
    %c0_31 = arith.constant 0 : index
    %c0_32 = arith.constant 0 : index
    %c0_33 = arith.constant 0 : index
    %67 = vector.load %arg7[%c0_31, %c0_32, %c0_33] : memref<2x128x128xbf16, #tpu.memory_space<vmem>>, vector<1x128x128xbf16>
    %68 = vector.shape_cast %67 : vector<1x128x128xbf16> to vector<128x128xbf16>
    %c0_34 = arith.constant 0 : index
    %c0_35 = arith.constant 0 : index
    %c0_36 = arith.constant 0 : index
    %69 = vector.load %arg8[%c0_34, %c0_35, %c0_36] : memref<2x1x128xf32, #tpu.memory_space<vmem>>, vector<1x1x128xf32>
    %70 = vector.shape_cast %69 : vector<1x1x128xf32> to vector<1x128xf32>
    %71 = vector.extract_strided_slice %64 {offsets = [0, 0], sizes = [16, 32], strides = [1, 1]} : vector<16x128xf32> to vector<16x32xf32>
    %72 = vector.extract_strided_slice %64 {offsets = [0, 32], sizes = [16, 32], strides = [1, 1]} : vector<16x128xf32> to vector<16x32xf32>
    %73 = vector.extract_strided_slice %64 {offsets = [0, 64], sizes = [16, 32], strides = [1, 1]} : vector<16x128xf32> to vector<16x32xf32>
    %74 = vector.extract_strided_slice %64 {offsets = [0, 96], sizes = [16, 32], strides = [1, 1]} : vector<16x128xf32> to vector<16x32xf32>
    %75 = tpu.concatenate %71, %72, %73, %74 in 0 : vector<16x32xf32>, vector<16x32xf32>, vector<16x32xf32>, vector<16x32xf32> -> vector<64x32xf32>
    %76 = arith.truncf %75 : vector<64x32xf32> to vector<64x32xbf16>
    %77 = vector.extract_strided_slice %65 {offsets = [0, 0], sizes = [16, 32], strides = [1, 1]} : vector<16x128xf32> to vector<16x32xf32>
    %78 = vector.extract_strided_slice %65 {offsets = [0, 32], sizes = [16, 32], strides = [1, 1]} : vector<16x128xf32> to vector<16x32xf32>
    %79 = vector.extract_strided_slice %65 {offsets = [0, 64], sizes = [16, 32], strides = [1, 1]} : vector<16x128xf32> to vector<16x32xf32>
    %80 = vector.extract_strided_slice %65 {offsets = [0, 96], sizes = [16, 32], strides = [1, 1]} : vector<16x128xf32> to vector<16x32xf32>
    %81 = tpu.concatenate %77, %78, %79, %80 in 0 : vector<16x32xf32>, vector<16x32xf32>, vector<16x32xf32>, vector<16x32xf32> -> vector<64x32xf32>
    %82 = arith.truncf %81 : vector<64x32xf32> to vector<64x32xbf16>
    %83 = vector.extract_strided_slice %66 {offsets = [0, 0], sizes = [16, 32], strides = [1, 1]} : vector<16x128xf32> to vector<16x32xf32>
    %84 = vector.extract_strided_slice %66 {offsets = [0, 32], sizes = [16, 32], strides = [1, 1]} : vector<16x128xf32> to vector<16x32xf32>
    %85 = vector.extract_strided_slice %66 {offsets = [0, 64], sizes = [16, 32], strides = [1, 1]} : vector<16x128xf32> to vector<16x32xf32>
    %86 = vector.extract_strided_slice %66 {offsets = [0, 96], sizes = [16, 32], strides = [1, 1]} : vector<16x128xf32> to vector<16x32xf32>
    %87 = tpu.concatenate %83, %84, %85, %86 in 0 : vector<16x32xf32>, vector<16x32xf32>, vector<16x32xf32>, vector<16x32xf32> -> vector<64x32xf32>
    %88 = arith.truncf %87 : vector<64x32xf32> to vector<64x32xbf16>
    %cst_37 = arith.constant dense<0.000000e+00> : vector<64x64xf32>
    %89 = tpu.matmul %76, %82, %cst_37 {dimension_numbers = #tpu.dot_dimension_numbers<[1], [1], [0], [0], [0, 0, 1, 0], [], []>} : vector<64x32xbf16>, vector<64x32xbf16>, vector<64x64xf32> -> vector<64x64xf32>
    %cst_38 = arith.constant 0.176776692 : f32
    %90 = vector.broadcast %cst_38 : f32 to vector<64x64xf32>
    %91 = arith.mulf %89, %90 : vector<64x64xf32>
    %92 = arith.addf %91, %14 : vector<64x64xf32>
    %cst_39 = arith.constant dense<0xFF800000> : vector<64xf32>
    %93 = vector.multi_reduction <maximumf>, %92, %cst_39 [1] : vector<64x64xf32> to vector<64xf32>
    %94 = vector.shape_cast %93 : vector<64xf32> to vector<64x1xf32>
    %95 = vector.broadcast %94 : vector<64x1xf32> to vector<64x64xf32>
    %96 = arith.subf %92, %95 : vector<64x64xf32>
    %97 = math.exp %96 : vector<64x64xf32>
    %cst_40 = arith.constant dense<0.000000e+00> : vector<64xf32>
    %98 = vector.multi_reduction <add>, %97, %cst_40 [1] : vector<64x64xf32> to vector<64xf32>
    %99 = vector.shape_cast %98 : vector<64xf32> to vector<64x1xf32>
    %100 = tpu.reciprocal %99 {approx = true} : vector<64x1xf32> -> vector<64x1xf32>
    %101 = vector.broadcast %100 : vector<64x1xf32> to vector<64x64xf32>
    %102 = arith.mulf %97, %101 : vector<64x64xf32>
    %103 = arith.truncf %102 : vector<64x64xf32> to vector<64x64xbf16>
    %cst_41 = arith.constant dense<0.000000e+00> : vector<64x32xf32>
    %104 = tpu.matmul %103, %88, %cst_41 {dimension_numbers = #tpu.dot_dimension_numbers<[1], [0], [0], [1], [0, 0, 1, 1], [], []>} : vector<64x64xbf16>, vector<64x32xbf16>, vector<64x32xf32> -> vector<64x32xf32>
    %105 = vector.extract_strided_slice %104 {offsets = [0, 0], sizes = [16, 32], strides = [1, 1]} : vector<64x32xf32> to vector<16x32xf32>
    %106 = vector.extract_strided_slice %104 {offsets = [16, 0], sizes = [16, 32], strides = [1, 1]} : vector<64x32xf32> to vector<16x32xf32>
    %107 = vector.extract_strided_slice %104 {offsets = [32, 0], sizes = [16, 32], strides = [1, 1]} : vector<64x32xf32> to vector<16x32xf32>
    %108 = vector.extract_strided_slice %104 {offsets = [48, 0], sizes = [16, 32], strides = [1, 1]} : vector<64x32xf32> to vector<16x32xf32>
    %109 = tpu.concatenate %105, %106, %107, %108 in 1 : vector<16x32xf32>, vector<16x32xf32>, vector<16x32xf32>, vector<16x32xf32> -> vector<16x128xf32>
    %110 = arith.truncf %109 : vector<16x128xf32> to vector<16x128xbf16>
    %cst_42 = arith.constant dense<0.000000e+00> : vector<16x128xf32>
    %111 = tpu.matmul %110, %68, %cst_42 {dimension_numbers = #tpu.dot_dimension_numbers<[1], [0], [0], [1], [0, 0, 1, 1], [], []>} : vector<16x128xbf16>, vector<128x128xbf16>, vector<16x128xf32> -> vector<16x128xf32>
    %112 = vector.broadcast %70 : vector<1x128xf32> to vector<16x128xf32>
    %113 = arith.addf %111, %112 : vector<16x128xf32>
    %114 = arith.addf %29, %113 : vector<16x128xf32>
    %c0_43 = arith.constant 0 : index
    %c0_44 = arith.constant 0 : index
    %c0_45 = arith.constant 0 : index
    %115 = vector.load %arg9[%c0_43, %c0_44, %c0_45] : memref<2x1x128xf32, #tpu.memory_space<vmem>>, vector<1x1x128xf32>
    %116 = vector.shape_cast %115 : vector<1x1x128xf32> to vector<1x128xf32>
    %c0_46 = arith.constant 0 : index
    %c0_47 = arith.constant 0 : index
    %c0_48 = arith.constant 0 : index
    %117 = vector.load %arg10[%c0_46, %c0_47, %c0_48] : memref<2x1x128xf32, #tpu.memory_space<vmem>>, vector<1x1x128xf32>
    %118 = vector.shape_cast %117 : vector<1x1x128xf32> to vector<1x128xf32>
    %cst_49 = arith.constant dense<0.000000e+00> : vector<16xf32>
    %119 = vector.multi_reduction <add>, %114, %cst_49 [1] : vector<16x128xf32> to vector<16xf32>
    %120 = vector.shape_cast %119 : vector<16xf32> to vector<16x1xf32>
    %cst_50 = arith.constant 1.280000e+02 : f32
    %121 = vector.broadcast %cst_50 : f32 to vector<16x1xf32>
    %122 = arith.divf %120, %121 : vector<16x1xf32>
    %123 = vector.broadcast %122 : vector<16x1xf32> to vector<16x128xf32>
    %124 = arith.subf %114, %123 : vector<16x128xf32>
    %125 = arith.mulf %124, %124 : vector<16x128xf32>
    %cst_51 = arith.constant dense<0.000000e+00> : vector<16xf32>
    %126 = vector.multi_reduction <add>, %125, %cst_51 [1] : vector<16x128xf32> to vector<16xf32>
    %127 = vector.shape_cast %126 : vector<16xf32> to vector<16x1xf32>
    %cst_52 = arith.constant 1.280000e+02 : f32
    %128 = vector.broadcast %cst_52 : f32 to vector<16x1xf32>
    %129 = arith.divf %127, %128 : vector<16x1xf32>
    %130 = vector.broadcast %122 : vector<16x1xf32> to vector<16x128xf32>
    %131 = arith.subf %114, %130 : vector<16x128xf32>
    %cst_53 = arith.constant 9.99999997E-7 : f32
    %132 = vector.broadcast %cst_53 : f32 to vector<16x1xf32>
    %133 = arith.addf %129, %132 : vector<16x1xf32>
    %134 = math.rsqrt %133 : vector<16x1xf32>
    %135 = vector.broadcast %134 : vector<16x1xf32> to vector<16x128xf32>
    %136 = arith.mulf %131, %135 : vector<16x128xf32>
    %137 = vector.broadcast %116 : vector<1x128xf32> to vector<16x128xf32>
    %138 = arith.mulf %136, %137 : vector<16x128xf32>
    %139 = vector.broadcast %118 : vector<1x128xf32> to vector<16x128xf32>
    %140 = arith.addf %138, %139 : vector<16x128xf32>
    %c0_54 = arith.constant 0 : index
    %c0_55 = arith.constant 0 : index
    %c0_56 = arith.constant 0 : index
    %141 = vector.load %arg11[%c0_54, %c0_55, %c0_56] : memref<2x128x512xbf16, #tpu.memory_space<vmem>>, vector<1x128x512xbf16>
    %142 = vector.shape_cast %141 : vector<1x128x512xbf16> to vector<128x512xbf16>
    %143 = arith.truncf %140 : vector<16x128xf32> to vector<16x128xbf16>
    %cst_57 = arith.constant dense<0.000000e+00> : vector<16x512xf32>
    %144 = tpu.matmul %143, %142, %cst_57 {dimension_numbers = #tpu.dot_dimension_numbers<[1], [0], [0], [1], [0, 0, 1, 1], [], []>} : vector<16x128xbf16>, vector<128x512xbf16>, vector<16x512xf32> -> vector<16x512xf32>
    %c0_58 = arith.constant 0 : index
    %c0_59 = arith.constant 0 : index
    %c0_60 = arith.constant 0 : index
    %145 = vector.load %arg12[%c0_58, %c0_59, %c0_60] : memref<2x1x512xf32, #tpu.memory_space<vmem>>, vector<1x1x512xf32>
    %146 = vector.shape_cast %145 : vector<1x1x512xf32> to vector<1x512xf32>
    %147 = vector.broadcast %146 : vector<1x512xf32> to vector<16x512xf32>
    %148 = arith.addf %144, %147 : vector<16x512xf32>
    %cst_61 = arith.constant 5.000000e-01 : f32
    %149 = vector.broadcast %cst_61 : f32 to vector<16x512xf32>
    %150 = arith.mulf %149, %148 : vector<16x512xf32>
    %cst_62 = arith.constant 4.471500e-02 : f32
    %151 = vector.broadcast %cst_62 : f32 to vector<16x512xf32>
    %152 = arith.mulf %151, %148 : vector<16x512xf32>
    %153 = arith.mulf %152, %148 : vector<16x512xf32>
    %154 = arith.mulf %153, %148 : vector<16x512xf32>
    %155 = arith.addf %148, %154 : vector<16x512xf32>
    %cst_63 = arith.constant 0.797884583 : f32
    %156 = vector.broadcast %cst_63 : f32 to vector<16x512xf32>
    %157 = arith.mulf %156, %155 : vector<16x512xf32>
    %158 = math.tanh %157 : vector<16x512xf32>
    %cst_64 = arith.constant 1.000000e+00 : f32
    %159 = vector.broadcast %cst_64 : f32 to vector<16x512xf32>
    %160 = arith.addf %159, %158 : vector<16x512xf32>
    %161 = arith.mulf %150, %160 : vector<16x512xf32>
    %c0_65 = arith.constant 0 : index
    %c0_66 = arith.constant 0 : index
    %c0_67 = arith.constant 0 : index
    %162 = vector.load %arg13[%c0_65, %c0_66, %c0_67] : memref<2x512x128xbf16, #tpu.memory_space<vmem>>, vector<1x512x128xbf16>
    %163 = vector.shape_cast %162 : vector<1x512x128xbf16> to vector<512x128xbf16>
    %164 = arith.truncf %161 : vector<16x512xf32> to vector<16x512xbf16>
    %cst_68 = arith.constant dense<0.000000e+00> : vector<16x128xf32>
    %165 = tpu.matmul %164, %163, %cst_68 {dimension_numbers = #tpu.dot_dimension_numbers<[1], [0], [0], [1], [0, 0, 1, 1], [], []>} : vector<16x512xbf16>, vector<512x128xbf16>, vector<16x128xf32> -> vector<16x128xf32>
    %166 = arith.addf %114, %165 : vector<16x128xf32>
    %c0_69 = arith.constant 0 : index
    %c0_70 = arith.constant 0 : index
    %c0_71 = arith.constant 0 : index
    %167 = vector.load %arg14[%c0_69, %c0_70, %c0_71] : memref<2x1x128xf32, #tpu.memory_space<vmem>>, vector<1x1x128xf32>
    %168 = vector.shape_cast %167 : vector<1x1x128xf32> to vector<1x128xf32>
    %169 = vector.broadcast %168 : vector<1x128xf32> to vector<16x128xf32>
    %170 = arith.addf %166, %169 : vector<16x128xf32>
    %c0_72 = arith.constant 0 : index
    %c0_73 = arith.constant 0 : index
    %c0_74 = arith.constant 0 : index
    %171 = vector.load %arg59[%c0_72, %c0_73, %c0_74] : memref<2x16x128xf32, #tpu.memory_space<vmem>>, vector<1x16x128xf32>
    %172 = vector.shape_cast %171 : vector<1x16x128xf32> to vector<16x128xf32>
    %173 = vector.shape_cast %170 : vector<16x128xf32> to vector<1x16x128xf32>
    tpu.vector_store %arg59[%c0_72, %c0_73, %c0_74], %173 {strides = array<i32>} : memref<2x16x128xf32, #tpu.memory_space<vmem>>, vector<1x16x128xf32>,
    %c1 = arith.constant 1 : index
    %c0_75 = arith.constant 0 : index
    %c0_76 = arith.constant 0 : index
    %174 = vector.load %arg3[%c1, %c0_75, %c0_76] : memref<2x1x128xf32, #tpu.memory_space<vmem>>, vector<1x1x128xf32>
    %175 = vector.shape_cast %174 : vector<1x1x128xf32> to vector<1x128xf32>
    %c1_77 = arith.constant 1 : index
    %c0_78 = arith.constant 0 : index
    %c0_79 = arith.constant 0 : index
    %176 = vector.load %arg4[%c1_77, %c0_78, %c0_79] : memref<2x1x128xf32, #tpu.memory_space<vmem>>, vector<1x1x128xf32>
    %177 = vector.shape_cast %176 : vector<1x1x128xf32> to vector<1x128xf32>
    %cst_80 = arith.constant dense<0.000000e+00> : vector<16xf32>
    %178 = vector.multi_reduction <add>, %170, %cst_80 [1] : vector<16x128xf32> to vector<16xf32>
    %179 = vector.shape_cast %178 : vector<16xf32> to vector<16x1xf32>
    %cst_81 = arith.constant 1.280000e+02 : f32
    %180 = vector.broadcast %cst_81 : f32 to vector<16x1xf32>
    %181 = arith.divf %179, %180 : vector<16x1xf32>
    %182 = vector.broadcast %181 : vector<16x1xf32> to vector<16x128xf32>
    %183 = arith.subf %170, %182 : vector<16x128xf32>
    %184 = arith.mulf %183, %183 : vector<16x128xf32>
    %cst_82 = arith.constant dense<0.000000e+00> : vector<16xf32>
    %185 = vector.multi_reduction <add>, %184, %cst_82 [1] : vector<16x128xf32> to vector<16xf32>
    %186 = vector.shape_cast %185 : vector<16xf32> to vector<16x1xf32>
    %cst_83 = arith.constant 1.280000e+02 : f32
    %187 = vector.broadcast %cst_83 : f32 to vector<16x1xf32>
    %188 = arith.divf %186, %187 : vector<16x1xf32>
    %189 = vector.broadcast %181 : vector<16x1xf32> to vector<16x128xf32>
    %190 = arith.subf %170, %189 : vector<16x128xf32>
    %cst_84 = arith.constant 9.99999997E-7 : f32
    %191 = vector.broadcast %cst_84 : f32 to vector<16x1xf32>
    %192 = arith.addf %188, %191 : vector<16x1xf32>
    %193 = math.rsqrt %192 : vector<16x1xf32>
    %194 = vector.broadcast %193 : vector<16x1xf32> to vector<16x128xf32>
    %195 = arith.mulf %190, %194 : vector<16x128xf32>
    %196 = vector.broadcast %175 : vector<1x128xf32> to vector<16x128xf32>
    %197 = arith.mulf %195, %196 : vector<16x128xf32>
    %198 = vector.broadcast %177 : vector<1x128xf32> to vector<16x128xf32>
    %199 = arith.addf %197, %198 : vector<16x128xf32>
    %c1_85 = arith.constant 1 : index
    %c0_86 = arith.constant 0 : index
    %c0_87 = arith.constant 0 : index
    %200 = vector.load %arg5[%c1_85, %c0_86, %c0_87] : memref<2x128x384xbf16, #tpu.memory_space<vmem>>, vector<1x128x384xbf16>
    %201 = vector.shape_cast %200 : vector<1x128x384xbf16> to vector<128x384xbf16>
    %202 = arith.truncf %199 : vector<16x128xf32> to vector<16x128xbf16>
    %cst_88 = arith.constant dense<0.000000e+00> : vector<16x384xf32>
    %203 = tpu.matmul %202, %201, %cst_88 {dimension_numbers = #tpu.dot_dimension_numbers<[1], [0], [0], [1], [0, 0, 1, 1], [], []>} : vector<16x128xbf16>, vector<128x384xbf16>, vector<16x384xf32> -> vector<16x384xf32>
    %c1_89 = arith.constant 1 : index
    %c0_90 = arith.constant 0 : index
    %c0_91 = arith.constant 0 : index
    %204 = vector.load %arg6[%c1_89, %c0_90, %c0_91] : memref<2x1x384xf32, #tpu.memory_space<vmem>>, vector<1x1x384xf32>
    %205 = vector.shape_cast %204 : vector<1x1x384xf32> to vector<1x384xf32>
    %206 = vector.broadcast %205 : vector<1x384xf32> to vector<16x384xf32>
    %207 = arith.addf %203, %206 : vector<16x384xf32>
    %208 = vector.extract_strided_slice %207 {offsets = [0, 0], sizes = [16, 128], strides = [1, 1]} : vector<16x384xf32> to vector<16x128xf32>
    %209 = vector.extract_strided_slice %207 {offsets = [0, 128], sizes = [16, 128], strides = [1, 1]} : vector<16x384xf32> to vector<16x128xf32>
    %210 = vector.extract_strided_slice %207 {offsets = [0, 256], sizes = [16, 128], strides = [1, 1]} : vector<16x384xf32> to vector<16x128xf32>
    %c1_92 = arith.constant 1 : index
    %c0_93 = arith.constant 0 : index
    %c0_94 = arith.constant 0 : index
    %211 = vector.load %arg7[%c1_92, %c0_93, %c0_94] : memref<2x128x128xbf16, #tpu.memory_space<vmem>>, vector<1x128x128xbf16>
    %212 = vector.shape_cast %211 : vector<1x128x128xbf16> to vector<128x128xbf16>
    %c1_95 = arith.constant 1 : index
    %c0_96 = arith.constant 0 : index
    %c0_97 = arith.constant 0 : index
    %213 = vector.load %arg8[%c1_95, %c0_96, %c0_97] : memref<2x1x128xf32, #tpu.memory_space<vmem>>, vector<1x1x128xf32>
    %214 = vector.shape_cast %213 : vector<1x1x128xf32> to vector<1x128xf32>
    %215 = vector.extract_strided_slice %208 {offsets = [0, 0], sizes = [16, 32], strides = [1, 1]} : vector<16x128xf32> to vector<16x32xf32>
    %216 = vector.extract_strided_slice %208 {offsets = [0, 32], sizes = [16, 32], strides = [1, 1]} : vector<16x128xf32> to vector<16x32xf32>
    %217 = vector.extract_strided_slice %208 {offsets = [0, 64], sizes = [16, 32], strides = [1, 1]} : vector<16x128xf32> to vector<16x32xf32>
    %218 = vector.extract_strided_slice %208 {offsets = [0, 96], sizes = [16, 32], strides = [1, 1]} : vector<16x128xf32> to vector<16x32xf32>
    %219 = tpu.concatenate %215, %216, %217, %218 in 0 : vector<16x32xf32>, vector<16x32xf32>, vector<16x32xf32>, vector<16x32xf32> -> vector<64x32xf32>
    %220 = arith.truncf %219 : vector<64x32xf32> to vector<64x32xbf16>
    %221 = vector.extract_strided_slice %209 {offsets = [0, 0], sizes = [16, 32], strides = [1, 1]} : vector<16x128xf32> to vector<16x32xf32>
    %222 = vector.extract_strided_slice %209 {offsets = [0, 32], sizes = [16, 32], strides = [1, 1]} : vector<16x128xf32> to vector<16x32xf32>
    %223 = vector.extract_strided_slice %209 {offsets = [0, 64], sizes = [16, 32], strides = [1, 1]} : vector<16x128xf32> to vector<16x32xf32>
    %224 = vector.extract_strided_slice %209 {offsets = [0, 96], sizes = [16, 32], strides = [1, 1]} : vector<16x128xf32> to vector<16x32xf32>
    %225 = tpu.concatenate %221, %222, %223, %224 in 0 : vector<16x32xf32>, vector<16x32xf32>, vector<16x32xf32>, vector<16x32xf32> -> vector<64x32xf32>
    %226 = arith.truncf %225 : vector<64x32xf32> to vector<64x32xbf16>
    %227 = vector.extract_strided_slice %210 {offsets = [0, 0], sizes = [16, 32], strides = [1, 1]} : vector<16x128xf32> to vector<16x32xf32>
    %228 = vector.extract_strided_slice %210 {offsets = [0, 32], sizes = [16, 32], strides = [1, 1]} : vector<16x128xf32> to vector<16x32xf32>
    %229 = vector.extract_strided_slice %210 {offsets = [0, 64], sizes = [16, 32], strides = [1, 1]} : vector<16x128xf32> to vector<16x32xf32>
    %230 = vector.extract_strided_slice %210 {offsets = [0, 96], sizes = [16, 32], strides = [1, 1]} : vector<16x128xf32> to vector<16x32xf32>
    %231 = tpu.concatenate %227, %228, %229, %230 in 0 : vector<16x32xf32>, vector<16x32xf32>, vector<16x32xf32>, vector<16x32xf32> -> vector<64x32xf32>
    %232 = arith.truncf %231 : vector<64x32xf32> to vector<64x32xbf16>
    %cst_98 = arith.constant dense<0.000000e+00> : vector<64x64xf32>
    %233 = tpu.matmul %220, %226, %cst_98 {dimension_numbers = #tpu.dot_dimension_numbers<[1], [1], [0], [0], [0, 0, 1, 0], [], []>} : vector<64x32xbf16>, vector<64x32xbf16>, vector<64x64xf32> -> vector<64x64xf32>
    %cst_99 = arith.constant 0.176776692 : f32
    %234 = vector.broadcast %cst_99 : f32 to vector<64x64xf32>
    %235 = arith.mulf %233, %234 : vector<64x64xf32>
    %236 = arith.addf %235, %14 : vector<64x64xf32>
    %cst_100 = arith.constant dense<0xFF800000> : vector<64xf32>
    %237 = vector.multi_reduction <maximumf>, %236, %cst_100 [1] : vector<64x64xf32> to vector<64xf32>
    %238 = vector.shape_cast %237 : vector<64xf32> to vector<64x1xf32>
    %239 = vector.broadcast %238 : vector<64x1xf32> to vector<64x64xf32>
    %240 = arith.subf %236, %239 : vector<64x64xf32>
    %241 = math.exp %240 : vector<64x64xf32>
    %cst_101 = arith.constant dense<0.000000e+00> : vector<64xf32>
    %242 = vector.multi_reduction <add>, %241, %cst_101 [1] : vector<64x64xf32> to vector<64xf32>
    %243 = vector.shape_cast %242 : vector<64xf32> to vector<64x1xf32>
    %244 = tpu.reciprocal %243 {approx = true} : vector<64x1xf32> -> vector<64x1xf32>
    %245 = vector.broadcast %244 : vector<64x1xf32> to vector<64x64xf32>
    %246 = arith.mulf %241, %245 : vector<64x64xf32>
    %247 = arith.truncf %246 : vector<64x64xf32> to vector<64x64xbf16>
    %cst_102 = arith.constant dense<0.000000e+00> : vector<64x32xf32>
    %248 = tpu.matmul %247, %232, %cst_102 {dimension_numbers = #tpu.dot_dimension_numbers<[1], [0], [0], [1], [0, 0, 1, 1], [], []>} : vector<64x64xbf16>, vector<64x32xbf16>, vector<64x32xf32> -> vector<64x32xf32>
    %249 = vector.extract_strided_slice %248 {offsets = [0, 0], sizes = [16, 32], strides = [1, 1]} : vector<64x32xf32> to vector<16x32xf32>
    %250 = vector.extract_strided_slice %248 {offsets = [16, 0], sizes = [16, 32], strides = [1, 1]} : vector<64x32xf32> to vector<16x32xf32>
    %251 = vector.extract_strided_slice %248 {offsets = [32, 0], sizes = [16, 32], strides = [1, 1]} : vector<64x32xf32> to vector<16x32xf32>
    %252 = vector.extract_strided_slice %248 {offsets = [48, 0], sizes = [16, 32], strides = [1, 1]} : vector<64x32xf32> to vector<16x32xf32>
    %253 = tpu.concatenate %249, %250, %251, %252 in 1 : vector<16x32xf32>, vector<16x32xf32>, vector<16x32xf32>, vector<16x32xf32> -> vector<16x128xf32>
    %254 = arith.truncf %253 : vector<16x128xf32> to vector<16x128xbf16>
    %cst_103 = arith.constant dense<0.000000e+00> : vector<16x128xf32>
    %255 = tpu.matmul %254, %212, %cst_103 {dimension_numbers = #tpu.dot_dimension_numbers<[1], [0], [0], [1], [0, 0, 1, 1], [], []>} : vector<16x128xbf16>, vector<128x128xbf16>, vector<16x128xf32> -> vector<16x128xf32>
    %256 = vector.broadcast %214 : vector<1x128xf32> to vector<16x128xf32>
    %257 = arith.addf %255, %256 : vector<16x128xf32>
    %258 = arith.addf %170, %257 : vector<16x128xf32>
    %c1_104 = arith.constant 1 : index
    %c0_105 = arith.constant 0 : index
    %c0_106 = arith.constant 0 : index
    %259 = vector.load %arg9[%c1_104, %c0_105, %c0_106] : memref<2x1x128xf32, #tpu.memory_space<vmem>>, vector<1x1x128xf32>
    %260 = vector.shape_cast %259 : vector<1x1x128xf32> to vector<1x128xf32>
    %c1_107 = arith.constant 1 : index
    %c0_108 = arith.constant 0 : index
    %c0_109 = arith.constant 0 : index
    %261 = vector.load %arg10[%c1_107, %c0_108, %c0_109] : memref<2x1x128xf32, #tpu.memory_space<vmem>>, vector<1x1x128xf32>
    %262 = vector.shape_cast %261 : vector<1x1x128xf32> to vector<1x128xf32>
    %cst_110 = arith.constant dense<0.000000e+00> : vector<16xf32>
    %263 = vector.multi_reduction <add>, %258, %cst_110 [1] : vector<16x128xf32> to vector<16xf32>
    %264 = vector.shape_cast %263 : vector<16xf32> to vector<16x1xf32>
    %cst_111 = arith.constant 1.280000e+02 : f32
    %265 = vector.broadcast %cst_111 : f32 to vector<16x1xf32>
    %266 = arith.divf %264, %265 : vector<16x1xf32>
    %267 = vector.broadcast %266 : vector<16x1xf32> to vector<16x128xf32>
    %268 = arith.subf %258, %267 : vector<16x128xf32>
    %269 = arith.mulf %268, %268 : vector<16x128xf32>
    %cst_112 = arith.constant dense<0.000000e+00> : vector<16xf32>
    %270 = vector.multi_reduction <add>, %269, %cst_112 [1] : vector<16x128xf32> to vector<16xf32>
    %271 = vector.shape_cast %270 : vector<16xf32> to vector<16x1xf32>
    %cst_113 = arith.constant 1.280000e+02 : f32
    %272 = vector.broadcast %cst_113 : f32 to vector<16x1xf32>
    %273 = arith.divf %271, %272 : vector<16x1xf32>
    %274 = vector.broadcast %266 : vector<16x1xf32> to vector<16x128xf32>
    %275 = arith.subf %258, %274 : vector<16x128xf32>
    %cst_114 = arith.constant 9.99999997E-7 : f32
    %276 = vector.broadcast %cst_114 : f32 to vector<16x1xf32>
    %277 = arith.addf %273, %276 : vector<16x1xf32>
    %278 = math.rsqrt %277 : vector<16x1xf32>
    %279 = vector.broadcast %278 : vector<16x1xf32> to vector<16x128xf32>
    %280 = arith.mulf %275, %279 : vector<16x128xf32>
    %281 = vector.broadcast %260 : vector<1x128xf32> to vector<16x128xf32>
    %282 = arith.mulf %280, %281 : vector<16x128xf32>
    %283 = vector.broadcast %262 : vector<1x128xf32> to vector<16x128xf32>
    %284 = arith.addf %282, %283 : vector<16x128xf32>
    %c1_115 = arith.constant 1 : index
    %c0_116 = arith.constant 0 : index
    %c0_117 = arith.constant 0 : index
    %285 = vector.load %arg11[%c1_115, %c0_116, %c0_117] : memref<2x128x512xbf16, #tpu.memory_space<vmem>>, vector<1x128x512xbf16>
    %286 = vector.shape_cast %285 : vector<1x128x512xbf16> to vector<128x512xbf16>
    %287 = arith.truncf %284 : vector<16x128xf32> to vector<16x128xbf16>
    %cst_118 = arith.constant dense<0.000000e+00> : vector<16x512xf32>
    %288 = tpu.matmul %287, %286, %cst_118 {dimension_numbers = #tpu.dot_dimension_numbers<[1], [0], [0], [1], [0, 0, 1, 1], [], []>} : vector<16x128xbf16>, vector<128x512xbf16>, vector<16x512xf32> -> vector<16x512xf32>
    %c1_119 = arith.constant 1 : index
    %c0_120 = arith.constant 0 : index
    %c0_121 = arith.constant 0 : index
    %289 = vector.load %arg12[%c1_119, %c0_120, %c0_121] : memref<2x1x512xf32, #tpu.memory_space<vmem>>, vector<1x1x512xf32>
    %290 = vector.shape_cast %289 : vector<1x1x512xf32> to vector<1x512xf32>
    %291 = vector.broadcast %290 : vector<1x512xf32> to vector<16x512xf32>
    %292 = arith.addf %288, %291 : vector<16x512xf32>
    %cst_122 = arith.constant 5.000000e-01 : f32
    %293 = vector.broadcast %cst_122 : f32 to vector<16x512xf32>
    %294 = arith.mulf %293, %292 : vector<16x512xf32>
    %cst_123 = arith.constant 4.471500e-02 : f32
    %295 = vector.broadcast %cst_123 : f32 to vector<16x512xf32>
    %296 = arith.mulf %295, %292 : vector<16x512xf32>
    %297 = arith.mulf %296, %292 : vector<16x512xf32>
    %298 = arith.mulf %297, %292 : vector<16x512xf32>
    %299 = arith.addf %292, %298 : vector<16x512xf32>
    %cst_124 = arith.constant 0.797884583 : f32
    %300 = vector.broadcast %cst_124 : f32 to vector<16x512xf32>
    %301 = arith.mulf %300, %299 : vector<16x512xf32>
    %302 = math.tanh %301 : vector<16x512xf32>
    %cst_125 = arith.constant 1.000000e+00 : f32
    %303 = vector.broadcast %cst_125 : f32 to vector<16x512xf32>
    %304 = arith.addf %303, %302 : vector<16x512xf32>
    %305 = arith.mulf %294, %304 : vector<16x512xf32>
    %c1_126 = arith.constant 1 : index
    %c0_127 = arith.constant 0 : index
    %c0_128 = arith.constant 0 : index
    %306 = vector.load %arg13[%c1_126, %c0_127, %c0_128] : memref<2x512x128xbf16, #tpu.memory_space<vmem>>, vector<1x512x128xbf16>
    %307 = vector.shape_cast %306 : vector<1x512x128xbf16> to vector<512x128xbf16>
    %308 = arith.truncf %305 : vector<16x512xf32> to vector<16x512xbf16>
    %cst_129 = arith.constant dense<0.000000e+00> : vector<16x128xf32>
    %309 = tpu.matmul %308, %307, %cst_129 {dimension_numbers = #tpu.dot_dimension_numbers<[1], [0], [0], [1], [0, 0, 1, 1], [], []>} : vector<16x512xbf16>, vector<512x128xbf16>, vector<16x128xf32> -> vector<16x128xf32>
    %310 = arith.addf %258, %309 : vector<16x128xf32>
    %c1_130 = arith.constant 1 : index
    %c0_131 = arith.constant 0 : index
    %c0_132 = arith.constant 0 : index
    %311 = vector.load %arg14[%c1_130, %c0_131, %c0_132] : memref<2x1x128xf32, #tpu.memory_space<vmem>>, vector<1x1x128xf32>
    %312 = vector.shape_cast %311 : vector<1x1x128xf32> to vector<1x128xf32>
    %313 = vector.broadcast %312 : vector<1x128xf32> to vector<16x128xf32>
    %314 = arith.addf %310, %313 : vector<16x128xf32>
    %c1_133 = arith.constant 1 : index
    %c0_134 = arith.constant 0 : index
    %c0_135 = arith.constant 0 : index
    %315 = vector.load %arg59[%c1_133, %c0_134, %c0_135] : memref<2x16x128xf32, #tpu.memory_space<vmem>>, vector<1x16x128xf32>
    %316 = vector.shape_cast %315 : vector<1x16x128xf32> to vector<16x128xf32>
    %317 = vector.shape_cast %314 : vector<16x128xf32> to vector<1x16x128xf32>
    tpu.vector_store %arg59[%c1_133, %c0_134, %c0_135], %317 {strides = array<i32>} : memref<2x16x128xf32, #tpu.memory_space<vmem>>, vector<1x16x128xf32>,
    %c0_136 = arith.constant 0 : index
    %c0_137 = arith.constant 0 : index
    %318 = vector.load %arg15[%c0_136, %c0_137] : memref<1x128xf32, #tpu.memory_space<vmem>>, vector<1x128xf32>
    %c0_138 = arith.constant 0 : index
    %c0_139 = arith.constant 0 : index
    %319 = vector.load %arg16[%c0_138, %c0_139] : memref<1x128xf32, #tpu.memory_space<vmem>>, vector<1x128xf32>
    %cst_140 = arith.constant dense<0.000000e+00> : vector<16xf32>
    %320 = vector.multi_reduction <add>, %314, %cst_140 [1] : vector<16x128xf32> to vector<16xf32>
    %321 = vector.shape_cast %320 : vector<16xf32> to vector<16x1xf32>
    %cst_141 = arith.constant 1.280000e+02 : f32
    %322 = vector.broadcast %cst_141 : f32 to vector<16x1xf32>
    %323 = arith.divf %321, %322 : vector<16x1xf32>
    %324 = vector.broadcast %323 : vector<16x1xf32> to vector<16x128xf32>
    %325 = arith.subf %314, %324 : vector<16x128xf32>
    %326 = arith.mulf %325, %325 : vector<16x128xf32>
    %cst_142 = arith.constant dense<0.000000e+00> : vector<16xf32>
    %327 = vector.multi_reduction <add>, %326, %cst_142 [1] : vector<16x128xf32> to vector<16xf32>
    %328 = vector.shape_cast %327 : vector<16xf32> to vector<16x1xf32>
    %cst_143 = arith.constant 1.280000e+02 : f32
    %329 = vector.broadcast %cst_143 : f32 to vector<16x1xf32>
    %330 = arith.divf %328, %329 : vector<16x1xf32>
    %331 = vector.broadcast %323 : vector<16x1xf32> to vector<16x128xf32>
    %332 = arith.subf %314, %331 : vector<16x128xf32>
    %cst_144 = arith.constant 9.99999997E-7 : f32
    %333 = vector.broadcast %cst_144 : f32 to vector<16x1xf32>
    %334 = arith.addf %330, %333 : vector<16x1xf32>
    %335 = math.rsqrt %334 : vector<16x1xf32>
    %336 = vector.broadcast %335 : vector<16x1xf32> to vector<16x128xf32>
    %337 = arith.mulf %332, %336 : vector<16x128xf32>
    %338 = vector.broadcast %318 : vector<1x128xf32> to vector<16x128xf32>
    %339 = arith.mulf %337, %338 : vector<16x128xf32>
    %340 = vector.broadcast %319 : vector<1x128xf32> to vector<16x128xf32>
    %341 = arith.addf %339, %340 : vector<16x128xf32>
    %c0_145 = arith.constant 0 : index
    %c0_146 = arith.constant 0 : index
    %342 = vector.load %arg17[%c0_145, %c0_146] : memref<16x128xf32, #tpu.memory_space<vmem>>, vector<16x128xf32>
    %343 = vector.extract_strided_slice %341 {offsets = [0, 0], sizes = [1, 128], strides = [1, 1]} : vector<16x128xf32> to vector<1x128xf32>
    %344 = vector.extract_strided_slice %341 {offsets = [8, 0], sizes = [1, 128], strides = [1, 1]} : vector<16x128xf32> to vector<1x128xf32>
    %345 = tpu.concatenate %343, %344 in 0 : vector<1x128xf32>, vector<1x128xf32> -> vector<2x128xf32>
    %cst_147 = arith.constant dense<0.000000e+00> : vector<2x16xf32>
    %346 = tpu.matmul %345, %342, %cst_147 {dimension_numbers = #tpu.dot_dimension_numbers<[1], [1], [0], [0], [0, 0, 1, 0], [], []>} : vector<2x128xf32>, vector<16x128xf32>, vector<2x16xf32> -> vector<2x16xf32>
    %cst_148 = arith.constant 2.500000e+01 : f32
    %347 = vector.broadcast %cst_148 : f32 to vector<2x16xf32>
    %348 = arith.mulf %346, %347 : vector<2x16xf32>
    %cst_149 = arith.constant dense<0xFF800000> : vector<2xf32>
    %349 = vector.multi_reduction <maximumf>, %348, %cst_149 [1] : vector<2x16xf32> to vector<2xf32>
    %350 = vector.shape_cast %349 : vector<2xf32> to vector<2x1xf32>
    %351 = vector.broadcast %350 : vector<2x1xf32> to vector<2x16xf32>
    %352 = arith.subf %348, %351 : vector<2x16xf32>
    %353 = math.exp %352 : vector<2x16xf32>
    %cst_150 = arith.constant dense<0.000000e+00> : vector<2xf32>
    %354 = vector.multi_reduction <add>, %353, %cst_150 [1] : vector<2x16xf32> to vector<2xf32>
    %355 = vector.shape_cast %354 : vector<2xf32> to vector<2x1xf32>
    %356 = tpu.reciprocal %355 {approx = true} : vector<2x1xf32> -> vector<2x1xf32>
    %357 = vector.broadcast %356 : vector<2x1xf32> to vector<2x16xf32>
    %358 = arith.mulf %353, %357 : vector<2x16xf32>
    %cst_151 = arith.constant dense<0.000000e+00> : vector<2x128xf32>
    %359 = tpu.matmul %358, %342, %cst_151 {dimension_numbers = #tpu.dot_dimension_numbers<[1], [0], [0], [1], [0, 0, 1, 1], [], []>} : vector<2x16xf32>, vector<16x128xf32>, vector<2x128xf32> -> vector<2x128xf32>
    %c0_152 = arith.constant 0 : index
    %c0_153 = arith.constant 0 : index
    %360 = vector.load %arg18[%c0_152, %c0_153] : memref<16x1xi32, #tpu.memory_space<vmem>>, vector<16x1xi32>
    %361 = tpu.iota {dimensions = array<i32: 1>} : vector<16x128xi32>
    %362 = vector.broadcast %360 : vector<16x1xi32> to vector<16x128xi32>
    %363 = arith.cmpi eq, %361, %362 : vector<16x128xi32>
    %cst_154 = arith.constant 1.000000e+00 : f32
    %cst_155 = arith.constant 0.000000e+00 : f32
    %364 = vector.broadcast %cst_154 : f32 to vector<16x128xf32>
    %365 = vector.broadcast %cst_155 : f32 to vector<16x128xf32>
    %366 = arith.select %363, %364, %365 : vector<16x128xi1>, vector<16x128xf32>
    %367 = arith.truncf %366 : vector<16x128xf32> to vector<16x128xbf16>
    %c0_156 = arith.constant 0 : index
    %c0_157 = arith.constant 0 : index
    %368 = vector.load %arg21[%c0_156, %c0_157] : memref<128x128xbf16, #tpu.memory_space<vmem>>, vector<128x128xbf16>
    %cst_158 = arith.constant dense<0.000000e+00> : vector<16x128xf32>
    %369 = tpu.matmul %367, %368, %cst_158 {dimension_numbers = #tpu.dot_dimension_numbers<[1], [0], [0], [1], [0, 0, 1, 1], [], []>} : vector<16x128xbf16>, vector<128x128xbf16>, vector<16x128xf32> -> vector<16x128xf32>
    %c0_159 = arith.constant 0 : index
    %c0_160 = arith.constant 0 : index
    %370 = vector.load %arg22[%c0_159, %c0_160] : memref<16x128xf32, #tpu.memory_space<vmem>>, vector<16x128xf32>
    %371 = arith.addf %369, %370 : vector<16x128xf32>
    %c0_161 = arith.constant 0 : index
    %c0_162 = arith.constant 0 : index
    %372 = vector.load %arg23[%c0_161, %c0_162] : memref<1x128xf32, #tpu.memory_space<vmem>>, vector<1x128xf32>
    %c0_163 = arith.constant 0 : index
    %c0_164 = arith.constant 0 : index
    %373 = vector.load %arg24[%c0_163, %c0_164] : memref<1x128xf32, #tpu.memory_space<vmem>>, vector<1x128xf32>
    %cst_165 = arith.constant dense<0.000000e+00> : vector<16xf32>
    %374 = vector.multi_reduction <add>, %371, %cst_165 [1] : vector<16x128xf32> to vector<16xf32>
    %375 = vector.shape_cast %374 : vector<16xf32> to vector<16x1xf32>
    %cst_166 = arith.constant 1.280000e+02 : f32
    %376 = vector.broadcast %cst_166 : f32 to vector<16x1xf32>
    %377 = arith.divf %375, %376 : vector<16x1xf32>
    %378 = vector.broadcast %377 : vector<16x1xf32> to vector<16x128xf32>
    %379 = arith.subf %371, %378 : vector<16x128xf32>
    %380 = arith.mulf %379, %379 : vector<16x128xf32>
    %cst_167 = arith.constant dense<0.000000e+00> : vector<16xf32>
    %381 = vector.multi_reduction <add>, %380, %cst_167 [1] : vector<16x128xf32> to vector<16xf32>
    %382 = vector.shape_cast %381 : vector<16xf32> to vector<16x1xf32>
    %cst_168 = arith.constant 1.280000e+02 : f32
    %383 = vector.broadcast %cst_168 : f32 to vector<16x1xf32>
    %384 = arith.divf %382, %383 : vector<16x1xf32>
    %385 = vector.broadcast %377 : vector<16x1xf32> to vector<16x128xf32>
    %386 = arith.subf %371, %385 : vector<16x128xf32>
    %cst_169 = arith.constant 9.99999996E-13 : f32
    %387 = vector.broadcast %cst_169 : f32 to vector<16x1xf32>
    %388 = arith.addf %384, %387 : vector<16x1xf32>
    %389 = math.rsqrt %388 : vector<16x1xf32>
    %390 = vector.broadcast %389 : vector<16x1xf32> to vector<16x128xf32>
    %391 = arith.mulf %386, %390 : vector<16x128xf32>
    %392 = vector.broadcast %372 : vector<1x128xf32> to vector<16x128xf32>
    %393 = arith.mulf %391, %392 : vector<16x128xf32>
    %394 = vector.broadcast %373 : vector<1x128xf32> to vector<16x128xf32>
    %395 = arith.addf %393, %394 : vector<16x128xf32>
    %c0_170 = arith.constant 0 : index
    %c0_171 = arith.constant 0 : index
    %c0_172 = arith.constant 0 : index
    %396 = vector.load %arg25[%c0_170, %c0_171, %c0_172] : memref<2x128x128xbf16, #tpu.memory_space<vmem>>, vector<1x128x128xbf16>
    %397 = vector.shape_cast %396 : vector<1x128x128xbf16> to vector<128x128xbf16>
    %398 = arith.truncf %395 : vector<16x128xf32> to vector<16x128xbf16>
    %cst_173 = arith.constant dense<0.000000e+00> : vector<16x128xf32>
    %399 = tpu.matmul %398, %397, %cst_173 {dimension_numbers = #tpu.dot_dimension_numbers<[1], [0], [0], [1], [0, 0, 1, 1], [], []>} : vector<16x128xbf16>, vector<128x128xbf16>, vector<16x128xf32> -> vector<16x128xf32>
    %c0_174 = arith.constant 0 : index
    %c0_175 = arith.constant 0 : index
    %c0_176 = arith.constant 0 : index
    %400 = vector.load %arg26[%c0_174, %c0_175, %c0_176] : memref<2x1x128xf32, #tpu.memory_space<vmem>>, vector<1x1x128xf32>
    %401 = vector.shape_cast %400 : vector<1x1x128xf32> to vector<1x128xf32>
    %402 = vector.broadcast %401 : vector<1x128xf32> to vector<16x128xf32>
    %403 = arith.addf %399, %402 : vector<16x128xf32>
    %c0_177 = arith.constant 0 : index
    %c0_178 = arith.constant 0 : index
    %c0_179 = arith.constant 0 : index
    %404 = vector.load %arg27[%c0_177, %c0_178, %c0_179] : memref<2x128x128xbf16, #tpu.memory_space<vmem>>, vector<1x128x128xbf16>
    %405 = vector.shape_cast %404 : vector<1x128x128xbf16> to vector<128x128xbf16>
    %406 = arith.truncf %395 : vector<16x128xf32> to vector<16x128xbf16>
    %cst_180 = arith.constant dense<0.000000e+00> : vector<16x128xf32>
    %407 = tpu.matmul %406, %405, %cst_180 {dimension_numbers = #tpu.dot_dimension_numbers<[1], [0], [0], [1], [0, 0, 1, 1], [], []>} : vector<16x128xbf16>, vector<128x128xbf16>, vector<16x128xf32> -> vector<16x128xf32>
    %c0_181 = arith.constant 0 : index
    %c0_182 = arith.constant 0 : index
    %c0_183 = arith.constant 0 : index
    %408 = vector.load %arg28[%c0_181, %c0_182, %c0_183] : memref<2x1x128xf32, #tpu.memory_space<vmem>>, vector<1x1x128xf32>
    %409 = vector.shape_cast %408 : vector<1x1x128xf32> to vector<1x128xf32>
    %410 = vector.broadcast %409 : vector<1x128xf32> to vector<16x128xf32>
    %411 = arith.addf %407, %410 : vector<16x128xf32>
    %c0_184 = arith.constant 0 : index
    %c0_185 = arith.constant 0 : index
    %c0_186 = arith.constant 0 : index
    %412 = vector.load %arg29[%c0_184, %c0_185, %c0_186] : memref<2x128x128xbf16, #tpu.memory_space<vmem>>, vector<1x128x128xbf16>
    %413 = vector.shape_cast %412 : vector<1x128x128xbf16> to vector<128x128xbf16>
    %414 = arith.truncf %395 : vector<16x128xf32> to vector<16x128xbf16>
    %cst_187 = arith.constant dense<0.000000e+00> : vector<16x128xf32>
    %415 = tpu.matmul %414, %413, %cst_187 {dimension_numbers = #tpu.dot_dimension_numbers<[1], [0], [0], [1], [0, 0, 1, 1], [], []>} : vector<16x128xbf16>, vector<128x128xbf16>, vector<16x128xf32> -> vector<16x128xf32>
    %c0_188 = arith.constant 0 : index
    %c0_189 = arith.constant 0 : index
    %c0_190 = arith.constant 0 : index
    %416 = vector.load %arg30[%c0_188, %c0_189, %c0_190] : memref<2x1x128xf32, #tpu.memory_space<vmem>>, vector<1x1x128xf32>
    %417 = vector.shape_cast %416 : vector<1x1x128xf32> to vector<1x128xf32>
    %418 = vector.broadcast %417 : vector<1x128xf32> to vector<16x128xf32>
    %419 = arith.addf %415, %418 : vector<16x128xf32>
    %c0_191 = arith.constant 0 : index
    %c0_192 = arith.constant 0 : index
    %c0_193 = arith.constant 0 : index
    %420 = vector.load %arg31[%c0_191, %c0_192, %c0_193] : memref<2x128x128xbf16, #tpu.memory_space<vmem>>, vector<1x128x128xbf16>
    %421 = vector.shape_cast %420 : vector<1x128x128xbf16> to vector<128x128xbf16>
    %c0_194 = arith.constant 0 : index
    %c0_195 = arith.constant 0 : index
    %c0_196 = arith.constant 0 : index
    %422 = vector.load %arg32[%c0_194, %c0_195, %c0_196] : memref<2x1x128xf32, #tpu.memory_space<vmem>>, vector<1x1x128xf32>
    %423 = vector.shape_cast %422 : vector<1x1x128xf32> to vector<1x128xf32>
    %424 = vector.extract_strided_slice %403 {offsets = [0, 0], sizes = [16, 32], strides = [1, 1]} : vector<16x128xf32> to vector<16x32xf32>
    %425 = vector.extract_strided_slice %403 {offsets = [0, 32], sizes = [16, 32], strides = [1, 1]} : vector<16x128xf32> to vector<16x32xf32>
    %426 = vector.extract_strided_slice %403 {offsets = [0, 64], sizes = [16, 32], strides = [1, 1]} : vector<16x128xf32> to vector<16x32xf32>
    %427 = vector.extract_strided_slice %403 {offsets = [0, 96], sizes = [16, 32], strides = [1, 1]} : vector<16x128xf32> to vector<16x32xf32>
    %428 = tpu.concatenate %424, %425, %426, %427 in 0 : vector<16x32xf32>, vector<16x32xf32>, vector<16x32xf32>, vector<16x32xf32> -> vector<64x32xf32>
    %429 = arith.truncf %428 : vector<64x32xf32> to vector<64x32xbf16>
    %430 = vector.extract_strided_slice %411 {offsets = [0, 0], sizes = [16, 32], strides = [1, 1]} : vector<16x128xf32> to vector<16x32xf32>
    %431 = vector.extract_strided_slice %411 {offsets = [0, 32], sizes = [16, 32], strides = [1, 1]} : vector<16x128xf32> to vector<16x32xf32>
    %432 = vector.extract_strided_slice %411 {offsets = [0, 64], sizes = [16, 32], strides = [1, 1]} : vector<16x128xf32> to vector<16x32xf32>
    %433 = vector.extract_strided_slice %411 {offsets = [0, 96], sizes = [16, 32], strides = [1, 1]} : vector<16x128xf32> to vector<16x32xf32>
    %434 = tpu.concatenate %430, %431, %432, %433 in 0 : vector<16x32xf32>, vector<16x32xf32>, vector<16x32xf32>, vector<16x32xf32> -> vector<64x32xf32>
    %435 = arith.truncf %434 : vector<64x32xf32> to vector<64x32xbf16>
    %436 = vector.extract_strided_slice %419 {offsets = [0, 0], sizes = [16, 32], strides = [1, 1]} : vector<16x128xf32> to vector<16x32xf32>
    %437 = vector.extract_strided_slice %419 {offsets = [0, 32], sizes = [16, 32], strides = [1, 1]} : vector<16x128xf32> to vector<16x32xf32>
    %438 = vector.extract_strided_slice %419 {offsets = [0, 64], sizes = [16, 32], strides = [1, 1]} : vector<16x128xf32> to vector<16x32xf32>
    %439 = vector.extract_strided_slice %419 {offsets = [0, 96], sizes = [16, 32], strides = [1, 1]} : vector<16x128xf32> to vector<16x32xf32>
    %440 = tpu.concatenate %436, %437, %438, %439 in 0 : vector<16x32xf32>, vector<16x32xf32>, vector<16x32xf32>, vector<16x32xf32> -> vector<64x32xf32>
    %441 = arith.truncf %440 : vector<64x32xf32> to vector<64x32xbf16>
    %cst_197 = arith.constant dense<0.000000e+00> : vector<64x64xf32>
    %442 = tpu.matmul %429, %435, %cst_197 {dimension_numbers = #tpu.dot_dimension_numbers<[1], [1], [0], [0], [0, 0, 1, 0], [], []>} : vector<64x32xbf16>, vector<64x32xbf16>, vector<64x64xf32> -> vector<64x64xf32>
    %cst_198 = arith.constant 0.176776692 : f32
    %443 = vector.broadcast %cst_198 : f32 to vector<64x64xf32>
    %444 = arith.mulf %442, %443 : vector<64x64xf32>
    %445 = arith.addf %444, %24 : vector<64x64xf32>
    %cst_199 = arith.constant dense<0xFF800000> : vector<64xf32>
    %446 = vector.multi_reduction <maximumf>, %445, %cst_199 [1] : vector<64x64xf32> to vector<64xf32>
    %447 = vector.shape_cast %446 : vector<64xf32> to vector<64x1xf32>
    %448 = vector.broadcast %447 : vector<64x1xf32> to vector<64x64xf32>
    %449 = arith.subf %445, %448 : vector<64x64xf32>
    %450 = math.exp %449 : vector<64x64xf32>
    %cst_200 = arith.constant dense<0.000000e+00> : vector<64xf32>
    %451 = vector.multi_reduction <add>, %450, %cst_200 [1] : vector<64x64xf32> to vector<64xf32>
    %452 = vector.shape_cast %451 : vector<64xf32> to vector<64x1xf32>
    %453 = tpu.reciprocal %452 {approx = true} : vector<64x1xf32> -> vector<64x1xf32>
    %454 = vector.broadcast %453 : vector<64x1xf32> to vector<64x64xf32>
    %455 = arith.mulf %450, %454 : vector<64x64xf32>
    %456 = arith.truncf %455 : vector<64x64xf32> to vector<64x64xbf16>
    %cst_201 = arith.constant dense<0.000000e+00> : vector<64x32xf32>
    %457 = tpu.matmul %456, %441, %cst_201 {dimension_numbers = #tpu.dot_dimension_numbers<[1], [0], [0], [1], [0, 0, 1, 1], [], []>} : vector<64x64xbf16>, vector<64x32xbf16>, vector<64x32xf32> -> vector<64x32xf32>
    %458 = vector.extract_strided_slice %457 {offsets = [0, 0], sizes = [16, 32], strides = [1, 1]} : vector<64x32xf32> to vector<16x32xf32>
    %459 = vector.extract_strided_slice %457 {offsets = [16, 0], sizes = [16, 32], strides = [1, 1]} : vector<64x32xf32> to vector<16x32xf32>
    %460 = vector.extract_strided_slice %457 {offsets = [32, 0], sizes = [16, 32], strides = [1, 1]} : vector<64x32xf32> to vector<16x32xf32>
    %461 = vector.extract_strided_slice %457 {offsets = [48, 0], sizes = [16, 32], strides = [1, 1]} : vector<64x32xf32> to vector<16x32xf32>
    %462 = tpu.concatenate %458, %459, %460, %461 in 1 : vector<16x32xf32>, vector<16x32xf32>, vector<16x32xf32>, vector<16x32xf32> -> vector<16x128xf32>
    %463 = arith.truncf %462 : vector<16x128xf32> to vector<16x128xbf16>
    %cst_202 = arith.constant dense<0.000000e+00> : vector<16x128xf32>
    %464 = tpu.matmul %463, %421, %cst_202 {dimension_numbers = #tpu.dot_dimension_numbers<[1], [0], [0], [1], [0, 0, 1, 1], [], []>} : vector<16x128xbf16>, vector<128x128xbf16>, vector<16x128xf32> -> vector<16x128xf32>
    %465 = vector.broadcast %423 : vector<1x128xf32> to vector<16x128xf32>
    %466 = arith.addf %464, %465 : vector<16x128xf32>
    %467 = arith.addf %395, %466 : vector<16x128xf32>
    %c0_203 = arith.constant 0 : index
    %c0_204 = arith.constant 0 : index
    %c0_205 = arith.constant 0 : index
    %468 = vector.load %arg33[%c0_203, %c0_204, %c0_205] : memref<2x1x128xf32, #tpu.memory_space<vmem>>, vector<1x1x128xf32>
    %469 = vector.shape_cast %468 : vector<1x1x128xf32> to vector<1x128xf32>
    %c0_206 = arith.constant 0 : index
    %c0_207 = arith.constant 0 : index
    %c0_208 = arith.constant 0 : index
    %470 = vector.load %arg34[%c0_206, %c0_207, %c0_208] : memref<2x1x128xf32, #tpu.memory_space<vmem>>, vector<1x1x128xf32>
    %471 = vector.shape_cast %470 : vector<1x1x128xf32> to vector<1x128xf32>
    %cst_209 = arith.constant dense<0.000000e+00> : vector<16xf32>
    %472 = vector.multi_reduction <add>, %467, %cst_209 [1] : vector<16x128xf32> to vector<16xf32>
    %473 = vector.shape_cast %472 : vector<16xf32> to vector<16x1xf32>
    %cst_210 = arith.constant 1.280000e+02 : f32
    %474 = vector.broadcast %cst_210 : f32 to vector<16x1xf32>
    %475 = arith.divf %473, %474 : vector<16x1xf32>
    %476 = vector.broadcast %475 : vector<16x1xf32> to vector<16x128xf32>
    %477 = arith.subf %467, %476 : vector<16x128xf32>
    %478 = arith.mulf %477, %477 : vector<16x128xf32>
    %cst_211 = arith.constant dense<0.000000e+00> : vector<16xf32>
    %479 = vector.multi_reduction <add>, %478, %cst_211 [1] : vector<16x128xf32> to vector<16xf32>
    %480 = vector.shape_cast %479 : vector<16xf32> to vector<16x1xf32>
    %cst_212 = arith.constant 1.280000e+02 : f32
    %481 = vector.broadcast %cst_212 : f32 to vector<16x1xf32>
    %482 = arith.divf %480, %481 : vector<16x1xf32>
    %483 = vector.broadcast %475 : vector<16x1xf32> to vector<16x128xf32>
    %484 = arith.subf %467, %483 : vector<16x128xf32>
    %cst_213 = arith.constant 9.99999996E-13 : f32
    %485 = vector.broadcast %cst_213 : f32 to vector<16x1xf32>
    %486 = arith.addf %482, %485 : vector<16x1xf32>
    %487 = math.rsqrt %486 : vector<16x1xf32>
    %488 = vector.broadcast %487 : vector<16x1xf32> to vector<16x128xf32>
    %489 = arith.mulf %484, %488 : vector<16x128xf32>
    %490 = vector.broadcast %469 : vector<1x128xf32> to vector<16x128xf32>
    %491 = arith.mulf %489, %490 : vector<16x128xf32>
    %492 = vector.broadcast %471 : vector<1x128xf32> to vector<16x128xf32>
    %493 = arith.addf %491, %492 : vector<16x128xf32>
    %c0_214 = arith.constant 0 : index
    %c0_215 = arith.constant 0 : index
    %c0_216 = arith.constant 0 : index
    %494 = vector.load %arg35[%c0_214, %c0_215, %c0_216] : memref<2x128x128xbf16, #tpu.memory_space<vmem>>, vector<1x128x128xbf16>
    %495 = vector.shape_cast %494 : vector<1x128x128xbf16> to vector<128x128xbf16>
    %496 = arith.truncf %493 : vector<16x128xf32> to vector<16x128xbf16>
    %cst_217 = arith.constant dense<0.000000e+00> : vector<16x128xf32>
    %497 = tpu.matmul %496, %495, %cst_217 {dimension_numbers = #tpu.dot_dimension_numbers<[1], [0], [0], [1], [0, 0, 1, 1], [], []>} : vector<16x128xbf16>, vector<128x128xbf16>, vector<16x128xf32> -> vector<16x128xf32>
    %c0_218 = arith.constant 0 : index
    %c0_219 = arith.constant 0 : index
    %c0_220 = arith.constant 0 : index
    %498 = vector.load %arg36[%c0_218, %c0_219, %c0_220] : memref<2x1x128xf32, #tpu.memory_space<vmem>>, vector<1x1x128xf32>
    %499 = vector.shape_cast %498 : vector<1x1x128xf32> to vector<1x128xf32>
    %500 = vector.broadcast %499 : vector<1x128xf32> to vector<16x128xf32>
    %501 = arith.addf %497, %500 : vector<16x128xf32>
    %c0_221 = arith.constant 0 : index
    %c0_222 = arith.constant 0 : index
    %c0_223 = arith.constant 0 : index
    %502 = vector.load %arg37[%c0_221, %c0_222, %c0_223] : memref<2x128x128xbf16, #tpu.memory_space<vmem>>, vector<1x128x128xbf16>
    %503 = vector.shape_cast %502 : vector<1x128x128xbf16> to vector<128x128xbf16>
    %504 = arith.truncf %341 : vector<16x128xf32> to vector<16x128xbf16>
    %cst_224 = arith.constant dense<0.000000e+00> : vector<16x128xf32>
    %505 = tpu.matmul %504, %503, %cst_224 {dimension_numbers = #tpu.dot_dimension_numbers<[1], [0], [0], [1], [0, 0, 1, 1], [], []>} : vector<16x128xbf16>, vector<128x128xbf16>, vector<16x128xf32> -> vector<16x128xf32>
    %c0_225 = arith.constant 0 : index
    %c0_226 = arith.constant 0 : index
    %c0_227 = arith.constant 0 : index
    %506 = vector.load %arg38[%c0_225, %c0_226, %c0_227] : memref<2x1x128xf32, #tpu.memory_space<vmem>>, vector<1x1x128xf32>
    %507 = vector.shape_cast %506 : vector<1x1x128xf32> to vector<1x128xf32>
    %508 = vector.broadcast %507 : vector<1x128xf32> to vector<16x128xf32>
    %509 = arith.addf %505, %508 : vector<16x128xf32>
    %c0_228 = arith.constant 0 : index
    %c0_229 = arith.constant 0 : index
    %c0_230 = arith.constant 0 : index
    %510 = vector.load %arg39[%c0_228, %c0_229, %c0_230] : memref<2x128x128xbf16, #tpu.memory_space<vmem>>, vector<1x128x128xbf16>
    %511 = vector.shape_cast %510 : vector<1x128x128xbf16> to vector<128x128xbf16>
    %512 = arith.truncf %341 : vector<16x128xf32> to vector<16x128xbf16>
    %cst_231 = arith.constant dense<0.000000e+00> : vector<16x128xf32>
    %513 = tpu.matmul %512, %511, %cst_231 {dimension_numbers = #tpu.dot_dimension_numbers<[1], [0], [0], [1], [0, 0, 1, 1], [], []>} : vector<16x128xbf16>, vector<128x128xbf16>, vector<16x128xf32> -> vector<16x128xf32>
    %c0_232 = arith.constant 0 : index
    %c0_233 = arith.constant 0 : index
    %c0_234 = arith.constant 0 : index
    %514 = vector.load %arg40[%c0_232, %c0_233, %c0_234] : memref<2x1x128xf32, #tpu.memory_space<vmem>>, vector<1x1x128xf32>
    %515 = vector.shape_cast %514 : vector<1x1x128xf32> to vector<1x128xf32>
    %516 = vector.broadcast %515 : vector<1x128xf32> to vector<16x128xf32>
    %517 = arith.addf %513, %516 : vector<16x128xf32>
    %c0_235 = arith.constant 0 : index
    %c0_236 = arith.constant 0 : index
    %c0_237 = arith.constant 0 : index
    %518 = vector.load %arg41[%c0_235, %c0_236, %c0_237] : memref<2x128x128xbf16, #tpu.memory_space<vmem>>, vector<1x128x128xbf16>
    %519 = vector.shape_cast %518 : vector<1x128x128xbf16> to vector<128x128xbf16>
    %c0_238 = arith.constant 0 : index
    %c0_239 = arith.constant 0 : index
    %c0_240 = arith.constant 0 : index
    %520 = vector.load %arg42[%c0_238, %c0_239, %c0_240] : memref<2x1x128xf32, #tpu.memory_space<vmem>>, vector<1x1x128xf32>
    %521 = vector.shape_cast %520 : vector<1x1x128xf32> to vector<1x128xf32>
    %522 = vector.extract_strided_slice %501 {offsets = [0, 0], sizes = [16, 32], strides = [1, 1]} : vector<16x128xf32> to vector<16x32xf32>
    %523 = vector.extract_strided_slice %501 {offsets = [0, 32], sizes = [16, 32], strides = [1, 1]} : vector<16x128xf32> to vector<16x32xf32>
    %524 = vector.extract_strided_slice %501 {offsets = [0, 64], sizes = [16, 32], strides = [1, 1]} : vector<16x128xf32> to vector<16x32xf32>
    %525 = vector.extract_strided_slice %501 {offsets = [0, 96], sizes = [16, 32], strides = [1, 1]} : vector<16x128xf32> to vector<16x32xf32>
    %526 = tpu.concatenate %522, %523, %524, %525 in 0 : vector<16x32xf32>, vector<16x32xf32>, vector<16x32xf32>, vector<16x32xf32> -> vector<64x32xf32>
    %527 = arith.truncf %526 : vector<64x32xf32> to vector<64x32xbf16>
    %528 = vector.extract_strided_slice %509 {offsets = [0, 0], sizes = [16, 32], strides = [1, 1]} : vector<16x128xf32> to vector<16x32xf32>
    %529 = vector.extract_strided_slice %509 {offsets = [0, 32], sizes = [16, 32], strides = [1, 1]} : vector<16x128xf32> to vector<16x32xf32>
    %530 = vector.extract_strided_slice %509 {offsets = [0, 64], sizes = [16, 32], strides = [1, 1]} : vector<16x128xf32> to vector<16x32xf32>
    %531 = vector.extract_strided_slice %509 {offsets = [0, 96], sizes = [16, 32], strides = [1, 1]} : vector<16x128xf32> to vector<16x32xf32>
    %532 = tpu.concatenate %528, %529, %530, %531 in 0 : vector<16x32xf32>, vector<16x32xf32>, vector<16x32xf32>, vector<16x32xf32> -> vector<64x32xf32>
    %533 = arith.truncf %532 : vector<64x32xf32> to vector<64x32xbf16>
    %534 = vector.extract_strided_slice %517 {offsets = [0, 0], sizes = [16, 32], strides = [1, 1]} : vector<16x128xf32> to vector<16x32xf32>
    %535 = vector.extract_strided_slice %517 {offsets = [0, 32], sizes = [16, 32], strides = [1, 1]} : vector<16x128xf32> to vector<16x32xf32>
    %536 = vector.extract_strided_slice %517 {offsets = [0, 64], sizes = [16, 32], strides = [1, 1]} : vector<16x128xf32> to vector<16x32xf32>
    %537 = vector.extract_strided_slice %517 {offsets = [0, 96], sizes = [16, 32], strides = [1, 1]} : vector<16x128xf32> to vector<16x32xf32>
    %538 = tpu.concatenate %534, %535, %536, %537 in 0 : vector<16x32xf32>, vector<16x32xf32>, vector<16x32xf32>, vector<16x32xf32> -> vector<64x32xf32>
    %539 = arith.truncf %538 : vector<64x32xf32> to vector<64x32xbf16>
    %cst_241 = arith.constant dense<0.000000e+00> : vector<64x64xf32>
    %540 = tpu.matmul %527, %533, %cst_241 {dimension_numbers = #tpu.dot_dimension_numbers<[1], [1], [0], [0], [0, 0, 1, 0], [], []>} : vector<64x32xbf16>, vector<64x32xbf16>, vector<64x64xf32> -> vector<64x64xf32>
    %cst_242 = arith.constant 0.176776692 : f32
    %541 = vector.broadcast %cst_242 : f32 to vector<64x64xf32>
    %542 = arith.mulf %540, %541 : vector<64x64xf32>
    %543 = arith.addf %542, %14 : vector<64x64xf32>
    %cst_243 = arith.constant dense<0xFF800000> : vector<64xf32>
    %544 = vector.multi_reduction <maximumf>, %543, %cst_243 [1] : vector<64x64xf32> to vector<64xf32>
    %545 = vector.shape_cast %544 : vector<64xf32> to vector<64x1xf32>
    %546 = vector.broadcast %545 : vector<64x1xf32> to vector<64x64xf32>
    %547 = arith.subf %543, %546 : vector<64x64xf32>
    %548 = math.exp %547 : vector<64x64xf32>
    %cst_244 = arith.constant dense<0.000000e+00> : vector<64xf32>
    %549 = vector.multi_reduction <add>, %548, %cst_244 [1] : vector<64x64xf32> to vector<64xf32>
    %550 = vector.shape_cast %549 : vector<64xf32> to vector<64x1xf32>
    %551 = tpu.reciprocal %550 {approx = true} : vector<64x1xf32> -> vector<64x1xf32>
    %552 = vector.broadcast %551 : vector<64x1xf32> to vector<64x64xf32>
    %553 = arith.mulf %548, %552 : vector<64x64xf32>
    %554 = arith.truncf %553 : vector<64x64xf32> to vector<64x64xbf16>
    %cst_245 = arith.constant dense<0.000000e+00> : vector<64x32xf32>
    %555 = tpu.matmul %554, %539, %cst_245 {dimension_numbers = #tpu.dot_dimension_numbers<[1], [0], [0], [1], [0, 0, 1, 1], [], []>} : vector<64x64xbf16>, vector<64x32xbf16>, vector<64x32xf32> -> vector<64x32xf32>
    %556 = vector.extract_strided_slice %555 {offsets = [0, 0], sizes = [16, 32], strides = [1, 1]} : vector<64x32xf32> to vector<16x32xf32>
    %557 = vector.extract_strided_slice %555 {offsets = [16, 0], sizes = [16, 32], strides = [1, 1]} : vector<64x32xf32> to vector<16x32xf32>
    %558 = vector.extract_strided_slice %555 {offsets = [32, 0], sizes = [16, 32], strides = [1, 1]} : vector<64x32xf32> to vector<16x32xf32>
    %559 = vector.extract_strided_slice %555 {offsets = [48, 0], sizes = [16, 32], strides = [1, 1]} : vector<64x32xf32> to vector<16x32xf32>
    %560 = tpu.concatenate %556, %557, %558, %559 in 1 : vector<16x32xf32>, vector<16x32xf32>, vector<16x32xf32>, vector<16x32xf32> -> vector<16x128xf32>
    %561 = arith.truncf %560 : vector<16x128xf32> to vector<16x128xbf16>
    %cst_246 = arith.constant dense<0.000000e+00> : vector<16x128xf32>
    %562 = tpu.matmul %561, %519, %cst_246 {dimension_numbers = #tpu.dot_dimension_numbers<[1], [0], [0], [1], [0, 0, 1, 1], [], []>} : vector<16x128xbf16>, vector<128x128xbf16>, vector<16x128xf32> -> vector<16x128xf32>
    %563 = vector.broadcast %521 : vector<1x128xf32> to vector<16x128xf32>
    %564 = arith.addf %562, %563 : vector<16x128xf32>
    %565 = arith.addf %493, %564 : vector<16x128xf32>
    %c0_247 = arith.constant 0 : index
    %c0_248 = arith.constant 0 : index
    %c0_249 = arith.constant 0 : index
    %566 = vector.load %arg43[%c0_247, %c0_248, %c0_249] : memref<2x1x128xf32, #tpu.memory_space<vmem>>, vector<1x1x128xf32>
    %567 = vector.shape_cast %566 : vector<1x1x128xf32> to vector<1x128xf32>
    %c0_250 = arith.constant 0 : index
    %c0_251 = arith.constant 0 : index
    %c0_252 = arith.constant 0 : index
    %568 = vector.load %arg44[%c0_250, %c0_251, %c0_252] : memref<2x1x128xf32, #tpu.memory_space<vmem>>, vector<1x1x128xf32>
    %569 = vector.shape_cast %568 : vector<1x1x128xf32> to vector<1x128xf32>
    %cst_253 = arith.constant dense<0.000000e+00> : vector<16xf32>
    %570 = vector.multi_reduction <add>, %565, %cst_253 [1] : vector<16x128xf32> to vector<16xf32>
    %571 = vector.shape_cast %570 : vector<16xf32> to vector<16x1xf32>
    %cst_254 = arith.constant 1.280000e+02 : f32
    %572 = vector.broadcast %cst_254 : f32 to vector<16x1xf32>
    %573 = arith.divf %571, %572 : vector<16x1xf32>
    %574 = vector.broadcast %573 : vector<16x1xf32> to vector<16x128xf32>
    %575 = arith.subf %565, %574 : vector<16x128xf32>
    %576 = arith.mulf %575, %575 : vector<16x128xf32>
    %cst_255 = arith.constant dense<0.000000e+00> : vector<16xf32>
    %577 = vector.multi_reduction <add>, %576, %cst_255 [1] : vector<16x128xf32> to vector<16xf32>
    %578 = vector.shape_cast %577 : vector<16xf32> to vector<16x1xf32>
    %cst_256 = arith.constant 1.280000e+02 : f32
    %579 = vector.broadcast %cst_256 : f32 to vector<16x1xf32>
    %580 = arith.divf %578, %579 : vector<16x1xf32>
    %581 = vector.broadcast %573 : vector<16x1xf32> to vector<16x128xf32>
    %582 = arith.subf %565, %581 : vector<16x128xf32>
    %cst_257 = arith.constant 9.99999996E-13 : f32
    %583 = vector.broadcast %cst_257 : f32 to vector<16x1xf32>
    %584 = arith.addf %580, %583 : vector<16x1xf32>
    %585 = math.rsqrt %584 : vector<16x1xf32>
    %586 = vector.broadcast %585 : vector<16x1xf32> to vector<16x128xf32>
    %587 = arith.mulf %582, %586 : vector<16x128xf32>
    %588 = vector.broadcast %567 : vector<1x128xf32> to vector<16x128xf32>
    %589 = arith.mulf %587, %588 : vector<16x128xf32>
    %590 = vector.broadcast %569 : vector<1x128xf32> to vector<16x128xf32>
    %591 = arith.addf %589, %590 : vector<16x128xf32>
    %c0_258 = arith.constant 0 : index
    %c0_259 = arith.constant 0 : index
    %c0_260 = arith.constant 0 : index
    %592 = vector.load %arg45[%c0_258, %c0_259, %c0_260] : memref<2x128x512xbf16, #tpu.memory_space<vmem>>, vector<1x128x512xbf16>
    %593 = vector.shape_cast %592 : vector<1x128x512xbf16> to vector<128x512xbf16>
    %594 = arith.truncf %591 : vector<16x128xf32> to vector<16x128xbf16>
    %cst_261 = arith.constant dense<0.000000e+00> : vector<16x512xf32>
    %595 = tpu.matmul %594, %593, %cst_261 {dimension_numbers = #tpu.dot_dimension_numbers<[1], [0], [0], [1], [0, 0, 1, 1], [], []>} : vector<16x128xbf16>, vector<128x512xbf16>, vector<16x512xf32> -> vector<16x512xf32>
    %c0_262 = arith.constant 0 : index
    %c0_263 = arith.constant 0 : index
    %c0_264 = arith.constant 0 : index
    %596 = vector.load %arg46[%c0_262, %c0_263, %c0_264] : memref<2x1x512xf32, #tpu.memory_space<vmem>>, vector<1x1x512xf32>
    %597 = vector.shape_cast %596 : vector<1x1x512xf32> to vector<1x512xf32>
    %598 = vector.broadcast %597 : vector<1x512xf32> to vector<16x512xf32>
    %599 = arith.addf %595, %598 : vector<16x512xf32>
    %cst_265 = arith.constant 5.000000e-01 : f32
    %600 = vector.broadcast %cst_265 : f32 to vector<16x512xf32>
    %601 = arith.mulf %600, %599 : vector<16x512xf32>
    %cst_266 = arith.constant 4.471500e-02 : f32
    %602 = vector.broadcast %cst_266 : f32 to vector<16x512xf32>
    %603 = arith.mulf %602, %599 : vector<16x512xf32>
    %604 = arith.mulf %603, %599 : vector<16x512xf32>
    %605 = arith.mulf %604, %599 : vector<16x512xf32>
    %606 = arith.addf %599, %605 : vector<16x512xf32>
    %cst_267 = arith.constant 0.797884583 : f32
    %607 = vector.broadcast %cst_267 : f32 to vector<16x512xf32>
    %608 = arith.mulf %607, %606 : vector<16x512xf32>
    %609 = math.tanh %608 : vector<16x512xf32>
    %cst_268 = arith.constant 1.000000e+00 : f32
    %610 = vector.broadcast %cst_268 : f32 to vector<16x512xf32>
    %611 = arith.addf %610, %609 : vector<16x512xf32>
    %612 = arith.mulf %601, %611 : vector<16x512xf32>
    %c0_269 = arith.constant 0 : index
    %c0_270 = arith.constant 0 : index
    %c0_271 = arith.constant 0 : index
    %613 = vector.load %arg47[%c0_269, %c0_270, %c0_271] : memref<2x512x128xbf16, #tpu.memory_space<vmem>>, vector<1x512x128xbf16>
    %614 = vector.shape_cast %613 : vector<1x512x128xbf16> to vector<512x128xbf16>
    %615 = arith.truncf %612 : vector<16x512xf32> to vector<16x512xbf16>
    %cst_272 = arith.constant dense<0.000000e+00> : vector<16x128xf32>
    %616 = tpu.matmul %615, %614, %cst_272 {dimension_numbers = #tpu.dot_dimension_numbers<[1], [0], [0], [1], [0, 0, 1, 1], [], []>} : vector<16x512xbf16>, vector<512x128xbf16>, vector<16x128xf32> -> vector<16x128xf32>
    %617 = arith.addf %591, %616 : vector<16x128xf32>
    %c0_273 = arith.constant 0 : index
    %c0_274 = arith.constant 0 : index
    %c0_275 = arith.constant 0 : index
    %618 = vector.load %arg48[%c0_273, %c0_274, %c0_275] : memref<2x1x128xf32, #tpu.memory_space<vmem>>, vector<1x1x128xf32>
    %619 = vector.shape_cast %618 : vector<1x1x128xf32> to vector<1x128xf32>
    %620 = vector.broadcast %619 : vector<1x128xf32> to vector<16x128xf32>
    %621 = arith.addf %617, %620 : vector<16x128xf32>
    %c0_276 = arith.constant 0 : index
    %c0_277 = arith.constant 0 : index
    %c0_278 = arith.constant 0 : index
    %622 = vector.load %arg49[%c0_276, %c0_277, %c0_278] : memref<2x1x128xf32, #tpu.memory_space<vmem>>, vector<1x1x128xf32>
    %623 = vector.shape_cast %622 : vector<1x1x128xf32> to vector<1x128xf32>
    %c0_279 = arith.constant 0 : index
    %c0_280 = arith.constant 0 : index
    %c0_281 = arith.constant 0 : index
    %624 = vector.load %arg50[%c0_279, %c0_280, %c0_281] : memref<2x1x128xf32, #tpu.memory_space<vmem>>, vector<1x1x128xf32>
    %625 = vector.shape_cast %624 : vector<1x1x128xf32> to vector<1x128xf32>
    %cst_282 = arith.constant dense<0.000000e+00> : vector<16xf32>
    %626 = vector.multi_reduction <add>, %621, %cst_282 [1] : vector<16x128xf32> to vector<16xf32>
    %627 = vector.shape_cast %626 : vector<16xf32> to vector<16x1xf32>
    %cst_283 = arith.constant 1.280000e+02 : f32
    %628 = vector.broadcast %cst_283 : f32 to vector<16x1xf32>
    %629 = arith.divf %627, %628 : vector<16x1xf32>
    %630 = vector.broadcast %629 : vector<16x1xf32> to vector<16x128xf32>
    %631 = arith.subf %621, %630 : vector<16x128xf32>
    %632 = arith.mulf %631, %631 : vector<16x128xf32>
    %cst_284 = arith.constant dense<0.000000e+00> : vector<16xf32>
    %633 = vector.multi_reduction <add>, %632, %cst_284 [1] : vector<16x128xf32> to vector<16xf32>
    %634 = vector.shape_cast %633 : vector<16xf32> to vector<16x1xf32>
    %cst_285 = arith.constant 1.280000e+02 : f32
    %635 = vector.broadcast %cst_285 : f32 to vector<16x1xf32>
    %636 = arith.divf %634, %635 : vector<16x1xf32>
    %637 = vector.broadcast %629 : vector<16x1xf32> to vector<16x128xf32>
    %638 = arith.subf %621, %637 : vector<16x128xf32>
    %cst_286 = arith.constant 9.99999996E-13 : f32
    %639 = vector.broadcast %cst_286 : f32 to vector<16x1xf32>
    %640 = arith.addf %636, %639 : vector<16x1xf32>
    %641 = math.rsqrt %640 : vector<16x1xf32>
    %642 = vector.broadcast %641 : vector<16x1xf32> to vector<16x128xf32>
    %643 = arith.mulf %638, %642 : vector<16x128xf32>
    %644 = vector.broadcast %623 : vector<1x128xf32> to vector<16x128xf32>
    %645 = arith.mulf %643, %644 : vector<16x128xf32>
    %646 = vector.broadcast %625 : vector<1x128xf32> to vector<16x128xf32>
    %647 = arith.addf %645, %646 : vector<16x128xf32>
    %c0_287 = arith.constant 0 : index
    %c0_288 = arith.constant 0 : index
    %c0_289 = arith.constant 0 : index
    %648 = vector.load %arg60[%c0_287, %c0_288, %c0_289] : memref<2x16x128xf32, #tpu.memory_space<vmem>>, vector<1x16x128xf32>
    %649 = vector.shape_cast %648 : vector<1x16x128xf32> to vector<16x128xf32>
    %650 = vector.shape_cast %647 : vector<16x128xf32> to vector<1x16x128xf32>
    tpu.vector_store %arg60[%c0_287, %c0_288, %c0_289], %650 {strides = array<i32>} : memref<2x16x128xf32, #tpu.memory_space<vmem>>, vector<1x16x128xf32>,
    %c1_290 = arith.constant 1 : index
    %c0_291 = arith.constant 0 : index
    %c0_292 = arith.constant 0 : index
    %651 = vector.load %arg25[%c1_290, %c0_291, %c0_292] : memref<2x128x128xbf16, #tpu.memory_space<vmem>>, vector<1x128x128xbf16>
    %652 = vector.shape_cast %651 : vector<1x128x128xbf16> to vector<128x128xbf16>
    %653 = arith.truncf %647 : vector<16x128xf32> to vector<16x128xbf16>
    %cst_293 = arith.constant dense<0.000000e+00> : vector<16x128xf32>
    %654 = tpu.matmul %653, %652, %cst_293 {dimension_numbers = #tpu.dot_dimension_numbers<[1], [0], [0], [1], [0, 0, 1, 1], [], []>} : vector<16x128xbf16>, vector<128x128xbf16>, vector<16x128xf32> -> vector<16x128xf32>
    %c1_294 = arith.constant 1 : index
    %c0_295 = arith.constant 0 : index
    %c0_296 = arith.constant 0 : index
    %655 = vector.load %arg26[%c1_294, %c0_295, %c0_296] : memref<2x1x128xf32, #tpu.memory_space<vmem>>, vector<1x1x128xf32>
    %656 = vector.shape_cast %655 : vector<1x1x128xf32> to vector<1x128xf32>
    %657 = vector.broadcast %656 : vector<1x128xf32> to vector<16x128xf32>
    %658 = arith.addf %654, %657 : vector<16x128xf32>
    %c1_297 = arith.constant 1 : index
    %c0_298 = arith.constant 0 : index
    %c0_299 = arith.constant 0 : index
    %659 = vector.load %arg27[%c1_297, %c0_298, %c0_299] : memref<2x128x128xbf16, #tpu.memory_space<vmem>>, vector<1x128x128xbf16>
    %660 = vector.shape_cast %659 : vector<1x128x128xbf16> to vector<128x128xbf16>
    %661 = arith.truncf %647 : vector<16x128xf32> to vector<16x128xbf16>
    %cst_300 = arith.constant dense<0.000000e+00> : vector<16x128xf32>
    %662 = tpu.matmul %661, %660, %cst_300 {dimension_numbers = #tpu.dot_dimension_numbers<[1], [0], [0], [1], [0, 0, 1, 1], [], []>} : vector<16x128xbf16>, vector<128x128xbf16>, vector<16x128xf32> -> vector<16x128xf32>
    %c1_301 = arith.constant 1 : index
    %c0_302 = arith.constant 0 : index
    %c0_303 = arith.constant 0 : index
    %663 = vector.load %arg28[%c1_301, %c0_302, %c0_303] : memref<2x1x128xf32, #tpu.memory_space<vmem>>, vector<1x1x128xf32>
    %664 = vector.shape_cast %663 : vector<1x1x128xf32> to vector<1x128xf32>
    %665 = vector.broadcast %664 : vector<1x128xf32> to vector<16x128xf32>
    %666 = arith.addf %662, %665 : vector<16x128xf32>
    %c1_304 = arith.constant 1 : index
    %c0_305 = arith.constant 0 : index
    %c0_306 = arith.constant 0 : index
    %667 = vector.load %arg29[%c1_304, %c0_305, %c0_306] : memref<2x128x128xbf16, #tpu.memory_space<vmem>>, vector<1x128x128xbf16>
    %668 = vector.shape_cast %667 : vector<1x128x128xbf16> to vector<128x128xbf16>
    %669 = arith.truncf %647 : vector<16x128xf32> to vector<16x128xbf16>
    %cst_307 = arith.constant dense<0.000000e+00> : vector<16x128xf32>
    %670 = tpu.matmul %669, %668, %cst_307 {dimension_numbers = #tpu.dot_dimension_numbers<[1], [0], [0], [1], [0, 0, 1, 1], [], []>} : vector<16x128xbf16>, vector<128x128xbf16>, vector<16x128xf32> -> vector<16x128xf32>
    %c1_308 = arith.constant 1 : index
    %c0_309 = arith.constant 0 : index
    %c0_310 = arith.constant 0 : index
    %671 = vector.load %arg30[%c1_308, %c0_309, %c0_310] : memref<2x1x128xf32, #tpu.memory_space<vmem>>, vector<1x1x128xf32>
    %672 = vector.shape_cast %671 : vector<1x1x128xf32> to vector<1x128xf32>
    %673 = vector.broadcast %672 : vector<1x128xf32> to vector<16x128xf32>
    %674 = arith.addf %670, %673 : vector<16x128xf32>
    %c1_311 = arith.constant 1 : index
    %c0_312 = arith.constant 0 : index
    %c0_313 = arith.constant 0 : index
    %675 = vector.load %arg31[%c1_311, %c0_312, %c0_313] : memref<2x128x128xbf16, #tpu.memory_space<vmem>>, vector<1x128x128xbf16>
    %676 = vector.shape_cast %675 : vector<1x128x128xbf16> to vector<128x128xbf16>
    %c1_314 = arith.constant 1 : index
    %c0_315 = arith.constant 0 : index
    %c0_316 = arith.constant 0 : index
    %677 = vector.load %arg32[%c1_314, %c0_315, %c0_316] : memref<2x1x128xf32, #tpu.memory_space<vmem>>, vector<1x1x128xf32>
    %678 = vector.shape_cast %677 : vector<1x1x128xf32> to vector<1x128xf32>
    %679 = vector.extract_strided_slice %658 {offsets = [0, 0], sizes = [16, 32], strides = [1, 1]} : vector<16x128xf32> to vector<16x32xf32>
    %680 = vector.extract_strided_slice %658 {offsets = [0, 32], sizes = [16, 32], strides = [1, 1]} : vector<16x128xf32> to vector<16x32xf32>
    %681 = vector.extract_strided_slice %658 {offsets = [0, 64], sizes = [16, 32], strides = [1, 1]} : vector<16x128xf32> to vector<16x32xf32>
    %682 = vector.extract_strided_slice %658 {offsets = [0, 96], sizes = [16, 32], strides = [1, 1]} : vector<16x128xf32> to vector<16x32xf32>
    %683 = tpu.concatenate %679, %680, %681, %682 in 0 : vector<16x32xf32>, vector<16x32xf32>, vector<16x32xf32>, vector<16x32xf32> -> vector<64x32xf32>
    %684 = arith.truncf %683 : vector<64x32xf32> to vector<64x32xbf16>
    %685 = vector.extract_strided_slice %666 {offsets = [0, 0], sizes = [16, 32], strides = [1, 1]} : vector<16x128xf32> to vector<16x32xf32>
    %686 = vector.extract_strided_slice %666 {offsets = [0, 32], sizes = [16, 32], strides = [1, 1]} : vector<16x128xf32> to vector<16x32xf32>
    %687 = vector.extract_strided_slice %666 {offsets = [0, 64], sizes = [16, 32], strides = [1, 1]} : vector<16x128xf32> to vector<16x32xf32>
    %688 = vector.extract_strided_slice %666 {offsets = [0, 96], sizes = [16, 32], strides = [1, 1]} : vector<16x128xf32> to vector<16x32xf32>
    %689 = tpu.concatenate %685, %686, %687, %688 in 0 : vector<16x32xf32>, vector<16x32xf32>, vector<16x32xf32>, vector<16x32xf32> -> vector<64x32xf32>
    %690 = arith.truncf %689 : vector<64x32xf32> to vector<64x32xbf16>
    %691 = vector.extract_strided_slice %674 {offsets = [0, 0], sizes = [16, 32], strides = [1, 1]} : vector<16x128xf32> to vector<16x32xf32>
    %692 = vector.extract_strided_slice %674 {offsets = [0, 32], sizes = [16, 32], strides = [1, 1]} : vector<16x128xf32> to vector<16x32xf32>
    %693 = vector.extract_strided_slice %674 {offsets = [0, 64], sizes = [16, 32], strides = [1, 1]} : vector<16x128xf32> to vector<16x32xf32>
    %694 = vector.extract_strided_slice %674 {offsets = [0, 96], sizes = [16, 32], strides = [1, 1]} : vector<16x128xf32> to vector<16x32xf32>
    %695 = tpu.concatenate %691, %692, %693, %694 in 0 : vector<16x32xf32>, vector<16x32xf32>, vector<16x32xf32>, vector<16x32xf32> -> vector<64x32xf32>
    %696 = arith.truncf %695 : vector<64x32xf32> to vector<64x32xbf16>
    %cst_317 = arith.constant dense<0.000000e+00> : vector<64x64xf32>
    %697 = tpu.matmul %684, %690, %cst_317 {dimension_numbers = #tpu.dot_dimension_numbers<[1], [1], [0], [0], [0, 0, 1, 0], [], []>} : vector<64x32xbf16>, vector<64x32xbf16>, vector<64x64xf32> -> vector<64x64xf32>
    %cst_318 = arith.constant 0.176776692 : f32
    %698 = vector.broadcast %cst_318 : f32 to vector<64x64xf32>
    %699 = arith.mulf %697, %698 : vector<64x64xf32>
    %700 = arith.addf %699, %24 : vector<64x64xf32>
    %cst_319 = arith.constant dense<0xFF800000> : vector<64xf32>
    %701 = vector.multi_reduction <maximumf>, %700, %cst_319 [1] : vector<64x64xf32> to vector<64xf32>
    %702 = vector.shape_cast %701 : vector<64xf32> to vector<64x1xf32>
    %703 = vector.broadcast %702 : vector<64x1xf32> to vector<64x64xf32>
    %704 = arith.subf %700, %703 : vector<64x64xf32>
    %705 = math.exp %704 : vector<64x64xf32>
    %cst_320 = arith.constant dense<0.000000e+00> : vector<64xf32>
    %706 = vector.multi_reduction <add>, %705, %cst_320 [1] : vector<64x64xf32> to vector<64xf32>
    %707 = vector.shape_cast %706 : vector<64xf32> to vector<64x1xf32>
    %708 = tpu.reciprocal %707 {approx = true} : vector<64x1xf32> -> vector<64x1xf32>
    %709 = vector.broadcast %708 : vector<64x1xf32> to vector<64x64xf32>
    %710 = arith.mulf %705, %709 : vector<64x64xf32>
    %711 = arith.truncf %710 : vector<64x64xf32> to vector<64x64xbf16>
    %cst_321 = arith.constant dense<0.000000e+00> : vector<64x32xf32>
    %712 = tpu.matmul %711, %696, %cst_321 {dimension_numbers = #tpu.dot_dimension_numbers<[1], [0], [0], [1], [0, 0, 1, 1], [], []>} : vector<64x64xbf16>, vector<64x32xbf16>, vector<64x32xf32> -> vector<64x32xf32>
    %713 = vector.extract_strided_slice %712 {offsets = [0, 0], sizes = [16, 32], strides = [1, 1]} : vector<64x32xf32> to vector<16x32xf32>
    %714 = vector.extract_strided_slice %712 {offsets = [16, 0], sizes = [16, 32], strides = [1, 1]} : vector<64x32xf32> to vector<16x32xf32>
    %715 = vector.extract_strided_slice %712 {offsets = [32, 0], sizes = [16, 32], strides = [1, 1]} : vector<64x32xf32> to vector<16x32xf32>
    %716 = vector.extract_strided_slice %712 {offsets = [48, 0], sizes = [16, 32], strides = [1, 1]} : vector<64x32xf32> to vector<16x32xf32>
    %717 = tpu.concatenate %713, %714, %715, %716 in 1 : vector<16x32xf32>, vector<16x32xf32>, vector<16x32xf32>, vector<16x32xf32> -> vector<16x128xf32>
    %718 = arith.truncf %717 : vector<16x128xf32> to vector<16x128xbf16>
    %cst_322 = arith.constant dense<0.000000e+00> : vector<16x128xf32>
    %719 = tpu.matmul %718, %676, %cst_322 {dimension_numbers = #tpu.dot_dimension_numbers<[1], [0], [0], [1], [0, 0, 1, 1], [], []>} : vector<16x128xbf16>, vector<128x128xbf16>, vector<16x128xf32> -> vector<16x128xf32>
    %720 = vector.broadcast %678 : vector<1x128xf32> to vector<16x128xf32>
    %721 = arith.addf %719, %720 : vector<16x128xf32>
    %722 = arith.addf %647, %721 : vector<16x128xf32>
    %c1_323 = arith.constant 1 : index
    %c0_324 = arith.constant 0 : index
    %c0_325 = arith.constant 0 : index
    %723 = vector.load %arg33[%c1_323, %c0_324, %c0_325] : memref<2x1x128xf32, #tpu.memory_space<vmem>>, vector<1x1x128xf32>
    %724 = vector.shape_cast %723 : vector<1x1x128xf32> to vector<1x128xf32>
    %c1_326 = arith.constant 1 : index
    %c0_327 = arith.constant 0 : index
    %c0_328 = arith.constant 0 : index
    %725 = vector.load %arg34[%c1_326, %c0_327, %c0_328] : memref<2x1x128xf32, #tpu.memory_space<vmem>>, vector<1x1x128xf32>
    %726 = vector.shape_cast %725 : vector<1x1x128xf32> to vector<1x128xf32>
    %cst_329 = arith.constant dense<0.000000e+00> : vector<16xf32>
    %727 = vector.multi_reduction <add>, %722, %cst_329 [1] : vector<16x128xf32> to vector<16xf32>
    %728 = vector.shape_cast %727 : vector<16xf32> to vector<16x1xf32>
    %cst_330 = arith.constant 1.280000e+02 : f32
    %729 = vector.broadcast %cst_330 : f32 to vector<16x1xf32>
    %730 = arith.divf %728, %729 : vector<16x1xf32>
    %731 = vector.broadcast %730 : vector<16x1xf32> to vector<16x128xf32>
    %732 = arith.subf %722, %731 : vector<16x128xf32>
    %733 = arith.mulf %732, %732 : vector<16x128xf32>
    %cst_331 = arith.constant dense<0.000000e+00> : vector<16xf32>
    %734 = vector.multi_reduction <add>, %733, %cst_331 [1] : vector<16x128xf32> to vector<16xf32>
    %735 = vector.shape_cast %734 : vector<16xf32> to vector<16x1xf32>
    %cst_332 = arith.constant 1.280000e+02 : f32
    %736 = vector.broadcast %cst_332 : f32 to vector<16x1xf32>
    %737 = arith.divf %735, %736 : vector<16x1xf32>
    %738 = vector.broadcast %730 : vector<16x1xf32> to vector<16x128xf32>
    %739 = arith.subf %722, %738 : vector<16x128xf32>
    %cst_333 = arith.constant 9.99999996E-13 : f32
    %740 = vector.broadcast %cst_333 : f32 to vector<16x1xf32>
    %741 = arith.addf %737, %740 : vector<16x1xf32>
    %742 = math.rsqrt %741 : vector<16x1xf32>
    %743 = vector.broadcast %742 : vector<16x1xf32> to vector<16x128xf32>
    %744 = arith.mulf %739, %743 : vector<16x128xf32>
    %745 = vector.broadcast %724 : vector<1x128xf32> to vector<16x128xf32>
    %746 = arith.mulf %744, %745 : vector<16x128xf32>
    %747 = vector.broadcast %726 : vector<1x128xf32> to vector<16x128xf32>
    %748 = arith.addf %746, %747 : vector<16x128xf32>
    %c1_334 = arith.constant 1 : index
    %c0_335 = arith.constant 0 : index
    %c0_336 = arith.constant 0 : index
    %749 = vector.load %arg35[%c1_334, %c0_335, %c0_336] : memref<2x128x128xbf16, #tpu.memory_space<vmem>>, vector<1x128x128xbf16>
    %750 = vector.shape_cast %749 : vector<1x128x128xbf16> to vector<128x128xbf16>
    %751 = arith.truncf %748 : vector<16x128xf32> to vector<16x128xbf16>
    %cst_337 = arith.constant dense<0.000000e+00> : vector<16x128xf32>
    %752 = tpu.matmul %751, %750, %cst_337 {dimension_numbers = #tpu.dot_dimension_numbers<[1], [0], [0], [1], [0, 0, 1, 1], [], []>} : vector<16x128xbf16>, vector<128x128xbf16>, vector<16x128xf32> -> vector<16x128xf32>
    %c1_338 = arith.constant 1 : index
    %c0_339 = arith.constant 0 : index
    %c0_340 = arith.constant 0 : index
    %753 = vector.load %arg36[%c1_338, %c0_339, %c0_340] : memref<2x1x128xf32, #tpu.memory_space<vmem>>, vector<1x1x128xf32>
    %754 = vector.shape_cast %753 : vector<1x1x128xf32> to vector<1x128xf32>
    %755 = vector.broadcast %754 : vector<1x128xf32> to vector<16x128xf32>
    %756 = arith.addf %752, %755 : vector<16x128xf32>
    %c1_341 = arith.constant 1 : index
    %c0_342 = arith.constant 0 : index
    %c0_343 = arith.constant 0 : index
    %757 = vector.load %arg37[%c1_341, %c0_342, %c0_343] : memref<2x128x128xbf16, #tpu.memory_space<vmem>>, vector<1x128x128xbf16>
    %758 = vector.shape_cast %757 : vector<1x128x128xbf16> to vector<128x128xbf16>
    %759 = arith.truncf %341 : vector<16x128xf32> to vector<16x128xbf16>
    %cst_344 = arith.constant dense<0.000000e+00> : vector<16x128xf32>
    %760 = tpu.matmul %759, %758, %cst_344 {dimension_numbers = #tpu.dot_dimension_numbers<[1], [0], [0], [1], [0, 0, 1, 1], [], []>} : vector<16x128xbf16>, vector<128x128xbf16>, vector<16x128xf32> -> vector<16x128xf32>
    %c1_345 = arith.constant 1 : index
    %c0_346 = arith.constant 0 : index
    %c0_347 = arith.constant 0 : index
    %761 = vector.load %arg38[%c1_345, %c0_346, %c0_347] : memref<2x1x128xf32, #tpu.memory_space<vmem>>, vector<1x1x128xf32>
    %762 = vector.shape_cast %761 : vector<1x1x128xf32> to vector<1x128xf32>
    %763 = vector.broadcast %762 : vector<1x128xf32> to vector<16x128xf32>
    %764 = arith.addf %760, %763 : vector<16x128xf32>
    %c1_348 = arith.constant 1 : index
    %c0_349 = arith.constant 0 : index
    %c0_350 = arith.constant 0 : index
    %765 = vector.load %arg39[%c1_348, %c0_349, %c0_350] : memref<2x128x128xbf16, #tpu.memory_space<vmem>>, vector<1x128x128xbf16>
    %766 = vector.shape_cast %765 : vector<1x128x128xbf16> to vector<128x128xbf16>
    %767 = arith.truncf %341 : vector<16x128xf32> to vector<16x128xbf16>
    %cst_351 = arith.constant dense<0.000000e+00> : vector<16x128xf32>
    %768 = tpu.matmul %767, %766, %cst_351 {dimension_numbers = #tpu.dot_dimension_numbers<[1], [0], [0], [1], [0, 0, 1, 1], [], []>} : vector<16x128xbf16>, vector<128x128xbf16>, vector<16x128xf32> -> vector<16x128xf32>
    %c1_352 = arith.constant 1 : index
    %c0_353 = arith.constant 0 : index
    %c0_354 = arith.constant 0 : index
    %769 = vector.load %arg40[%c1_352, %c0_353, %c0_354] : memref<2x1x128xf32, #tpu.memory_space<vmem>>, vector<1x1x128xf32>
    %770 = vector.shape_cast %769 : vector<1x1x128xf32> to vector<1x128xf32>
    %771 = vector.broadcast %770 : vector<1x128xf32> to vector<16x128xf32>
    %772 = arith.addf %768, %771 : vector<16x128xf32>
    %c1_355 = arith.constant 1 : index
    %c0_356 = arith.constant 0 : index
    %c0_357 = arith.constant 0 : index
    %773 = vector.load %arg41[%c1_355, %c0_356, %c0_357] : memref<2x128x128xbf16, #tpu.memory_space<vmem>>, vector<1x128x128xbf16>
    %774 = vector.shape_cast %773 : vector<1x128x128xbf16> to vector<128x128xbf16>
    %c1_358 = arith.constant 1 : index
    %c0_359 = arith.constant 0 : index
    %c0_360 = arith.constant 0 : index
    %775 = vector.load %arg42[%c1_358, %c0_359, %c0_360] : memref<2x1x128xf32, #tpu.memory_space<vmem>>, vector<1x1x128xf32>
    %776 = vector.shape_cast %775 : vector<1x1x128xf32> to vector<1x128xf32>
    %777 = vector.extract_strided_slice %756 {offsets = [0, 0], sizes = [16, 32], strides = [1, 1]} : vector<16x128xf32> to vector<16x32xf32>
    %778 = vector.extract_strided_slice %756 {offsets = [0, 32], sizes = [16, 32], strides = [1, 1]} : vector<16x128xf32> to vector<16x32xf32>
    %779 = vector.extract_strided_slice %756 {offsets = [0, 64], sizes = [16, 32], strides = [1, 1]} : vector<16x128xf32> to vector<16x32xf32>
    %780 = vector.extract_strided_slice %756 {offsets = [0, 96], sizes = [16, 32], strides = [1, 1]} : vector<16x128xf32> to vector<16x32xf32>
    %781 = tpu.concatenate %777, %778, %779, %780 in 0 : vector<16x32xf32>, vector<16x32xf32>, vector<16x32xf32>, vector<16x32xf32> -> vector<64x32xf32>
    %782 = arith.truncf %781 : vector<64x32xf32> to vector<64x32xbf16>
    %783 = vector.extract_strided_slice %764 {offsets = [0, 0], sizes = [16, 32], strides = [1, 1]} : vector<16x128xf32> to vector<16x32xf32>
    %784 = vector.extract_strided_slice %764 {offsets = [0, 32], sizes = [16, 32], strides = [1, 1]} : vector<16x128xf32> to vector<16x32xf32>
    %785 = vector.extract_strided_slice %764 {offsets = [0, 64], sizes = [16, 32], strides = [1, 1]} : vector<16x128xf32> to vector<16x32xf32>
    %786 = vector.extract_strided_slice %764 {offsets = [0, 96], sizes = [16, 32], strides = [1, 1]} : vector<16x128xf32> to vector<16x32xf32>
    %787 = tpu.concatenate %783, %784, %785, %786 in 0 : vector<16x32xf32>, vector<16x32xf32>, vector<16x32xf32>, vector<16x32xf32> -> vector<64x32xf32>
    %788 = arith.truncf %787 : vector<64x32xf32> to vector<64x32xbf16>
    %789 = vector.extract_strided_slice %772 {offsets = [0, 0], sizes = [16, 32], strides = [1, 1]} : vector<16x128xf32> to vector<16x32xf32>
    %790 = vector.extract_strided_slice %772 {offsets = [0, 32], sizes = [16, 32], strides = [1, 1]} : vector<16x128xf32> to vector<16x32xf32>
    %791 = vector.extract_strided_slice %772 {offsets = [0, 64], sizes = [16, 32], strides = [1, 1]} : vector<16x128xf32> to vector<16x32xf32>
    %792 = vector.extract_strided_slice %772 {offsets = [0, 96], sizes = [16, 32], strides = [1, 1]} : vector<16x128xf32> to vector<16x32xf32>
    %793 = tpu.concatenate %789, %790, %791, %792 in 0 : vector<16x32xf32>, vector<16x32xf32>, vector<16x32xf32>, vector<16x32xf32> -> vector<64x32xf32>
    %794 = arith.truncf %793 : vector<64x32xf32> to vector<64x32xbf16>
    %cst_361 = arith.constant dense<0.000000e+00> : vector<64x64xf32>
    %795 = tpu.matmul %782, %788, %cst_361 {dimension_numbers = #tpu.dot_dimension_numbers<[1], [1], [0], [0], [0, 0, 1, 0], [], []>} : vector<64x32xbf16>, vector<64x32xbf16>, vector<64x64xf32> -> vector<64x64xf32>
    %cst_362 = arith.constant 0.176776692 : f32
    %796 = vector.broadcast %cst_362 : f32 to vector<64x64xf32>
    %797 = arith.mulf %795, %796 : vector<64x64xf32>
    %798 = arith.addf %797, %14 : vector<64x64xf32>
    %cst_363 = arith.constant dense<0xFF800000> : vector<64xf32>
    %799 = vector.multi_reduction <maximumf>, %798, %cst_363 [1] : vector<64x64xf32> to vector<64xf32>
    %800 = vector.shape_cast %799 : vector<64xf32> to vector<64x1xf32>
    %801 = vector.broadcast %800 : vector<64x1xf32> to vector<64x64xf32>
    %802 = arith.subf %798, %801 : vector<64x64xf32>
    %803 = math.exp %802 : vector<64x64xf32>
    %cst_364 = arith.constant dense<0.000000e+00> : vector<64xf32>
    %804 = vector.multi_reduction <add>, %803, %cst_364 [1] : vector<64x64xf32> to vector<64xf32>
    %805 = vector.shape_cast %804 : vector<64xf32> to vector<64x1xf32>
    %806 = tpu.reciprocal %805 {approx = true} : vector<64x1xf32> -> vector<64x1xf32>
    %807 = vector.broadcast %806 : vector<64x1xf32> to vector<64x64xf32>
    %808 = arith.mulf %803, %807 : vector<64x64xf32>
    %809 = arith.truncf %808 : vector<64x64xf32> to vector<64x64xbf16>
    %cst_365 = arith.constant dense<0.000000e+00> : vector<64x32xf32>
    %810 = tpu.matmul %809, %794, %cst_365 {dimension_numbers = #tpu.dot_dimension_numbers<[1], [0], [0], [1], [0, 0, 1, 1], [], []>} : vector<64x64xbf16>, vector<64x32xbf16>, vector<64x32xf32> -> vector<64x32xf32>
    %811 = vector.extract_strided_slice %810 {offsets = [0, 0], sizes = [16, 32], strides = [1, 1]} : vector<64x32xf32> to vector<16x32xf32>
    %812 = vector.extract_strided_slice %810 {offsets = [16, 0], sizes = [16, 32], strides = [1, 1]} : vector<64x32xf32> to vector<16x32xf32>
    %813 = vector.extract_strided_slice %810 {offsets = [32, 0], sizes = [16, 32], strides = [1, 1]} : vector<64x32xf32> to vector<16x32xf32>
    %814 = vector.extract_strided_slice %810 {offsets = [48, 0], sizes = [16, 32], strides = [1, 1]} : vector<64x32xf32> to vector<16x32xf32>
    %815 = tpu.concatenate %811, %812, %813, %814 in 1 : vector<16x32xf32>, vector<16x32xf32>, vector<16x32xf32>, vector<16x32xf32> -> vector<16x128xf32>
    %816 = arith.truncf %815 : vector<16x128xf32> to vector<16x128xbf16>
    %cst_366 = arith.constant dense<0.000000e+00> : vector<16x128xf32>
    %817 = tpu.matmul %816, %774, %cst_366 {dimension_numbers = #tpu.dot_dimension_numbers<[1], [0], [0], [1], [0, 0, 1, 1], [], []>} : vector<16x128xbf16>, vector<128x128xbf16>, vector<16x128xf32> -> vector<16x128xf32>
    %818 = vector.broadcast %776 : vector<1x128xf32> to vector<16x128xf32>
    %819 = arith.addf %817, %818 : vector<16x128xf32>
    %820 = arith.addf %748, %819 : vector<16x128xf32>
    %c1_367 = arith.constant 1 : index
    %c0_368 = arith.constant 0 : index
    %c0_369 = arith.constant 0 : index
    %821 = vector.load %arg43[%c1_367, %c0_368, %c0_369] : memref<2x1x128xf32, #tpu.memory_space<vmem>>, vector<1x1x128xf32>
    %822 = vector.shape_cast %821 : vector<1x1x128xf32> to vector<1x128xf32>
    %c1_370 = arith.constant 1 : index
    %c0_371 = arith.constant 0 : index
    %c0_372 = arith.constant 0 : index
    %823 = vector.load %arg44[%c1_370, %c0_371, %c0_372] : memref<2x1x128xf32, #tpu.memory_space<vmem>>, vector<1x1x128xf32>
    %824 = vector.shape_cast %823 : vector<1x1x128xf32> to vector<1x128xf32>
    %cst_373 = arith.constant dense<0.000000e+00> : vector<16xf32>
    %825 = vector.multi_reduction <add>, %820, %cst_373 [1] : vector<16x128xf32> to vector<16xf32>
    %826 = vector.shape_cast %825 : vector<16xf32> to vector<16x1xf32>
    %cst_374 = arith.constant 1.280000e+02 : f32
    %827 = vector.broadcast %cst_374 : f32 to vector<16x1xf32>
    %828 = arith.divf %826, %827 : vector<16x1xf32>
    %829 = vector.broadcast %828 : vector<16x1xf32> to vector<16x128xf32>
    %830 = arith.subf %820, %829 : vector<16x128xf32>
    %831 = arith.mulf %830, %830 : vector<16x128xf32>
    %cst_375 = arith.constant dense<0.000000e+00> : vector<16xf32>
    %832 = vector.multi_reduction <add>, %831, %cst_375 [1] : vector<16x128xf32> to vector<16xf32>
    %833 = vector.shape_cast %832 : vector<16xf32> to vector<16x1xf32>
    %cst_376 = arith.constant 1.280000e+02 : f32
    %834 = vector.broadcast %cst_376 : f32 to vector<16x1xf32>
    %835 = arith.divf %833, %834 : vector<16x1xf32>
    %836 = vector.broadcast %828 : vector<16x1xf32> to vector<16x128xf32>
    %837 = arith.subf %820, %836 : vector<16x128xf32>
    %cst_377 = arith.constant 9.99999996E-13 : f32
    %838 = vector.broadcast %cst_377 : f32 to vector<16x1xf32>
    %839 = arith.addf %835, %838 : vector<16x1xf32>
    %840 = math.rsqrt %839 : vector<16x1xf32>
    %841 = vector.broadcast %840 : vector<16x1xf32> to vector<16x128xf32>
    %842 = arith.mulf %837, %841 : vector<16x128xf32>
    %843 = vector.broadcast %822 : vector<1x128xf32> to vector<16x128xf32>
    %844 = arith.mulf %842, %843 : vector<16x128xf32>
    %845 = vector.broadcast %824 : vector<1x128xf32> to vector<16x128xf32>
    %846 = arith.addf %844, %845 : vector<16x128xf32>
    %c1_378 = arith.constant 1 : index
    %c0_379 = arith.constant 0 : index
    %c0_380 = arith.constant 0 : index
    %847 = vector.load %arg45[%c1_378, %c0_379, %c0_380] : memref<2x128x512xbf16, #tpu.memory_space<vmem>>, vector<1x128x512xbf16>
    %848 = vector.shape_cast %847 : vector<1x128x512xbf16> to vector<128x512xbf16>
    %849 = arith.truncf %846 : vector<16x128xf32> to vector<16x128xbf16>
    %cst_381 = arith.constant dense<0.000000e+00> : vector<16x512xf32>
    %850 = tpu.matmul %849, %848, %cst_381 {dimension_numbers = #tpu.dot_dimension_numbers<[1], [0], [0], [1], [0, 0, 1, 1], [], []>} : vector<16x128xbf16>, vector<128x512xbf16>, vector<16x512xf32> -> vector<16x512xf32>
    %c1_382 = arith.constant 1 : index
    %c0_383 = arith.constant 0 : index
    %c0_384 = arith.constant 0 : index
    %851 = vector.load %arg46[%c1_382, %c0_383, %c0_384] : memref<2x1x512xf32, #tpu.memory_space<vmem>>, vector<1x1x512xf32>
    %852 = vector.shape_cast %851 : vector<1x1x512xf32> to vector<1x512xf32>
    %853 = vector.broadcast %852 : vector<1x512xf32> to vector<16x512xf32>
    %854 = arith.addf %850, %853 : vector<16x512xf32>
    %cst_385 = arith.constant 5.000000e-01 : f32
    %855 = vector.broadcast %cst_385 : f32 to vector<16x512xf32>
    %856 = arith.mulf %855, %854 : vector<16x512xf32>
    %cst_386 = arith.constant 4.471500e-02 : f32
    %857 = vector.broadcast %cst_386 : f32 to vector<16x512xf32>
    %858 = arith.mulf %857, %854 : vector<16x512xf32>
    %859 = arith.mulf %858, %854 : vector<16x512xf32>
    %860 = arith.mulf %859, %854 : vector<16x512xf32>
    %861 = arith.addf %854, %860 : vector<16x512xf32>
    %cst_387 = arith.constant 0.797884583 : f32
    %862 = vector.broadcast %cst_387 : f32 to vector<16x512xf32>
    %863 = arith.mulf %862, %861 : vector<16x512xf32>
    %864 = math.tanh %863 : vector<16x512xf32>
    %cst_388 = arith.constant 1.000000e+00 : f32
    %865 = vector.broadcast %cst_388 : f32 to vector<16x512xf32>
    %866 = arith.addf %865, %864 : vector<16x512xf32>
    %867 = arith.mulf %856, %866 : vector<16x512xf32>
    %c1_389 = arith.constant 1 : index
    %c0_390 = arith.constant 0 : index
    %c0_391 = arith.constant 0 : index
    %868 = vector.load %arg47[%c1_389, %c0_390, %c0_391] : memref<2x512x128xbf16, #tpu.memory_space<vmem>>, vector<1x512x128xbf16>
    %869 = vector.shape_cast %868 : vector<1x512x128xbf16> to vector<512x128xbf16>
    %870 = arith.truncf %867 : vector<16x512xf32> to vector<16x512xbf16>
    %cst_392 = arith.constant dense<0.000000e+00> : vector<16x128xf32>
    %871 = tpu.matmul %870, %869, %cst_392 {dimension_numbers = #tpu.dot_dimension_numbers<[1], [0], [0], [1], [0, 0, 1, 1], [], []>} : vector<16x512xbf16>, vector<512x128xbf16>, vector<16x128xf32> -> vector<16x128xf32>
    %872 = arith.addf %846, %871 : vector<16x128xf32>
    %c1_393 = arith.constant 1 : index
    %c0_394 = arith.constant 0 : index
    %c0_395 = arith.constant 0 : index
    %873 = vector.load %arg48[%c1_393, %c0_394, %c0_395] : memref<2x1x128xf32, #tpu.memory_space<vmem>>, vector<1x1x128xf32>
    %874 = vector.shape_cast %873 : vector<1x1x128xf32> to vector<1x128xf32>
    %875 = vector.broadcast %874 : vector<1x128xf32> to vector<16x128xf32>
    %876 = arith.addf %872, %875 : vector<16x128xf32>
    %c1_396 = arith.constant 1 : index
    %c0_397 = arith.constant 0 : index
    %c0_398 = arith.constant 0 : index
    %877 = vector.load %arg49[%c1_396, %c0_397, %c0_398] : memref<2x1x128xf32, #tpu.memory_space<vmem>>, vector<1x1x128xf32>
    %878 = vector.shape_cast %877 : vector<1x1x128xf32> to vector<1x128xf32>
    %c1_399 = arith.constant 1 : index
    %c0_400 = arith.constant 0 : index
    %c0_401 = arith.constant 0 : index
    %879 = vector.load %arg50[%c1_399, %c0_400, %c0_401] : memref<2x1x128xf32, #tpu.memory_space<vmem>>, vector<1x1x128xf32>
    %880 = vector.shape_cast %879 : vector<1x1x128xf32> to vector<1x128xf32>
    %cst_402 = arith.constant dense<0.000000e+00> : vector<16xf32>
    %881 = vector.multi_reduction <add>, %876, %cst_402 [1] : vector<16x128xf32> to vector<16xf32>
    %882 = vector.shape_cast %881 : vector<16xf32> to vector<16x1xf32>
    %cst_403 = arith.constant 1.280000e+02 : f32
    %883 = vector.broadcast %cst_403 : f32 to vector<16x1xf32>
    %884 = arith.divf %882, %883 : vector<16x1xf32>
    %885 = vector.broadcast %884 : vector<16x1xf32> to vector<16x128xf32>
    %886 = arith.subf %876, %885 : vector<16x128xf32>
    %887 = arith.mulf %886, %886 : vector<16x128xf32>
    %cst_404 = arith.constant dense<0.000000e+00> : vector<16xf32>
    %888 = vector.multi_reduction <add>, %887, %cst_404 [1] : vector<16x128xf32> to vector<16xf32>
    %889 = vector.shape_cast %888 : vector<16xf32> to vector<16x1xf32>
    %cst_405 = arith.constant 1.280000e+02 : f32
    %890 = vector.broadcast %cst_405 : f32 to vector<16x1xf32>
    %891 = arith.divf %889, %890 : vector<16x1xf32>
    %892 = vector.broadcast %884 : vector<16x1xf32> to vector<16x128xf32>
    %893 = arith.subf %876, %892 : vector<16x128xf32>
    %cst_406 = arith.constant 9.99999996E-13 : f32
    %894 = vector.broadcast %cst_406 : f32 to vector<16x1xf32>
    %895 = arith.addf %891, %894 : vector<16x1xf32>
    %896 = math.rsqrt %895 : vector<16x1xf32>
    %897 = vector.broadcast %896 : vector<16x1xf32> to vector<16x128xf32>
    %898 = arith.mulf %893, %897 : vector<16x128xf32>
    %899 = vector.broadcast %878 : vector<1x128xf32> to vector<16x128xf32>
    %900 = arith.mulf %898, %899 : vector<16x128xf32>
    %901 = vector.broadcast %880 : vector<1x128xf32> to vector<16x128xf32>
    %902 = arith.addf %900, %901 : vector<16x128xf32>
    %c1_407 = arith.constant 1 : index
    %c0_408 = arith.constant 0 : index
    %c0_409 = arith.constant 0 : index
    %903 = vector.load %arg60[%c1_407, %c0_408, %c0_409] : memref<2x16x128xf32, #tpu.memory_space<vmem>>, vector<1x16x128xf32>
    %904 = vector.shape_cast %903 : vector<1x16x128xf32> to vector<16x128xf32>
    %905 = vector.shape_cast %902 : vector<16x128xf32> to vector<1x16x128xf32>
    tpu.vector_store %arg60[%c1_407, %c0_408, %c0_409], %905 {strides = array<i32>} : memref<2x16x128xf32, #tpu.memory_space<vmem>>, vector<1x16x128xf32>,
    %c0_410 = arith.constant 0 : index
    %c0_411 = arith.constant 0 : index
    %906 = vector.load %arg51[%c0_410, %c0_411] : memref<128x128xbf16, #tpu.memory_space<vmem>>, vector<128x128xbf16>
    %907 = arith.truncf %902 : vector<16x128xf32> to vector<16x128xbf16>
    %cst_412 = arith.constant dense<0.000000e+00> : vector<16x128xf32>
    %908 = tpu.matmul %907, %906, %cst_412 {dimension_numbers = #tpu.dot_dimension_numbers<[1], [0], [0], [1], [0, 0, 1, 1], [], []>} : vector<16x128xbf16>, vector<128x128xbf16>, vector<16x128xf32> -> vector<16x128xf32>
    %c0_413 = arith.constant 0 : index
    %c0_414 = arith.constant 0 : index
    %909 = vector.load %arg52[%c0_413, %c0_414] : memref<1x128xf32, #tpu.memory_space<vmem>>, vector<1x128xf32>
    %910 = vector.broadcast %909 : vector<1x128xf32> to vector<16x128xf32>
    %911 = arith.addf %908, %910 : vector<16x128xf32>
    %cst_415 = arith.constant 5.000000e-01 : f32
    %912 = vector.broadcast %cst_415 : f32 to vector<16x128xf32>
    %913 = arith.mulf %912, %911 : vector<16x128xf32>
    %cst_416 = arith.constant 4.471500e-02 : f32
    %914 = vector.broadcast %cst_416 : f32 to vector<16x128xf32>
    %915 = arith.mulf %914, %911 : vector<16x128xf32>
    %916 = arith.mulf %915, %911 : vector<16x128xf32>
    %917 = arith.mulf %916, %911 : vector<16x128xf32>
    %918 = arith.addf %911, %917 : vector<16x128xf32>
    %cst_417 = arith.constant 0.797884583 : f32
    %919 = vector.broadcast %cst_417 : f32 to vector<16x128xf32>
    %920 = arith.mulf %919, %918 : vector<16x128xf32>
    %921 = math.tanh %920 : vector<16x128xf32>
    %cst_418 = arith.constant 1.000000e+00 : f32
    %922 = vector.broadcast %cst_418 : f32 to vector<16x128xf32>
    %923 = arith.addf %922, %921 : vector<16x128xf32>
    %924 = arith.mulf %913, %923 : vector<16x128xf32>
    %c0_419 = arith.constant 0 : index
    %c0_420 = arith.constant 0 : index
    %925 = vector.load %arg53[%c0_419, %c0_420] : memref<1x128xf32, #tpu.memory_space<vmem>>, vector<1x128xf32>
    %c0_421 = arith.constant 0 : index
    %c0_422 = arith.constant 0 : index
    %926 = vector.load %arg54[%c0_421, %c0_422] : memref<1x128xf32, #tpu.memory_space<vmem>>, vector<1x128xf32>
    %cst_423 = arith.constant dense<0.000000e+00> : vector<16xf32>
    %927 = vector.multi_reduction <add>, %924, %cst_423 [1] : vector<16x128xf32> to vector<16xf32>
    %928 = vector.shape_cast %927 : vector<16xf32> to vector<16x1xf32>
    %cst_424 = arith.constant 1.280000e+02 : f32
    %929 = vector.broadcast %cst_424 : f32 to vector<16x1xf32>
    %930 = arith.divf %928, %929 : vector<16x1xf32>
    %931 = vector.broadcast %930 : vector<16x1xf32> to vector<16x128xf32>
    %932 = arith.subf %924, %931 : vector<16x128xf32>
    %933 = arith.mulf %932, %932 : vector<16x128xf32>
    %cst_425 = arith.constant dense<0.000000e+00> : vector<16xf32>
    %934 = vector.multi_reduction <add>, %933, %cst_425 [1] : vector<16x128xf32> to vector<16xf32>
    %935 = vector.shape_cast %934 : vector<16xf32> to vector<16x1xf32>
    %cst_426 = arith.constant 1.280000e+02 : f32
    %936 = vector.broadcast %cst_426 : f32 to vector<16x1xf32>
    %937 = arith.divf %935, %936 : vector<16x1xf32>
    %938 = vector.broadcast %930 : vector<16x1xf32> to vector<16x128xf32>
    %939 = arith.subf %924, %938 : vector<16x128xf32>
    %cst_427 = arith.constant 9.99999996E-13 : f32
    %940 = vector.broadcast %cst_427 : f32 to vector<16x1xf32>
    %941 = arith.addf %937, %940 : vector<16x1xf32>
    %942 = math.rsqrt %941 : vector<16x1xf32>
    %943 = vector.broadcast %942 : vector<16x1xf32> to vector<16x128xf32>
    %944 = arith.mulf %939, %943 : vector<16x128xf32>
    %945 = vector.broadcast %925 : vector<1x128xf32> to vector<16x128xf32>
    %946 = arith.mulf %944, %945 : vector<16x128xf32>
    %947 = vector.broadcast %926 : vector<1x128xf32> to vector<16x128xf32>
    %948 = arith.addf %946, %947 : vector<16x128xf32>
    %c0_428 = arith.constant 0 : index
    %c0_429 = arith.constant 0 : index
    %949 = vector.load %arg55[%c0_428, %c0_429] : memref<128x128xbf16, #tpu.memory_space<vmem>>, vector<128x128xbf16>
    %950 = arith.truncf %948 : vector<16x128xf32> to vector<16x128xbf16>
    %cst_430 = arith.constant dense<0.000000e+00> : vector<16x128xf32>
    %951 = tpu.matmul %950, %949, %cst_430 {dimension_numbers = #tpu.dot_dimension_numbers<[1], [0], [0], [1], [0, 0, 1, 1], [], []>} : vector<16x128xbf16>, vector<128x128xbf16>, vector<16x128xf32> -> vector<16x128xf32>
    %c0_431 = arith.constant 0 : index
    %c0_432 = arith.constant 0 : index
    %952 = vector.load %arg56[%c0_431, %c0_432] : memref<1x128xf32, #tpu.memory_space<vmem>>, vector<1x128xf32>
    %953 = vector.broadcast %952 : vector<1x128xf32> to vector<16x128xf32>
    %954 = arith.addf %951, %953 : vector<16x128xf32>
    %c0_433 = arith.constant 0 : index
    %c0_434 = arith.constant 0 : index
    %955 = vector.load %arg61[%c0_433, %c0_434] : memref<16x128xf32, #tpu.memory_space<vmem>>, vector<16x128xf32>
    tpu.vector_store %arg61[%c0_433, %c0_434], %954 {strides = array<i32>} : memref<16x128xf32, #tpu.memory_space<vmem>>, vector<16x128xf32>,
    %cst_435 = arith.constant dense<0xFF800000> : vector<16xf32>
    %956 = vector.multi_reduction <maximumf>, %954, %cst_435 [1] : vector<16x128xf32> to vector<16xf32>
    %957 = vector.shape_cast %956 : vector<16xf32> to vector<16x1xf32>
    %958 = vector.broadcast %957 : vector<16x1xf32> to vector<16x128xf32>
    %959 = arith.subf %954, %958 : vector<16x128xf32>
    %960 = math.exp %959 : vector<16x128xf32>
    %cst_436 = arith.constant dense<0.000000e+00> : vector<16xf32>
    %961 = vector.multi_reduction <add>, %960, %cst_436 [1] : vector<16x128xf32> to vector<16xf32>
    %962 = vector.shape_cast %961 : vector<16xf32> to vector<16x1xf32>
    %963 = math.log %962 : vector<16x1xf32>
    %964 = vector.broadcast %963 : vector<16x1xf32> to vector<16x128xf32>
    %965 = arith.subf %959, %964 : vector<16x128xf32>
    %c0_437 = arith.constant 0 : index
    %c0_438 = arith.constant 0 : index
    %966 = vector.load %arg19[%c0_437, %c0_438] : memref<16x1xi32, #tpu.memory_space<vmem>>, vector<16x1xi32>
    %c-100_i32 = arith.constant -100 : i32
    %967 = vector.broadcast %c-100_i32 : i32 to vector<16x1xi32>
    %968 = arith.cmpi ne, %966, %967 : vector<16x1xi32>
    %c0_i32 = arith.constant 0 : i32
    %969 = vector.broadcast %c0_i32 : i32 to vector<16x1xi32>
    %970 = arith.select %968, %966, %969 : vector<16x1xi1>, vector<16x1xi32>
    %971 = vector.broadcast %970 : vector<16x1xi32> to vector<16x128xi32>
    %972 = arith.cmpi eq, %361, %971 : vector<16x128xi32>
    %cst_439 = arith.constant 0.899999976 : f32
    %cst_440 = arith.constant 0.000000e+00 : f32
    %973 = vector.broadcast %cst_439 : f32 to vector<16x128xf32>
    %974 = vector.broadcast %cst_440 : f32 to vector<16x128xf32>
    %975 = arith.select %972, %973, %974 : vector<16x128xi1>, vector<16x128xf32>
    %cst_441 = arith.constant 7.812500e-04 : f32
    %976 = vector.broadcast %cst_441 : f32 to vector<16x128xf32>
    %977 = arith.addf %975, %976 : vector<16x128xf32>
    %978 = arith.mulf %977, %965 : vector<16x128xf32>
    %cst_442 = arith.constant dense<0.000000e+00> : vector<16xf32>
    %979 = vector.multi_reduction <add>, %978, %cst_442 [1] : vector<16x128xf32> to vector<16xf32>
    %980 = vector.shape_cast %979 : vector<16xf32> to vector<16x1xf32>
    %cst_443 = arith.constant 0.000000e+00 : f32
    %981 = vector.broadcast %cst_443 : f32 to vector<16x1xf32>
    %982 = arith.subf %981, %980 : vector<16x1xf32>
    %cst_444 = arith.constant 0.000000e+00 : f32
    %983 = vector.broadcast %cst_444 : f32 to vector<16x1xf32>
    %984 = arith.select %968, %982, %983 : vector<16x1xi1>, vector<16x1xf32>
    %985 = vector.shape_cast %984 : vector<16x1xf32> to vector<1x16x1xf32>
    %cst_445 = arith.constant dense<0.000000e+00> : vector<1xf32>
    %986 = vector.multi_reduction <add>, %985, %cst_445 [1, 2] : vector<1x16x1xf32> to vector<1xf32>
    %987 = vector.shape_cast %986 : vector<1xf32> to vector<1x1x1xf32>
    %988 = vector.extract %987[0, 0, 0] : f32 from vector<1x1x1xf32>
    %989 = arith.extui %968 : vector<16x1xi1> to vector<16x1xi32>
    %990 = arith.sitofp %989 : vector<16x1xi32> to vector<16x1xf32>
    %991 = vector.shape_cast %990 : vector<16x1xf32> to vector<1x16x1xf32>
    %cst_446 = arith.constant dense<0.000000e+00> : vector<1xf32>
    %992 = vector.multi_reduction <add>, %991, %cst_446 [1, 2] : vector<1x16x1xf32> to vector<1xf32>
    %993 = vector.shape_cast %992 : vector<1xf32> to vector<1x1x1xf32>
    %994 = vector.extract %993[0, 0, 0] : f32 from vector<1x1x1xf32>
    %cst_447 = arith.constant 1.000000e+00 : f32
    %995 = arith.maximumf %994, %cst_447 : f32
    %996 = arith.divf %988, %995 : f32
    %c0_448 = arith.constant 0 : index
    %997 = memref.load %arg62[%c0_448] : memref<2xf32, #tpu.memory_space<smem>>
    memref.store %996, %arg62[%c0_448] : memref<2xf32, #tpu.memory_space<smem>>
    %998 = vector.extract_strided_slice %902 {offsets = [0, 0], sizes = [1, 128], strides = [1, 1]} : vector<16x128xf32> to vector<1x128xf32>
    %999 = vector.extract_strided_slice %902 {offsets = [8, 0], sizes = [1, 128], strides = [1, 1]} : vector<16x128xf32> to vector<1x128xf32>
    %1000 = tpu.concatenate %998, %999 in 0 : vector<1x128xf32>, vector<1x128xf32> -> vector<2x128xf32>
    %c0_449 = arith.constant 0 : index
    %c0_450 = arith.constant 0 : index
    %1001 = vector.load %arg57[%c0_449, %c0_450] : memref<128x128xbf16, #tpu.memory_space<vmem>>, vector<128x128xbf16>
    %1002 = arith.truncf %1000 : vector<2x128xf32> to vector<2x128xbf16>
    %cst_451 = arith.constant dense<0.000000e+00> : vector<2x128xf32>
    %1003 = tpu.matmul %1002, %1001, %cst_451 {dimension_numbers = #tpu.dot_dimension_numbers<[1], [0], [0], [1], [0, 0, 1, 1], [], []>} : vector<2x128xbf16>, vector<128x128xbf16>, vector<2x128xf32> -> vector<2x128xf32>
    %c0_452 = arith.constant 0 : index
    %c0_453 = arith.constant 0 : index
    %1004 = vector.load %arg58[%c0_452, %c0_453] : memref<1x128xf32, #tpu.memory_space<vmem>>, vector<1x128xf32>
    %1005 = vector.broadcast %1004 : vector<1x128xf32> to vector<2x128xf32>
    %1006 = arith.addf %1003, %1005 : vector<2x128xf32>
    %1007 = arith.mulf %359, %359 : vector<2x128xf32>
    %cst_454 = arith.constant dense<0.000000e+00> : vector<2xf32>
    %1008 = vector.multi_reduction <add>, %1007, %cst_454 [1] : vector<2x128xf32> to vector<2xf32>
    %1009 = vector.shape_cast %1008 : vector<2xf32> to vector<2x1xf32>
    %1010 = math.sqrt %1009 : vector<2x1xf32>
    %cst_455 = arith.constant 1.000000e-10 : f32
    %1011 = vector.broadcast %cst_455 : f32 to vector<2x1xf32>
    %1012 = arith.addf %1010, %1011 : vector<2x1xf32>
    %1013 = vector.broadcast %1012 : vector<2x1xf32> to vector<2x128xf32>
    %1014 = arith.divf %359, %1013 : vector<2x128xf32>
    %1015 = arith.mulf %1006, %1006 : vector<2x128xf32>
    %cst_456 = arith.constant dense<0.000000e+00> : vector<2xf32>
    %1016 = vector.multi_reduction <add>, %1015, %cst_456 [1] : vector<2x128xf32> to vector<2xf32>
    %1017 = vector.shape_cast %1016 : vector<2xf32> to vector<2x1xf32>
    %1018 = math.sqrt %1017 : vector<2x1xf32>
    %cst_457 = arith.constant 1.000000e-10 : f32
    %1019 = vector.broadcast %cst_457 : f32 to vector<2x1xf32>
    %1020 = arith.addf %1018, %1019 : vector<2x1xf32>
    %1021 = vector.broadcast %1020 : vector<2x1xf32> to vector<2x128xf32>
    %1022 = arith.divf %1006, %1021 : vector<2x128xf32>
    %1023 = arith.mulf %1014, %1022 : vector<2x128xf32>
    %cst_458 = arith.constant dense<0.000000e+00> : vector<2xf32>
    %1024 = vector.multi_reduction <add>, %1023, %cst_458 [1] : vector<2x128xf32> to vector<2xf32>
    %1025 = vector.shape_cast %1024 : vector<2xf32> to vector<2x1xf32>
    %1026 = arith.mulf %1014, %1014 : vector<2x128xf32>
    %cst_459 = arith.constant dense<0.000000e+00> : vector<2xf32>
    %1027 = vector.multi_reduction <add>, %1026, %cst_459 [1] : vector<2x128xf32> to vector<2xf32>
    %1028 = vector.shape_cast %1027 : vector<2xf32> to vector<2x1xf32>
    %1029 = math.sqrt %1028 : vector<2x1xf32>
    %1030 = arith.mulf %1022, %1022 : vector<2x128xf32>
    %cst_460 = arith.constant dense<0.000000e+00> : vector<2xf32>
    %1031 = vector.multi_reduction <add>, %1030, %cst_460 [1] : vector<2x128xf32> to vector<2xf32>
    %1032 = vector.shape_cast %1031 : vector<2xf32> to vector<2x1xf32>
    %1033 = math.sqrt %1032 : vector<2x1xf32>
    %1034 = arith.mulf %1029, %1033 : vector<2x1xf32>
    %cst_461 = arith.constant 9.99999993E-9 : f32
    %1035 = vector.broadcast %cst_461 : f32 to vector<2x1xf32>
    %1036 = arith.maximumf %1034, %1035 : vector<2x1xf32>
    %1037 = arith.divf %1025, %1036 : vector<2x1xf32>
    %cst_462 = arith.constant 1.000000e+00 : f32
    %1038 = vector.broadcast %cst_462 : f32 to vector<2x1xf32>
    %1039 = arith.subf %1038, %1037 : vector<2x1xf32>
    %1040 = vector.shape_cast %1039 : vector<2x1xf32> to vector<1x2x1xf32>
    %cst_463 = arith.constant dense<0.000000e+00> : vector<1xf32>
    %1041 = vector.multi_reduction <add>, %1040, %cst_463 [1, 2] : vector<1x2x1xf32> to vector<1xf32>
    %1042 = vector.shape_cast %1041 : vector<1xf32> to vector<1x1x1xf32>
    %1043 = vector.extract %1042[0, 0, 0] : f32 from vector<1x1x1xf32>
    %cst_464 = arith.constant 2.000000e+00 : f32
    %1044 = arith.divf %1043, %cst_464 : f32
    %c1_465 = arith.constant 1 : index
    %1045 = memref.load %arg62[%c1_465] : memref<2xf32, #tpu.memory_space<smem>>
    memref.store %1044, %arg62[%c1_465] : memref<2xf32, #tpu.memory_space<smem>>
    return
  }
}

</mosaic_0001>

<llo_original>
// kernel: blip_decoder_forward.1
$region0: #{blip_decoder_forward.1}
  #allocation0 [shape = 'u32[]', space=smem, size = 0x4, offset = 0x4, fixed_abs, tag = 'smem constant byte address 0x4 - core index']
  #allocation1 [shape = 'u32[144,128]{1,0:T(1,128)}', space=vmem, size = 0x12000, scoped, tag = 'internal scratch']
  %s0 = inlined_call_operand.smem [shape: u32[63], index: -1, kind: input, shape index: {}]
  %s1 = sld [smem:[%s0]]
  %s2 = scalar_lea.smem %s0, 1
  %s3 = sld [smem:[%s2]]
  %s4 = scalar_lea.smem %s0, 2
  %s5 = sld [smem:[%s4]]
  %s6 = scalar_lea.smem %s0, 3
  %s7 = sld [smem:[%s6]]
  %s8 = scalar_lea.smem %s0, 4
  %s9 = sld [smem:[%s8]]
  %s10 = scalar_lea.smem %s0, 5
  %s11 = sld [smem:[%s10]]
  %s12 = scalar_lea.smem %s0, 6
  %s13 = sld [smem:[%s12]]
  %s14 = scalar_lea.smem %s0, 7
  %s15 = sld [smem:[%s14]]
  %s16 = scalar_lea.smem %s0, 8
  %s17 = sld [smem:[%s16]]
  %s18 = scalar_lea.smem %s0, 9
  %s19 = sld [smem:[%s18]]
  %s20 = scalar_lea.smem %s0, 10
  %s21 = sld [smem:[%s20]]
  %s22 = scalar_lea.smem %s0, 11
  %s23 = sld [smem:[%s22]]
  %s24 = scalar_lea.smem %s0, 12
  %s25 = sld [smem:[%s24]]
  %s26 = scalar_lea.smem %s0, 13
  %s27 = sld [smem:[%s26]]
  %s28 = scalar_lea.smem %s0, 14
  %s29 = sld [smem:[%s28]]
  %s30 = scalar_lea.smem %s0, 15
  %s31 = sld [smem:[%s30]]
  %s32 = scalar_lea.smem %s0, 16
  %s33 = sld [smem:[%s32]]
  %s34 = scalar_lea.smem %s0, 17
  %s35 = sld [smem:[%s34]]
  %s36 = scalar_lea.smem %s0, 18
  %s37 = sld [smem:[%s36]]
  %s38 = scalar_lea.smem %s0, 19
  %s39 = sld [smem:[%s38]]
  %s40 = scalar_lea.smem %s0, 20
  %s41 = sld [smem:[%s40]]
  %s42 = scalar_lea.smem %s0, 21
  %s43 = sld [smem:[%s42]]
  %s44 = scalar_lea.smem %s0, 22
  %s45 = sld [smem:[%s44]]
  %s46 = scalar_lea.smem %s0, 23
  %s47 = sld [smem:[%s46]]
  %s48 = scalar_lea.smem %s0, 24
  %s49 = sld [smem:[%s48]]
  %s50 = scalar_lea.smem %s0, 25
  %s51 = sld [smem:[%s50]]
  %s52 = scalar_lea.smem %s0, 26
  %s53 = sld [smem:[%s52]]
  %s54 = scalar_lea.smem %s0, 27
  %s55 = sld [smem:[%s54]]
  %s56 = scalar_lea.smem %s0, 28
  %s57 = sld [smem:[%s56]]
  %s58 = scalar_lea.smem %s0, 29
  %s59 = sld [smem:[%s58]]
  %s60 = scalar_lea.smem %s0, 30
  %s61 = sld [smem:[%s60]]
  %s62 = scalar_lea.smem %s0, 31
  %s63 = sld [smem:[%s62]]
  %s64 = scalar_lea.smem %s0, 32
  %s65 = sld [smem:[%s64]]
  %s66 = scalar_lea.smem %s0, 33
  %s67 = sld [smem:[%s66]]
  %s68 = scalar_lea.smem %s0, 34
  %s69 = sld [smem:[%s68]]
  %s70 = scalar_lea.smem %s0, 35
  %s71 = sld [smem:[%s70]]
  %s72 = scalar_lea.smem %s0, 36
  %s73 = sld [smem:[%s72]]
  %s74 = scalar_lea.smem %s0, 37
  %s75 = sld [smem:[%s74]]
  %s76 = scalar_lea.smem %s0, 38
  %s77 = sld [smem:[%s76]]
  %s78 = scalar_lea.smem %s0, 39
  %s79 = sld [smem:[%s78]]
  %s80 = scalar_lea.smem %s0, 40
  %s81 = sld [smem:[%s80]]
  %s82 = scalar_lea.smem %s0, 41
  %s83 = sld [smem:[%s82]]
  %s84 = scalar_lea.smem %s0, 42
  %s85 = sld [smem:[%s84]]
  %s86 = scalar_lea.smem %s0, 43
  %s87 = sld [smem:[%s86]]
  %s88 = scalar_lea.smem %s0, 44
  %s89 = sld [smem:[%s88]]
  %s90 = scalar_lea.smem %s0, 45
  %s91 = sld [smem:[%s90]]
  %s92 = scalar_lea.smem %s0, 46
  %s93 = sld [smem:[%s92]]
  %s94 = scalar_lea.smem %s0, 47
  %s95 = sld [smem:[%s94]]
  %s96 = scalar_lea.smem %s0, 48
  %s97 = sld [smem:[%s96]]
  %s98 = scalar_lea.smem %s0, 49
  %s99 = sld [smem:[%s98]]
  %s100 = scalar_lea.smem %s0, 50
  %s101 = sld [smem:[%s100]]
  %s102 = scalar_lea.smem %s0, 51
  %s103 = sld [smem:[%s102]]
  %s104 = scalar_lea.smem %s0, 52
  %s105 = sld [smem:[%s104]]
  %s106 = scalar_lea.smem %s0, 53
  %s107 = sld [smem:[%s106]]
  %s108 = scalar_lea.smem %s0, 54
  %s109 = sld [smem:[%s108]]
  %s110 = scalar_lea.smem %s0, 55
  %s111 = sld [smem:[%s110]]
  %s112 = scalar_lea.smem %s0, 56
  %s113 = sld [smem:[%s112]]
  %s114 = scalar_lea.smem %s0, 57
  %s115 = sld [smem:[%s114]]
  %s116 = scalar_lea.smem %s0, 58
  %s117 = sld [smem:[%s116]]
  %s118 = scalar_lea.smem %s0, 59
  %s119 = sld [smem:[%s118]]
  %s120 = scalar_lea.smem %s0, 60
  %s121 = sld [smem:[%s120]]
  %s122 = scalar_lea.smem %s0, 61
  %s123 = sld [smem:[%s122]]
  %s124 = scalar_lea.smem %s0, 62
  %s125 = sld [smem:[%s124]]
  %126 = xla_tuple %s119, %s121, %s123, %s125
  %s127 = sld [smem:[#allocation0]]
  $region270: #{blip_decoder_forward.1} parent=0
    _
  %s129 = ssub.s32 1, %s127
  %s130 = scalar_select 0, %s129, %s127
  $region1: #{blip_decoder_forward.1} parent=0
    #allocation2 [shape = 'u8[16384]{0}', space=vmem, size = 0x4000, scoped, tag = 'output window, operand 1, single buffered']
    #allocation3 [shape = 's32[1]{0}', space=sflag, size = 0x4, scoped, tag = 'scoped memory for blip_decoder_forward.1']
    #allocation4 [shape = 's32[1]{0}', space=sflag, size = 0x4, scoped, tag = 'scoped memory for blip_decoder_forward.1']
    #allocation5 [shape = 'u8[8192]{0}', space=vmem, size = 0x2000, scoped, tag = 'output window, operand 2, single buffered']
    #allocation6 [shape = 's32[1]{0}', space=sflag, size = 0x4, scoped, tag = 'scoped memory for blip_decoder_forward.1']
    #allocation7 [shape = 'u8[512]{0}', space=smem, size = 0x200, scoped, tag = 'output window, operand 3, single buffered']
    %131 = vsyncpa [#allocation3], 0
    %132 = vsyncpa [#allocation6], 0
    %133 = vsyncpa [#allocation4], 0
    // Predicated region
    $region2: #{blip_decoder_forward.1} parent=1 // pred_check
      _
    $region3: #{blip_decoder_forward.1} parent=1 // pred_check_branch
      %135 = sbr.rel (0) target = $region5
    $region4: #{blip_decoder_forward.1} parent=1 // pred_region
      _
    $region5: #{blip_decoder_forward.1} parent=1 // pred_fallthru
      _
    // Predicated region
    $region6: #{blip_decoder_forward.1} parent=1 // pred_check
      _
    $region7: #{blip_decoder_forward.1} parent=1 // pred_check_branch
      %137 = sbr.rel (0) target = $region9
    $region8: #{blip_decoder_forward.1} parent=1 // pred_region
      _
    $region9: #{blip_decoder_forward.1} parent=1 // pred_fallthru
      _
    // Predicated region
    $region10: #{blip_decoder_forward.1} parent=1 // pred_check
      _
    $region11: #{blip_decoder_forward.1} parent=1 // pred_check_branch
      %139 = sbr.rel (0) target = $region13
    $region12: #{blip_decoder_forward.1} parent=1 // pred_region
      _
    $region13: #{blip_decoder_forward.1} parent=1 // pred_fallthru
      _
    // Predicated region
    $region14: #{blip_decoder_forward.1} parent=1 // pred_check
      _
    $region15: #{blip_decoder_forward.1} parent=1 // pred_check_branch
      %141 = sbr.rel (0) target = $region17
    $region16: #{blip_decoder_forward.1} parent=1 // pred_region
      _
    $region17: #{blip_decoder_forward.1} parent=1 // pred_fallthru
      _
    // Predicated region
    $region18: #{blip_decoder_forward.1} parent=1 // pred_check
      _
    $region19: #{blip_decoder_forward.1} parent=1 // pred_check_branch
      %143 = sbr.rel (0) target = $region21
    $region20: #{blip_decoder_forward.1} parent=1 // pred_region
      _
    $region21: #{blip_decoder_forward.1} parent=1 // pred_fallthru
      _
    // Predicated region
    $region22: #{blip_decoder_forward.1} parent=1 // pred_check
      _
    $region23: #{blip_decoder_forward.1} parent=1 // pred_check_branch
      %145 = sbr.rel (0) target = $region25
    $region24: #{blip_decoder_forward.1} parent=1 // pred_region
      _
    $region25: #{blip_decoder_forward.1} parent=1 // pred_fallthru
      _
    // Predicated region
    $region26: #{blip_decoder_forward.1} parent=1 // pred_check
      _
    $region27: #{blip_decoder_forward.1} parent=1 // pred_check_branch
      %147 = sbr.rel (0) target = $region29
    $region28: #{blip_decoder_forward.1} parent=1 // pred_region
      _
    $region29: #{blip_decoder_forward.1} parent=1 // pred_fallthru
      _
    // Predicated region
    $region30: #{blip_decoder_forward.1} parent=1 // pred_check
      _
    $region31: #{blip_decoder_forward.1} parent=1 // pred_check_branch
      %149 = sbr.rel (0) target = $region33
    $region32: #{blip_decoder_forward.1} parent=1 // pred_region
      _
    $region33: #{blip_decoder_forward.1} parent=1 // pred_fallthru
      _
    // Predicated region
    $region34: #{blip_decoder_forward.1} parent=1 // pred_check
      _
    $region35: #{blip_decoder_forward.1} parent=1 // pred_check_branch
      %151 = sbr.rel (0) target = $region37
    $region36: #{blip_decoder_forward.1} parent=1 // pred_region
      _
    $region37: #{blip_decoder_forward.1} parent=1 // pred_fallthru
      _
    // Predicated region
    $region38: #{blip_decoder_forward.1} parent=1 // pred_check
      _
    $region39: #{blip_decoder_forward.1} parent=1 // pred_check_branch
      %153 = sbr.rel (0) target = $region41
    $region40: #{blip_decoder_forward.1} parent=1 // pred_region
      _
    $region41: #{blip_decoder_forward.1} parent=1 // pred_fallthru
      _
    // Predicated region
    $region42: #{blip_decoder_forward.1} parent=1 // pred_check
      _
    $region43: #{blip_decoder_forward.1} parent=1 // pred_check_branch
      %155 = sbr.rel (0) target = $region45
    $region44: #{blip_decoder_forward.1} parent=1 // pred_region
      _
    $region45: #{blip_decoder_forward.1} parent=1 // pred_fallthru
      _
    // Predicated region
    $region46: #{blip_decoder_forward.1} parent=1 // pred_check
      _
    $region47: #{blip_decoder_forward.1} parent=1 // pred_check_branch
      %157 = sbr.rel (0) target = $region49
    $region48: #{blip_decoder_forward.1} parent=1 // pred_region
      _
    $region49: #{blip_decoder_forward.1} parent=1 // pred_fallthru
      _
    // Predicated region
    $region50: #{blip_decoder_forward.1} parent=1 // pred_check
      _
    $region51: #{blip_decoder_forward.1} parent=1 // pred_check_branch
      %159 = sbr.rel (0) target = $region53
    $region52: #{blip_decoder_forward.1} parent=1 // pred_region
      _
    $region53: #{blip_decoder_forward.1} parent=1 // pred_fallthru
      _
    // Predicated region
    $region54: #{blip_decoder_forward.1} parent=1 // pred_check
      _
    $region55: #{blip_decoder_forward.1} parent=1 // pred_check_branch
      %161 = sbr.rel (0) target = $region57
    $region56: #{blip_decoder_forward.1} parent=1 // pred_region
      _
    $region57: #{blip_decoder_forward.1} parent=1 // pred_fallthru
      _
    // Predicated region
    $region58: #{blip_decoder_forward.1} parent=1 // pred_check
      _
    $region59: #{blip_decoder_forward.1} parent=1 // pred_check_branch
      %163 = sbr.rel (0) target = $region61
    $region60: #{blip_decoder_forward.1} parent=1 // pred_region
      _
    $region61: #{blip_decoder_forward.1} parent=1 // pred_fallthru
      _
    // Predicated region
    $region62: #{blip_decoder_forward.1} parent=1 // pred_check
      _
    $region63: #{blip_decoder_forward.1} parent=1 // pred_check_branch
      %165 = sbr.rel (0) target = $region65
    $region64: #{blip_decoder_forward.1} parent=1 // pred_region
      _
    $region65: #{blip_decoder_forward.1} parent=1 // pred_fallthru
      _
    // Predicated region
    $region66: #{blip_decoder_forward.1} parent=1 // pred_check
      _
    $region67: #{blip_decoder_forward.1} parent=1 // pred_check_branch
      %167 = sbr.rel (0) target = $region69
    $region68: #{blip_decoder_forward.1} parent=1 // pred_region
      _
    $region69: #{blip_decoder_forward.1} parent=1 // pred_fallthru
      _
    // Predicated region
    $region70: #{blip_decoder_forward.1} parent=1 // pred_check
      _
    $region71: #{blip_decoder_forward.1} parent=1 // pred_check_branch
      %169 = sbr.rel (0) target = $region73
    $region72: #{blip_decoder_forward.1} parent=1 // pred_region
      _
    $region73: #{blip_decoder_forward.1} parent=1 // pred_fallthru
      _
    // Predicated region
    $region74: #{blip_decoder_forward.1} parent=1 // pred_check
      _
    $region75: #{blip_decoder_forward.1} parent=1 // pred_check_branch
      %171 = sbr.rel (0) target = $region77
    $region76: #{blip_decoder_forward.1} parent=1 // pred_region
      _
    $region77: #{blip_decoder_forward.1} parent=1 // pred_fallthru
      _
    // Predicated region
    $region78: #{blip_decoder_forward.1} parent=1 // pred_check
      _
    $region79: #{blip_decoder_forward.1} parent=1 // pred_check_branch
      %173 = sbr.rel (0) target = $region81
    $region80: #{blip_decoder_forward.1} parent=1 // pred_region
      _
    $region81: #{blip_decoder_forward.1} parent=1 // pred_fallthru
      _
    // Predicated region
    $region82: #{blip_decoder_forward.1} parent=1 // pred_check
      _
    $region83: #{blip_decoder_forward.1} parent=1 // pred_check_branch
      %175 = sbr.rel (0) target = $region85
    $region84: #{blip_decoder_forward.1} parent=1 // pred_region
      _
    $region85: #{blip_decoder_forward.1} parent=1 // pred_fallthru
      _
    // Predicated region
    $region86: #{blip_decoder_forward.1} parent=1 // pred_check
      _
    $region87: #{blip_decoder_forward.1} parent=1 // pred_check_branch
      %177 = sbr.rel (0) target = $region89
    $region88: #{blip_decoder_forward.1} parent=1 // pred_region
      _
    $region89: #{blip_decoder_forward.1} parent=1 // pred_fallthru
      _
    // Predicated region
    $region90: #{blip_decoder_forward.1} parent=1 // pred_check
      _
    $region91: #{blip_decoder_forward.1} parent=1 // pred_check_branch
      %179 = sbr.rel (0) target = $region93
    $region92: #{blip_decoder_forward.1} parent=1 // pred_region
      _
    $region93: #{blip_decoder_forward.1} parent=1 // pred_fallthru
      _
    // Predicated region
    $region94: #{blip_decoder_forward.1} parent=1 // pred_check
      _
    $region95: #{blip_decoder_forward.1} parent=1 // pred_check_branch
      %181 = sbr.rel (0) target = $region97
    $region96: #{blip_decoder_forward.1} parent=1 // pred_region
      _
    $region97: #{blip_decoder_forward.1} parent=1 // pred_fallthru
      _
    // Predicated region
    $region98: #{blip_decoder_forward.1} parent=1 // pred_check
      _
    $region99: #{blip_decoder_forward.1} parent=1 // pred_check_branch
      %183 = sbr.rel (0) target = $region101
    $region100: #{blip_decoder_forward.1} parent=1 // pred_region
      _
    $region101: #{blip_decoder_forward.1} parent=1 // pred_fallthru
      _
    // Predicated region
    $region102: #{blip_decoder_forward.1} parent=1 // pred_check
      _
    $region103: #{blip_decoder_forward.1} parent=1 // pred_check_branch
      %185 = sbr.rel (0) target = $region105
    $region104: #{blip_decoder_forward.1} parent=1 // pred_region
      _
    $region105: #{blip_decoder_forward.1} parent=1 // pred_fallthru
      _
    // Predicated region
    $region106: #{blip_decoder_forward.1} parent=1 // pred_check
      _
    $region107: #{blip_decoder_forward.1} parent=1 // pred_check_branch
      %187 = sbr.rel (0) target = $region109
    $region108: #{blip_decoder_forward.1} parent=1 // pred_region
      _
    $region109: #{blip_decoder_forward.1} parent=1 // pred_fallthru
      _
    // Predicated region
    $region110: #{blip_decoder_forward.1} parent=1 // pred_check
      _
    $region111: #{blip_decoder_forward.1} parent=1 // pred_check_branch
      %189 = sbr.rel (0) target = $region113
    $region112: #{blip_decoder_forward.1} parent=1 // pred_region
      _
    $region113: #{blip_decoder_forward.1} parent=1 // pred_fallthru
      _
    // Predicated region
    $region114: #{blip_decoder_forward.1} parent=1 // pred_check
      _
    $region115: #{blip_decoder_forward.1} parent=1 // pred_check_branch
      %191 = sbr.rel (0) target = $region117
    $region116: #{blip_decoder_forward.1} parent=1 // pred_region
      _
    $region117: #{blip_decoder_forward.1} parent=1 // pred_fallthru
      _
    // Predicated region
    $region118: #{blip_decoder_forward.1} parent=1 // pred_check
      _
    $region119: #{blip_decoder_forward.1} parent=1 // pred_check_branch
      %193 = sbr.rel (0) target = $region121
    $region120: #{blip_decoder_forward.1} parent=1 // pred_region
      _
    $region121: #{blip_decoder_forward.1} parent=1 // pred_fallthru
      _
    // Predicated region
    $region122: #{blip_decoder_forward.1} parent=1 // pred_check
      _
    $region123: #{blip_decoder_forward.1} parent=1 // pred_check_branch
      %195 = sbr.rel (0) target = $region125
    $region124: #{blip_decoder_forward.1} parent=1 // pred_region
      _
    $region125: #{blip_decoder_forward.1} parent=1 // pred_fallthru
      _
    // Predicated region
    $region126: #{blip_decoder_forward.1} parent=1 // pred_check
      _
    $region127: #{blip_decoder_forward.1} parent=1 // pred_check_branch
      %197 = sbr.rel (0) target = $region129
    $region128: #{blip_decoder_forward.1} parent=1 // pred_region
      _
    $region129: #{blip_decoder_forward.1} parent=1 // pred_fallthru
      _
    // Predicated region
    $region130: #{blip_decoder_forward.1} parent=1 // pred_check
      _
    $region131: #{blip_decoder_forward.1} parent=1 // pred_check_branch
      %199 = sbr.rel (0) target = $region133
    $region132: #{blip_decoder_forward.1} parent=1 // pred_region
      _
    $region133: #{blip_decoder_forward.1} parent=1 // pred_fallthru
      _
    // Predicated region
    $region134: #{blip_decoder_forward.1} parent=1 // pred_check
      _
    $region135: #{blip_decoder_forward.1} parent=1 // pred_check_branch
      %201 = sbr.rel (0) target = $region137
    $region136: #{blip_decoder_forward.1} parent=1 // pred_region
      _
    $region137: #{blip_decoder_forward.1} parent=1 // pred_fallthru
      _
    // Predicated region
    $region138: #{blip_decoder_forward.1} parent=1 // pred_check
      _
    $region139: #{blip_decoder_forward.1} parent=1 // pred_check_branch
      %203 = sbr.rel (0) target = $region141
    $region140: #{blip_decoder_forward.1} parent=1 // pred_region
      _
    $region141: #{blip_decoder_forward.1} parent=1 // pred_fallthru
      _
    // Predicated region
    $region142: #{blip_decoder_forward.1} parent=1 // pred_check
      _
    $region143: #{blip_decoder_forward.1} parent=1 // pred_check_branch
      %205 = sbr.rel (0) target = $region145
    $region144: #{blip_decoder_forward.1} parent=1 // pred_region
      _
    $region145: #{blip_decoder_forward.1} parent=1 // pred_fallthru
      _
    // Predicated region
    $region146: #{blip_decoder_forward.1} parent=1 // pred_check
      _
    $region147: #{blip_decoder_forward.1} parent=1 // pred_check_branch
      %207 = sbr.rel (0) target = $region149
    $region148: #{blip_decoder_forward.1} parent=1 // pred_region
      _
    $region149: #{blip_decoder_forward.1} parent=1 // pred_fallthru
      _
    // Predicated region
    $region150: #{blip_decoder_forward.1} parent=1 // pred_check
      _
    $region151: #{blip_decoder_forward.1} parent=1 // pred_check_branch
      %209 = sbr.rel (0) target = $region153
    $region152: #{blip_decoder_forward.1} parent=1 // pred_region
      _
    $region153: #{blip_decoder_forward.1} parent=1 // pred_fallthru
      _
    // Predicated region
    $region154: #{blip_decoder_forward.1} parent=1 // pred_check
      _
    $region155: #{blip_decoder_forward.1} parent=1 // pred_check_branch
      %211 = sbr.rel (0) target = $region157
    $region156: #{blip_decoder_forward.1} parent=1 // pred_region
      _
    $region157: #{blip_decoder_forward.1} parent=1 // pred_fallthru
      _
    // Predicated region
    $region158: #{blip_decoder_forward.1} parent=1 // pred_check
      _
    $region159: #{blip_decoder_forward.1} parent=1 // pred_check_branch
      %213 = sbr.rel (0) target = $region161
    $region160: #{blip_decoder_forward.1} parent=1 // pred_region
      _
    $region161: #{blip_decoder_forward.1} parent=1 // pred_fallthru
      _
    // Predicated region
    $region162: #{blip_decoder_forward.1} parent=1 // pred_check
      _
    $region163: #{blip_decoder_forward.1} parent=1 // pred_check_branch
      %215 = sbr.rel (0) target = $region165
    $region164: #{blip_decoder_forward.1} parent=1 // pred_region
      _
    $region165: #{blip_decoder_forward.1} parent=1 // pred_fallthru
      _
    // Predicated region
    $region166: #{blip_decoder_forward.1} parent=1 // pred_check
      _
    $region167: #{blip_decoder_forward.1} parent=1 // pred_check_branch
      %217 = sbr.rel (0) target = $region169
    $region168: #{blip_decoder_forward.1} parent=1 // pred_region
      _
    $region169: #{blip_decoder_forward.1} parent=1 // pred_fallthru
      _
    // Predicated region
    $region170: #{blip_decoder_forward.1} parent=1 // pred_check
      _
    $region171: #{blip_decoder_forward.1} parent=1 // pred_check_branch
      %219 = sbr.rel (0) target = $region173
    $region172: #{blip_decoder_forward.1} parent=1 // pred_region
      _
    $region173: #{blip_decoder_forward.1} parent=1 // pred_fallthru
      _
    // Predicated region
    $region174: #{blip_decoder_forward.1} parent=1 // pred_check
      _
    $region175: #{blip_decoder_forward.1} parent=1 // pred_check_branch
      %221 = sbr.rel (0) target = $region177
    $region176: #{blip_decoder_forward.1} parent=1 // pred_region
      _
    $region177: #{blip_decoder_forward.1} parent=1 // pred_fallthru
      _
    // Predicated region
    $region178: #{blip_decoder_forward.1} parent=1 // pred_check
      _
    $region179: #{blip_decoder_forward.1} parent=1 // pred_check_branch
      %223 = sbr.rel (0) target = $region181
    $region180: #{blip_decoder_forward.1} parent=1 // pred_region
      _
    $region181: #{blip_decoder_forward.1} parent=1 // pred_fallthru
      _
    // Predicated region
    $region182: #{blip_decoder_forward.1} parent=1 // pred_check
      _
    $region183: #{blip_decoder_forward.1} parent=1 // pred_check_branch
      %225 = sbr.rel (0) target = $region185
    $region184: #{blip_decoder_forward.1} parent=1 // pred_region
      _
    $region185: #{blip_decoder_forward.1} parent=1 // pred_fallthru
      _
    // Predicated region
    $region186: #{blip_decoder_forward.1} parent=1 // pred_check
      _
    $region187: #{blip_decoder_forward.1} parent=1 // pred_check_branch
      %227 = sbr.rel (0) target = $region189
    $region188: #{blip_decoder_forward.1} parent=1 // pred_region
      _
    $region189: #{blip_decoder_forward.1} parent=1 // pred_fallthru
      _
    // Predicated region
    $region190: #{blip_decoder_forward.1} parent=1 // pred_check
      _
    $region191: #{blip_decoder_forward.1} parent=1 // pred_check_branch
      %229 = sbr.rel (0) target = $region193
    $region192: #{blip_decoder_forward.1} parent=1 // pred_region
      _
    $region193: #{blip_decoder_forward.1} parent=1 // pred_fallthru
      _
    // Predicated region
    $region194: #{blip_decoder_forward.1} parent=1 // pred_check
      _
    $region195: #{blip_decoder_forward.1} parent=1 // pred_check_branch
      %231 = sbr.rel (0) target = $region197
    $region196: #{blip_decoder_forward.1} parent=1 // pred_region
      _
    $region197: #{blip_decoder_forward.1} parent=1 // pred_fallthru
      _
    // Predicated region
    $region198: #{blip_decoder_forward.1} parent=1 // pred_check
      _
    $region199: #{blip_decoder_forward.1} parent=1 // pred_check_branch
      %233 = sbr.rel (0) target = $region201
    $region200: #{blip_decoder_forward.1} parent=1 // pred_region
      _
    $region201: #{blip_decoder_forward.1} parent=1 // pred_fallthru
      _
    // Predicated region
    $region202: #{blip_decoder_forward.1} parent=1 // pred_check
      _
    $region203: #{blip_decoder_forward.1} parent=1 // pred_check_branch
      %235 = sbr.rel (0) target = $region205
    $region204: #{blip_decoder_forward.1} parent=1 // pred_region
      _
    $region205: #{blip_decoder_forward.1} parent=1 // pred_fallthru
      _
    // Predicated region
    $region206: #{blip_decoder_forward.1} parent=1 // pred_check
      _
    $region207: #{blip_decoder_forward.1} parent=1 // pred_check_branch
      %237 = sbr.rel (0) target = $region209
    $region208: #{blip_decoder_forward.1} parent=1 // pred_region
      _
    $region209: #{blip_decoder_forward.1} parent=1 // pred_fallthru
      _
    // Predicated region
    $region210: #{blip_decoder_forward.1} parent=1 // pred_check
      _
    $region211: #{blip_decoder_forward.1} parent=1 // pred_check_branch
      %239 = sbr.rel (0) target = $region213
    $region212: #{blip_decoder_forward.1} parent=1 // pred_region
      _
    $region213: #{blip_decoder_forward.1} parent=1 // pred_fallthru
      _
    // Predicated region
    $region214: #{blip_decoder_forward.1} parent=1 // pred_check
      _
    $region215: #{blip_decoder_forward.1} parent=1 // pred_check_branch
      %241 = sbr.rel (0) target = $region217
    $region216: #{blip_decoder_forward.1} parent=1 // pred_region
      _
    $region217: #{blip_decoder_forward.1} parent=1 // pred_fallthru
      _
    // Predicated region
    $region218: #{blip_decoder_forward.1} parent=1 // pred_check
      _
    $region219: #{blip_decoder_forward.1} parent=1 // pred_check_branch
      %243 = sbr.rel (0) target = $region221
    $region220: #{blip_decoder_forward.1} parent=1 // pred_region
      _
    $region221: #{blip_decoder_forward.1} parent=1 // pred_fallthru
      _
    // Predicated region
    $region222: #{blip_decoder_forward.1} parent=1 // pred_check
      _
    $region223: #{blip_decoder_forward.1} parent=1 // pred_check_branch
      %245 = sbr.rel (0) target = $region225
    $region224: #{blip_decoder_forward.1} parent=1 // pred_region
      _
    $region225: #{blip_decoder_forward.1} parent=1 // pred_fallthru
      _
    // Predicated region
    $region226: #{blip_decoder_forward.1} parent=1 // pred_check
      _
    $region227: #{blip_decoder_forward.1} parent=1 // pred_check_branch
      %247 = sbr.rel (0) target = $region229
    $region228: #{blip_decoder_forward.1} parent=1 // pred_region
      _
    $region229: #{blip_decoder_forward.1} parent=1 // pred_fallthru
      _
    // Predicated region
    $region230: #{blip_decoder_forward.1} parent=1 // pred_check
      _
    $region231: #{blip_decoder_forward.1} parent=1 // pred_check_branch
      %249 = sbr.rel (0) target = $region233
    $region232: #{blip_decoder_forward.1} parent=1 // pred_region
      _
    $region233: #{blip_decoder_forward.1} parent=1 // pred_fallthru
      _
    // Predicated region
    $region234: #{blip_decoder_forward.1} parent=1 // pred_check
      _
    $region235: #{blip_decoder_forward.1} parent=1 // pred_check_branch
      %251 = sbr.rel (0) target = $region237
    $region236: #{blip_decoder_forward.1} parent=1 // pred_region
      _
    $region237: #{blip_decoder_forward.1} parent=1 // pred_fallthru
      _
    %v253 = vlaneseq
    %v254 = vshrl.u32 %v253, 7
    %v255 = vadd.s32 %v254, 8
    %v256 = vadd.s32 %v254, 16
    %v257 = vadd.s32 %v254, 24
    %v258 = vadd.s32 %v254, 32
    %v259 = vadd.s32 %v254, 40
    %v260 = vadd.s32 %v254, 48
    %v261 = vadd.s32 %v254, 56
    %v262 = vlaneseq
    %v263 = vand.u32 %v262, 127
    %v264 = vand.u32 %v254, 7
    %v265 = vand.u32 %v255, 7
    %v266 = vand.u32 %v256, 7
    %v267 = vand.u32 %v257, 7
    %v268 = vand.u32 %v258, 7
    %v269 = vand.u32 %v259, 7
    %v270 = vand.u32 %v260, 7
    %v271 = vand.u32 %v261, 7
    %v272 = vand.u32 %v263, 7
    %v273 = vsub.s32 %v254, %v264
    %v274 = vsub.s32 %v255, %v265
    %v275 = vsub.s32 %v256, %v266
    %v276 = vsub.s32 %v257, %v267
    %v277 = vsub.s32 %v258, %v268
    %v278 = vsub.s32 %v259, %v269
    %v279 = vsub.s32 %v260, %v270
    %v280 = vsub.s32 %v261, %v271
    %v281 = vsub.s32 %v263, %v272
    %vm282 = vcmp.eq.s32.totalorder %v273, %v281
    %vm283 = vcmp.eq.s32.totalorder %v274, %v281
    %vm284 = vcmp.eq.s32.totalorder %v275, %v281
    %vm285 = vcmp.eq.s32.totalorder %v276, %v281
    %vm286 = vcmp.eq.s32.totalorder %v277, %v281
    %vm287 = vcmp.eq.s32.totalorder %v278, %v281
    %vm288 = vcmp.eq.s32.totalorder %v279, %v281
    %vm289 = vcmp.eq.s32.totalorder %v280, %v281
    %vm290 = vcmp.lt.s32.totalorder %v272, 5
    %vm291 = vmand %vm282, %vm290
    %vm292 = vmand %vm283, %vm290
    %vm293 = vmand %vm284, %vm290
    %vm294 = vmand %vm285, %vm290
    %vm295 = vmand %vm286, %vm290
    %vm296 = vmand %vm287, %vm290
    %vm297 = vmand %vm288, %vm290
    %vm298 = vmand %vm289, %vm290
    %v299 = vsel %vm291, 0.0, -10000.0
    %v300 = vsel %vm292, 0.0, -10000.0
    %v301 = vsel %vm293, 0.0, -10000.0
    %v302 = vsel %vm294, 0.0, -10000.0
    %v303 = vsel %vm295, 0.0, -10000.0
    %v304 = vsel %vm296, 0.0, -10000.0
    %v305 = vsel %vm297, 0.0, -10000.0
    %v306 = vsel %vm298, 0.0, -10000.0
    %v307 = vld [vmem:[%s41] sm:$0x1]
    %vm308 = vcmp.gt.f32.partialorder %v307, 0.5
    %vm309 = vcmp.ge.s32.totalorder %v264, %v272
    %vm310 = vcmp.ge.s32.totalorder %v265, %v272
    %vm311 = vcmp.ge.s32.totalorder %v266, %v272
    %vm312 = vcmp.ge.s32.totalorder %v267, %v272
    %vm313 = vcmp.ge.s32.totalorder %v268, %v272
    %vm314 = vcmp.ge.s32.totalorder %v269, %v272
    %vm315 = vcmp.ge.s32.totalorder %v270, %v272
    %vm316 = vcmp.ge.s32.totalorder %v271, %v272
    %vm317 = vmand %vm282, %vm309
    %vm318 = vmand %vm283, %vm310
    %vm319 = vmand %vm284, %vm311
    %vm320 = vmand %vm285, %vm312
    %vm321 = vmand %vm286, %vm313
    %vm322 = vmand %vm287, %vm314
    %vm323 = vmand %vm288, %vm315
    %vm324 = vmand %vm289, %vm316
    %v325 = vsel %vm308, 1, 0
    %v326 = vlaneseq
    %v327 = vshrl.u32 %v326, 7
    %v328 = vsub.s32 0, %v327
    %v329 = vrot.slane %v325, %v328
    %vm330 = vcmp.eq.s32.totalorder %v329, 1
    %vm331 = vmand %vm317, %vm330
    %vm332 = vmand %vm318, %vm330
    %vm333 = vmand %vm319, %vm330
    %vm334 = vmand %vm320, %vm330
    %vm335 = vmand %vm321, %vm330
    %vm336 = vmand %vm322, %vm330
    %vm337 = vmand %vm323, %vm330
    %vm338 = vmand %vm324, %vm330
    %v339 = vsel %vm331, 0.0, -10000.0
    %v340 = vsel %vm332, 0.0, -10000.0
    %v341 = vsel %vm333, 0.0, -10000.0
    %v342 = vsel %vm334, 0.0, -10000.0
    %v343 = vsel %vm335, 0.0, -10000.0
    %v344 = vsel %vm336, 0.0, -10000.0
    %v345 = vsel %vm337, 0.0, -10000.0
    %v346 = vsel %vm338, 0.0, -10000.0
    %v347 = vld [vmem:[%s1] sm:$0xff]
    %v348 = vld [vmem:[%s1 + $0x8] sm:$0xff]
    %v349 = vld [vmem:[%s1 + $0x10] sm:$0xff]
    %v350 = vld [vmem:[%s1 + $0x18] sm:$0xff]
    %v351 = vld [vmem:[%s1 + $0x20] sm:$0xff]
    %v352 = vld [vmem:[%s1 + $0x28] sm:$0xff]
    %v353 = vld [vmem:[%s3] sm:$0xf]
    %v354 = vld [vmem:[%s3 + $0x4] sm:$0xf]
    %v355 = vld [vmem:[%s3 + $0x8] sm:$0xf]
    %v356 = vld [vmem:[%s3 + $0xc] sm:$0xf]
    %v357 = vld [vmem:[%s3 + $0x10] sm:$0xf]
    %v358 = vld [vmem:[%s3 + $0x14] sm:$0xf]
    %v359 = vld [vmem:[%s3 + $0x18] sm:$0xf]
    %v360 = vld [vmem:[%s3 + $0x1c] sm:$0xf]
    %v361 = vld [vmem:[%s3 + $0x20] sm:$0xf]
    %v362 = vld [vmem:[%s3 + $0x24] sm:$0xf]
    %v363 = vld [vmem:[%s3 + $0x28] sm:$0xf]
    %v364 = vld [vmem:[%s3 + $0x2c] sm:$0xf]
    %v365 = vld [vmem:[%s3 + $0x30] sm:$0xf]
    %v366 = vld [vmem:[%s3 + $0x34] sm:$0xf]
    %v367 = vld [vmem:[%s3 + $0x38] sm:$0xf]
    %v368 = vld [vmem:[%s3 + $0x3c] sm:$0xf]
    %v369 = vld [vmem:[%s3 + $0x40] sm:$0xf]
    %v370 = vld [vmem:[%s3 + $0x44] sm:$0xf]
    %v371 = vld [vmem:[%s3 + $0x48] sm:$0xf]
    %v372 = vld [vmem:[%s3 + $0x4c] sm:$0xf]
    %v373 = vld [vmem:[%s3 + $0x50] sm:$0xf]
    %v374 = vld [vmem:[%s3 + $0x54] sm:$0xf]
    %v375 = vld [vmem:[%s3 + $0x58] sm:$0xf]
    %v376 = vld [vmem:[%s3 + $0x5c] sm:$0xf]
    %v377 = vld [vmem:[%s3 + $0x60] sm:$0xf]
    %v378 = vld [vmem:[%s3 + $0x64] sm:$0xf]
    %v379 = vld [vmem:[%s3 + $0x68] sm:$0xf]
    %v380 = vld [vmem:[%s3 + $0x6c] sm:$0xf]
    %v381 = vld [vmem:[%s3 + $0x70] sm:$0xf]
    %v382 = vld [vmem:[%s3 + $0x74] sm:$0xf]
    %v383 = vld [vmem:[%s3 + $0x78] sm:$0xf]
    %v384 = vld [vmem:[%s3 + $0x7c] sm:$0xf]
    %v385 = vld [vmem:[%s3 + $0x80] sm:$0xf]
    %v386 = vld [vmem:[%s3 + $0x84] sm:$0xf]
    %v387 = vld [vmem:[%s3 + $0x88] sm:$0xf]
    %v388 = vld [vmem:[%s3 + $0x8c] sm:$0xf]
    %v389 = vld [vmem:[%s3 + $0x90] sm:$0xf]
    %v390 = vld [vmem:[%s3 + $0x94] sm:$0xf]
    %v391 = vld [vmem:[%s3 + $0x98] sm:$0xf]
    %v392 = vld [vmem:[%s3 + $0x9c] sm:$0xf]
    %v393 = vld [vmem:[%s3 + $0xa0] sm:$0xf]
    %v394 = vld [vmem:[%s3 + $0xa4] sm:$0xf]
    %v395 = vld [vmem:[%s3 + $0xa8] sm:$0xf]
    %v396 = vld [vmem:[%s3 + $0xac] sm:$0xf]
    %v397 = vld [vmem:[%s3 + $0xb0] sm:$0xf]
    %v398 = vld [vmem:[%s3 + $0xb4] sm:$0xf]
    %v399 = vld [vmem:[%s3 + $0xb8] sm:$0xf]
    %v400 = vld [vmem:[%s3 + $0xbc] sm:$0xf]
    %v401 = vld [vmem:[%s3 + $0xc0] sm:$0xf]
    %v402 = vld [vmem:[%s3 + $0xc4] sm:$0xf]
    %v403 = vld [vmem:[%s3 + $0xc8] sm:$0xf]
    %v404 = vld [vmem:[%s3 + $0xcc] sm:$0xf]
    %v405 = vld [vmem:[%s3 + $0xd0] sm:$0xf]
    %v406 = vld [vmem:[%s3 + $0xd4] sm:$0xf]
    %v407 = vld [vmem:[%s3 + $0xd8] sm:$0xf]
    %v408 = vld [vmem:[%s3 + $0xdc] sm:$0xf]
    %v409 = vld [vmem:[%s3 + $0xe0] sm:$0xf]
    %v410 = vld [vmem:[%s3 + $0xe4] sm:$0xf]
    %v411 = vld [vmem:[%s3 + $0xe8] sm:$0xf]
    %v412 = vld [vmem:[%s3 + $0xec] sm:$0xf]
    %v413 = vld [vmem:[%s3 + $0xf0] sm:$0xf]
    %v414 = vld [vmem:[%s3 + $0xf4] sm:$0xf]
    %v415 = vld [vmem:[%s3 + $0xf8] sm:$0xf]
    %v416 = vld [vmem:[%s3 + $0xfc] sm:$0xf]
    %v417 = vld [vmem:[%s3 + $0x100] sm:$0xf]
    %v418 = vld [vmem:[%s3 + $0x104] sm:$0xf]
    %v419 = vld [vmem:[%s3 + $0x108] sm:$0xf]
    %v420 = vld [vmem:[%s3 + $0x10c] sm:$0xf]
    %v421 = vld [vmem:[%s3 + $0x110] sm:$0xf]
    %v422 = vld [vmem:[%s3 + $0x114] sm:$0xf]
    %v423 = vld [vmem:[%s3 + $0x118] sm:$0xf]
    %v424 = vld [vmem:[%s3 + $0x11c] sm:$0xf]
    %v425 = vld [vmem:[%s3 + $0x120] sm:$0xf]
    %v426 = vld [vmem:[%s3 + $0x124] sm:$0xf]
    %v427 = vld [vmem:[%s3 + $0x128] sm:$0xf]
    %v428 = vld [vmem:[%s3 + $0x12c] sm:$0xf]
    %v429 = vld [vmem:[%s3 + $0x130] sm:$0xf]
    %v430 = vld [vmem:[%s3 + $0x134] sm:$0xf]
    %v431 = vld [vmem:[%s3 + $0x138] sm:$0xf]
    %v432 = vld [vmem:[%s3 + $0x13c] sm:$0xf]
    %v433 = vld [vmem:[%s3 + $0x140] sm:$0xf]
    %v434 = vld [vmem:[%s3 + $0x144] sm:$0xf]
    %v435 = vld [vmem:[%s3 + $0x148] sm:$0xf]
    %v436 = vld [vmem:[%s3 + $0x14c] sm:$0xf]
    %v437 = vld [vmem:[%s3 + $0x150] sm:$0xf]
    %v438 = vld [vmem:[%s3 + $0x154] sm:$0xf]
    %v439 = vld [vmem:[%s3 + $0x158] sm:$0xf]
    %v440 = vld [vmem:[%s3 + $0x15c] sm:$0xf]
    %v441 = vld [vmem:[%s3 + $0x160] sm:$0xf]
    %v442 = vld [vmem:[%s3 + $0x164] sm:$0xf]
    %v443 = vld [vmem:[%s3 + $0x168] sm:$0xf]
    %v444 = vld [vmem:[%s3 + $0x16c] sm:$0xf]
    %v445 = vld [vmem:[%s3 + $0x170] sm:$0xf]
    %v446 = vld [vmem:[%s3 + $0x174] sm:$0xf]
    %v447 = vld [vmem:[%s3 + $0x178] sm:$0xf]
    %v448 = vld [vmem:[%s3 + $0x17c] sm:$0xf]
    %v449 = vld [vmem:[%s5] sm:$0xff]
    %v450 = vld [vmem:[%s5 + $0x8] sm:$0xff]
    %v457 = vunpack.c.l.b16 %v347
    %v458 = vunpack.c.h.b16 %v347
    %v459 = vunpack.c.l.b16 %v348
    %v460 = vunpack.c.h.b16 %v348
    %v461 = vunpack.c.l.b16 %v349
    %v462 = vunpack.c.h.b16 %v349
    %v463 = vunpack.c.l.b16 %v350
    %v464 = vunpack.c.h.b16 %v350
    %v465 = vunpack.c.l.b16 %v351
    %v466 = vunpack.c.h.b16 %v351
    %v467 = vunpack.c.l.b16 %v352
    %v468 = vunpack.c.h.b16 %v352
    %v469 = vpack.c.b16 %v463, %v457
    %v470 = vpack.c.b16 %v464, %v458
    %v471 = vpack.c.b16 %v465, %v459
    %v472 = vpack.c.b16 %v466, %v460
    %v473 = vpack.c.b16 %v467, %v461
    %v474 = vpack.c.b16 %v468, %v462
    %v577 = vunpack.c.l.b16 %v353
    %v578 = vunpack.c.l.b16 %v354
    %v579 = vunpack.c.l.b16 %v355
    %v580 = vunpack.c.l.b16 %v356
    %v581 = vunpack.c.l.b16 %v357
    %v582 = vunpack.c.l.b16 %v358
    %v583 = vunpack.c.l.b16 %v359
    %v584 = vunpack.c.l.b16 %v360
    %v585 = vunpack.c.l.b16 %v361
    %v586 = vunpack.c.l.b16 %v362
    %v587 = vunpack.c.l.b16 %v363
    %v588 = vunpack.c.l.b16 %v364
    %v589 = vunpack.c.l.b16 %v365
    %v590 = vunpack.c.l.b16 %v366
    %v591 = vunpack.c.l.b16 %v367
    %v592 = vunpack.c.l.b16 %v368
    %v593 = vunpack.c.l.b16 %v369
    %v594 = vunpack.c.l.b16 %v370
    %v595 = vunpack.c.l.b16 %v371
    %v596 = vunpack.c.l.b16 %v372
    %v597 = vunpack.c.l.b16 %v373
    %v598 = vunpack.c.l.b16 %v374
    %v599 = vunpack.c.l.b16 %v375
    %v600 = vunpack.c.l.b16 %v376
    %v601 = vunpack.c.l.b16 %v377
    %v602 = vunpack.c.l.b16 %v378
    %v603 = vunpack.c.l.b16 %v379
    %v604 = vunpack.c.l.b16 %v380
    %v605 = vunpack.c.l.b16 %v381
    %v606 = vunpack.c.l.b16 %v382
    %v607 = vunpack.c.l.b16 %v383
    %v608 = vunpack.c.l.b16 %v384
    %v609 = vunpack.c.l.b16 %v385
    %v610 = vunpack.c.l.b16 %v386
    %v611 = vunpack.c.l.b16 %v387
    %v612 = vunpack.c.l.b16 %v388
    %v613 = vunpack.c.l.b16 %v389
    %v614 = vunpack.c.l.b16 %v390
    %v615 = vunpack.c.l.b16 %v391
    %v616 = vunpack.c.l.b16 %v392
    %v617 = vunpack.c.l.b16 %v393
    %v618 = vunpack.c.l.b16 %v394
    %v619 = vunpack.c.l.b16 %v395
    %v620 = vunpack.c.l.b16 %v396
    %v621 = vunpack.c.l.b16 %v397
    %v622 = vunpack.c.l.b16 %v398
    %v623 = vunpack.c.l.b16 %v399
    %v624 = vunpack.c.l.b16 %v400
    %v625 = vunpack.c.l.b16 %v401
    %v626 = vunpack.c.l.b16 %v402
    %v627 = vunpack.c.l.b16 %v403
    %v628 = vunpack.c.l.b16 %v404
    %v629 = vunpack.c.l.b16 %v405
    %v630 = vunpack.c.l.b16 %v406
    %v631 = vunpack.c.l.b16 %v407
    %v632 = vunpack.c.l.b16 %v408
    %v633 = vunpack.c.l.b16 %v409
    %v634 = vunpack.c.l.b16 %v410
    %v635 = vunpack.c.l.b16 %v411
    %v636 = vunpack.c.l.b16 %v412
    %v637 = vunpack.c.l.b16 %v413
    %v638 = vunpack.c.l.b16 %v414
    %v639 = vunpack.c.l.b16 %v415
    %v640 = vunpack.c.l.b16 %v416
    %v641 = vunpack.c.l.b16 %v417
    %v642 = vunpack.c.l.b16 %v418
    %v643 = vunpack.c.l.b16 %v419
    %v644 = vunpack.c.l.b16 %v420
    %v645 = vunpack.c.l.b16 %v421
    %v646 = vunpack.c.l.b16 %v422
    %v647 = vunpack.c.l.b16 %v423
    %v648 = vunpack.c.l.b16 %v424
    %v649 = vunpack.c.l.b16 %v425
    %v650 = vunpack.c.l.b16 %v426
    %v651 = vunpack.c.l.b16 %v427
    %v652 = vunpack.c.l.b16 %v428
    %v653 = vunpack.c.l.b16 %v429
    %v654 = vunpack.c.l.b16 %v430
    %v655 = vunpack.c.l.b16 %v431
    %v656 = vunpack.c.l.b16 %v432
    %v657 = vunpack.c.l.b16 %v433
    %v658 = vunpack.c.l.b16 %v434
    %v659 = vunpack.c.l.b16 %v435
    %v660 = vunpack.c.l.b16 %v436
    %v661 = vunpack.c.l.b16 %v437
    %v662 = vunpack.c.l.b16 %v438
    %v663 = vunpack.c.l.b16 %v439
    %v664 = vunpack.c.l.b16 %v440
    %v665 = vunpack.c.l.b16 %v441
    %v666 = vunpack.c.l.b16 %v442
    %v667 = vunpack.c.l.b16 %v443
    %v668 = vunpack.c.l.b16 %v444
    %v669 = vunpack.c.l.b16 %v445
    %v670 = vunpack.c.l.b16 %v446
    %v671 = vunpack.c.l.b16 %v447
    %v672 = vunpack.c.l.b16 %v448
    %v673 = vpack.c.b16 %v578, %v577
    %v674 = vpack.c.b16 %v580, %v579
    %v675 = vpack.c.b16 %v582, %v581
    %v676 = vpack.c.b16 %v584, %v583
    %v677 = vpack.c.b16 %v586, %v585
    %v678 = vpack.c.b16 %v588, %v587
    %v679 = vpack.c.b16 %v590, %v589
    %v680 = vpack.c.b16 %v592, %v591
    %v681 = vpack.c.b16 %v594, %v593
    %v682 = vpack.c.b16 %v596, %v595
    %v683 = vpack.c.b16 %v598, %v597
    %v684 = vpack.c.b16 %v600, %v599
    %v685 = vpack.c.b16 %v602, %v601
    %v686 = vpack.c.b16 %v604, %v603
    %v687 = vpack.c.b16 %v606, %v605
    %v688 = vpack.c.b16 %v608, %v607
    %v689 = vpack.c.b16 %v610, %v609
    %v690 = vpack.c.b16 %v612, %v611
    %v691 = vpack.c.b16 %v614, %v613
    %v692 = vpack.c.b16 %v616, %v615
    %v693 = vpack.c.b16 %v618, %v617
    %v694 = vpack.c.b16 %v620, %v619
    %v695 = vpack.c.b16 %v622, %v621
    %v696 = vpack.c.b16 %v624, %v623
    %v697 = vpack.c.b16 %v626, %v625
    %v698 = vpack.c.b16 %v628, %v627
    %v699 = vpack.c.b16 %v630, %v629
    %v700 = vpack.c.b16 %v632, %v631
    %v701 = vpack.c.b16 %v634, %v633
    %v702 = vpack.c.b16 %v636, %v635
    %v703 = vpack.c.b16 %v638, %v637
    %v704 = vpack.c.b16 %v640, %v639
    %v705 = vpack.c.b16 %v642, %v641
    %v706 = vpack.c.b16 %v644, %v643
    %v707 = vpack.c.b16 %v646, %v645
    %v708 = vpack.c.b16 %v648, %v647
    %v709 = vpack.c.b16 %v650, %v649
    %v710 = vpack.c.b16 %v652, %v651
    %v711 = vpack.c.b16 %v654, %v653
    %v712 = vpack.c.b16 %v656, %v655
    %v713 = vpack.c.b16 %v658, %v657
    %v714 = vpack.c.b16 %v660, %v659
    %v715 = vpack.c.b16 %v662, %v661
    %v716 = vpack.c.b16 %v664, %v663
    %v717 = vpack.c.b16 %v666, %v665
    %v718 = vpack.c.b16 %v668, %v667
    %v719 = vpack.c.b16 %v670, %v669
    %v720 = vpack.c.b16 %v672, %v671
    %769 = vmatprep.subr.bf16.mxu0 0
    %770 = vmatpush1.bf16.msra.mxu0 %v680
    %771 = vmatprep.subr.bf16.mxu0 0
    %772 = vmatpush1.bf16.msra.mxu0 %v679
    %773 = vmatprep.subr.bf16.mxu0 0
    %774 = vmatpush1.bf16.msra.mxu0 %v678
    %775 = vmatprep.subr.bf16.mxu0 0
    %776 = vmatpush1.bf16.msra.mxu0 %v677
    %777 = vmatprep.subr.bf16.mxu0 0
    %778 = vmatpush1.bf16.msra.mxu0 %v676
    %779 = vmatprep.subr.bf16.mxu0 0
    %780 = vmatpush1.bf16.msra.mxu0 %v675
    %781 = vmatprep.subr.bf16.mxu0 0
    %782 = vmatpush1.bf16.msra.mxu0 %v674
    %783 = vmatprep.subr.bf16.mxu0 0
    %784 = vmatpush1.bf16.msra.mxu0 %v673
    %785 = vmatprep.subr.bf16.mxu0 0
    %786 = vmatpush2.bf16.msra.mxu0 %v688
    %787 = vmatprep.subr.bf16.mxu0 0
    %788 = vmatpush2.bf16.msra.mxu0 %v687
    %789 = vmatprep.subr.bf16.mxu0 0
    %790 = vmatpush2.bf16.msra.mxu0 %v686
    %791 = vmatprep.subr.bf16.mxu0 0
    %792 = vmatpush2.bf16.msra.mxu0 %v685
    %793 = vmatprep.subr.bf16.mxu0 0
    %794 = vmatpush2.bf16.msra.mxu0 %v684
    %795 = vmatprep.subr.bf16.mxu0 0
    %796 = vmatpush2.bf16.msra.mxu0 %v683
    %797 = vmatprep.subr.bf16.mxu0 0
    %798 = vmatpush2.bf16.msra.mxu0 %v682
    %799 = vmatprep.subr.bf16.mxu0 0
    %800 = vmatpush2.bf16.msra.mxu0 %v681
    %801 = vmatprep.mubr.bf16.mxu0 %v470
    %802 = vmatmul.mubr.bf16.gmra.mxu0 %v469
    %v803 = vpop.f32.mrf.mxu0
    %v804 = vadd.f32 %v449, %v803
    %v805 = vpop.f32.mrf.mxu0
    %v806 = vpop.f32.mrf.mxu0
    %v807 = vadd.f32 %v450, %v806
    %v808 = vpop.f32.mrf.mxu0
    %809 = vdwg.mxu0
    %810 = vmatprep.subr.bf16.mxu0 0
    %811 = vmatpush1.bf16.msra.mxu0 %v696
    %812 = vmatprep.subr.bf16.mxu0 0
    %813 = vmatpush1.bf16.msra.mxu0 %v695
    %814 = vmatprep.subr.bf16.mxu0 0
    %815 = vmatpush1.bf16.msra.mxu0 %v694
    %816 = vmatprep.subr.bf16.mxu0 0
    %817 = vmatpush1.bf16.msra.mxu0 %v693
    %818 = vmatprep.subr.bf16.mxu0 0
    %819 = vmatpush1.bf16.msra.mxu0 %v692
    %820 = vmatprep.subr.bf16.mxu0 0
    %821 = vmatpush1.bf16.msra.mxu0 %v691
    %822 = vmatprep.subr.bf16.mxu0 0
    %823 = vmatpush1.bf16.msra.mxu0 %v690
    %824 = vmatprep.subr.bf16.mxu0 0
    %825 = vmatpush1.bf16.msra.mxu0 %v689
    %826 = vmatprep.subr.bf16.mxu0 0
    %827 = vmatpush2.bf16.msra.mxu0 %v704
    %828 = vmatprep.subr.bf16.mxu0 0
    %829 = vmatpush2.bf16.msra.mxu0 %v703
    %830 = vmatprep.subr.bf16.mxu0 0
    %831 = vmatpush2.bf16.msra.mxu0 %v702
    %832 = vmatprep.subr.bf16.mxu0 0
    %833 = vmatpush2.bf16.msra.mxu0 %v701
    %834 = vmatprep.subr.bf16.mxu0 0
    %835 = vmatpush2.bf16.msra.mxu0 %v700
    %836 = vmatprep.subr.bf16.mxu0 0
    %837 = vmatpush2.bf16.msra.mxu0 %v699
    %838 = vmatprep.subr.bf16.mxu0 0
    %839 = vmatpush2.bf16.msra.mxu0 %v698
    %840 = vmatprep.subr.bf16.mxu0 0
    %841 = vmatpush2.bf16.msra.mxu0 %v697
    %842 = vmatprep.mubr.bf16.mxu0 %v472
    %843 = vmatmul.mubr.bf16.gmra.mxu0 %v471
    %v844 = vpop.f32.mrf.mxu0
    %v845 = vadd.f32 %v804, %v844
    %v846 = vpop.f32.mrf.mxu0
    %v847 = vpop.f32.mrf.mxu0
    %v848 = vadd.f32 %v807, %v847
    %v849 = vpop.f32.mrf.mxu0
    %850 = vdwg.mxu0
    %851 = vmatprep.subr.bf16.mxu0 0
    %852 = vmatpush1.bf16.msra.mxu0 %v712
    %853 = vmatprep.subr.bf16.mxu0 0
    %854 = vmatpush1.bf16.msra.mxu0 %v711
    %855 = vmatprep.subr.bf16.mxu0 0
    %856 = vmatpush1.bf16.msra.mxu0 %v710
    %857 = vmatprep.subr.bf16.mxu0 0
    %858 = vmatpush1.bf16.msra.mxu0 %v709
    %859 = vmatprep.subr.bf16.mxu0 0
    %860 = vmatpush1.bf16.msra.mxu0 %v708
    %861 = vmatprep.subr.bf16.mxu0 0
    %862 = vmatpush1.bf16.msra.mxu0 %v707
    %863 = vmatprep.subr.bf16.mxu0 0
    %864 = vmatpush1.bf16.msra.mxu0 %v706
    %865 = vmatprep.subr.bf16.mxu0 0
    %866 = vmatpush1.bf16.msra.mxu0 %v705
    %867 = vmatprep.subr.bf16.mxu0 0
    %868 = vmatpush2.bf16.msra.mxu0 %v720
    %869 = vmatprep.subr.bf16.mxu0 0
    %870 = vmatpush2.bf16.msra.mxu0 %v719
    %871 = vmatprep.subr.bf16.mxu0 0
    %872 = vmatpush2.bf16.msra.mxu0 %v718
    %873 = vmatprep.subr.bf16.mxu0 0
    %874 = vmatpush2.bf16.msra.mxu0 %v717
    %875 = vmatprep.subr.bf16.mxu0 0
    %876 = vmatpush2.bf16.msra.mxu0 %v716
    %877 = vmatprep.subr.bf16.mxu0 0
    %878 = vmatpush2.bf16.msra.mxu0 %v715
    %879 = vmatprep.subr.bf16.mxu0 0
    %880 = vmatpush2.bf16.msra.mxu0 %v714
    %881 = vmatprep.subr.bf16.mxu0 0
    %882 = vmatpush2.bf16.msra.mxu0 %v713
    %883 = vmatprep.mubr.bf16.mxu0 %v474
    %884 = vmatmul.mubr.bf16.gmra.mxu0 %v473
    %v885 = vpop.f32.mrf.mxu0
    %v886 = vadd.f32 %v845, %v885
    %v887 = vpop.f32.mrf.mxu0
    %v888 = vpop.f32.mrf.mxu0
    %v889 = vadd.f32 %v848, %v888
    %v890 = vpop.f32.mrf.mxu0
    %891 = vdwg.mxu0
    %v892 = vld [vmem:[%s7] sm:$0x1]
    %v893 = vld [vmem:[%s9] sm:$0x1]
    %894 = vadd.xlane.f32.xlu0 %v886
    %v895 = vpop.xlane.xlu0 %894
    %896 = vadd.xlane.f32.xlu0 %v889
    %v897 = vpop.xlane.xlu0 %896
    %v898 = vrcp.pop 128.0
    %v899 = vmul.f32 %v895, %v898
    %v900 = vmul.f32 %v897, %v898
    %v901 = vsub.f32 %v886, %v899
    %v902 = vsub.f32 %v889, %v900
    %v903 = vmul.f32 %v901, %v901
    %v904 = vmul.f32 %v902, %v902
    %905 = vadd.xlane.f32.xlu0 %v903
    %v906 = vpop.xlane.xlu0 %905
    %907 = vadd.xlane.f32.xlu0 %v904
    %v908 = vpop.xlane.xlu0 %907
    %v909 = vmul.f32 %v906, %v898
    %v910 = vmul.f32 %v908, %v898
    %v911 = vadd.f32 %v909, 1e-06
    %v912 = vadd.f32 %v910, 1e-06
    %v913 = vrsqrt.pop %v911
    %v914 = vrsqrt.pop %v912
    %v915 = vmul.f32 %v901, %v913
    %v916 = vmul.f32 %v902, %v914
    %v918 = vlaneseq
    %v919 = vshrl.u32 %v918, 7
    %v920 = vsub.s32 0, %v919
    %v921 = vrot.slane %v892, %v920
    %v923 = vmul.f32 %v915, %v921
    %v924 = vmul.f32 %v916, %v921
    %v926 = vlaneseq
    %v927 = vshrl.u32 %v926, 7
    %v928 = vsub.s32 0, %v927
    %v929 = vrot.slane %v893, %v928
    %v931 = vadd.f32 %v923, %v929
    %v932 = vadd.f32 %v924, %v929
    %v933 = vld [vmem:[%s11] sm:$0xff]
    %v934 = vld [vmem:[%s11 + $0x8] sm:$0xf]
    %v935 = vld [vmem:[%s11 + $0xc] sm:$0xff]
    %v936 = vld [vmem:[%s11 + $0x14] sm:$0xf]
    %v937 = vld [vmem:[%s11 + $0x18] sm:$0xff]
    %v938 = vld [vmem:[%s11 + $0x20] sm:$0xf]
    %v939 = vld [vmem:[%s11 + $0x24] sm:$0xff]
    %v940 = vld [vmem:[%s11 + $0x2c] sm:$0xf]
    %v941 = vld [vmem:[%s11 + $0x30] sm:$0xff]
    %v942 = vld [vmem:[%s11 + $0x38] sm:$0xf]
    %v943 = vld [vmem:[%s11 + $0x3c] sm:$0xff]
    %v944 = vld [vmem:[%s11 + $0x44] sm:$0xf]
    %v945 = vld [vmem:[%s11 + $0x48] sm:$0xff]
    %v946 = vld [vmem:[%s11 + $0x50] sm:$0xf]
    %v947 = vld [vmem:[%s11 + $0x54] sm:$0xff]
    %v948 = vld [vmem:[%s11 + $0x5c] sm:$0xf]
    %v949 = vld [vmem:[%s11 + $0x60] sm:$0xff]
    %v950 = vld [vmem:[%s11 + $0x68] sm:$0xf]
    %v951 = vld [vmem:[%s11 + $0x6c] sm:$0xff]
    %v952 = vld [vmem:[%s11 + $0x74] sm:$0xf]
    %v953 = vld [vmem:[%s11 + $0x78] sm:$0xff]
    %v954 = vld [vmem:[%s11 + $0x80] sm:$0xf]
    %v955 = vld [vmem:[%s11 + $0x84] sm:$0xff]
    %v956 = vld [vmem:[%s11 + $0x8c] sm:$0xf]
    %v957 = vld [vmem:[%s11 + $0x90] sm:$0xff]
    %v958 = vld [vmem:[%s11 + $0x98] sm:$0xf]
    %v959 = vld [vmem:[%s11 + $0x9c] sm:$0xff]
    %v960 = vld [vmem:[%s11 + $0xa4] sm:$0xf]
    %v961 = vld [vmem:[%s11 + $0xa8] sm:$0xff]
    %v962 = vld [vmem:[%s11 + $0xb0] sm:$0xf]
    %v963 = vld [vmem:[%s11 + $0xb4] sm:$0xff]
    %v964 = vld [vmem:[%s11 + $0xbc] sm:$0xf]
    %v965 = vpack.c.bf16 %v932, %v931
    %v966 = vld [vmem:[%s13] sm:$0x7]
    %v968 = vlaneseq
    %v969 = vshrl.u32 %v968, 7
    %v970 = vsub.s32 0, %v969
    %v971 = vrot.slane %v966, %v970
    %v972 = vlaneseq
    %v973 = vshrl.u32 %v972, 7
    %v974 = vsub.s32 1, %v973
    %v975 = vrot.slane %v966, %v974
    %v976 = vlaneseq
    %v977 = vshrl.u32 %v976, 7
    %v978 = vsub.s32 2, %v977
    %v979 = vrot.slane %v966, %v978
    %v1015 = vunpack.c.l.b16 %v933
    %v1016 = vunpack.c.h.b16 %v933
    %v1017 = vunpack.c.l.b16 %v934
    %v1018 = vunpack.c.l.b16 %v935
    %v1019 = vunpack.c.h.b16 %v935
    %v1020 = vunpack.c.l.b16 %v936
    %v1021 = vunpack.c.l.b16 %v937
    %v1022 = vunpack.c.h.b16 %v937
    %v1023 = vunpack.c.l.b16 %v938
    %v1024 = vunpack.c.l.b16 %v939
    %v1025 = vunpack.c.h.b16 %v939
    %v1026 = vunpack.c.l.b16 %v940
    %v1027 = vunpack.c.l.b16 %v941
    %v1028 = vunpack.c.h.b16 %v941
    %v1029 = vunpack.c.l.b16 %v942
    %v1030 = vunpack.c.l.b16 %v943
    %v1031 = vunpack.c.h.b16 %v943
    %v1032 = vunpack.c.l.b16 %v944
    %v1033 = vunpack.c.l.b16 %v945
    %v1034 = vunpack.c.h.b16 %v945
    %v1035 = vunpack.c.l.b16 %v946
    %v1036 = vunpack.c.l.b16 %v947
    %v1037 = vunpack.c.h.b16 %v947
    %v1038 = vunpack.c.l.b16 %v948
    %v1039 = vunpack.c.l.b16 %v949
    %v1040 = vunpack.c.h.b16 %v949
    %v1041 = vunpack.c.l.b16 %v950
    %v1042 = vunpack.c.l.b16 %v951
    %v1043 = vunpack.c.h.b16 %v951
    %v1044 = vunpack.c.l.b16 %v952
    %v1045 = vunpack.c.l.b16 %v953
    %v1046 = vunpack.c.h.b16 %v953
    %v1047 = vunpack.c.l.b16 %v954
    %v1048 = vunpack.c.l.b16 %v955
    %v1049 = vunpack.c.h.b16 %v955
    %v1050 = vunpack.c.l.b16 %v956
    %v1051 = vunpack.c.l.b16 %v957
    %v1052 = vunpack.c.h.b16 %v957
    %v1053 = vunpack.c.l.b16 %v958
    %v1054 = vunpack.c.l.b16 %v959
    %v1055 = vunpack.c.h.b16 %v959
    %v1056 = vunpack.c.l.b16 %v960
    %v1057 = vunpack.c.l.b16 %v961
    %v1058 = vunpack.c.h.b16 %v961
    %v1059 = vunpack.c.l.b16 %v962
    %v1060 = vunpack.c.l.b16 %v963
    %v1061 = vunpack.c.h.b16 %v963
    %v1062 = vunpack.c.l.b16 %v964
    %v1063 = vpack.c.b16 %v1018, %v1015
    %v1064 = vpack.c.b16 %v1019, %v1016
    %v1065 = vpack.c.b16 %v1020, %v1017
    %v1066 = vpack.c.b16 %v1024, %v1021
    %v1067 = vpack.c.b16 %v1025, %v1022
    %v1068 = vpack.c.b16 %v1026, %v1023
    %v1069 = vpack.c.b16 %v1030, %v1027
    %v1070 = vpack.c.b16 %v1031, %v1028
    %v1071 = vpack.c.b16 %v1032, %v1029
    %v1072 = vpack.c.b16 %v1036, %v1033
    %v1073 = vpack.c.b16 %v1037, %v1034
    %v1074 = vpack.c.b16 %v1038, %v1035
    %v1075 = vpack.c.b16 %v1042, %v1039
    %v1076 = vpack.c.b16 %v1043, %v1040
    %v1077 = vpack.c.b16 %v1044, %v1041
    %v1078 = vpack.c.b16 %v1048, %v1045
    %v1079 = vpack.c.b16 %v1049, %v1046
    %v1080 = vpack.c.b16 %v1050, %v1047
    %v1081 = vpack.c.b16 %v1054, %v1051
    %v1082 = vpack.c.b16 %v1055, %v1052
    %v1083 = vpack.c.b16 %v1056, %v1053
    %v1084 = vpack.c.b16 %v1060, %v1057
    %v1085 = vpack.c.b16 %v1061, %v1058
    %v1086 = vpack.c.b16 %v1062, %v1059
    %1111 = vmatprep.subr.bf16.mxu0 %v1085
    %1112 = vmatpush1.bf16.msra.mxu0 %v1084
    %1113 = vmatprep.subr.bf16.mxu0 %v1082
    %1114 = vmatpush1.bf16.msra.mxu0 %v1081
    %1115 = vmatprep.subr.bf16.mxu0 %v1079
    %1116 = vmatpush1.bf16.msra.mxu0 %v1078
    %1117 = vmatprep.subr.bf16.mxu0 %v1076
    %1118 = vmatpush1.bf16.msra.mxu0 %v1075
    %1119 = vmatprep.subr.bf16.mxu0 %v1073
    %1120 = vmatpush1.bf16.msra.mxu0 %v1072
    %1121 = vmatprep.subr.bf16.mxu0 %v1070
    %1122 = vmatpush1.bf16.msra.mxu0 %v1069
    %1123 = vmatprep.subr.bf16.mxu0 %v1067
    %1124 = vmatpush1.bf16.msra.mxu0 %v1066
    %1125 = vmatprep.subr.bf16.mxu0 %v1064
    %1126 = vmatpush1.bf16.msra.mxu0 %v1063
    %1127 = vmatprep.subr.bf16.mxu0 0
    %1128 = vmatpush2.bf16.msra.mxu0 0
    %1129 = vmatprep.subr.bf16.mxu0 0
    %1130 = vmatpush2.bf16.msra.mxu0 0
    %1131 = vmatprep.subr.bf16.mxu0 0
    %1132 = vmatpush2.bf16.msra.mxu0 0
    %1133 = vmatprep.subr.bf16.mxu0 0
    %1134 = vmatpush2.bf16.msra.mxu0 0
    %1135 = vmatprep.subr.bf16.mxu0 0
    %1136 = vmatpush2.bf16.msra.mxu0 0
    %1137 = vmatprep.subr.bf16.mxu0 0
    %1138 = vmatpush2.bf16.msra.mxu0 0
    %1139 = vmatprep.subr.bf16.mxu0 0
    %1140 = vmatpush2.bf16.msra.mxu0 0
    %1141 = vmatprep.subr.bf16.mxu0 0
    %1142 = vmatpush2.bf16.msra.mxu0 0
    %1143 = vmatprep.mubr.bf16.mxu0 0
    %1144 = vmatmul.mubr.bf16.gmra.mxu0 %v965
    %v1145 = vpop.f32.mrf.mxu0
    %v1146 = vadd.f32 %v971, %v1145
    %v1147 = vpop.f32.mrf.mxu0
    %v1148 = vadd.f32 %v975, %v1147
    %v1149 = vpop.f32.mrf.mxu0
    %v1150 = vadd.f32 %v971, %v1149
    %v1151 = vpop.f32.mrf.mxu0
    %v1152 = vadd.f32 %v975, %v1151
    %1153 = vdwg.mxu0
    %1154 = vmatprep.subr.bf16.mxu0 0
    %1155 = vmatpush1.bf16.msra.mxu0 %v1086
    %1156 = vmatprep.subr.bf16.mxu0 0
    %1157 = vmatpush1.bf16.msra.mxu0 %v1083
    %1158 = vmatprep.subr.bf16.mxu0 0
    %1159 = vmatpush1.bf16.msra.mxu0 %v1080
    %1160 = vmatprep.subr.bf16.mxu0 0
    %1161 = vmatpush1.bf16.msra.mxu0 %v1077
    %1162 = vmatprep.subr.bf16.mxu0 0
    %1163 = vmatpush1.bf16.msra.mxu0 %v1074
    %1164 = vmatprep.subr.bf16.mxu0 0
    %1165 = vmatpush1.bf16.msra.mxu0 %v1071
    %1166 = vmatprep.subr.bf16.mxu0 0
    %1167 = vmatpush1.bf16.msra.mxu0 %v1068
    %1168 = vmatprep.subr.bf16.mxu0 0
    %1169 = vmatpush1.bf16.msra.mxu0 %v1065
    %1170 = vmatprep.subr.bf16.mxu0 0
    %1171 = vmatpush2.bf16.msra.mxu0 0
    %1172 = vmatprep.subr.bf16.mxu0 0
    %1173 = vmatpush2.bf16.msra.mxu0 0
    %1174 = vmatprep.subr.bf16.mxu0 0
    %1175 = vmatpush2.bf16.msra.mxu0 0
    %1176 = vmatprep.subr.bf16.mxu0 0
    %1177 = vmatpush2.bf16.msra.mxu0 0
    %1178 = vmatprep.subr.bf16.mxu0 0
    %1179 = vmatpush2.bf16.msra.mxu0 0
    %1180 = vmatprep.subr.bf16.mxu0 0
    %1181 = vmatpush2.bf16.msra.mxu0 0
    %1182 = vmatprep.subr.bf16.mxu0 0
    %1183 = vmatpush2.bf16.msra.mxu0 0
    %1184 = vmatprep.subr.bf16.mxu0 0
    %1185 = vmatpush2.bf16.msra.mxu0 0
    %1186 = vmatprep.mubr.bf16.mxu0 0
    %1187 = vmatmul.mubr.bf16.gmra.mxu0 %v965
    %v1188 = vpop.f32.mrf.mxu0
    %v1189 = vadd.f32 %v979, %v1188
    %v1190 = vpop.f32.mrf.mxu0
    %v1191 = vpop.f32.mrf.mxu0
    %v1192 = vadd.f32 %v979, %v1191
    %v1193 = vpop.f32.mrf.mxu0
    %1194 = vdwg.mxu0
    %v1195 = vld [vmem:[%s15] sm:$0xf]
    %v1196 = vld [vmem:[%s15 + $0x4] sm:$0xf]
    %v1197 = vld [vmem:[%s15 + $0x8] sm:$0xf]
    %v1198 = vld [vmem:[%s15 + $0xc] sm:$0xf]
    %v1199 = vld [vmem:[%s15 + $0x10] sm:$0xf]
    %v1200 = vld [vmem:[%s15 + $0x14] sm:$0xf]
    %v1201 = vld [vmem:[%s15 + $0x18] sm:$0xf]
    %v1202 = vld [vmem:[%s15 + $0x1c] sm:$0xf]
    %v1203 = vld [vmem:[%s15 + $0x20] sm:$0xf]
    %v1204 = vld [vmem:[%s15 + $0x24] sm:$0xf]
    %v1205 = vld [vmem:[%s15 + $0x28] sm:$0xf]
    %v1206 = vld [vmem:[%s15 + $0x2c] sm:$0xf]
    %v1207 = vld [vmem:[%s15 + $0x30] sm:$0xf]
    %v1208 = vld [vmem:[%s15 + $0x34] sm:$0xf]
    %v1209 = vld [vmem:[%s15 + $0x38] sm:$0xf]
    %v1210 = vld [vmem:[%s15 + $0x3c] sm:$0xf]
    %v1211 = vld [vmem:[%s17] sm:$0x1]
    %1214 = vrot.lane.b32.xlu0 %v1146, 96
    %v1215 = vpop.permute.xlu0 %1214
    %1216 = vrot.lane.b32.xlu0 %v1150, 96
    %v1217 = vpop.permute.xlu0 %1216
    %1220 = vrot.lane.b32.xlu0 %v1146, 64
    %v1221 = vpop.permute.xlu0 %1220
    %1222 = vrot.lane.b32.xlu0 %v1150, 64
    %v1223 = vpop.permute.xlu0 %1222
    %1226 = vrot.lane.b32.xlu0 %v1146, 32
    %v1227 = vpop.permute.xlu0 %1226
    %1228 = vrot.lane.b32.xlu0 %v1150, 32
    %v1229 = vpop.permute.xlu0 %1228
    %v1232 = vpack.c.bf16 %v1150, %v1146
    %v1233 = vpack.c.bf16 %v1217, %v1215
    %v1234 = vpack.c.bf16 %v1223, %v1221
    %v1235 = vpack.c.bf16 %v1229, %v1227
    %1238 = vrot.lane.b32.xlu0 %v1148, 96
    %v1239 = vpop.permute.xlu0 %1238
    %1240 = vrot.lane.b32.xlu0 %v1152, 96
    %v1241 = vpop.permute.xlu0 %1240
    %1244 = vrot.lane.b32.xlu0 %v1148, 64
    %v1245 = vpop.permute.xlu0 %1244
    %1246 = vrot.lane.b32.xlu0 %v1152, 64
    %v1247 = vpop.permute.xlu0 %1246
    %1250 = vrot.lane.b32.xlu0 %v1148, 32
    %v1251 = vpop.permute.xlu0 %1250
    %1252 = vrot.lane.b32.xlu0 %v1152, 32
    %v1253 = vpop.permute.xlu0 %1252
    %v1256 = vpack.c.bf16 %v1152, %v1148
    %v1257 = vpack.c.bf16 %v1241, %v1239
    %v1258 = vpack.c.bf16 %v1247, %v1245
    %v1259 = vpack.c.bf16 %v1253, %v1251
    %1262 = vrot.lane.b32.xlu0 %v1189, 96
    %v1263 = vpop.permute.xlu0 %1262
    %1264 = vrot.lane.b32.xlu0 %v1192, 96
    %v1265 = vpop.permute.xlu0 %1264
    %1268 = vrot.lane.b32.xlu0 %v1189, 64
    %v1269 = vpop.permute.xlu0 %1268
    %1270 = vrot.lane.b32.xlu0 %v1192, 64
    %v1271 = vpop.permute.xlu0 %1270
    %1274 = vrot.lane.b32.xlu0 %v1189, 32
    %v1275 = vpop.permute.xlu0 %1274
    %1276 = vrot.lane.b32.xlu0 %v1192, 32
    %v1277 = vpop.permute.xlu0 %1276
    %v1280 = vpack.c.bf16 %v1192, %v1189
    %v1281 = vpack.c.bf16 %v1265, %v1263
    %v1282 = vpack.c.bf16 %v1271, %v1269
    %v1283 = vpack.c.bf16 %v1277, %v1275
    %vm1284 = vcmask 261120
    %v1286 = vsel %vm1284, %v1232, 0
    %v1289 = vsel %vm1284, %v1233, 0
    %v1292 = vsel %vm1284, %v1234, 0
    %v1295 = vsel %vm1284, %v1235, 0
    %v1298 = vsel %vm1284, %v1256, 0
    %v1301 = vsel %vm1284, %v1257, 0
    %v1304 = vsel %vm1284, %v1258, 0
    %v1307 = vsel %vm1284, %v1259, 0
    %1309 = vmatprep.subr.bf16.mxu0 0
    %1310 = vmatpush1.bf16.xpose.msra.mxu0 0
    %1311 = vmatprep.subr.bf16.mxu0 0
    %1312 = vmatpush1.bf16.xpose.msra.mxu0 0
    %1313 = vmatprep.subr.bf16.mxu0 0
    %1314 = vmatpush1.bf16.xpose.msra.mxu0 0
    %1315 = vmatprep.subr.bf16.mxu0 0
    %1316 = vmatpush1.bf16.xpose.msra.mxu0 0
    %1317 = vmatprep.subr.bf16.mxu0 0
    %1318 = vmatpush1.bf16.xpose.msra.mxu0 %v1307
    %1319 = vmatprep.subr.bf16.mxu0 0
    %1320 = vmatpush1.bf16.xpose.msra.mxu0 %v1304
    %1321 = vmatprep.subr.bf16.mxu0 0
    %1322 = vmatpush1.bf16.xpose.msra.mxu0 %v1301
    %1323 = vmatprep.subr.bf16.mxu0 0
    %1324 = vmatpush1.bf16.xpose.msra.mxu0 %v1298
    %1325 = vmatprep.subr.bf16.mxu0 0
    %1326 = vmatpush2.bf16.xpose.msra.mxu0 0
    %1327 = vmatprep.subr.bf16.mxu0 0
    %1328 = vmatpush2.bf16.xpose.msra.mxu0 0
    %1329 = vmatprep.subr.bf16.mxu0 0
    %1330 = vmatpush2.bf16.xpose.msra.mxu0 0
    %1331 = vmatprep.subr.bf16.mxu0 0
    %1332 = vmatpush2.bf16.xpose.msra.mxu0 0
    %1333 = vmatprep.subr.bf16.mxu0 0
    %1334 = vmatpush2.bf16.xpose.msra.mxu0 0
    %1335 = vmatprep.subr.bf16.mxu0 0
    %1336 = vmatpush2.bf16.xpose.msra.mxu0 0
    %1337 = vmatprep.subr.bf16.mxu0 0
    %1338 = vmatpush2.bf16.xpose.msra.mxu0 0
    %1339 = vmatprep.subr.bf16.mxu0 0
    %1340 = vmatpush2.bf16.xpose.msra.mxu0 0
    %1341 = vmatprep.mubr.bf16.mxu0 0
    %1342 = vmatmul.mubr.bf16.gmra.mxu0 %v1286
    %v1343 = vpop.f32.mrf.mxu0
    %v1344 = vadd.f32 0.0, %v1343
    %v1345 = vpop.f32.mrf.mxu0
    %v1346 = vpop.f32.mrf.mxu0
    %v1347 = vadd.f32 0.0, %v1346
    %v1348 = vpop.f32.mrf.mxu0
    %1349 = vmatprep.mubr.bf16.mxu0 0
    %1350 = vmatmul.mubr.bf16.gmra.mxu0 %v1289
    %v1351 = vpop.f32.mrf.mxu0
    %v1352 = vadd.f32 0.0, %v1351
    %v1353 = vpop.f32.mrf.mxu0
    %v1354 = vpop.f32.mrf.mxu0
    %v1355 = vadd.f32 0.0, %v1354
    %v1356 = vpop.f32.mrf.mxu0
    %1357 = vmatprep.mubr.bf16.mxu0 0
    %1358 = vmatmul.mubr.bf16.gmra.mxu0 %v1292
    %v1359 = vpop.f32.mrf.mxu0
    %v1360 = vadd.f32 0.0, %v1359
    %v1361 = vpop.f32.mrf.mxu0
    %v1362 = vpop.f32.mrf.mxu0
    %v1363 = vadd.f32 0.0, %v1362
    %v1364 = vpop.f32.mrf.mxu0
    %1365 = vmatprep.mubr.bf16.mxu0 0
    %1366 = vmatmul.mubr.bf16.gmra.mxu0 %v1295
    %v1367 = vpop.f32.mrf.mxu0
    %v1368 = vadd.f32 0.0, %v1367
    %v1369 = vpop.f32.mrf.mxu0
    %v1370 = vpop.f32.mrf.mxu0
    %v1371 = vadd.f32 0.0, %v1370
    %v1372 = vpop.f32.mrf.mxu0
    %1373 = vdwg.mxu0
    %v1374 = vmul.f32 %v1344, 0.17677669
    %v1375 = vmul.f32 %v1347, 0.17677669
    %v1376 = vmul.f32 %v1352, 0.17677669
    %v1377 = vmul.f32 %v1355, 0.17677669
    %v1378 = vmul.f32 %v1360, 0.17677669
    %v1379 = vmul.f32 %v1363, 0.17677669
    %v1380 = vmul.f32 %v1368, 0.17677669
    %v1381 = vmul.f32 %v1371, 0.17677669
    %v1382 = vadd.f32 %v1374, %v299
    %v1383 = vadd.f32 %v1375, %v300
    %v1384 = vadd.f32 %v1376, %v301
    %v1385 = vadd.f32 %v1377, %v302
    %v1386 = vadd.f32 %v1378, %v303
    %v1387 = vadd.f32 %v1379, %v304
    %v1388 = vadd.f32 %v1380, %v305
    %v1389 = vadd.f32 %v1381, %v306
    %vm1390 = vcmask 523264
    %v1391 = vsel %vm1390, %v1382, -inf
    %1392 = vmax.xlane.f32.xlu0 %v1391
    %v1393 = vpop.xlane.xlu0 %1392
    %v1394 = vsel %vm1390, %v1383, -inf
    %1395 = vmax.xlane.f32.xlu0 %v1394
    %v1396 = vpop.xlane.xlu0 %1395
    %v1397 = vsel %vm1390, %v1384, -inf
    %1398 = vmax.xlane.f32.xlu0 %v1397
    %v1399 = vpop.xlane.xlu0 %1398
    %v1400 = vsel %vm1390, %v1385, -inf
    %1401 = vmax.xlane.f32.xlu0 %v1400
    %v1402 = vpop.xlane.xlu0 %1401
    %v1403 = vsel %vm1390, %v1386, -inf
    %1404 = vmax.xlane.f32.xlu0 %v1403
    %v1405 = vpop.xlane.xlu0 %1404
    %v1406 = vsel %vm1390, %v1387, -inf
    %1407 = vmax.xlane.f32.xlu0 %v1406
    %v1408 = vpop.xlane.xlu0 %1407
    %v1409 = vsel %vm1390, %v1388, -inf
    %1410 = vmax.xlane.f32.xlu0 %v1409
    %v1411 = vpop.xlane.xlu0 %1410
    %v1412 = vsel %vm1390, %v1389, -inf
    %1413 = vmax.xlane.f32.xlu0 %v1412
    %v1414 = vpop.xlane.xlu0 %1413
    %v1415 = vsub.f32 %v1382, %v1393
    %v1416 = vsub.f32 %v1383, %v1396
    %v1417 = vsub.f32 %v1384, %v1399
    %v1418 = vsub.f32 %v1385, %v1402
    %v1419 = vsub.f32 %v1386, %v1405
    %v1420 = vsub.f32 %v1387, %v1408
    %v1421 = vsub.f32 %v1388, %v1411
    %v1422 = vsub.f32 %v1389, %v1414
    %v1423 = vmul.f32 %v1415, 1.442695
    %v1424 = vpow.pop %v1423
    %v1425 = vmul.f32 %v1416, 1.442695
    %v1426 = vpow.pop %v1425
    %v1427 = vmul.f32 %v1417, 1.442695
    %v1428 = vpow.pop %v1427
    %v1429 = vmul.f32 %v1418, 1.442695
    %v1430 = vpow.pop %v1429
    %v1431 = vmul.f32 %v1419, 1.442695
    %v1432 = vpow.pop %v1431
    %v1433 = vmul.f32 %v1420, 1.442695
    %v1434 = vpow.pop %v1433
    %v1435 = vmul.f32 %v1421, 1.442695
    %v1436 = vpow.pop %v1435
    %v1437 = vmul.f32 %v1422, 1.442695
    %v1438 = vpow.pop %v1437
    %v1439 = vsel %vm1390, %v1424, 0.0
    %1440 = vadd.xlane.f32.xlu0 %v1439
    %v1441 = vpop.xlane.xlu0 %1440
    %v1442 = vsel %vm1390, %v1426, 0.0
    %1443 = vadd.xlane.f32.xlu0 %v1442
    %v1444 = vpop.xlane.xlu0 %1443
    %v1445 = vsel %vm1390, %v1428, 0.0
    %1446 = vadd.xlane.f32.xlu0 %v1445
    %v1447 = vpop.xlane.xlu0 %1446
    %v1448 = vsel %vm1390, %v1430, 0.0
    %1449 = vadd.xlane.f32.xlu0 %v1448
    %v1450 = vpop.xlane.xlu0 %1449
    %v1451 = vsel %vm1390, %v1432, 0.0
    %1452 = vadd.xlane.f32.xlu0 %v1451
    %v1453 = vpop.xlane.xlu0 %1452
    %v1454 = vsel %vm1390, %v1434, 0.0
    %1455 = vadd.xlane.f32.xlu0 %v1454
    %v1456 = vpop.xlane.xlu0 %1455
    %v1457 = vsel %vm1390, %v1436, 0.0
    %1458 = vadd.xlane.f32.xlu0 %v1457
    %v1459 = vpop.xlane.xlu0 %1458
    %v1460 = vsel %vm1390, %v1438, 0.0
    %1461 = vadd.xlane.f32.xlu0 %v1460
    %v1462 = vpop.xlane.xlu0 %1461
    %v1463 = vrcp.pop %v1441
    %v1464 = vrcp.pop %v1444
    %v1465 = vrcp.pop %v1447
    %v1466 = vrcp.pop %v1450
    %v1467 = vrcp.pop %v1453
    %v1468 = vrcp.pop %v1456
    %v1469 = vrcp.pop %v1459
    %v1470 = vrcp.pop %v1462
    %v1471 = vmul.f32 %v1424, %v1463
    %v1472 = vmul.f32 %v1426, %v1464
    %v1473 = vmul.f32 %v1428, %v1465
    %v1474 = vmul.f32 %v1430, %v1466
    %v1475 = vmul.f32 %v1432, %v1467
    %v1476 = vmul.f32 %v1434, %v1468
    %v1477 = vmul.f32 %v1436, %v1469
    %v1478 = vmul.f32 %v1438, %v1470
    %v1479 = vpack.c.bf16 %v1472, %v1471
    %v1480 = vpack.c.bf16 %v1474, %v1473
    %v1481 = vpack.c.bf16 %v1476, %v1475
    %v1482 = vpack.c.bf16 %v1478, %v1477
    %v1484 = vsel %vm1390, %v1479, 0
    %v1487 = vsel %vm1390, %v1480, 0
    %v1490 = vsel %vm1390, %v1481, 0
    %v1493 = vsel %vm1390, %v1482, 0
    %1495 = vmatprep.subr.bf16.mxu0 0
    %1496 = vmatpush1.bf16.msra.mxu0 0
    %1497 = vmatprep.subr.bf16.mxu0 0
    %1498 = vmatpush1.bf16.msra.mxu0 0
    %1499 = vmatprep.subr.bf16.mxu0 0
    %1500 = vmatpush1.bf16.msra.mxu0 0
    %1501 = vmatprep.subr.bf16.mxu0 0
    %1502 = vmatpush1.bf16.msra.mxu0 0
    %1503 = vmatprep.subr.bf16.mxu0 0
    %1504 = vmatpush1.bf16.msra.mxu0 %v1283
    %1505 = vmatprep.subr.bf16.mxu0 0
    %1506 = vmatpush1.bf16.msra.mxu0 %v1282
    %1507 = vmatprep.subr.bf16.mxu0 0
    %1508 = vmatpush1.bf16.msra.mxu0 %v1281
    %1509 = vmatprep.subr.bf16.mxu0 0
    %1510 = vmatpush1.bf16.msra.mxu0 %v1280
    %1511 = vmatprep.subr.bf16.mxu0 0
    %1512 = vmatpush2.bf16.msra.mxu0 0
    %1513 = vmatprep.subr.bf16.mxu0 0
    %1514 = vmatpush2.bf16.msra.mxu0 0
    %1515 = vmatprep.subr.bf16.mxu0 0
    %1516 = vmatpush2.bf16.msra.mxu0 0
    %1517 = vmatprep.subr.bf16.mxu0 0
    %1518 = vmatpush2.bf16.msra.mxu0 0
    %1519 = vmatprep.subr.bf16.mxu0 0
    %1520 = vmatpush2.bf16.msra.mxu0 0
    %1521 = vmatprep.subr.bf16.mxu0 0
    %1522 = vmatpush2.bf16.msra.mxu0 0
    %1523 = vmatprep.subr.bf16.mxu0 0
    %1524 = vmatpush2.bf16.msra.mxu0 0
    %1525 = vmatprep.subr.bf16.mxu0 0
    %1526 = vmatpush2.bf16.msra.mxu0 0
    %1527 = vmatprep.mubr.bf16.mxu0 0
    %1528 = vmatmul.mubr.bf16.gmra.mxu0 %v1484
    %v1529 = vpop.f32.mrf.mxu0
    %v1530 = vadd.f32 0.0, %v1529
    %v1531 = vpop.f32.mrf.mxu0
    %v1532 = vpop.f32.mrf.mxu0
    %v1533 = vadd.f32 0.0, %v1532
    %v1534 = vpop.f32.mrf.mxu0
    %1535 = vmatprep.mubr.bf16.mxu0 0
    %1536 = vmatmul.mubr.bf16.gmra.mxu0 %v1487
    %v1537 = vpop.f32.mrf.mxu0
    %v1538 = vadd.f32 0.0, %v1537
    %v1539 = vpop.f32.mrf.mxu0
    %v1540 = vpop.f32.mrf.mxu0
    %v1541 = vadd.f32 0.0, %v1540
    %v1542 = vpop.f32.mrf.mxu0
    %1543 = vmatprep.mubr.bf16.mxu0 0
    %1544 = vmatmul.mubr.bf16.gmra.mxu0 %v1490
    %v1545 = vpop.f32.mrf.mxu0
    %v1546 = vadd.f32 0.0, %v1545
    %v1547 = vpop.f32.mrf.mxu0
    %v1548 = vpop.f32.mrf.mxu0
    %v1549 = vadd.f32 0.0, %v1548
    %v1550 = vpop.f32.mrf.mxu0
    %1551 = vmatprep.mubr.bf16.mxu0 0
    %1552 = vmatmul.mubr.bf16.gmra.mxu0 %v1493
    %v1553 = vpop.f32.mrf.mxu0
    %v1554 = vadd.f32 0.0, %v1553
    %v1555 = vpop.f32.mrf.mxu0
    %v1556 = vpop.f32.mrf.mxu0
    %v1557 = vadd.f32 0.0, %v1556
    %v1558 = vpop.f32.mrf.mxu0
    %1559 = vdwg.mxu0
    %1562 = vrot.lane.b32.xlu0 %v1538, 32
    %v1563 = vpop.permute.xlu0 %1562
    %1564 = vrot.lane.b32.xlu0 %v1541, 32
    %v1565 = vpop.permute.xlu0 %1564
    %1570 = vrot.lane.b32.xlu0 %v1546, 64
    %v1571 = vpop.permute.xlu0 %1570
    %1572 = vrot.lane.b32.xlu0 %v1549, 64
    %v1573 = vpop.permute.xlu0 %1572
    %1578 = vrot.lane.b32.xlu0 %v1554, 96
    %v1579 = vpop.permute.xlu0 %1578
    %1580 = vrot.lane.b32.xlu0 %v1557, 96
    %v1581 = vpop.permute.xlu0 %1580
    %v1584 = vsel %vm1284, %v1530, %v1563
    %v1585 = vsel %vm1284, %v1533, %v1565
    %v1586 = vsel %vm1390, %v1584, %v1571
    %v1587 = vsel %vm1390, %v1585, %v1573
    %vm1588 = vcmask 785408
    %v1589 = vsel %vm1588, %v1586, %v1579
    %v1590 = vsel %vm1588, %v1587, %v1581
    %v1591 = vpack.c.bf16 %v1590, %v1589
    %v1593 = vlaneseq
    %v1594 = vshrl.u32 %v1593, 7
    %v1595 = vsub.s32 0, %v1594
    %v1596 = vrot.slane %v1211, %v1595
    %v1614 = vunpack.c.l.b16 %v1195
    %v1615 = vunpack.c.l.b16 %v1196
    %v1616 = vunpack.c.l.b16 %v1197
    %v1617 = vunpack.c.l.b16 %v1198
    %v1618 = vunpack.c.l.b16 %v1199
    %v1619 = vunpack.c.l.b16 %v1200
    %v1620 = vunpack.c.l.b16 %v1201
    %v1621 = vunpack.c.l.b16 %v1202
    %v1622 = vunpack.c.l.b16 %v1203
    %v1623 = vunpack.c.l.b16 %v1204
    %v1624 = vunpack.c.l.b16 %v1205
    %v1625 = vunpack.c.l.b16 %v1206
    %v1626 = vunpack.c.l.b16 %v1207
    %v1627 = vunpack.c.l.b16 %v1208
    %v1628 = vunpack.c.l.b16 %v1209
    %v1629 = vunpack.c.l.b16 %v1210
    %v1630 = vpack.c.b16 %v1615, %v1614
    %v1631 = vpack.c.b16 %v1617, %v1616
    %v1632 = vpack.c.b16 %v1619, %v1618
    %v1633 = vpack.c.b16 %v1621, %v1620
    %v1634 = vpack.c.b16 %v1623, %v1622
    %v1635 = vpack.c.b16 %v1625, %v1624
    %v1636 = vpack.c.b16 %v1627, %v1626
    %v1637 = vpack.c.b16 %v1629, %v1628
    %1646 = vmatprep.subr.bf16.mxu0 0
    %1647 = vmatpush1.bf16.msra.mxu0 %v1637
    %1648 = vmatprep.subr.bf16.mxu0 0
    %1649 = vmatpush1.bf16.msra.mxu0 %v1636
    %1650 = vmatprep.subr.bf16.mxu0 0
    %1651 = vmatpush1.bf16.msra.mxu0 %v1635
    %1652 = vmatprep.subr.bf16.mxu0 0
    %1653 = vmatpush1.bf16.msra.mxu0 %v1634
    %1654 = vmatprep.subr.bf16.mxu0 0
    %1655 = vmatpush1.bf16.msra.mxu0 %v1633
    %1656 = vmatprep.subr.bf16.mxu0 0
    %1657 = vmatpush1.bf16.msra.mxu0 %v1632
    %1658 = vmatprep.subr.bf16.mxu0 0
    %1659 = vmatpush1.bf16.msra.mxu0 %v1631
    %1660 = vmatprep.subr.bf16.mxu0 0
    %1661 = vmatpush1.bf16.msra.mxu0 %v1630
    %1662 = vmatprep.subr.bf16.mxu0 0
    %1663 = vmatpush2.bf16.msra.mxu0 0
    %1664 = vmatprep.subr.bf16.mxu0 0
    %1665 = vmatpush2.bf16.msra.mxu0 0
    %1666 = vmatprep.subr.bf16.mxu0 0
    %1667 = vmatpush2.bf16.msra.mxu0 0
    %1668 = vmatprep.subr.bf16.mxu0 0
    %1669 = vmatpush2.bf16.msra.mxu0 0
    %1670 = vmatprep.subr.bf16.mxu0 0
    %1671 = vmatpush2.bf16.msra.mxu0 0
    %1672 = vmatprep.subr.bf16.mxu0 0
    %1673 = vmatpush2.bf16.msra.mxu0 0
    %1674 = vmatprep.subr.bf16.mxu0 0
    %1675 = vmatpush2.bf16.msra.mxu0 0
    %1676 = vmatprep.subr.bf16.mxu0 0
    %1677 = vmatpush2.bf16.msra.mxu0 0
    %1678 = vmatprep.mubr.bf16.mxu0 0
    %1679 = vmatmul.mubr.bf16.gmra.mxu0 %v1591
    %v1680 = vpop.f32.mrf.mxu0
    %v1681 = vadd.f32 %v1596, %v1680
    %v1682 = vpop.f32.mrf.mxu0
    %v1683 = vpop.f32.mrf.mxu0
    %v1684 = vadd.f32 %v1596, %v1683
    %v1685 = vpop.f32.mrf.mxu0
    %1686 = vdwg.mxu0
    %v1687 = vadd.f32 %v886, %v1681
    %v1688 = vadd.f32 %v889, %v1684
    %v1689 = vld [vmem:[%s19] sm:$0x1]
    %v1690 = vld [vmem:[%s21] sm:$0x1]
    %1691 = vadd.xlane.f32.xlu0 %v1687
    %v1692 = vpop.xlane.xlu0 %1691
    %1693 = vadd.xlane.f32.xlu0 %v1688
    %v1694 = vpop.xlane.xlu0 %1693
    %v1695 = vmul.f32 %v1692, %v898
    %v1696 = vmul.f32 %v1694, %v898
    %v1697 = vsub.f32 %v1687, %v1695
    %v1698 = vsub.f32 %v1688, %v1696
    %v1699 = vmul.f32 %v1697, %v1697
    %v1700 = vmul.f32 %v1698, %v1698
    %1701 = vadd.xlane.f32.xlu0 %v1699
    %v1702 = vpop.xlane.xlu0 %1701
    %1703 = vadd.xlane.f32.xlu0 %v1700
    %v1704 = vpop.xlane.xlu0 %1703
    %v1705 = vmul.f32 %v1702, %v898
    %v1706 = vmul.f32 %v1704, %v898
    %v1707 = vadd.f32 %v1705, 1e-06
    %v1708 = vadd.f32 %v1706, 1e-06
    %v1709 = vrsqrt.pop %v1707
    %v1710 = vrsqrt.pop %v1708
    %v1711 = vmul.f32 %v1697, %v1709
    %v1712 = vmul.f32 %v1698, %v1710
    %v1714 = vlaneseq
    %v1715 = vshrl.u32 %v1714, 7
    %v1716 = vsub.s32 0, %v1715
    %v1717 = vrot.slane %v1689, %v1716
    %v1719 = vmul.f32 %v1711, %v1717
    %v1720 = vmul.f32 %v1712, %v1717
    %v1722 = vlaneseq
    %v1723 = vshrl.u32 %v1722, 7
    %v1724 = vsub.s32 0, %v1723
    %v1725 = vrot.slane %v1690, %v1724
    %v1727 = vadd.f32 %v1719, %v1725
    %v1728 = vadd.f32 %v1720, %v1725
    %v1729 = vld [vmem:[%s23] sm:$0xff]
    %v1730 = vld [vmem:[%s23 + $0x8] sm:$0xff]
    %v1731 = vld [vmem:[%s23 + $0x10] sm:$0xff]
    %v1732 = vld [vmem:[%s23 + $0x18] sm:$0xff]
    %v1733 = vld [vmem:[%s23 + $0x20] sm:$0xff]
    %v1734 = vld [vmem:[%s23 + $0x28] sm:$0xff]
    %v1735 = vld [vmem:[%s23 + $0x30] sm:$0xff]
    %v1736 = vld [vmem:[%s23 + $0x38] sm:$0xff]
    %v1737 = vld [vmem:[%s23 + $0x40] sm:$0xff]
    %v1738 = vld [vmem:[%s23 + $0x48] sm:$0xff]
    %v1739 = vld [vmem:[%s23 + $0x50] sm:$0xff]
    %v1740 = vld [vmem:[%s23 + $0x58] sm:$0xff]
    %v1741 = vld [vmem:[%s23 + $0x60] sm:$0xff]
    %v1742 = vld [vmem:[%s23 + $0x68] sm:$0xff]
    %v1743 = vld [vmem:[%s23 + $0x70] sm:$0xff]
    %v1744 = vld [vmem:[%s23 + $0x78] sm:$0xff]
    %v1745 = vld [vmem:[%s23 + $0x80] sm:$0xff]
    %v1746 = vld [vmem:[%s23 + $0x88] sm:$0xff]
    %v1747 = vld [vmem:[%s23 + $0x90] sm:$0xff]
    %v1748 = vld [vmem:[%s23 + $0x98] sm:$0xff]
    %v1749 = vld [vmem:[%s23 + $0xa0] sm:$0xff]
    %v1750 = vld [vmem:[%s23 + $0xa8] sm:$0xff]
    %v1751 = vld [vmem:[%s23 + $0xb0] sm:$0xff]
    %v1752 = vld [vmem:[%s23 + $0xb8] sm:$0xff]
    %v1753 = vld [vmem:[%s23 + $0xc0] sm:$0xff]
    %v1754 = vld [vmem:[%s23 + $0xc8] sm:$0xff]
    %v1755 = vld [vmem:[%s23 + $0xd0] sm:$0xff]
    %v1756 = vld [vmem:[%s23 + $0xd8] sm:$0xff]
    %v1757 = vld [vmem:[%s23 + $0xe0] sm:$0xff]
    %v1758 = vld [vmem:[%s23 + $0xe8] sm:$0xff]
    %v1759 = vld [vmem:[%s23 + $0xf0] sm:$0xff]
    %v1760 = vld [vmem:[%s23 + $0xf8] sm:$0xff]
    %v1761 = vpack.c.bf16 %v1728, %v1727
    %v1762 = vld [vmem:[%s25] sm:$0xf]
    %v1764 = vlaneseq
    %v1765 = vshrl.u32 %v1764, 7
    %v1766 = vsub.s32 0, %v1765
    %v1767 = vrot.slane %v1762, %v1766
    %v1768 = vlaneseq
    %v1769 = vshrl.u32 %v1768, 7
    %v1770 = vsub.s32 1, %v1769
    %v1771 = vrot.slane %v1762, %v1770
    %v1772 = vlaneseq
    %v1773 = vshrl.u32 %v1772, 7
    %v1774 = vsub.s32 2, %v1773
    %v1775 = vrot.slane %v1762, %v1774
    %v1776 = vlaneseq
    %v1777 = vshrl.u32 %v1776, 7
    %v1778 = vsub.s32 3, %v1777
    %v1779 = vrot.slane %v1762, %v1778
    %v1816 = vunpack.c.l.b16 %v1729
    %v1817 = vunpack.c.h.b16 %v1729
    %v1818 = vunpack.c.l.b16 %v1730
    %v1819 = vunpack.c.h.b16 %v1730
    %v1820 = vunpack.c.l.b16 %v1731
    %v1821 = vunpack.c.h.b16 %v1731
    %v1822 = vunpack.c.l.b16 %v1732
    %v1823 = vunpack.c.h.b16 %v1732
    %v1824 = vunpack.c.l.b16 %v1733
    %v1825 = vunpack.c.h.b16 %v1733
    %v1826 = vunpack.c.l.b16 %v1734
    %v1827 = vunpack.c.h.b16 %v1734
    %v1828 = vunpack.c.l.b16 %v1735
    %v1829 = vunpack.c.h.b16 %v1735
    %v1830 = vunpack.c.l.b16 %v1736
    %v1831 = vunpack.c.h.b16 %v1736
    %v1832 = vunpack.c.l.b16 %v1737
    %v1833 = vunpack.c.h.b16 %v1737
    %v1834 = vunpack.c.l.b16 %v1738
    %v1835 = vunpack.c.h.b16 %v1738
    %v1836 = vunpack.c.l.b16 %v1739
    %v1837 = vunpack.c.h.b16 %v1739
    %v1838 = vunpack.c.l.b16 %v1740
    %v1839 = vunpack.c.h.b16 %v1740
    %v1840 = vunpack.c.l.b16 %v1741
    %v1841 = vunpack.c.h.b16 %v1741
    %v1842 = vunpack.c.l.b16 %v1742
    %v1843 = vunpack.c.h.b16 %v1742
    %v1844 = vunpack.c.l.b16 %v1743
    %v1845 = vunpack.c.h.b16 %v1743
    %v1846 = vunpack.c.l.b16 %v1744
    %v1847 = vunpack.c.h.b16 %v1744
    %v1848 = vunpack.c.l.b16 %v1745
    %v1849 = vunpack.c.h.b16 %v1745
    %v1850 = vunpack.c.l.b16 %v1746
    %v1851 = vunpack.c.h.b16 %v1746
    %v1852 = vunpack.c.l.b16 %v1747
    %v1853 = vunpack.c.h.b16 %v1747
    %v1854 = vunpack.c.l.b16 %v1748
    %v1855 = vunpack.c.h.b16 %v1748
    %v1856 = vunpack.c.l.b16 %v1749
    %v1857 = vunpack.c.h.b16 %v1749
    %v1858 = vunpack.c.l.b16 %v1750
    %v1859 = vunpack.c.h.b16 %v1750
    %v1860 = vunpack.c.l.b16 %v1751
    %v1861 = vunpack.c.h.b16 %v1751
    %v1862 = vunpack.c.l.b16 %v1752
    %v1863 = vunpack.c.h.b16 %v1752
    %v1864 = vunpack.c.l.b16 %v1753
    %v1865 = vunpack.c.h.b16 %v1753
    %v1866 = vunpack.c.l.b16 %v1754
    %v1867 = vunpack.c.h.b16 %v1754
    %v1868 = vunpack.c.l.b16 %v1755
    %v1869 = vunpack.c.h.b16 %v1755
    %v1870 = vunpack.c.l.b16 %v1756
    %v1871 = vunpack.c.h.b16 %v1756
    %v1872 = vunpack.c.l.b16 %v1757
    %v1873 = vunpack.c.h.b16 %v1757
    %v1874 = vunpack.c.l.b16 %v1758
    %v1875 = vunpack.c.h.b16 %v1758
    %v1876 = vunpack.c.l.b16 %v1759
    %v1877 = vunpack.c.h.b16 %v1759
    %v1878 = vunpack.c.l.b16 %v1760
    %v1879 = vunpack.c.h.b16 %v1760
    %v1880 = vpack.c.b16 %v1820, %v1816
    %v1881 = vpack.c.b16 %v1821, %v1817
    %v1882 = vpack.c.b16 %v1822, %v1818
    %v1883 = vpack.c.b16 %v1823, %v1819
    %v1884 = vpack.c.b16 %v1828, %v1824
    %v1885 = vpack.c.b16 %v1829, %v1825
    %v1886 = vpack.c.b16 %v1830, %v1826
    %v1887 = vpack.c.b16 %v1831, %v1827
    %v1888 = vpack.c.b16 %v1836, %v1832
    %v1889 = vpack.c.b16 %v1837, %v1833
    %v1890 = vpack.c.b16 %v1838, %v1834
    %v1891 = vpack.c.b16 %v1839, %v1835
    %v1892 = vpack.c.b16 %v1844, %v1840
    %v1893 = vpack.c.b16 %v1845, %v1841
    %v1894 = vpack.c.b16 %v1846, %v1842
    %v1895 = vpack.c.b16 %v1847, %v1843
    %v1896 = vpack.c.b16 %v1852, %v1848
    %v1897 = vpack.c.b16 %v1853, %v1849
    %v1898 = vpack.c.b16 %v1854, %v1850
    %v1899 = vpack.c.b16 %v1855, %v1851
    %v1900 = vpack.c.b16 %v1860, %v1856
    %v1901 = vpack.c.b16 %v1861, %v1857
    %v1902 = vpack.c.b16 %v1862, %v1858
    %v1903 = vpack.c.b16 %v1863, %v1859
    %v1904 = vpack.c.b16 %v1868, %v1864
    %v1905 = vpack.c.b16 %v1869, %v1865
    %v1906 = vpack.c.b16 %v1870, %v1866
    %v1907 = vpack.c.b16 %v1871, %v1867
    %v1908 = vpack.c.b16 %v1876, %v1872
    %v1909 = vpack.c.b16 %v1877, %v1873
    %v1910 = vpack.c.b16 %v1878, %v1874
    %v1911 = vpack.c.b16 %v1879, %v1875
    %1944 = vmatprep.subr.bf16.mxu0 %v1909
    %1945 = vmatpush1.bf16.msra.mxu0 %v1908
    %1946 = vmatprep.subr.bf16.mxu0 %v1905
    %1947 = vmatpush1.bf16.msra.mxu0 %v1904
    %1948 = vmatprep.subr.bf16.mxu0 %v1901
    %1949 = vmatpush1.bf16.msra.mxu0 %v1900
    %1950 = vmatprep.subr.bf16.mxu0 %v1897
    %1951 = vmatpush1.bf16.msra.mxu0 %v1896
    %1952 = vmatprep.subr.bf16.mxu0 %v1893
    %1953 = vmatpush1.bf16.msra.mxu0 %v1892
    %1954 = vmatprep.subr.bf16.mxu0 %v1889
    %1955 = vmatpush1.bf16.msra.mxu0 %v1888
    %1956 = vmatprep.subr.bf16.mxu0 %v1885
    %1957 = vmatpush1.bf16.msra.mxu0 %v1884
    %1958 = vmatprep.subr.bf16.mxu0 %v1881
    %1959 = vmatpush1.bf16.msra.mxu0 %v1880
    %1960 = vmatprep.subr.bf16.mxu0 0
    %1961 = vmatpush2.bf16.msra.mxu0 0
    %1962 = vmatprep.subr.bf16.mxu0 0
    %1963 = vmatpush2.bf16.msra.mxu0 0
    %1964 = vmatprep.subr.bf16.mxu0 0
    %1965 = vmatpush2.bf16.msra.mxu0 0
    %1966 = vmatprep.subr.bf16.mxu0 0
    %1967 = vmatpush2.bf16.msra.mxu0 0
    %1968 = vmatprep.subr.bf16.mxu0 0
    %1969 = vmatpush2.bf16.msra.mxu0 0
    %1970 = vmatprep.subr.bf16.mxu0 0
    %1971 = vmatpush2.bf16.msra.mxu0 0
    %1972 = vmatprep.subr.bf16.mxu0 0
    %1973 = vmatpush2.bf16.msra.mxu0 0
    %1974 = vmatprep.subr.bf16.mxu0 0
    %1975 = vmatpush2.bf16.msra.mxu0 0
    %1976 = vmatprep.mubr.bf16.mxu0 0
    %1977 = vmatmul.mubr.bf16.gmra.mxu0 %v1761
    %v1978 = vpop.f32.mrf.mxu0
    %v1979 = vadd.f32 %v1767, %v1978
    %v1980 = vpop.f32.mrf.mxu0
    %v1981 = vadd.f32 %v1771, %v1980
    %v1982 = vpop.f32.mrf.mxu0
    %v1983 = vadd.f32 %v1767, %v1982
    %v1984 = vpop.f32.mrf.mxu0
    %v1985 = vadd.f32 %v1771, %v1984
    %1986 = vdwg.mxu0
    %1987 = vmatprep.subr.bf16.mxu0 %v1911
    %1988 = vmatpush1.bf16.msra.mxu0 %v1910
    %1989 = vmatprep.subr.bf16.mxu0 %v1907
    %1990 = vmatpush1.bf16.msra.mxu0 %v1906
    %1991 = vmatprep.subr.bf16.mxu0 %v1903
    %1992 = vmatpush1.bf16.msra.mxu0 %v1902
    %1993 = vmatprep.subr.bf16.mxu0 %v1899
    %1994 = vmatpush1.bf16.msra.mxu0 %v1898
    %1995 = vmatprep.subr.bf16.mxu0 %v1895
    %1996 = vmatpush1.bf16.msra.mxu0 %v1894
    %1997 = vmatprep.subr.bf16.mxu0 %v1891
    %1998 = vmatpush1.bf16.msra.mxu0 %v1890
    %1999 = vmatprep.subr.bf16.mxu0 %v1887
    %2000 = vmatpush1.bf16.msra.mxu0 %v1886
    %2001 = vmatprep.subr.bf16.mxu0 %v1883
    %2002 = vmatpush1.bf16.msra.mxu0 %v1882
    %2003 = vmatprep.subr.bf16.mxu0 0
    %2004 = vmatpush2.bf16.msra.mxu0 0
    %2005 = vmatprep.subr.bf16.mxu0 0
    %2006 = vmatpush2.bf16.msra.mxu0 0
    %2007 = vmatprep.subr.bf16.mxu0 0
    %2008 = vmatpush2.bf16.msra.mxu0 0
    %2009 = vmatprep.subr.bf16.mxu0 0
    %2010 = vmatpush2.bf16.msra.mxu0 0
    %2011 = vmatprep.subr.bf16.mxu0 0
    %2012 = vmatpush2.bf16.msra.mxu0 0
    %2013 = vmatprep.subr.bf16.mxu0 0
    %2014 = vmatpush2.bf16.msra.mxu0 0
    %2015 = vmatprep.subr.bf16.mxu0 0
    %2016 = vmatpush2.bf16.msra.mxu0 0
    %2017 = vmatprep.subr.bf16.mxu0 0
    %2018 = vmatpush2.bf16.msra.mxu0 0
    %2019 = vmatprep.mubr.bf16.mxu0 0
    %2020 = vmatmul.mubr.bf16.gmra.mxu0 %v1761
    %v2021 = vpop.f32.mrf.mxu0
    %v2022 = vadd.f32 %v1775, %v2021
    %v2023 = vpop.f32.mrf.mxu0
    %v2024 = vadd.f32 %v1779, %v2023
    %v2025 = vpop.f32.mrf.mxu0
    %v2026 = vadd.f32 %v1775, %v2025
    %v2027 = vpop.f32.mrf.mxu0
    %v2028 = vadd.f32 %v1779, %v2027
    %2029 = vdwg.mxu0
    %v2030 = vmul.f32 %v1979, 0.5
    %v2031 = vmul.f32 %v1981, 0.5
    %v2032 = vmul.f32 %v2022, 0.5
    %v2033 = vmul.f32 %v2024, 0.5
    %v2034 = vmul.f32 %v1983, 0.5
    %v2035 = vmul.f32 %v1985, 0.5
    %v2036 = vmul.f32 %v2026, 0.5
    %v2037 = vmul.f32 %v2028, 0.5
    %v2038 = vmul.f32 %v1979, 0.044715
    %v2039 = vmul.f32 %v1981, 0.044715
    %v2040 = vmul.f32 %v2022, 0.044715
    %v2041 = vmul.f32 %v2024, 0.044715
    %v2042 = vmul.f32 %v1983, 0.044715
    %v2043 = vmul.f32 %v1985, 0.044715
    %v2044 = vmul.f32 %v2026, 0.044715
    %v2045 = vmul.f32 %v2028, 0.044715
    %v2046 = vmul.f32 %v2038, %v1979
    %v2047 = vmul.f32 %v2039, %v1981
    %v2048 = vmul.f32 %v2040, %v2022
    %v2049 = vmul.f32 %v2041, %v2024
    %v2050 = vmul.f32 %v2042, %v1983
    %v2051 = vmul.f32 %v2043, %v1985
    %v2052 = vmul.f32 %v2044, %v2026
    %v2053 = vmul.f32 %v2045, %v2028
    %v2054 = vmul.f32 %v2046, %v1979
    %v2055 = vmul.f32 %v2047, %v1981
    %v2056 = vmul.f32 %v2048, %v2022
    %v2057 = vmul.f32 %v2049, %v2024
    %v2058 = vmul.f32 %v2050, %v1983
    %v2059 = vmul.f32 %v2051, %v1985
    %v2060 = vmul.f32 %v2052, %v2026
    %v2061 = vmul.f32 %v2053, %v2028
    %v2062 = vadd.f32 %v1979, %v2054
    %v2063 = vadd.f32 %v1981, %v2055
    %v2064 = vadd.f32 %v2022, %v2056
    %v2065 = vadd.f32 %v2024, %v2057
    %v2066 = vadd.f32 %v1983, %v2058
    %v2067 = vadd.f32 %v1985, %v2059
    %v2068 = vadd.f32 %v2026, %v2060
    %v2069 = vadd.f32 %v2028, %v2061
    %v2070 = vmul.f32 %v2062, 0.7978846
    %v2071 = vmul.f32 %v2063, 0.7978846
    %v2072 = vmul.f32 %v2064, 0.7978846
    %v2073 = vmul.f32 %v2065, 0.7978846
    %v2074 = vmul.f32 %v2066, 0.7978846
    %v2075 = vmul.f32 %v2067, 0.7978846
    %v2076 = vmul.f32 %v2068, 0.7978846
    %v2077 = vmul.f32 %v2069, 0.7978846
    %v2078 = vtanh.pop %v2070
    %v2079 = vtanh.pop %v2071
    %v2080 = vtanh.pop %v2072
    %v2081 = vtanh.pop %v2073
    %v2082 = vtanh.pop %v2074
    %v2083 = vtanh.pop %v2075
    %v2084 = vtanh.pop %v2076
    %v2085 = vtanh.pop %v2077
    %v2086 = vadd.f32 %v2078, 1.0
    %v2087 = vadd.f32 %v2079, 1.0
    %v2088 = vadd.f32 %v2080, 1.0
    %v2089 = vadd.f32 %v2081, 1.0
    %v2090 = vadd.f32 %v2082, 1.0
    %v2091 = vadd.f32 %v2083, 1.0
    %v2092 = vadd.f32 %v2084, 1.0
    %v2093 = vadd.f32 %v2085, 1.0
    %v2094 = vmul.f32 %v2030, %v2086
    %v2095 = vmul.f32 %v2031, %v2087
    %v2096 = vmul.f32 %v2032, %v2088
    %v2097 = vmul.f32 %v2033, %v2089
    %v2098 = vmul.f32 %v2034, %v2090
    %v2099 = vmul.f32 %v2035, %v2091
    %v2100 = vmul.f32 %v2036, %v2092
    %v2101 = vmul.f32 %v2037, %v2093
    %v2102 = vld [vmem:[%s27] sm:$0xf]
    %v2103 = vld [vmem:[%s27 + $0x4] sm:$0xf]
    %v2104 = vld [vmem:[%s27 + $0x8] sm:$0xf]
    %v2105 = vld [vmem:[%s27 + $0xc] sm:$0xf]
    %v2106 = vld [vmem:[%s27 + $0x10] sm:$0xf]
    %v2107 = vld [vmem:[%s27 + $0x14] sm:$0xf]
    %v2108 = vld [vmem:[%s27 + $0x18] sm:$0xf]
    %v2109 = vld [vmem:[%s27 + $0x1c] sm:$0xf]
    %v2110 = vld [vmem:[%s27 + $0x20] sm:$0xf]
    %v2111 = vld [vmem:[%s27 + $0x24] sm:$0xf]
    %v2112 = vld [vmem:[%s27 + $0x28] sm:$0xf]
    %v2113 = vld [vmem:[%s27 + $0x2c] sm:$0xf]
    %v2114 = vld [vmem:[%s27 + $0x30] sm:$0xf]
    %v2115 = vld [vmem:[%s27 + $0x34] sm:$0xf]
    %v2116 = vld [vmem:[%s27 + $0x38] sm:$0xf]
    %v2117 = vld [vmem:[%s27 + $0x3c] sm:$0xf]
    %v2118 = vld [vmem:[%s27 + $0x40] sm:$0xf]
    %v2119 = vld [vmem:[%s27 + $0x44] sm:$0xf]
    %v2120 = vld [vmem:[%s27 + $0x48] sm:$0xf]
    %v2121 = vld [vmem:[%s27 + $0x4c] sm:$0xf]
    %v2122 = vld [vmem:[%s27 + $0x50] sm:$0xf]
    %v2123 = vld [vmem:[%s27 + $0x54] sm:$0xf]
    %v2124 = vld [vmem:[%s27 + $0x58] sm:$0xf]
    %v2125 = vld [vmem:[%s27 + $0x5c] sm:$0xf]
    %v2126 = vld [vmem:[%s27 + $0x60] sm:$0xf]
    %v2127 = vld [vmem:[%s27 + $0x64] sm:$0xf]
    %v2128 = vld [vmem:[%s27 + $0x68] sm:$0xf]
    %v2129 = vld [vmem:[%s27 + $0x6c] sm:$0xf]
    %v2130 = vld [vmem:[%s27 + $0x70] sm:$0xf]
    %v2131 = vld [vmem:[%s27 + $0x74] sm:$0xf]
    %v2132 = vld [vmem:[%s27 + $0x78] sm:$0xf]
    %v2133 = vld [vmem:[%s27 + $0x7c] sm:$0xf]
    %v2134 = vld [vmem:[%s27 + $0x80] sm:$0xf]
    %v2135 = vld [vmem:[%s27 + $0x84] sm:$0xf]
    %v2136 = vld [vmem:[%s27 + $0x88] sm:$0xf]
    %v2137 = vld [vmem:[%s27 + $0x8c] sm:$0xf]
    %v2138 = vld [vmem:[%s27 + $0x90] sm:$0xf]
    %v2139 = vld [vmem:[%s27 + $0x94] sm:$0xf]
    %v2140 = vld [vmem:[%s27 + $0x98] sm:$0xf]
    %v2141 = vld [vmem:[%s27 + $0x9c] sm:$0xf]
    %v2142 = vld [vmem:[%s27 + $0xa0] sm:$0xf]
    %v2143 = vld [vmem:[%s27 + $0xa4] sm:$0xf]
    %v2144 = vld [vmem:[%s27 + $0xa8] sm:$0xf]
    %v2145 = vld [vmem:[%s27 + $0xac] sm:$0xf]
    %v2146 = vld [vmem:[%s27 + $0xb0] sm:$0xf]
    %v2147 = vld [vmem:[%s27 + $0xb4] sm:$0xf]
    %v2148 = vld [vmem:[%s27 + $0xb8] sm:$0xf]
    %v2149 = vld [vmem:[%s27 + $0xbc] sm:$0xf]
    %v2150 = vld [vmem:[%s27 + $0xc0] sm:$0xf]
    %v2151 = vld [vmem:[%s27 + $0xc4] sm:$0xf]
    %v2152 = vld [vmem:[%s27 + $0xc8] sm:$0xf]
    %v2153 = vld [vmem:[%s27 + $0xcc] sm:$0xf]
    %v2154 = vld [vmem:[%s27 + $0xd0] sm:$0xf]
    %v2155 = vld [vmem:[%s27 + $0xd4] sm:$0xf]
    %v2156 = vld [vmem:[%s27 + $0xd8] sm:$0xf]
    %v2157 = vld [vmem:[%s27 + $0xdc] sm:$0xf]
    %v2158 = vld [vmem:[%s27 + $0xe0] sm:$0xf]
    %v2159 = vld [vmem:[%s27 + $0xe4] sm:$0xf]
    %v2160 = vld [vmem:[%s27 + $0xe8] sm:$0xf]
    %v2161 = vld [vmem:[%s27 + $0xec] sm:$0xf]
    %v2162 = vld [vmem:[%s27 + $0xf0] sm:$0xf]
    %v2163 = vld [vmem:[%s27 + $0xf4] sm:$0xf]
    %v2164 = vld [vmem:[%s27 + $0xf8] sm:$0xf]
    %v2165 = vld [vmem:[%s27 + $0xfc] sm:$0xf]
    %v2166 = vpack.c.bf16 %v2098, %v2094
    %v2167 = vpack.c.bf16 %v2099, %v2095
    %v2168 = vpack.c.bf16 %v2100, %v2096
    %v2169 = vpack.c.bf16 %v2101, %v2097
    %v2234 = vunpack.c.l.b16 %v2102
    %v2235 = vunpack.c.l.b16 %v2103
    %v2236 = vunpack.c.l.b16 %v2104
    %v2237 = vunpack.c.l.b16 %v2105
    %v2238 = vunpack.c.l.b16 %v2106
    %v2239 = vunpack.c.l.b16 %v2107
    %v2240 = vunpack.c.l.b16 %v2108
    %v2241 = vunpack.c.l.b16 %v2109
    %v2242 = vunpack.c.l.b16 %v2110
    %v2243 = vunpack.c.l.b16 %v2111
    %v2244 = vunpack.c.l.b16 %v2112
    %v2245 = vunpack.c.l.b16 %v2113
    %v2246 = vunpack.c.l.b16 %v2114
    %v2247 = vunpack.c.l.b16 %v2115
    %v2248 = vunpack.c.l.b16 %v2116
    %v2249 = vunpack.c.l.b16 %v2117
    %v2250 = vunpack.c.l.b16 %v2118
    %v2251 = vunpack.c.l.b16 %v2119
    %v2252 = vunpack.c.l.b16 %v2120
    %v2253 = vunpack.c.l.b16 %v2121
    %v2254 = vunpack.c.l.b16 %v2122
    %v2255 = vunpack.c.l.b16 %v2123
    %v2256 = vunpack.c.l.b16 %v2124
    %v2257 = vunpack.c.l.b16 %v2125
    %v2258 = vunpack.c.l.b16 %v2126
    %v2259 = vunpack.c.l.b16 %v2127
    %v2260 = vunpack.c.l.b16 %v2128
    %v2261 = vunpack.c.l.b16 %v2129
    %v2262 = vunpack.c.l.b16 %v2130
    %v2263 = vunpack.c.l.b16 %v2131
    %v2264 = vunpack.c.l.b16 %v2132
    %v2265 = vunpack.c.l.b16 %v2133
    %v2266 = vunpack.c.l.b16 %v2134
    %v2267 = vunpack.c.l.b16 %v2135
    %v2268 = vunpack.c.l.b16 %v2136
    %v2269 = vunpack.c.l.b16 %v2137
    %v2270 = vunpack.c.l.b16 %v2138
    %v2271 = vunpack.c.l.b16 %v2139
    %v2272 = vunpack.c.l.b16 %v2140
    %v2273 = vunpack.c.l.b16 %v2141
    %v2274 = vunpack.c.l.b16 %v2142
    %v2275 = vunpack.c.l.b16 %v2143
    %v2276 = vunpack.c.l.b16 %v2144
    %v2277 = vunpack.c.l.b16 %v2145
    %v2278 = vunpack.c.l.b16 %v2146
    %v2279 = vunpack.c.l.b16 %v2147
    %v2280 = vunpack.c.l.b16 %v2148
    %v2281 = vunpack.c.l.b16 %v2149
    %v2282 = vunpack.c.l.b16 %v2150
    %v2283 = vunpack.c.l.b16 %v2151
    %v2284 = vunpack.c.l.b16 %v2152
    %v2285 = vunpack.c.l.b16 %v2153
    %v2286 = vunpack.c.l.b16 %v2154
    %v2287 = vunpack.c.l.b16 %v2155
    %v2288 = vunpack.c.l.b16 %v2156
    %v2289 = vunpack.c.l.b16 %v2157
    %v2290 = vunpack.c.l.b16 %v2158
    %v2291 = vunpack.c.l.b16 %v2159
    %v2292 = vunpack.c.l.b16 %v2160
    %v2293 = vunpack.c.l.b16 %v2161
    %v2294 = vunpack.c.l.b16 %v2162
    %v2295 = vunpack.c.l.b16 %v2163
    %v2296 = vunpack.c.l.b16 %v2164
    %v2297 = vunpack.c.l.b16 %v2165
    %v2298 = vpack.c.b16 %v2235, %v2234
    %v2299 = vpack.c.b16 %v2237, %v2236
    %v2300 = vpack.c.b16 %v2239, %v2238
    %v2301 = vpack.c.b16 %v2241, %v2240
    %v2302 = vpack.c.b16 %v2243, %v2242
    %v2303 = vpack.c.b16 %v2245, %v2244
    %v2304 = vpack.c.b16 %v2247, %v2246
    %v2305 = vpack.c.b16 %v2249, %v2248
    %v2306 = vpack.c.b16 %v2251, %v2250
    %v2307 = vpack.c.b16 %v2253, %v2252
    %v2308 = vpack.c.b16 %v2255, %v2254
    %v2309 = vpack.c.b16 %v2257, %v2256
    %v2310 = vpack.c.b16 %v2259, %v2258
    %v2311 = vpack.c.b16 %v2261, %v2260
    %v2312 = vpack.c.b16 %v2263, %v2262
    %v2313 = vpack.c.b16 %v2265, %v2264
    %v2314 = vpack.c.b16 %v2267, %v2266
    %v2315 = vpack.c.b16 %v2269, %v2268
    %v2316 = vpack.c.b16 %v2271, %v2270
    %v2317 = vpack.c.b16 %v2273, %v2272
    %v2318 = vpack.c.b16 %v2275, %v2274
    %v2319 = vpack.c.b16 %v2277, %v2276
    %v2320 = vpack.c.b16 %v2279, %v2278
    %v2321 = vpack.c.b16 %v2281, %v2280
    %v2322 = vpack.c.b16 %v2283, %v2282
    %v2323 = vpack.c.b16 %v2285, %v2284
    %v2324 = vpack.c.b16 %v2287, %v2286
    %v2325 = vpack.c.b16 %v2289, %v2288
    %v2326 = vpack.c.b16 %v2291, %v2290
    %v2327 = vpack.c.b16 %v2293, %v2292
    %v2328 = vpack.c.b16 %v2295, %v2294
    %v2329 = vpack.c.b16 %v2297, %v2296
    %2362 = vmatprep.subr.bf16.mxu0 0
    %2363 = vmatpush1.bf16.msra.mxu0 %v2305
    %2364 = vmatprep.subr.bf16.mxu0 0
    %2365 = vmatpush1.bf16.msra.mxu0 %v2304
    %2366 = vmatprep.subr.bf16.mxu0 0
    %2367 = vmatpush1.bf16.msra.mxu0 %v2303
    %2368 = vmatprep.subr.bf16.mxu0 0
    %2369 = vmatpush1.bf16.msra.mxu0 %v2302
    %2370 = vmatprep.subr.bf16.mxu0 0
    %2371 = vmatpush1.bf16.msra.mxu0 %v2301
    %2372 = vmatprep.subr.bf16.mxu0 0
    %2373 = vmatpush1.bf16.msra.mxu0 %v2300
    %2374 = vmatprep.subr.bf16.mxu0 0
    %2375 = vmatpush1.bf16.msra.mxu0 %v2299
    %2376 = vmatprep.subr.bf16.mxu0 0
    %2377 = vmatpush1.bf16.msra.mxu0 %v2298
    %2378 = vmatprep.subr.bf16.mxu0 0
    %2379 = vmatpush2.bf16.msra.mxu0 %v2313
    %2380 = vmatprep.subr.bf16.mxu0 0
    %2381 = vmatpush2.bf16.msra.mxu0 %v2312
    %2382 = vmatprep.subr.bf16.mxu0 0
    %2383 = vmatpush2.bf16.msra.mxu0 %v2311
    %2384 = vmatprep.subr.bf16.mxu0 0
    %2385 = vmatpush2.bf16.msra.mxu0 %v2310
    %2386 = vmatprep.subr.bf16.mxu0 0
    %2387 = vmatpush2.bf16.msra.mxu0 %v2309
    %2388 = vmatprep.subr.bf16.mxu0 0
    %2389 = vmatpush2.bf16.msra.mxu0 %v2308
    %2390 = vmatprep.subr.bf16.mxu0 0
    %2391 = vmatpush2.bf16.msra.mxu0 %v2307
    %2392 = vmatprep.subr.bf16.mxu0 0
    %2393 = vmatpush2.bf16.msra.mxu0 %v2306
    %2394 = vmatprep.mubr.bf16.mxu0 %v2167
    %2395 = vmatmul.mubr.bf16.gmra.mxu0 %v2166
    %v2396 = vpop.f32.mrf.mxu0
    %v2397 = vadd.f32 0.0, %v2396
    %v2398 = vpop.f32.mrf.mxu0
    %v2399 = vpop.f32.mrf.mxu0
    %v2400 = vadd.f32 0.0, %v2399
    %v2401 = vpop.f32.mrf.mxu0
    %2402 = vdwg.mxu0
    %2403 = vmatprep.subr.bf16.mxu0 0
    %2404 = vmatpush1.bf16.msra.mxu0 %v2321
    %2405 = vmatprep.subr.bf16.mxu0 0
    %2406 = vmatpush1.bf16.msra.mxu0 %v2320
    %2407 = vmatprep.subr.bf16.mxu0 0
    %2408 = vmatpush1.bf16.msra.mxu0 %v2319
    %2409 = vmatprep.subr.bf16.mxu0 0
    %2410 = vmatpush1.bf16.msra.mxu0 %v2318
    %2411 = vmatprep.subr.bf16.mxu0 0
    %2412 = vmatpush1.bf16.msra.mxu0 %v2317
    %2413 = vmatprep.subr.bf16.mxu0 0
    %2414 = vmatpush1.bf16.msra.mxu0 %v2316
    %2415 = vmatprep.subr.bf16.mxu0 0
    %2416 = vmatpush1.bf16.msra.mxu0 %v2315
    %2417 = vmatprep.subr.bf16.mxu0 0
    %2418 = vmatpush1.bf16.msra.mxu0 %v2314
    %2419 = vmatprep.subr.bf16.mxu0 0
    %2420 = vmatpush2.bf16.msra.mxu0 %v2329
    %2421 = vmatprep.subr.bf16.mxu0 0
    %2422 = vmatpush2.bf16.msra.mxu0 %v2328
    %2423 = vmatprep.subr.bf16.mxu0 0
    %2424 = vmatpush2.bf16.msra.mxu0 %v2327
    %2425 = vmatprep.subr.bf16.mxu0 0
    %2426 = vmatpush2.bf16.msra.mxu0 %v2326
    %2427 = vmatprep.subr.bf16.mxu0 0
    %2428 = vmatpush2.bf16.msra.mxu0 %v2325
    %2429 = vmatprep.subr.bf16.mxu0 0
    %2430 = vmatpush2.bf16.msra.mxu0 %v2324
    %2431 = vmatprep.subr.bf16.mxu0 0
    %2432 = vmatpush2.bf16.msra.mxu0 %v2323
    %2433 = vmatprep.subr.bf16.mxu0 0
    %2434 = vmatpush2.bf16.msra.mxu0 %v2322
    %2435 = vmatprep.mubr.bf16.mxu0 %v2169
    %2436 = vmatmul.mubr.bf16.gmra.mxu0 %v2168
    %v2437 = vpop.f32.mrf.mxu0
    %v2438 = vadd.f32 %v2397, %v2437
    %v2439 = vpop.f32.mrf.mxu0
    %v2440 = vpop.f32.mrf.mxu0
    %v2441 = vadd.f32 %v2400, %v2440
    %v2442 = vpop.f32.mrf.mxu0
    %2443 = vdwg.mxu0
    %v2444 = vadd.f32 %v1687, %v2438
    %v2445 = vadd.f32 %v1688, %v2441
    %v2446 = vld [vmem:[%s29] sm:$0x1]
    %v2448 = vlaneseq
    %v2449 = vshrl.u32 %v2448, 7
    %v2450 = vsub.s32 0, %v2449
    %v2451 = vrot.slane %v2446, %v2450
    %v2453 = vadd.f32 %v2444, %v2451
    %v2454 = vadd.f32 %v2445, %v2451
    %2455 = vst [vmem:[%s119] sm:$0xff] %v2453
    %2456 = vst [vmem:[%s119 + $0x8] sm:$0xff] %v2454
    %s2457 = scalar_lea.vmem %s7, 1
    %v2458 = vld [vmem:[%s2457] sm:$0x1]
    %s2459 = scalar_lea.vmem %s9, 1
    %v2460 = vld [vmem:[%s2459] sm:$0x1]
    %2461 = vadd.xlane.f32.xlu0 %v2453
    %v2462 = vpop.xlane.xlu0 %2461
    %2463 = vadd.xlane.f32.xlu0 %v2454
    %v2464 = vpop.xlane.xlu0 %2463
    %v2465 = vmul.f32 %v2462, %v898
    %v2466 = vmul.f32 %v2464, %v898
    %v2467 = vsub.f32 %v2453, %v2465
    %v2468 = vsub.f32 %v2454, %v2466
    %v2469 = vmul.f32 %v2467, %v2467
    %v2470 = vmul.f32 %v2468, %v2468
    %2471 = vadd.xlane.f32.xlu0 %v2469
    %v2472 = vpop.xlane.xlu0 %2471
    %2473 = vadd.xlane.f32.xlu0 %v2470
    %v2474 = vpop.xlane.xlu0 %2473
    %v2475 = vmul.f32 %v2472, %v898
    %v2476 = vmul.f32 %v2474, %v898
    %v2477 = vadd.f32 %v2475, 1e-06
    %v2478 = vadd.f32 %v2476, 1e-06
    %v2479 = vrsqrt.pop %v2477
    %v2480 = vrsqrt.pop %v2478
    %v2481 = vmul.f32 %v2467, %v2479
    %v2482 = vmul.f32 %v2468, %v2480
    %v2484 = vlaneseq
    %v2485 = vshrl.u32 %v2484, 7
    %v2486 = vsub.s32 0, %v2485
    %v2487 = vrot.slane %v2458, %v2486
    %v2489 = vmul.f32 %v2481, %v2487
    %v2490 = vmul.f32 %v2482, %v2487
    %v2492 = vlaneseq
    %v2493 = vshrl.u32 %v2492, 7
    %v2494 = vsub.s32 0, %v2493
    %v2495 = vrot.slane %v2460, %v2494
    %v2497 = vadd.f32 %v2489, %v2495
    %v2498 = vadd.f32 %v2490, %v2495
    %s2499 = scalar_lea.vmem %s11, 192
    %v2500 = vld [vmem:[%s2499] sm:$0xff]
    %v2501 = vld [vmem:[%s2499 + $0x8] sm:$0xf]
    %v2502 = vld [vmem:[%s2499 + $0xc] sm:$0xff]
    %v2503 = vld [vmem:[%s2499 + $0x14] sm:$0xf]
    %v2504 = vld [vmem:[%s2499 + $0x18] sm:$0xff]
    %v2505 = vld [vmem:[%s2499 + $0x20] sm:$0xf]
    %v2506 = vld [vmem:[%s2499 + $0x24] sm:$0xff]
    %v2507 = vld [vmem:[%s2499 + $0x2c] sm:$0xf]
    %v2508 = vld [vmem:[%s2499 + $0x30] sm:$0xff]
    %v2509 = vld [vmem:[%s2499 + $0x38] sm:$0xf]
    %v2510 = vld [vmem:[%s2499 + $0x3c] sm:$0xff]
    %v2511 = vld [vmem:[%s2499 + $0x44] sm:$0xf]
    %v2512 = vld [vmem:[%s2499 + $0x48] sm:$0xff]
    %v2513 = vld [vmem:[%s2499 + $0x50] sm:$0xf]
    %v2514 = vld [vmem:[%s2499 + $0x54] sm:$0xff]
    %v2515 = vld [vmem:[%s2499 + $0x5c] sm:$0xf]
    %v2516 = vld [vmem:[%s2499 + $0x60] sm:$0xff]
    %v2517 = vld [vmem:[%s2499 + $0x68] sm:$0xf]
    %v2518 = vld [vmem:[%s2499 + $0x6c] sm:$0xff]
    %v2519 = vld [vmem:[%s2499 + $0x74] sm:$0xf]
    %v2520 = vld [vmem:[%s2499 + $0x78] sm:$0xff]
    %v2521 = vld [vmem:[%s2499 + $0x80] sm:$0xf]
    %v2522 = vld [vmem:[%s2499 + $0x84] sm:$0xff]
    %v2523 = vld [vmem:[%s2499 + $0x8c] sm:$0xf]
    %v2524 = vld [vmem:[%s2499 + $0x90] sm:$0xff]
    %v2525 = vld [vmem:[%s2499 + $0x98] sm:$0xf]
    %v2526 = vld [vmem:[%s2499 + $0x9c] sm:$0xff]
    %v2527 = vld [vmem:[%s2499 + $0xa4] sm:$0xf]
    %v2528 = vld [vmem:[%s2499 + $0xa8] sm:$0xff]
    %v2529 = vld [vmem:[%s2499 + $0xb0] sm:$0xf]
    %v2530 = vld [vmem:[%s2499 + $0xb4] sm:$0xff]
    %v2531 = vld [vmem:[%s2499 + $0xbc] sm:$0xf]
    %v2532 = vpack.c.bf16 %v2498, %v2497
    %s2533 = scalar_lea.vmem %s13, 3
    %v2534 = vld [vmem:[%s2533] sm:$0x7]
    %v2536 = vlaneseq
    %v2537 = vshrl.u32 %v2536, 7
    %v2538 = vsub.s32 0, %v2537
    %v2539 = vrot.slane %v2534, %v2538
    %v2540 = vlaneseq
    %v2541 = vshrl.u32 %v2540, 7
    %v2542 = vsub.s32 1, %v2541
    %v2543 = vrot.slane %v2534, %v2542
    %v2544 = vlaneseq
    %v2545 = vshrl.u32 %v2544, 7
    %v2546 = vsub.s32 2, %v2545
    %v2547 = vrot.slane %v2534, %v2546
    %v2583 = vunpack.c.l.b16 %v2500
    %v2584 = vunpack.c.h.b16 %v2500
    %v2585 = vunpack.c.l.b16 %v2501
    %v2586 = vunpack.c.l.b16 %v2502
    %v2587 = vunpack.c.h.b16 %v2502
    %v2588 = vunpack.c.l.b16 %v2503
    %v2589 = vunpack.c.l.b16 %v2504
    %v2590 = vunpack.c.h.b16 %v2504
    %v2591 = vunpack.c.l.b16 %v2505
    %v2592 = vunpack.c.l.b16 %v2506
    %v2593 = vunpack.c.h.b16 %v2506
    %v2594 = vunpack.c.l.b16 %v2507
    %v2595 = vunpack.c.l.b16 %v2508
    %v2596 = vunpack.c.h.b16 %v2508
    %v2597 = vunpack.c.l.b16 %v2509
    %v2598 = vunpack.c.l.b16 %v2510
    %v2599 = vunpack.c.h.b16 %v2510
    %v2600 = vunpack.c.l.b16 %v2511
    %v2601 = vunpack.c.l.b16 %v2512
    %v2602 = vunpack.c.h.b16 %v2512
    %v2603 = vunpack.c.l.b16 %v2513
    %v2604 = vunpack.c.l.b16 %v2514
    %v2605 = vunpack.c.h.b16 %v2514
    %v2606 = vunpack.c.l.b16 %v2515
    %v2607 = vunpack.c.l.b16 %v2516
    %v2608 = vunpack.c.h.b16 %v2516
    %v2609 = vunpack.c.l.b16 %v2517
    %v2610 = vunpack.c.l.b16 %v2518
    %v2611 = vunpack.c.h.b16 %v2518
    %v2612 = vunpack.c.l.b16 %v2519
    %v2613 = vunpack.c.l.b16 %v2520
    %v2614 = vunpack.c.h.b16 %v2520
    %v2615 = vunpack.c.l.b16 %v2521
    %v2616 = vunpack.c.l.b16 %v2522
    %v2617 = vunpack.c.h.b16 %v2522
    %v2618 = vunpack.c.l.b16 %v2523
    %v2619 = vunpack.c.l.b16 %v2524
    %v2620 = vunpack.c.h.b16 %v2524
    %v2621 = vunpack.c.l.b16 %v2525
    %v2622 = vunpack.c.l.b16 %v2526
    %v2623 = vunpack.c.h.b16 %v2526
    %v2624 = vunpack.c.l.b16 %v2527
    %v2625 = vunpack.c.l.b16 %v2528
    %v2626 = vunpack.c.h.b16 %v2528
    %v2627 = vunpack.c.l.b16 %v2529
    %v2628 = vunpack.c.l.b16 %v2530
    %v2629 = vunpack.c.h.b16 %v2530
    %v2630 = vunpack.c.l.b16 %v2531
    %v2631 = vpack.c.b16 %v2586, %v2583
    %v2632 = vpack.c.b16 %v2587, %v2584
    %v2633 = vpack.c.b16 %v2588, %v2585
    %v2634 = vpack.c.b16 %v2592, %v2589
    %v2635 = vpack.c.b16 %v2593, %v2590
    %v2636 = vpack.c.b16 %v2594, %v2591
    %v2637 = vpack.c.b16 %v2598, %v2595
    %v2638 = vpack.c.b16 %v2599, %v2596
    %v2639 = vpack.c.b16 %v2600, %v2597
    %v2640 = vpack.c.b16 %v2604, %v2601
    %v2641 = vpack.c.b16 %v2605, %v2602
    %v2642 = vpack.c.b16 %v2606, %v2603
    %v2643 = vpack.c.b16 %v2610, %v2607
    %v2644 = vpack.c.b16 %v2611, %v2608
    %v2645 = vpack.c.b16 %v2612, %v2609
    %v2646 = vpack.c.b16 %v2616, %v2613
    %v2647 = vpack.c.b16 %v2617, %v2614
    %v2648 = vpack.c.b16 %v2618, %v2615
    %v2649 = vpack.c.b16 %v2622, %v2619
    %v2650 = vpack.c.b16 %v2623, %v2620
    %v2651 = vpack.c.b16 %v2624, %v2621
    %v2652 = vpack.c.b16 %v2628, %v2625
    %v2653 = vpack.c.b16 %v2629, %v2626
    %v2654 = vpack.c.b16 %v2630, %v2627
    %2679 = vmatprep.subr.bf16.mxu0 %v2653
    %2680 = vmatpush1.bf16.msra.mxu0 %v2652
    %2681 = vmatprep.subr.bf16.mxu0 %v2650
    %2682 = vmatpush1.bf16.msra.mxu0 %v2649
    %2683 = vmatprep.subr.bf16.mxu0 %v2647
    %2684 = vmatpush1.bf16.msra.mxu0 %v2646
    %2685 = vmatprep.subr.bf16.mxu0 %v2644
    %2686 = vmatpush1.bf16.msra.mxu0 %v2643
    %2687 = vmatprep.subr.bf16.mxu0 %v2641
    %2688 = vmatpush1.bf16.msra.mxu0 %v2640
    %2689 = vmatprep.subr.bf16.mxu0 %v2638
    %2690 = vmatpush1.bf16.msra.mxu0 %v2637
    %2691 = vmatprep.subr.bf16.mxu0 %v2635
    %2692 = vmatpush1.bf16.msra.mxu0 %v2634
    %2693 = vmatprep.subr.bf16.mxu0 %v2632
    %2694 = vmatpush1.bf16.msra.mxu0 %v2631
    %2695 = vmatprep.subr.bf16.mxu0 0
    %2696 = vmatpush2.bf16.msra.mxu0 0
    %2697 = vmatprep.subr.bf16.mxu0 0
    %2698 = vmatpush2.bf16.msra.mxu0 0
    %2699 = vmatprep.subr.bf16.mxu0 0
    %2700 = vmatpush2.bf16.msra.mxu0 0
    %2701 = vmatprep.subr.bf16.mxu0 0
    %2702 = vmatpush2.bf16.msra.mxu0 0
    %2703 = vmatprep.subr.bf16.mxu0 0
    %2704 = vmatpush2.bf16.msra.mxu0 0
    %2705 = vmatprep.subr.bf16.mxu0 0
    %2706 = vmatpush2.bf16.msra.mxu0 0
    %2707 = vmatprep.subr.bf16.mxu0 0
    %2708 = vmatpush2.bf16.msra.mxu0 0
    %2709 = vmatprep.subr.bf16.mxu0 0
    %2710 = vmatpush2.bf16.msra.mxu0 0
    %2711 = vmatprep.mubr.bf16.mxu0 0
    %2712 = vmatmul.mubr.bf16.gmra.mxu0 %v2532
    %v2713 = vpop.f32.mrf.mxu0
    %v2714 = vadd.f32 %v2539, %v2713
    %v2715 = vpop.f32.mrf.mxu0
    %v2716 = vadd.f32 %v2543, %v2715
    %v2717 = vpop.f32.mrf.mxu0
    %v2718 = vadd.f32 %v2539, %v2717
    %v2719 = vpop.f32.mrf.mxu0
    %v2720 = vadd.f32 %v2543, %v2719
    %2721 = vdwg.mxu0
    %2722 = vmatprep.subr.bf16.mxu0 0
    %2723 = vmatpush1.bf16.msra.mxu0 %v2654
    %2724 = vmatprep.subr.bf16.mxu0 0
    %2725 = vmatpush1.bf16.msra.mxu0 %v2651
    %2726 = vmatprep.subr.bf16.mxu0 0
    %2727 = vmatpush1.bf16.msra.mxu0 %v2648
    %2728 = vmatprep.subr.bf16.mxu0 0
    %2729 = vmatpush1.bf16.msra.mxu0 %v2645
    %2730 = vmatprep.subr.bf16.mxu0 0
    %2731 = vmatpush1.bf16.msra.mxu0 %v2642
    %2732 = vmatprep.subr.bf16.mxu0 0
    %2733 = vmatpush1.bf16.msra.mxu0 %v2639
    %2734 = vmatprep.subr.bf16.mxu0 0
    %2735 = vmatpush1.bf16.msra.mxu0 %v2636
    %2736 = vmatprep.subr.bf16.mxu0 0
    %2737 = vmatpush1.bf16.msra.mxu0 %v2633
    %2738 = vmatprep.subr.bf16.mxu0 0
    %2739 = vmatpush2.bf16.msra.mxu0 0
    %2740 = vmatprep.subr.bf16.mxu0 0
    %2741 = vmatpush2.bf16.msra.mxu0 0
    %2742 = vmatprep.subr.bf16.mxu0 0
    %2743 = vmatpush2.bf16.msra.mxu0 0
    %2744 = vmatprep.subr.bf16.mxu0 0
    %2745 = vmatpush2.bf16.msra.mxu0 0
    %2746 = vmatprep.subr.bf16.mxu0 0
    %2747 = vmatpush2.bf16.msra.mxu0 0
    %2748 = vmatprep.subr.bf16.mxu0 0
    %2749 = vmatpush2.bf16.msra.mxu0 0
    %2750 = vmatprep.subr.bf16.mxu0 0
    %2751 = vmatpush2.bf16.msra.mxu0 0
    %2752 = vmatprep.subr.bf16.mxu0 0
    %2753 = vmatpush2.bf16.msra.mxu0 0
    %2754 = vmatprep.mubr.bf16.mxu0 0
    %2755 = vmatmul.mubr.bf16.gmra.mxu0 %v2532
    %v2756 = vpop.f32.mrf.mxu0
    %v2757 = vadd.f32 %v2547, %v2756
    %v2758 = vpop.f32.mrf.mxu0
    %v2759 = vpop.f32.mrf.mxu0
    %v2760 = vadd.f32 %v2547, %v2759
    %v2761 = vpop.f32.mrf.mxu0
    %2762 = vdwg.mxu0
    %s2763 = scalar_lea.vmem %s15, 64
    %v2764 = vld [vmem:[%s2763] sm:$0xf]
    %v2765 = vld [vmem:[%s2763 + $0x4] sm:$0xf]
    %v2766 = vld [vmem:[%s2763 + $0x8] sm:$0xf]
    %v2767 = vld [vmem:[%s2763 + $0xc] sm:$0xf]
    %v2768 = vld [vmem:[%s2763 + $0x10] sm:$0xf]
    %v2769 = vld [vmem:[%s2763 + $0x14] sm:$0xf]
    %v2770 = vld [vmem:[%s2763 + $0x18] sm:$0xf]
    %v2771 = vld [vmem:[%s2763 + $0x1c] sm:$0xf]
    %v2772 = vld [vmem:[%s2763 + $0x20] sm:$0xf]
    %v2773 = vld [vmem:[%s2763 + $0x24] sm:$0xf]
    %v2774 = vld [vmem:[%s2763 + $0x28] sm:$0xf]
    %v2775 = vld [vmem:[%s2763 + $0x2c] sm:$0xf]
    %v2776 = vld [vmem:[%s2763 + $0x30] sm:$0xf]
    %v2777 = vld [vmem:[%s2763 + $0x34] sm:$0xf]
    %v2778 = vld [vmem:[%s2763 + $0x38] sm:$0xf]
    %v2779 = vld [vmem:[%s2763 + $0x3c] sm:$0xf]
    %s2780 = scalar_lea.vmem %s17, 1
    %v2781 = vld [vmem:[%s2780] sm:$0x1]
    %2784 = vrot.lane.b32.xlu0 %v2714, 96
    %v2785 = vpop.permute.xlu0 %2784
    %2786 = vrot.lane.b32.xlu0 %v2718, 96
    %v2787 = vpop.permute.xlu0 %2786
    %2790 = vrot.lane.b32.xlu0 %v2714, 64
    %v2791 = vpop.permute.xlu0 %2790
    %2792 = vrot.lane.b32.xlu0 %v2718, 64
    %v2793 = vpop.permute.xlu0 %2792
    %2796 = vrot.lane.b32.xlu0 %v2714, 32
    %v2797 = vpop.permute.xlu0 %2796
    %2798 = vrot.lane.b32.xlu0 %v2718, 32
    %v2799 = vpop.permute.xlu0 %2798
    %v2802 = vpack.c.bf16 %v2718, %v2714
    %v2803 = vpack.c.bf16 %v2787, %v2785
    %v2804 = vpack.c.bf16 %v2793, %v2791
    %v2805 = vpack.c.bf16 %v2799, %v2797
    %2808 = vrot.lane.b32.xlu0 %v2716, 96
    %v2809 = vpop.permute.xlu0 %2808
    %2810 = vrot.lane.b32.xlu0 %v2720, 96
    %v2811 = vpop.permute.xlu0 %2810
    %2814 = vrot.lane.b32.xlu0 %v2716, 64
    %v2815 = vpop.permute.xlu0 %2814
    %2816 = vrot.lane.b32.xlu0 %v2720, 64
    %v2817 = vpop.permute.xlu0 %2816
    %2820 = vrot.lane.b32.xlu0 %v2716, 32
    %v2821 = vpop.permute.xlu0 %2820
    %2822 = vrot.lane.b32.xlu0 %v2720, 32
    %v2823 = vpop.permute.xlu0 %2822
    %v2826 = vpack.c.bf16 %v2720, %v2716
    %v2827 = vpack.c.bf16 %v2811, %v2809
    %v2828 = vpack.c.bf16 %v2817, %v2815
    %v2829 = vpack.c.bf16 %v2823, %v2821
    %2832 = vrot.lane.b32.xlu0 %v2757, 96
    %v2833 = vpop.permute.xlu0 %2832
    %2834 = vrot.lane.b32.xlu0 %v2760, 96
    %v2835 = vpop.permute.xlu0 %2834
    %2838 = vrot.lane.b32.xlu0 %v2757, 64
    %v2839 = vpop.permute.xlu0 %2838
    %2840 = vrot.lane.b32.xlu0 %v2760, 64
    %v2841 = vpop.permute.xlu0 %2840
    %2844 = vrot.lane.b32.xlu0 %v2757, 32
    %v2845 = vpop.permute.xlu0 %2844
    %2846 = vrot.lane.b32.xlu0 %v2760, 32
    %v2847 = vpop.permute.xlu0 %2846
    %v2850 = vpack.c.bf16 %v2760, %v2757
    %v2851 = vpack.c.bf16 %v2835, %v2833
    %v2852 = vpack.c.bf16 %v2841, %v2839
    %v2853 = vpack.c.bf16 %v2847, %v2845
    %v2855 = vsel %vm1284, %v2802, 0
    %v2858 = vsel %vm1284, %v2803, 0
    %v2861 = vsel %vm1284, %v2804, 0
    %v2864 = vsel %vm1284, %v2805, 0
    %v2867 = vsel %vm1284, %v2826, 0
    %v2870 = vsel %vm1284, %v2827, 0
    %v2873 = vsel %vm1284, %v2828, 0
    %v2876 = vsel %vm1284, %v2829, 0
    %2878 = vmatprep.subr.bf16.mxu0 0
    %2879 = vmatpush1.bf16.xpose.msra.mxu0 0
    %2880 = vmatprep.subr.bf16.mxu0 0
    %2881 = vmatpush1.bf16.xpose.msra.mxu0 0
    %2882 = vmatprep.subr.bf16.mxu0 0
    %2883 = vmatpush1.bf16.xpose.msra.mxu0 0
    %2884 = vmatprep.subr.bf16.mxu0 0
    %2885 = vmatpush1.bf16.xpose.msra.mxu0 0
    %2886 = vmatprep.subr.bf16.mxu0 0
    %2887 = vmatpush1.bf16.xpose.msra.mxu0 %v2876
    %2888 = vmatprep.subr.bf16.mxu0 0
    %2889 = vmatpush1.bf16.xpose.msra.mxu0 %v2873
    %2890 = vmatprep.subr.bf16.mxu0 0
    %2891 = vmatpush1.bf16.xpose.msra.mxu0 %v2870
    %2892 = vmatprep.subr.bf16.mxu0 0
    %2893 = vmatpush1.bf16.xpose.msra.mxu0 %v2867
    %2894 = vmatprep.subr.bf16.mxu0 0
    %2895 = vmatpush2.bf16.xpose.msra.mxu0 0
    %2896 = vmatprep.subr.bf16.mxu0 0
    %2897 = vmatpush2.bf16.xpose.msra.mxu0 0
    %2898 = vmatprep.subr.bf16.mxu0 0
    %2899 = vmatpush2.bf16.xpose.msra.mxu0 0
    %2900 = vmatprep.subr.bf16.mxu0 0
    %2901 = vmatpush2.bf16.xpose.msra.mxu0 0
    %2902 = vmatprep.subr.bf16.mxu0 0
    %2903 = vmatpush2.bf16.xpose.msra.mxu0 0
    %2904 = vmatprep.subr.bf16.mxu0 0
    %2905 = vmatpush2.bf16.xpose.msra.mxu0 0
    %2906 = vmatprep.subr.bf16.mxu0 0
    %2907 = vmatpush2.bf16.xpose.msra.mxu0 0
    %2908 = vmatprep.subr.bf16.mxu0 0
    %2909 = vmatpush2.bf16.xpose.msra.mxu0 0
    %2910 = vmatprep.mubr.bf16.mxu0 0
    %2911 = vmatmul.mubr.bf16.gmra.mxu0 %v2855
    %v2912 = vpop.f32.mrf.mxu0
    %v2913 = vadd.f32 0.0, %v2912
    %v2914 = vpop.f32.mrf.mxu0
    %v2915 = vpop.f32.mrf.mxu0
    %v2916 = vadd.f32 0.0, %v2915
    %v2917 = vpop.f32.mrf.mxu0
    %2918 = vmatprep.mubr.bf16.mxu0 0
    %2919 = vmatmul.mubr.bf16.gmra.mxu0 %v2858
    %v2920 = vpop.f32.mrf.mxu0
    %v2921 = vadd.f32 0.0, %v2920
    %v2922 = vpop.f32.mrf.mxu0
    %v2923 = vpop.f32.mrf.mxu0
    %v2924 = vadd.f32 0.0, %v2923
    %v2925 = vpop.f32.mrf.mxu0
    %2926 = vmatprep.mubr.bf16.mxu0 0
    %2927 = vmatmul.mubr.bf16.gmra.mxu0 %v2861
    %v2928 = vpop.f32.mrf.mxu0
    %v2929 = vadd.f32 0.0, %v2928
    %v2930 = vpop.f32.mrf.mxu0
    %v2931 = vpop.f32.mrf.mxu0
    %v2932 = vadd.f32 0.0, %v2931
    %v2933 = vpop.f32.mrf.mxu0
    %2934 = vmatprep.mubr.bf16.mxu0 0
    %2935 = vmatmul.mubr.bf16.gmra.mxu0 %v2864
    %v2936 = vpop.f32.mrf.mxu0
    %v2937 = vadd.f32 0.0, %v2936
    %v2938 = vpop.f32.mrf.mxu0
    %v2939 = vpop.f32.mrf.mxu0
    %v2940 = vadd.f32 0.0, %v2939
    %v2941 = vpop.f32.mrf.mxu0
    %2942 = vdwg.mxu0
    %v2943 = vmul.f32 %v2913, 0.17677669
    %v2944 = vmul.f32 %v2916, 0.17677669
    %v2945 = vmul.f32 %v2921, 0.17677669
    %v2946 = vmul.f32 %v2924, 0.17677669
    %v2947 = vmul.f32 %v2929, 0.17677669
    %v2948 = vmul.f32 %v2932, 0.17677669
    %v2949 = vmul.f32 %v2937, 0.17677669
    %v2950 = vmul.f32 %v2940, 0.17677669
    %v2951 = vadd.f32 %v2943, %v299
    %v2952 = vadd.f32 %v2944, %v300
    %v2953 = vadd.f32 %v2945, %v301
    %v2954 = vadd.f32 %v2946, %v302
    %v2955 = vadd.f32 %v2947, %v303
    %v2956 = vadd.f32 %v2948, %v304
    %v2957 = vadd.f32 %v2949, %v305
    %v2958 = vadd.f32 %v2950, %v306
    %v2959 = vsel %vm1390, %v2951, -inf
    %2960 = vmax.xlane.f32.xlu0 %v2959
    %v2961 = vpop.xlane.xlu0 %2960
    %v2962 = vsel %vm1390, %v2952, -inf
    %2963 = vmax.xlane.f32.xlu0 %v2962
    %v2964 = vpop.xlane.xlu0 %2963
    %v2965 = vsel %vm1390, %v2953, -inf
    %2966 = vmax.xlane.f32.xlu0 %v2965
    %v2967 = vpop.xlane.xlu0 %2966
    %v2968 = vsel %vm1390, %v2954, -inf
    %2969 = vmax.xlane.f32.xlu0 %v2968
    %v2970 = vpop.xlane.xlu0 %2969
    %v2971 = vsel %vm1390, %v2955, -inf
    %2972 = vmax.xlane.f32.xlu0 %v2971
    %v2973 = vpop.xlane.xlu0 %2972
    %v2974 = vsel %vm1390, %v2956, -inf
    %2975 = vmax.xlane.f32.xlu0 %v2974
    %v2976 = vpop.xlane.xlu0 %2975
    %v2977 = vsel %vm1390, %v2957, -inf
    %2978 = vmax.xlane.f32.xlu0 %v2977
    %v2979 = vpop.xlane.xlu0 %2978
    %v2980 = vsel %vm1390, %v2958, -inf
    %2981 = vmax.xlane.f32.xlu0 %v2980
    %v2982 = vpop.xlane.xlu0 %2981
    %v2983 = vsub.f32 %v2951, %v2961
    %v2984 = vsub.f32 %v2952, %v2964
    %v2985 = vsub.f32 %v2953, %v2967
    %v2986 = vsub.f32 %v2954, %v2970
    %v2987 = vsub.f32 %v2955, %v2973
    %v2988 = vsub.f32 %v2956, %v2976
    %v2989 = vsub.f32 %v2957, %v2979
    %v2990 = vsub.f32 %v2958, %v2982
    %v2991 = vmul.f32 %v2983, 1.442695
    %v2992 = vpow.pop %v2991
    %v2993 = vmul.f32 %v2984, 1.442695
    %v2994 = vpow.pop %v2993
    %v2995 = vmul.f32 %v2985, 1.442695
    %v2996 = vpow.pop %v2995
    %v2997 = vmul.f32 %v2986, 1.442695
    %v2998 = vpow.pop %v2997
    %v2999 = vmul.f32 %v2987, 1.442695
    %v3000 = vpow.pop %v2999
    %v3001 = vmul.f32 %v2988, 1.442695
    %v3002 = vpow.pop %v3001
    %v3003 = vmul.f32 %v2989, 1.442695
    %v3004 = vpow.pop %v3003
    %v3005 = vmul.f32 %v2990, 1.442695
    %v3006 = vpow.pop %v3005
    %v3007 = vsel %vm1390, %v2992, 0.0
    %3008 = vadd.xlane.f32.xlu0 %v3007
    %v3009 = vpop.xlane.xlu0 %3008
    %v3010 = vsel %vm1390, %v2994, 0.0
    %3011 = vadd.xlane.f32.xlu0 %v3010
    %v3012 = vpop.xlane.xlu0 %3011
    %v3013 = vsel %vm1390, %v2996, 0.0
    %3014 = vadd.xlane.f32.xlu0 %v3013
    %v3015 = vpop.xlane.xlu0 %3014
    %v3016 = vsel %vm1390, %v2998, 0.0
    %3017 = vadd.xlane.f32.xlu0 %v3016
    %v3018 = vpop.xlane.xlu0 %3017
    %v3019 = vsel %vm1390, %v3000, 0.0
    %3020 = vadd.xlane.f32.xlu0 %v3019
    %v3021 = vpop.xlane.xlu0 %3020
    %v3022 = vsel %vm1390, %v3002, 0.0
    %3023 = vadd.xlane.f32.xlu0 %v3022
    %v3024 = vpop.xlane.xlu0 %3023
    %v3025 = vsel %vm1390, %v3004, 0.0
    %3026 = vadd.xlane.f32.xlu0 %v3025
    %v3027 = vpop.xlane.xlu0 %3026
    %v3028 = vsel %vm1390, %v3006, 0.0
    %3029 = vadd.xlane.f32.xlu0 %v3028
    %v3030 = vpop.xlane.xlu0 %3029
    %v3031 = vrcp.pop %v3009
    %v3032 = vrcp.pop %v3012
    %v3033 = vrcp.pop %v3015
    %v3034 = vrcp.pop %v3018
    %v3035 = vrcp.pop %v3021
    %v3036 = vrcp.pop %v3024
    %v3037 = vrcp.pop %v3027
    %v3038 = vrcp.pop %v3030
    %v3039 = vmul.f32 %v2992, %v3031
    %v3040 = vmul.f32 %v2994, %v3032
    %v3041 = vmul.f32 %v2996, %v3033
    %v3042 = vmul.f32 %v2998, %v3034
    %v3043 = vmul.f32 %v3000, %v3035
    %v3044 = vmul.f32 %v3002, %v3036
    %v3045 = vmul.f32 %v3004, %v3037
    %v3046 = vmul.f32 %v3006, %v3038
    %v3047 = vpack.c.bf16 %v3040, %v3039
    %v3048 = vpack.c.bf16 %v3042, %v3041
    %v3049 = vpack.c.bf16 %v3044, %v3043
    %v3050 = vpack.c.bf16 %v3046, %v3045
    %v3052 = vsel %vm1390, %v3047, 0
    %v3055 = vsel %vm1390, %v3048, 0
    %v3058 = vsel %vm1390, %v3049, 0
    %v3061 = vsel %vm1390, %v3050, 0
    %3063 = vmatprep.subr.bf16.mxu0 0
    %3064 = vmatpush1.bf16.msra.mxu0 0
    %3065 = vmatprep.subr.bf16.mxu0 0
    %3066 = vmatpush1.bf16.msra.mxu0 0
    %3067 = vmatprep.subr.bf16.mxu0 0
    %3068 = vmatpush1.bf16.msra.mxu0 0
    %3069 = vmatprep.subr.bf16.mxu0 0
    %3070 = vmatpush1.bf16.msra.mxu0 0
    %3071 = vmatprep.subr.bf16.mxu0 0
    %3072 = vmatpush1.bf16.msra.mxu0 %v2853
    %3073 = vmatprep.subr.bf16.mxu0 0
    %3074 = vmatpush1.bf16.msra.mxu0 %v2852
    %3075 = vmatprep.subr.bf16.mxu0 0
    %3076 = vmatpush1.bf16.msra.mxu0 %v2851
    %3077 = vmatprep.subr.bf16.mxu0 0
    %3078 = vmatpush1.bf16.msra.mxu0 %v2850
    %3079 = vmatprep.subr.bf16.mxu0 0
    %3080 = vmatpush2.bf16.msra.mxu0 0
    %3081 = vmatprep.subr.bf16.mxu0 0
    %3082 = vmatpush2.bf16.msra.mxu0 0
    %3083 = vmatprep.subr.bf16.mxu0 0
    %3084 = vmatpush2.bf16.msra.mxu0 0
    %3085 = vmatprep.subr.bf16.mxu0 0
    %3086 = vmatpush2.bf16.msra.mxu0 0
    %3087 = vmatprep.subr.bf16.mxu0 0
    %3088 = vmatpush2.bf16.msra.mxu0 0
    %3089 = vmatprep.subr.bf16.mxu0 0
    %3090 = vmatpush2.bf16.msra.mxu0 0
    %3091 = vmatprep.subr.bf16.mxu0 0
    %3092 = vmatpush2.bf16.msra.mxu0 0
    %3093 = vmatprep.subr.bf16.mxu0 0
    %3094 = vmatpush2.bf16.msra.mxu0 0
    %3095 = vmatprep.mubr.bf16.mxu0 0
    %3096 = vmatmul.mubr.bf16.gmra.mxu0 %v3052
    %v3097 = vpop.f32.mrf.mxu0
    %v3098 = vadd.f32 0.0, %v3097
    %v3099 = vpop.f32.mrf.mxu0
    %v3100 = vpop.f32.mrf.mxu0
    %v3101 = vadd.f32 0.0, %v3100
    %v3102 = vpop.f32.mrf.mxu0
    %3103 = vmatprep.mubr.bf16.mxu0 0
    %3104 = vmatmul.mubr.bf16.gmra.mxu0 %v3055
    %v3105 = vpop.f32.mrf.mxu0
    %v3106 = vadd.f32 0.0, %v3105
    %v3107 = vpop.f32.mrf.mxu0
    %v3108 = vpop.f32.mrf.mxu0
    %v3109 = vadd.f32 0.0, %v3108
    %v3110 = vpop.f32.mrf.mxu0
    %3111 = vmatprep.mubr.bf16.mxu0 0
    %3112 = vmatmul.mubr.bf16.gmra.mxu0 %v3058
    %v3113 = vpop.f32.mrf.mxu0
    %v3114 = vadd.f32 0.0, %v3113
    %v3115 = vpop.f32.mrf.mxu0
    %v3116 = vpop.f32.mrf.mxu0
    %v3117 = vadd.f32 0.0, %v3116
    %v3118 = vpop.f32.mrf.mxu0
    %3119 = vmatprep.mubr.bf16.mxu0 0
    %3120 = vmatmul.mubr.bf16.gmra.mxu0 %v3061
    %v3121 = vpop.f32.mrf.mxu0
    %v3122 = vadd.f32 0.0, %v3121
    %v3123 = vpop.f32.mrf.mxu0
    %v3124 = vpop.f32.mrf.mxu0
    %v3125 = vadd.f32 0.0, %v3124
    %v3126 = vpop.f32.mrf.mxu0
    %3127 = vdwg.mxu0
    %3130 = vrot.lane.b32.xlu0 %v3106, 32
    %v3131 = vpop.permute.xlu0 %3130
    %3132 = vrot.lane.b32.xlu0 %v3109, 32
    %v3133 = vpop.permute.xlu0 %3132
    %3138 = vrot.lane.b32.xlu0 %v3114, 64
    %v3139 = vpop.permute.xlu0 %3138
    %3140 = vrot.lane.b32.xlu0 %v3117, 64
    %v3141 = vpop.permute.xlu0 %3140
    %3146 = vrot.lane.b32.xlu0 %v3122, 96
    %v3147 = vpop.permute.xlu0 %3146
    %3148 = vrot.lane.b32.xlu0 %v3125, 96
    %v3149 = vpop.permute.xlu0 %3148
    %v3152 = vsel %vm1284, %v3098, %v3131
    %v3153 = vsel %vm1284, %v3101, %v3133
    %v3154 = vsel %vm1390, %v3152, %v3139
    %v3155 = vsel %vm1390, %v3153, %v3141
    %v3156 = vsel %vm1588, %v3154, %v3147
    %v3157 = vsel %vm1588, %v3155, %v3149
    %v3158 = vpack.c.bf16 %v3157, %v3156
    %v3160 = vlaneseq
    %v3161 = vshrl.u32 %v3160, 7
    %v3162 = vsub.s32 0, %v3161
    %v3163 = vrot.slane %v2781, %v3162
    %v3181 = vunpack.c.l.b16 %v2764
    %v3182 = vunpack.c.l.b16 %v2765
    %v3183 = vunpack.c.l.b16 %v2766
    %v3184 = vunpack.c.l.b16 %v2767
    %v3185 = vunpack.c.l.b16 %v2768
    %v3186 = vunpack.c.l.b16 %v2769
    %v3187 = vunpack.c.l.b16 %v2770
    %v3188 = vunpack.c.l.b16 %v2771
    %v3189 = vunpack.c.l.b16 %v2772
    %v3190 = vunpack.c.l.b16 %v2773
    %v3191 = vunpack.c.l.b16 %v2774
    %v3192 = vunpack.c.l.b16 %v2775
    %v3193 = vunpack.c.l.b16 %v2776
    %v3194 = vunpack.c.l.b16 %v2777
    %v3195 = vunpack.c.l.b16 %v2778
    %v3196 = vunpack.c.l.b16 %v2779
    %v3197 = vpack.c.b16 %v3182, %v3181
    %v3198 = vpack.c.b16 %v3184, %v3183
    %v3199 = vpack.c.b16 %v3186, %v3185
    %v3200 = vpack.c.b16 %v3188, %v3187
    %v3201 = vpack.c.b16 %v3190, %v3189
    %v3202 = vpack.c.b16 %v3192, %v3191
    %v3203 = vpack.c.b16 %v3194, %v3193
    %v3204 = vpack.c.b16 %v3196, %v3195
    %3213 = vmatprep.subr.bf16.mxu0 0
    %3214 = vmatpush1.bf16.msra.mxu0 %v3204
    %3215 = vmatprep.subr.bf16.mxu0 0
    %3216 = vmatpush1.bf16.msra.mxu0 %v3203
    %3217 = vmatprep.subr.bf16.mxu0 0
    %3218 = vmatpush1.bf16.msra.mxu0 %v3202
    %3219 = vmatprep.subr.bf16.mxu0 0
    %3220 = vmatpush1.bf16.msra.mxu0 %v3201
    %3221 = vmatprep.subr.bf16.mxu0 0
    %3222 = vmatpush1.bf16.msra.mxu0 %v3200
    %3223 = vmatprep.subr.bf16.mxu0 0
    %3224 = vmatpush1.bf16.msra.mxu0 %v3199
    %3225 = vmatprep.subr.bf16.mxu0 0
    %3226 = vmatpush1.bf16.msra.mxu0 %v3198
    %3227 = vmatprep.subr.bf16.mxu0 0
    %3228 = vmatpush1.bf16.msra.mxu0 %v3197
    %3229 = vmatprep.subr.bf16.mxu0 0
    %3230 = vmatpush2.bf16.msra.mxu0 0
    %3231 = vmatprep.subr.bf16.mxu0 0
    %3232 = vmatpush2.bf16.msra.mxu0 0
    %3233 = vmatprep.subr.bf16.mxu0 0
    %3234 = vmatpush2.bf16.msra.mxu0 0
    %3235 = vmatprep.subr.bf16.mxu0 0
    %3236 = vmatpush2.bf16.msra.mxu0 0
    %3237 = vmatprep.subr.bf16.mxu0 0
    %3238 = vmatpush2.bf16.msra.mxu0 0
    %3239 = vmatprep.subr.bf16.mxu0 0
    %3240 = vmatpush2.bf16.msra.mxu0 0
    %3241 = vmatprep.subr.bf16.mxu0 0
    %3242 = vmatpush2.bf16.msra.mxu0 0
    %3243 = vmatprep.subr.bf16.mxu0 0
    %3244 = vmatpush2.bf16.msra.mxu0 0
    %3245 = vmatprep.mubr.bf16.mxu0 0
    %3246 = vmatmul.mubr.bf16.gmra.mxu0 %v3158
    %v3247 = vpop.f32.mrf.mxu0
    %v3248 = vadd.f32 %v3163, %v3247
    %v3249 = vpop.f32.mrf.mxu0
    %v3250 = vpop.f32.mrf.mxu0
    %v3251 = vadd.f32 %v3163, %v3250
    %v3252 = vpop.f32.mrf.mxu0
    %3253 = vdwg.mxu0
    %v3254 = vadd.f32 %v2453, %v3248
    %v3255 = vadd.f32 %v2454, %v3251
    %s3256 = scalar_lea.vmem %s19, 1
    %v3257 = vld [vmem:[%s3256] sm:$0x1]
    %s3258 = scalar_lea.vmem %s21, 1
    %v3259 = vld [vmem:[%s3258] sm:$0x1]
    %3260 = vadd.xlane.f32.xlu0 %v3254
    %v3261 = vpop.xlane.xlu0 %3260
    %3262 = vadd.xlane.f32.xlu0 %v3255
    %v3263 = vpop.xlane.xlu0 %3262
    %v3264 = vmul.f32 %v3261, %v898
    %v3265 = vmul.f32 %v3263, %v898
    %v3266 = vsub.f32 %v3254, %v3264
    %v3267 = vsub.f32 %v3255, %v3265
    %v3268 = vmul.f32 %v3266, %v3266
    %v3269 = vmul.f32 %v3267, %v3267
    %3270 = vadd.xlane.f32.xlu0 %v3268
    %v3271 = vpop.xlane.xlu0 %3270
    %3272 = vadd.xlane.f32.xlu0 %v3269
    %v3273 = vpop.xlane.xlu0 %3272
    %v3274 = vmul.f32 %v3271, %v898
    %v3275 = vmul.f32 %v3273, %v898
    %v3276 = vadd.f32 %v3274, 1e-06
    %v3277 = vadd.f32 %v3275, 1e-06
    %v3278 = vrsqrt.pop %v3276
    %v3279 = vrsqrt.pop %v3277
    %v3280 = vmul.f32 %v3266, %v3278
    %v3281 = vmul.f32 %v3267, %v3279
    %v3283 = vlaneseq
    %v3284 = vshrl.u32 %v3283, 7
    %v3285 = vsub.s32 0, %v3284
    %v3286 = vrot.slane %v3257, %v3285
    %v3288 = vmul.f32 %v3280, %v3286
    %v3289 = vmul.f32 %v3281, %v3286
    %v3291 = vlaneseq
    %v3292 = vshrl.u32 %v3291, 7
    %v3293 = vsub.s32 0, %v3292
    %v3294 = vrot.slane %v3259, %v3293
    %v3296 = vadd.f32 %v3288, %v3294
    %v3297 = vadd.f32 %v3289, %v3294
    %s3298 = scalar_lea.vmem %s23, 256
    %v3299 = vld [vmem:[%s3298] sm:$0xff]
    %v3300 = vld [vmem:[%s3298 + $0x8] sm:$0xff]
    %v3301 = vld [vmem:[%s3298 + $0x10] sm:$0xff]
    %v3302 = vld [vmem:[%s3298 + $0x18] sm:$0xff]
    %v3303 = vld [vmem:[%s3298 + $0x20] sm:$0xff]
    %v3304 = vld [vmem:[%s3298 + $0x28] sm:$0xff]
    %v3305 = vld [vmem:[%s3298 + $0x30] sm:$0xff]
    %v3306 = vld [vmem:[%s3298 + $0x38] sm:$0xff]
    %v3307 = vld [vmem:[%s3298 + $0x40] sm:$0xff]
    %v3308 = vld [vmem:[%s3298 + $0x48] sm:$0xff]
    %v3309 = vld [vmem:[%s3298 + $0x50] sm:$0xff]
    %v3310 = vld [vmem:[%s3298 + $0x58] sm:$0xff]
    %v3311 = vld [vmem:[%s3298 + $0x60] sm:$0xff]
    %v3312 = vld [vmem:[%s3298 + $0x68] sm:$0xff]
    %v3313 = vld [vmem:[%s3298 + $0x70] sm:$0xff]
    %v3314 = vld [vmem:[%s3298 + $0x78] sm:$0xff]
    %v3315 = vld [vmem:[%s3298 + $0x80] sm:$0xff]
    %v3316 = vld [vmem:[%s3298 + $0x88] sm:$0xff]
    %v3317 = vld [vmem:[%s3298 + $0x90] sm:$0xff]
    %v3318 = vld [vmem:[%s3298 + $0x98] sm:$0xff]
    %v3319 = vld [vmem:[%s3298 + $0xa0] sm:$0xff]
    %v3320 = vld [vmem:[%s3298 + $0xa8] sm:$0xff]
    %v3321 = vld [vmem:[%s3298 + $0xb0] sm:$0xff]
    %v3322 = vld [vmem:[%s3298 + $0xb8] sm:$0xff]
    %v3323 = vld [vmem:[%s3298 + $0xc0] sm:$0xff]
    %v3324 = vld [vmem:[%s3298 + $0xc8] sm:$0xff]
    %v3325 = vld [vmem:[%s3298 + $0xd0] sm:$0xff]
    %v3326 = vld [vmem:[%s3298 + $0xd8] sm:$0xff]
    %v3327 = vld [vmem:[%s3298 + $0xe0] sm:$0xff]
    %v3328 = vld [vmem:[%s3298 + $0xe8] sm:$0xff]
    %v3329 = vld [vmem:[%s3298 + $0xf0] sm:$0xff]
    %v3330 = vld [vmem:[%s3298 + $0xf8] sm:$0xff]
    %v3331 = vpack.c.bf16 %v3297, %v3296
    %s3332 = scalar_lea.vmem %s25, 4
    %v3333 = vld [vmem:[%s3332] sm:$0xf]
    %v3335 = vlaneseq
    %v3336 = vshrl.u32 %v3335, 7
    %v3337 = vsub.s32 0, %v3336
    %v3338 = vrot.slane %v3333, %v3337
    %v3339 = vlaneseq
    %v3340 = vshrl.u32 %v3339, 7
    %v3341 = vsub.s32 1, %v3340
    %v3342 = vrot.slane %v3333, %v3341
    %v3343 = vlaneseq
    %v3344 = vshrl.u32 %v3343, 7
    %v3345 = vsub.s32 2, %v3344
    %v3346 = vrot.slane %v3333, %v3345
    %v3347 = vlaneseq
    %v3348 = vshrl.u32 %v3347, 7
    %v3349 = vsub.s32 3, %v3348
    %v3350 = vrot.slane %v3333, %v3349
    %v3387 = vunpack.c.l.b16 %v3299
    %v3388 = vunpack.c.h.b16 %v3299
    %v3389 = vunpack.c.l.b16 %v3300
    %v3390 = vunpack.c.h.b16 %v3300
    %v3391 = vunpack.c.l.b16 %v3301
    %v3392 = vunpack.c.h.b16 %v3301
    %v3393 = vunpack.c.l.b16 %v3302
    %v3394 = vunpack.c.h.b16 %v3302
    %v3395 = vunpack.c.l.b16 %v3303
    %v3396 = vunpack.c.h.b16 %v3303
    %v3397 = vunpack.c.l.b16 %v3304
    %v3398 = vunpack.c.h.b16 %v3304
    %v3399 = vunpack.c.l.b16 %v3305
    %v3400 = vunpack.c.h.b16 %v3305
    %v3401 = vunpack.c.l.b16 %v3306
    %v3402 = vunpack.c.h.b16 %v3306
    %v3403 = vunpack.c.l.b16 %v3307
    %v3404 = vunpack.c.h.b16 %v3307
    %v3405 = vunpack.c.l.b16 %v3308
    %v3406 = vunpack.c.h.b16 %v3308
    %v3407 = vunpack.c.l.b16 %v3309
    %v3408 = vunpack.c.h.b16 %v3309
    %v3409 = vunpack.c.l.b16 %v3310
    %v3410 = vunpack.c.h.b16 %v3310
    %v3411 = vunpack.c.l.b16 %v3311
    %v3412 = vunpack.c.h.b16 %v3311
    %v3413 = vunpack.c.l.b16 %v3312
    %v3414 = vunpack.c.h.b16 %v3312
    %v3415 = vunpack.c.l.b16 %v3313
    %v3416 = vunpack.c.h.b16 %v3313
    %v3417 = vunpack.c.l.b16 %v3314
    %v3418 = vunpack.c.h.b16 %v3314
    %v3419 = vunpack.c.l.b16 %v3315
    %v3420 = vunpack.c.h.b16 %v3315
    %v3421 = vunpack.c.l.b16 %v3316
    %v3422 = vunpack.c.h.b16 %v3316
    %v3423 = vunpack.c.l.b16 %v3317
    %v3424 = vunpack.c.h.b16 %v3317
    %v3425 = vunpack.c.l.b16 %v3318
    %v3426 = vunpack.c.h.b16 %v3318
    %v3427 = vunpack.c.l.b16 %v3319
    %v3428 = vunpack.c.h.b16 %v3319
    %v3429 = vunpack.c.l.b16 %v3320
    %v3430 = vunpack.c.h.b16 %v3320
    %v3431 = vunpack.c.l.b16 %v3321
    %v3432 = vunpack.c.h.b16 %v3321
    %v3433 = vunpack.c.l.b16 %v3322
    %v3434 = vunpack.c.h.b16 %v3322
    %v3435 = vunpack.c.l.b16 %v3323
    %v3436 = vunpack.c.h.b16 %v3323
    %v3437 = vunpack.c.l.b16 %v3324
    %v3438 = vunpack.c.h.b16 %v3324
    %v3439 = vunpack.c.l.b16 %v3325
    %v3440 = vunpack.c.h.b16 %v3325
    %v3441 = vunpack.c.l.b16 %v3326
    %v3442 = vunpack.c.h.b16 %v3326
    %v3443 = vunpack.c.l.b16 %v3327
    %v3444 = vunpack.c.h.b16 %v3327
    %v3445 = vunpack.c.l.b16 %v3328
    %v3446 = vunpack.c.h.b16 %v3328
    %v3447 = vunpack.c.l.b16 %v3329
    %v3448 = vunpack.c.h.b16 %v3329
    %v3449 = vunpack.c.l.b16 %v3330
    %v3450 = vunpack.c.h.b16 %v3330
    %v3451 = vpack.c.b16 %v3391, %v3387
    %v3452 = vpack.c.b16 %v3392, %v3388
    %v3453 = vpack.c.b16 %v3393, %v3389
    %v3454 = vpack.c.b16 %v3394, %v3390
    %v3455 = vpack.c.b16 %v3399, %v3395
    %v3456 = vpack.c.b16 %v3400, %v3396
    %v3457 = vpack.c.b16 %v3401, %v3397
    %v3458 = vpack.c.b16 %v3402, %v3398
    %v3459 = vpack.c.b16 %v3407, %v3403
    %v3460 = vpack.c.b16 %v3408, %v3404
    %v3461 = vpack.c.b16 %v3409, %v3405
    %v3462 = vpack.c.b16 %v3410, %v3406
    %v3463 = vpack.c.b16 %v3415, %v3411
    %v3464 = vpack.c.b16 %v3416, %v3412
    %v3465 = vpack.c.b16 %v3417, %v3413
    %v3466 = vpack.c.b16 %v3418, %v3414
    %v3467 = vpack.c.b16 %v3423, %v3419
    %v3468 = vpack.c.b16 %v3424, %v3420
    %v3469 = vpack.c.b16 %v3425, %v3421
    %v3470 = vpack.c.b16 %v3426, %v3422
    %v3471 = vpack.c.b16 %v3431, %v3427
    %v3472 = vpack.c.b16 %v3432, %v3428
    %v3473 = vpack.c.b16 %v3433, %v3429
    %v3474 = vpack.c.b16 %v3434, %v3430
    %v3475 = vpack.c.b16 %v3439, %v3435
    %v3476 = vpack.c.b16 %v3440, %v3436
    %v3477 = vpack.c.b16 %v3441, %v3437
    %v3478 = vpack.c.b16 %v3442, %v3438
    %v3479 = vpack.c.b16 %v3447, %v3443
    %v3480 = vpack.c.b16 %v3448, %v3444
    %v3481 = vpack.c.b16 %v3449, %v3445
    %v3482 = vpack.c.b16 %v3450, %v3446
    %3515 = vmatprep.subr.bf16.mxu0 %v3480
    %3516 = vmatpush1.bf16.msra.mxu0 %v3479
    %3517 = vmatprep.subr.bf16.mxu0 %v3476
    %3518 = vmatpush1.bf16.msra.mxu0 %v3475
    %3519 = vmatprep.subr.bf16.mxu0 %v3472
    %3520 = vmatpush1.bf16.msra.mxu0 %v3471
    %3521 = vmatprep.subr.bf16.mxu0 %v3468
    %3522 = vmatpush1.bf16.msra.mxu0 %v3467
    %3523 = vmatprep.subr.bf16.mxu0 %v3464
    %3524 = vmatpush1.bf16.msra.mxu0 %v3463
    %3525 = vmatprep.subr.bf16.mxu0 %v3460
    %3526 = vmatpush1.bf16.msra.mxu0 %v3459
    %3527 = vmatprep.subr.bf16.mxu0 %v3456
    %3528 = vmatpush1.bf16.msra.mxu0 %v3455
    %3529 = vmatprep.subr.bf16.mxu0 %v3452
    %3530 = vmatpush1.bf16.msra.mxu0 %v3451
    %3531 = vmatprep.subr.bf16.mxu0 0
    %3532 = vmatpush2.bf16.msra.mxu0 0
    %3533 = vmatprep.subr.bf16.mxu0 0
    %3534 = vmatpush2.bf16.msra.mxu0 0
    %3535 = vmatprep.subr.bf16.mxu0 0
    %3536 = vmatpush2.bf16.msra.mxu0 0
    %3537 = vmatprep.subr.bf16.mxu0 0
    %3538 = vmatpush2.bf16.msra.mxu0 0
    %3539 = vmatprep.subr.bf16.mxu0 0
    %3540 = vmatpush2.bf16.msra.mxu0 0
    %3541 = vmatprep.subr.bf16.mxu0 0
    %3542 = vmatpush2.bf16.msra.mxu0 0
    %3543 = vmatprep.subr.bf16.mxu0 0
    %3544 = vmatpush2.bf16.msra.mxu0 0
    %3545 = vmatprep.subr.bf16.mxu0 0
    %3546 = vmatpush2.bf16.msra.mxu0 0
    %3547 = vmatprep.mubr.bf16.mxu0 0
    %3548 = vmatmul.mubr.bf16.gmra.mxu0 %v3331
    %v3549 = vpop.f32.mrf.mxu0
    %v3550 = vadd.f32 %v3338, %v3549
    %v3551 = vpop.f32.mrf.mxu0
    %v3552 = vadd.f32 %v3342, %v3551
    %v3553 = vpop.f32.mrf.mxu0
    %v3554 = vadd.f32 %v3338, %v3553
    %v3555 = vpop.f32.mrf.mxu0
    %v3556 = vadd.f32 %v3342, %v3555
    %3557 = vdwg.mxu0
    %3558 = vmatprep.subr.bf16.mxu0 %v3482
    %3559 = vmatpush1.bf16.msra.mxu0 %v3481
    %3560 = vmatprep.subr.bf16.mxu0 %v3478
    %3561 = vmatpush1.bf16.msra.mxu0 %v3477
    %3562 = vmatprep.subr.bf16.mxu0 %v3474
    %3563 = vmatpush1.bf16.msra.mxu0 %v3473
    %3564 = vmatprep.subr.bf16.mxu0 %v3470
    %3565 = vmatpush1.bf16.msra.mxu0 %v3469
    %3566 = vmatprep.subr.bf16.mxu0 %v3466
    %3567 = vmatpush1.bf16.msra.mxu0 %v3465
    %3568 = vmatprep.subr.bf16.mxu0 %v3462
    %3569 = vmatpush1.bf16.msra.mxu0 %v3461
    %3570 = vmatprep.subr.bf16.mxu0 %v3458
    %3571 = vmatpush1.bf16.msra.mxu0 %v3457
    %3572 = vmatprep.subr.bf16.mxu0 %v3454
    %3573 = vmatpush1.bf16.msra.mxu0 %v3453
    %3574 = vmatprep.subr.bf16.mxu0 0
    %3575 = vmatpush2.bf16.msra.mxu0 0
    %3576 = vmatprep.subr.bf16.mxu0 0
    %3577 = vmatpush2.bf16.msra.mxu0 0
    %3578 = vmatprep.subr.bf16.mxu0 0
    %3579 = vmatpush2.bf16.msra.mxu0 0
    %3580 = vmatprep.subr.bf16.mxu0 0
    %3581 = vmatpush2.bf16.msra.mxu0 0
    %3582 = vmatprep.subr.bf16.mxu0 0
    %3583 = vmatpush2.bf16.msra.mxu0 0
    %3584 = vmatprep.subr.bf16.mxu0 0
    %3585 = vmatpush2.bf16.msra.mxu0 0
    %3586 = vmatprep.subr.bf16.mxu0 0
    %3587 = vmatpush2.bf16.msra.mxu0 0
    %3588 = vmatprep.subr.bf16.mxu0 0
    %3589 = vmatpush2.bf16.msra.mxu0 0
    %3590 = vmatprep.mubr.bf16.mxu0 0
    %3591 = vmatmul.mubr.bf16.gmra.mxu0 %v3331
    %v3592 = vpop.f32.mrf.mxu0
    %v3593 = vadd.f32 %v3346, %v3592
    %v3594 = vpop.f32.mrf.mxu0
    %v3595 = vadd.f32 %v3350, %v3594
    %v3596 = vpop.f32.mrf.mxu0
    %v3597 = vadd.f32 %v3346, %v3596
    %v3598 = vpop.f32.mrf.mxu0
    %v3599 = vadd.f32 %v3350, %v3598
    %3600 = vdwg.mxu0
    %v3601 = vmul.f32 %v3550, 0.5
    %v3602 = vmul.f32 %v3552, 0.5
    %v3603 = vmul.f32 %v3593, 0.5
    %v3604 = vmul.f32 %v3595, 0.5
    %v3605 = vmul.f32 %v3554, 0.5
    %v3606 = vmul.f32 %v3556, 0.5
    %v3607 = vmul.f32 %v3597, 0.5
    %v3608 = vmul.f32 %v3599, 0.5
    %v3609 = vmul.f32 %v3550, 0.044715
    %v3610 = vmul.f32 %v3552, 0.044715
    %v3611 = vmul.f32 %v3593, 0.044715
    %v3612 = vmul.f32 %v3595, 0.044715
    %v3613 = vmul.f32 %v3554, 0.044715
    %v3614 = vmul.f32 %v3556, 0.044715
    %v3615 = vmul.f32 %v3597, 0.044715
    %v3616 = vmul.f32 %v3599, 0.044715
    %v3617 = vmul.f32 %v3609, %v3550
    %v3618 = vmul.f32 %v3610, %v3552
    %v3619 = vmul.f32 %v3611, %v3593
    %v3620 = vmul.f32 %v3612, %v3595
    %v3621 = vmul.f32 %v3613, %v3554
    %v3622 = vmul.f32 %v3614, %v3556
    %v3623 = vmul.f32 %v3615, %v3597
    %v3624 = vmul.f32 %v3616, %v3599
    %v3625 = vmul.f32 %v3617, %v3550
    %v3626 = vmul.f32 %v3618, %v3552
    %v3627 = vmul.f32 %v3619, %v3593
    %v3628 = vmul.f32 %v3620, %v3595
    %v3629 = vmul.f32 %v3621, %v3554
    %v3630 = vmul.f32 %v3622, %v3556
    %v3631 = vmul.f32 %v3623, %v3597
    %v3632 = vmul.f32 %v3624, %v3599
    %v3633 = vadd.f32 %v3550, %v3625
    %v3634 = vadd.f32 %v3552, %v3626
    %v3635 = vadd.f32 %v3593, %v3627
    %v3636 = vadd.f32 %v3595, %v3628
    %v3637 = vadd.f32 %v3554, %v3629
    %v3638 = vadd.f32 %v3556, %v3630
    %v3639 = vadd.f32 %v3597, %v3631
    %v3640 = vadd.f32 %v3599, %v3632
    %v3641 = vmul.f32 %v3633, 0.7978846
    %v3642 = vmul.f32 %v3634, 0.7978846
    %v3643 = vmul.f32 %v3635, 0.7978846
    %v3644 = vmul.f32 %v3636, 0.7978846
    %v3645 = vmul.f32 %v3637, 0.7978846
    %v3646 = vmul.f32 %v3638, 0.7978846
    %v3647 = vmul.f32 %v3639, 0.7978846
    %v3648 = vmul.f32 %v3640, 0.7978846
    %v3649 = vtanh.pop %v3641
    %v3650 = vtanh.pop %v3642
    %v3651 = vtanh.pop %v3643
    %v3652 = vtanh.pop %v3644
    %v3653 = vtanh.pop %v3645
    %v3654 = vtanh.pop %v3646
    %v3655 = vtanh.pop %v3647
    %v3656 = vtanh.pop %v3648
    %v3657 = vadd.f32 %v3649, 1.0
    %v3658 = vadd.f32 %v3650, 1.0
    %v3659 = vadd.f32 %v3651, 1.0
    %v3660 = vadd.f32 %v3652, 1.0
    %v3661 = vadd.f32 %v3653, 1.0
    %v3662 = vadd.f32 %v3654, 1.0
    %v3663 = vadd.f32 %v3655, 1.0
    %v3664 = vadd.f32 %v3656, 1.0
    %v3665 = vmul.f32 %v3601, %v3657
    %v3666 = vmul.f32 %v3602, %v3658
    %v3667 = vmul.f32 %v3603, %v3659
    %v3668 = vmul.f32 %v3604, %v3660
    %v3669 = vmul.f32 %v3605, %v3661
    %v3670 = vmul.f32 %v3606, %v3662
    %v3671 = vmul.f32 %v3607, %v3663
    %v3672 = vmul.f32 %v3608, %v3664
    %s3673 = scalar_lea.vmem %s27, 256
    %v3674 = vld [vmem:[%s3673] sm:$0xf]
    %v3675 = vld [vmem:[%s3673 + $0x4] sm:$0xf]
    %v3676 = vld [vmem:[%s3673 + $0x8] sm:$0xf]
    %v3677 = vld [vmem:[%s3673 + $0xc] sm:$0xf]
    %v3678 = vld [vmem:[%s3673 + $0x10] sm:$0xf]
    %v3679 = vld [vmem:[%s3673 + $0x14] sm:$0xf]
    %v3680 = vld [vmem:[%s3673 + $0x18] sm:$0xf]
    %v3681 = vld [vmem:[%s3673 + $0x1c] sm:$0xf]
    %v3682 = vld [vmem:[%s3673 + $0x20] sm:$0xf]
    %v3683 = vld [vmem:[%s3673 + $0x24] sm:$0xf]
    %v3684 = vld [vmem:[%s3673 + $0x28] sm:$0xf]
    %v3685 = vld [vmem:[%s3673 + $0x2c] sm:$0xf]
    %v3686 = vld [vmem:[%s3673 + $0x30] sm:$0xf]
    %v3687 = vld [vmem:[%s3673 + $0x34] sm:$0xf]
    %v3688 = vld [vmem:[%s3673 + $0x38] sm:$0xf]
    %v3689 = vld [vmem:[%s3673 + $0x3c] sm:$0xf]
    %v3690 = vld [vmem:[%s3673 + $0x40] sm:$0xf]
    %v3691 = vld [vmem:[%s3673 + $0x44] sm:$0xf]
    %v3692 = vld [vmem:[%s3673 + $0x48] sm:$0xf]
    %v3693 = vld [vmem:[%s3673 + $0x4c] sm:$0xf]
    %v3694 = vld [vmem:[%s3673 + $0x50] sm:$0xf]
    %v3695 = vld [vmem:[%s3673 + $0x54] sm:$0xf]
    %v3696 = vld [vmem:[%s3673 + $0x58] sm:$0xf]
    %v3697 = vld [vmem:[%s3673 + $0x5c] sm:$0xf]
    %v3698 = vld [vmem:[%s3673 + $0x60] sm:$0xf]
    %v3699 = vld [vmem:[%s3673 + $0x64] sm:$0xf]
    %v3700 = vld [vmem:[%s3673 + $0x68] sm:$0xf]
    %v3701 = vld [vmem:[%s3673 + $0x6c] sm:$0xf]
    %v3702 = vld [vmem:[%s3673 + $0x70] sm:$0xf]
    %v3703 = vld [vmem:[%s3673 + $0x74] sm:$0xf]
    %v3704 = vld [vmem:[%s3673 + $0x78] sm:$0xf]
    %v3705 = vld [vmem:[%s3673 + $0x7c] sm:$0xf]
    %v3706 = vld [vmem:[%s3673 + $0x80] sm:$0xf]
    %v3707 = vld [vmem:[%s3673 + $0x84] sm:$0xf]
    %v3708 = vld [vmem:[%s3673 + $0x88] sm:$0xf]
    %v3709 = vld [vmem:[%s3673 + $0x8c] sm:$0xf]
    %v3710 = vld [vmem:[%s3673 + $0x90] sm:$0xf]
    %v3711 = vld [vmem:[%s3673 + $0x94] sm:$0xf]
    %v3712 = vld [vmem:[%s3673 + $0x98] sm:$0xf]
    %v3713 = vld [vmem:[%s3673 + $0x9c] sm:$0xf]
    %v3714 = vld [vmem:[%s3673 + $0xa0] sm:$0xf]
    %v3715 = vld [vmem:[%s3673 + $0xa4] sm:$0xf]
    %v3716 = vld [vmem:[%s3673 + $0xa8] sm:$0xf]
    %v3717 = vld [vmem:[%s3673 + $0xac] sm:$0xf]
    %v3718 = vld [vmem:[%s3673 + $0xb0] sm:$0xf]
    %v3719 = vld [vmem:[%s3673 + $0xb4] sm:$0xf]
    %v3720 = vld [vmem:[%s3673 + $0xb8] sm:$0xf]
    %v3721 = vld [vmem:[%s3673 + $0xbc] sm:$0xf]
    %v3722 = vld [vmem:[%s3673 + $0xc0] sm:$0xf]
    %v3723 = vld [vmem:[%s3673 + $0xc4] sm:$0xf]
    %v3724 = vld [vmem:[%s3673 + $0xc8] sm:$0xf]
    %v3725 = vld [vmem:[%s3673 + $0xcc] sm:$0xf]
    %v3726 = vld [vmem:[%s3673 + $0xd0] sm:$0xf]
    %v3727 = vld [vmem:[%s3673 + $0xd4] sm:$0xf]
    %v3728 = vld [vmem:[%s3673 + $0xd8] sm:$0xf]
    %v3729 = vld [vmem:[%s3673 + $0xdc] sm:$0xf]
    %v3730 = vld [vmem:[%s3673 + $0xe0] sm:$0xf]
    %v3731 = vld [vmem:[%s3673 + $0xe4] sm:$0xf]
    %v3732 = vld [vmem:[%s3673 + $0xe8] sm:$0xf]
    %v3733 = vld [vmem:[%s3673 + $0xec] sm:$0xf]
    %v3734 = vld [vmem:[%s3673 + $0xf0] sm:$0xf]
    %v3735 = vld [vmem:[%s3673 + $0xf4] sm:$0xf]
    %v3736 = vld [vmem:[%s3673 + $0xf8] sm:$0xf]
    %v3737 = vld [vmem:[%s3673 + $0xfc] sm:$0xf]
    %v3738 = vpack.c.bf16 %v3669, %v3665
    %v3739 = vpack.c.bf16 %v3670, %v3666
    %v3740 = vpack.c.bf16 %v3671, %v3667
    %v3741 = vpack.c.bf16 %v3672, %v3668
    %v3806 = vunpack.c.l.b16 %v3674
    %v3807 = vunpack.c.l.b16 %v3675
    %v3808 = vunpack.c.l.b16 %v3676
    %v3809 = vunpack.c.l.b16 %v3677
    %v3810 = vunpack.c.l.b16 %v3678
    %v3811 = vunpack.c.l.b16 %v3679
    %v3812 = vunpack.c.l.b16 %v3680
    %v3813 = vunpack.c.l.b16 %v3681
    %v3814 = vunpack.c.l.b16 %v3682
    %v3815 = vunpack.c.l.b16 %v3683
    %v3816 = vunpack.c.l.b16 %v3684
    %v3817 = vunpack.c.l.b16 %v3685
    %v3818 = vunpack.c.l.b16 %v3686
    %v3819 = vunpack.c.l.b16 %v3687
    %v3820 = vunpack.c.l.b16 %v3688
    %v3821 = vunpack.c.l.b16 %v3689
    %v3822 = vunpack.c.l.b16 %v3690
    %v3823 = vunpack.c.l.b16 %v3691
    %v3824 = vunpack.c.l.b16 %v3692
    %v3825 = vunpack.c.l.b16 %v3693
    %v3826 = vunpack.c.l.b16 %v3694
    %v3827 = vunpack.c.l.b16 %v3695
    %v3828 = vunpack.c.l.b16 %v3696
    %v3829 = vunpack.c.l.b16 %v3697
    %v3830 = vunpack.c.l.b16 %v3698
    %v3831 = vunpack.c.l.b16 %v3699
    %v3832 = vunpack.c.l.b16 %v3700
    %v3833 = vunpack.c.l.b16 %v3701
    %v3834 = vunpack.c.l.b16 %v3702
    %v3835 = vunpack.c.l.b16 %v3703
    %v3836 = vunpack.c.l.b16 %v3704
    %v3837 = vunpack.c.l.b16 %v3705
    %v3838 = vunpack.c.l.b16 %v3706
    %v3839 = vunpack.c.l.b16 %v3707
    %v3840 = vunpack.c.l.b16 %v3708
    %v3841 = vunpack.c.l.b16 %v3709
    %v3842 = vunpack.c.l.b16 %v3710
    %v3843 = vunpack.c.l.b16 %v3711
    %v3844 = vunpack.c.l.b16 %v3712
    %v3845 = vunpack.c.l.b16 %v3713
    %v3846 = vunpack.c.l.b16 %v3714
    %v3847 = vunpack.c.l.b16 %v3715
    %v3848 = vunpack.c.l.b16 %v3716
    %v3849 = vunpack.c.l.b16 %v3717
    %v3850 = vunpack.c.l.b16 %v3718
    %v3851 = vunpack.c.l.b16 %v3719
    %v3852 = vunpack.c.l.b16 %v3720
    %v3853 = vunpack.c.l.b16 %v3721
    %v3854 = vunpack.c.l.b16 %v3722
    %v3855 = vunpack.c.l.b16 %v3723
    %v3856 = vunpack.c.l.b16 %v3724
    %v3857 = vunpack.c.l.b16 %v3725
    %v3858 = vunpack.c.l.b16 %v3726
    %v3859 = vunpack.c.l.b16 %v3727
    %v3860 = vunpack.c.l.b16 %v3728
    %v3861 = vunpack.c.l.b16 %v3729
    %v3862 = vunpack.c.l.b16 %v3730
    %v3863 = vunpack.c.l.b16 %v3731
    %v3864 = vunpack.c.l.b16 %v3732
    %v3865 = vunpack.c.l.b16 %v3733
    %v3866 = vunpack.c.l.b16 %v3734
    %v3867 = vunpack.c.l.b16 %v3735
    %v3868 = vunpack.c.l.b16 %v3736
    %v3869 = vunpack.c.l.b16 %v3737
    %v3870 = vpack.c.b16 %v3807, %v3806
    %v3871 = vpack.c.b16 %v3809, %v3808
    %v3872 = vpack.c.b16 %v3811, %v3810
    %v3873 = vpack.c.b16 %v3813, %v3812
    %v3874 = vpack.c.b16 %v3815, %v3814
    %v3875 = vpack.c.b16 %v3817, %v3816
    %v3876 = vpack.c.b16 %v3819, %v3818
    %v3877 = vpack.c.b16 %v3821, %v3820
    %v3878 = vpack.c.b16 %v3823, %v3822
    %v3879 = vpack.c.b16 %v3825, %v3824
    %v3880 = vpack.c.b16 %v3827, %v3826
    %v3881 = vpack.c.b16 %v3829, %v3828
    %v3882 = vpack.c.b16 %v3831, %v3830
    %v3883 = vpack.c.b16 %v3833, %v3832
    %v3884 = vpack.c.b16 %v3835, %v3834
    %v3885 = vpack.c.b16 %v3837, %v3836
    %v3886 = vpack.c.b16 %v3839, %v3838
    %v3887 = vpack.c.b16 %v3841, %v3840
    %v3888 = vpack.c.b16 %v3843, %v3842
    %v3889 = vpack.c.b16 %v3845, %v3844
    %v3890 = vpack.c.b16 %v3847, %v3846
    %v3891 = vpack.c.b16 %v3849, %v3848
    %v3892 = vpack.c.b16 %v3851, %v3850
    %v3893 = vpack.c.b16 %v3853, %v3852
    %v3894 = vpack.c.b16 %v3855, %v3854
    %v3895 = vpack.c.b16 %v3857, %v3856
    %v3896 = vpack.c.b16 %v3859, %v3858
    %v3897 = vpack.c.b16 %v3861, %v3860
    %v3898 = vpack.c.b16 %v3863, %v3862
    %v3899 = vpack.c.b16 %v3865, %v3864
    %v3900 = vpack.c.b16 %v3867, %v3866
    %v3901 = vpack.c.b16 %v3869, %v3868
    %3934 = vmatprep.subr.bf16.mxu0 0
    %3935 = vmatpush1.bf16.msra.mxu0 %v3877
    %3936 = vmatprep.subr.bf16.mxu0 0
    %3937 = vmatpush1.bf16.msra.mxu0 %v3876
    %3938 = vmatprep.subr.bf16.mxu0 0
    %3939 = vmatpush1.bf16.msra.mxu0 %v3875
    %3940 = vmatprep.subr.bf16.mxu0 0
    %3941 = vmatpush1.bf16.msra.mxu0 %v3874
    %3942 = vmatprep.subr.bf16.mxu0 0
    %3943 = vmatpush1.bf16.msra.mxu0 %v3873
    %3944 = vmatprep.subr.bf16.mxu0 0
    %3945 = vmatpush1.bf16.msra.mxu0 %v3872
    %3946 = vmatprep.subr.bf16.mxu0 0
    %3947 = vmatpush1.bf16.msra.mxu0 %v3871
    %3948 = vmatprep.subr.bf16.mxu0 0
    %3949 = vmatpush1.bf16.msra.mxu0 %v3870
    %3950 = vmatprep.subr.bf16.mxu0 0
    %3951 = vmatpush2.bf16.msra.mxu0 %v3885
    %3952 = vmatprep.subr.bf16.mxu0 0
    %3953 = vmatpush2.bf16.msra.mxu0 %v3884
    %3954 = vmatprep.subr.bf16.mxu0 0
    %3955 = vmatpush2.bf16.msra.mxu0 %v3883
    %3956 = vmatprep.subr.bf16.mxu0 0
    %3957 = vmatpush2.bf16.msra.mxu0 %v3882
    %3958 = vmatprep.subr.bf16.mxu0 0
    %3959 = vmatpush2.bf16.msra.mxu0 %v3881
    %3960 = vmatprep.subr.bf16.mxu0 0
    %3961 = vmatpush2.bf16.msra.mxu0 %v3880
    %3962 = vmatprep.subr.bf16.mxu0 0
    %3963 = vmatpush2.bf16.msra.mxu0 %v3879
    %3964 = vmatprep.subr.bf16.mxu0 0
    %3965 = vmatpush2.bf16.msra.mxu0 %v3878
    %3966 = vmatprep.mubr.bf16.mxu0 %v3739
    %3967 = vmatmul.mubr.bf16.gmra.mxu0 %v3738
    %v3968 = vpop.f32.mrf.mxu0
    %v3969 = vadd.f32 0.0, %v3968
    %v3970 = vpop.f32.mrf.mxu0
    %v3971 = vpop.f32.mrf.mxu0
    %v3972 = vadd.f32 0.0, %v3971
    %v3973 = vpop.f32.mrf.mxu0
    %3974 = vdwg.mxu0
    %3975 = vmatprep.subr.bf16.mxu0 0
    %3976 = vmatpush1.bf16.msra.mxu0 %v3893
    %3977 = vmatprep.subr.bf16.mxu0 0
    %3978 = vmatpush1.bf16.msra.mxu0 %v3892
    %3979 = vmatprep.subr.bf16.mxu0 0
    %3980 = vmatpush1.bf16.msra.mxu0 %v3891
    %3981 = vmatprep.subr.bf16.mxu0 0
    %3982 = vmatpush1.bf16.msra.mxu0 %v3890
    %3983 = vmatprep.subr.bf16.mxu0 0
    %3984 = vmatpush1.bf16.msra.mxu0 %v3889
    %3985 = vmatprep.subr.bf16.mxu0 0
    %3986 = vmatpush1.bf16.msra.mxu0 %v3888
    %3987 = vmatprep.subr.bf16.mxu0 0
    %3988 = vmatpush1.bf16.msra.mxu0 %v3887
    %3989 = vmatprep.subr.bf16.mxu0 0
    %3990 = vmatpush1.bf16.msra.mxu0 %v3886
    %3991 = vmatprep.subr.bf16.mxu0 0
    %3992 = vmatpush2.bf16.msra.mxu0 %v3901
    %3993 = vmatprep.subr.bf16.mxu0 0
    %3994 = vmatpush2.bf16.msra.mxu0 %v3900
    %3995 = vmatprep.subr.bf16.mxu0 0
    %3996 = vmatpush2.bf16.msra.mxu0 %v3899
    %3997 = vmatprep.subr.bf16.mxu0 0
    %3998 = vmatpush2.bf16.msra.mxu0 %v3898
    %3999 = vmatprep.subr.bf16.mxu0 0
    %4000 = vmatpush2.bf16.msra.mxu0 %v3897
    %4001 = vmatprep.subr.bf16.mxu0 0
    %4002 = vmatpush2.bf16.msra.mxu0 %v3896
    %4003 = vmatprep.subr.bf16.mxu0 0
    %4004 = vmatpush2.bf16.msra.mxu0 %v3895
    %4005 = vmatprep.subr.bf16.mxu0 0
    %4006 = vmatpush2.bf16.msra.mxu0 %v3894
    %4007 = vmatprep.mubr.bf16.mxu0 %v3741
    %4008 = vmatmul.mubr.bf16.gmra.mxu0 %v3740
    %v4009 = vpop.f32.mrf.mxu0
    %v4010 = vadd.f32 %v3969, %v4009
    %v4011 = vpop.f32.mrf.mxu0
    %v4012 = vpop.f32.mrf.mxu0
    %v4013 = vadd.f32 %v3972, %v4012
    %v4014 = vpop.f32.mrf.mxu0
    %4015 = vdwg.mxu0
    %v4016 = vadd.f32 %v3254, %v4010
    %v4017 = vadd.f32 %v3255, %v4013
    %s4018 = scalar_lea.vmem %s29, 1
    %v4019 = vld [vmem:[%s4018] sm:$0x1]
    %v4021 = vlaneseq
    %v4022 = vshrl.u32 %v4021, 7
    %v4023 = vsub.s32 0, %v4022
    %v4024 = vrot.slane %v4019, %v4023
    %v4026 = vadd.f32 %v4016, %v4024
    %v4027 = vadd.f32 %v4017, %v4024
    %s4028 = scalar_lea.vmem %s119, 16
    %4029 = vst [vmem:[%s4028] sm:$0xff] %v4026
    %4030 = vst [vmem:[%s4028 + $0x8] sm:$0xff] %v4027
    %v4031 = vld [vmem:[%s31] sm:$0x1]
    %v4032 = vld [vmem:[%s33] sm:$0x1]
    %4033 = vadd.xlane.f32.xlu0 %v4026
    %v4034 = vpop.xlane.xlu0 %4033
    %4035 = vadd.xlane.f32.xlu0 %v4027
    %v4036 = vpop.xlane.xlu0 %4035
    %v4037 = vmul.f32 %v4034, %v898
    %v4038 = vmul.f32 %v4036, %v898
    %v4039 = vsub.f32 %v4026, %v4037
    %v4040 = vsub.f32 %v4027, %v4038
    %v4041 = vmul.f32 %v4039, %v4039
    %v4042 = vmul.f32 %v4040, %v4040
    %4043 = vadd.xlane.f32.xlu0 %v4041
    %v4044 = vpop.xlane.xlu0 %4043
    %4045 = vadd.xlane.f32.xlu0 %v4042
    %v4046 = vpop.xlane.xlu0 %4045
    %v4047 = vmul.f32 %v4044, %v898
    %v4048 = vmul.f32 %v4046, %v898
    %v4049 = vadd.f32 %v4047, 1e-06
    %v4050 = vadd.f32 %v4048, 1e-06
    %v4051 = vrsqrt.pop %v4049
    %v4052 = vrsqrt.pop %v4050
    %v4053 = vmul.f32 %v4039, %v4051
    %v4054 = vmul.f32 %v4040, %v4052
    %v4056 = vlaneseq
    %v4057 = vshrl.u32 %v4056, 7
    %v4058 = vsub.s32 0, %v4057
    %v4059 = vrot.slane %v4031, %v4058
    %v4061 = vmul.f32 %v4053, %v4059
    %v4062 = vmul.f32 %v4054, %v4059
    %v4064 = vlaneseq
    %v4065 = vshrl.u32 %v4064, 7
    %v4066 = vsub.s32 0, %v4065
    %v4067 = vrot.slane %v4032, %v4066
    %v4069 = vadd.f32 %v4061, %v4067
    %v4070 = vadd.f32 %v4062, %v4067
    %v4071 = vld [vmem:[%s35] sm:$0xff]
    %v4072 = vld [vmem:[%s35 + $0x8] sm:$0xff]
    %v4074 = vrot.slane %v4070, 7
    %vm4076 = vcmask 1040384
    %v4077 = vsel %vm4076, %v4069, %v4074
    %4078 = vmatprep.subr.mxu0 0.0
    %4079 = vmatpush1.xpose.msra.mxu0 0.0
    %4080 = vmatprep.subr.mxu0 0.0
    %4081 = vmatpush1.xpose.msra.mxu0 0.0
    %4082 = vmatprep.subr.mxu0 0.0
    %4083 = vmatpush1.xpose.msra.mxu0 0.0
    %4084 = vmatprep.subr.mxu0 0.0
    %4085 = vmatpush1.xpose.msra.mxu0 0.0
    %4086 = vmatprep.subr.mxu0 0.0
    %4087 = vmatpush1.xpose.msra.mxu0 0.0
    %4088 = vmatprep.subr.mxu0 0.0
    %4089 = vmatpush1.xpose.msra.mxu0 0.0
    %4090 = vmatprep.subr.mxu0 0.0
    %4091 = vmatpush1.xpose.msra.mxu0 0.0
    %4092 = vmatprep.subr.mxu0 0.0
    %4093 = vmatpush1.xpose.msra.mxu0 0.0
    %4094 = vmatprep.subr.mxu0 0.0
    %4095 = vmatpush1.xpose.msra.mxu0 0.0
    %4096 = vmatprep.subr.mxu0 0.0
    %4097 = vmatpush1.xpose.msra.mxu0 0.0
    %4098 = vmatprep.subr.mxu0 0.0
    %4099 = vmatpush1.xpose.msra.mxu0 0.0
    %4100 = vmatprep.subr.mxu0 0.0
    %4101 = vmatpush1.xpose.msra.mxu0 0.0
    %4102 = vmatprep.subr.mxu0 0.0
    %4103 = vmatpush1.xpose.msra.mxu0 0.0
    %4104 = vmatprep.subr.mxu0 0.0
    %4105 = vmatpush1.xpose.msra.mxu0 0.0
    %4106 = vmatprep.subr.mxu0 0.0
    %4107 = vmatpush1.xpose.msra.mxu0 %v4072
    %4108 = vmatprep.subr.mxu0 0.0
    %4109 = vmatpush1.xpose.msra.mxu0 %v4071
    %4110 = vmatprep.subr.mxu0 0.0
    %4111 = vmatpush2.xpose.msra.mxu0 0.0
    %4112 = vmatprep.subr.mxu0 0.0
    %4113 = vmatpush2.xpose.msra.mxu0 0.0
    %4114 = vmatprep.subr.mxu0 0.0
    %4115 = vmatpush2.xpose.msra.mxu0 0.0
    %4116 = vmatprep.subr.mxu0 0.0
    %4117 = vmatpush2.xpose.msra.mxu0 0.0
    %4118 = vmatprep.subr.mxu0 0.0
    %4119 = vmatpush2.xpose.msra.mxu0 0.0
    %4120 = vmatprep.subr.mxu0 0.0
    %4121 = vmatpush2.xpose.msra.mxu0 0.0
    %4122 = vmatprep.subr.mxu0 0.0
    %4123 = vmatpush2.xpose.msra.mxu0 0.0
    %4124 = vmatprep.subr.mxu0 0.0
    %4125 = vmatpush2.xpose.msra.mxu0 0.0
    %4126 = vmatprep.subr.mxu0 0.0
    %4127 = vmatpush2.xpose.msra.mxu0 0.0
    %4128 = vmatprep.subr.mxu0 0.0
    %4129 = vmatpush2.xpose.msra.mxu0 0.0
    %4130 = vmatprep.subr.mxu0 0.0
    %4131 = vmatpush2.xpose.msra.mxu0 0.0
    %4132 = vmatprep.subr.mxu0 0.0
    %4133 = vmatpush2.xpose.msra.mxu0 0.0
    %4134 = vmatprep.subr.mxu0 0.0
    %4135 = vmatpush2.xpose.msra.mxu0 0.0
    %4136 = vmatprep.subr.mxu0 0.0
    %4137 = vmatpush2.xpose.msra.mxu0 0.0
    %4138 = vmatprep.subr.mxu0 0.0
    %4139 = vmatpush2.xpose.msra.mxu0 0.0
    %4140 = vmatprep.subr.mxu0 0.0
    %4141 = vmatpush2.xpose.msra.mxu0 0.0
    %4142 = vmatprep.mubr.f32.mxu0 0.0
    %4143 = vmatmul.mubr.f32.gmra.mxu0 %v4077
    %v4144 = vpop.f32.mrf.mxu0
    %v4145 = vadd.f32 0.0, %v4144
    %v4146 = vpop.f32.mrf.mxu0
    %4147 = vdwg.mxu0
    %v4148 = vmul.f32 %v4145, 25.0
    %vm4149 = vcmask 123904
    %v4150 = vsel %vm4149, %v4148, -inf
    %4151 = vmax.xlane.f32.xlu0 %v4150
    %v4152 = vpop.xlane.xlu0 %4151
    %v4153 = vsub.f32 %v4148, %v4152
    %v4154 = vmul.f32 %v4153, 1.442695
    %v4155 = vpow.pop %v4154
    %v4156 = vsel %vm4149, %v4155, 0.0
    %4157 = vadd.xlane.f32.xlu0 %v4156
    %v4158 = vpop.xlane.xlu0 %4157
    %v4159 = vrcp.pop %v4158
    %v4160 = vmul.f32 %v4155, %v4159
    %vm4161 = vcmask 130048
    %v4163 = vsel %vm4161, %v4160, 0
    %4165 = vmatprep.subr.mxu0 0.0
    %4166 = vmatpush1.msra.mxu0 0.0
    %4167 = vmatprep.subr.mxu0 0.0
    %4168 = vmatpush1.msra.mxu0 0.0
    %4169 = vmatprep.subr.mxu0 0.0
    %4170 = vmatpush1.msra.mxu0 0.0
    %4171 = vmatprep.subr.mxu0 0.0
    %4172 = vmatpush1.msra.mxu0 0.0
    %4173 = vmatprep.subr.mxu0 0.0
    %4174 = vmatpush1.msra.mxu0 0.0
    %4175 = vmatprep.subr.mxu0 0.0
    %4176 = vmatpush1.msra.mxu0 0.0
    %4177 = vmatprep.subr.mxu0 0.0
    %4178 = vmatpush1.msra.mxu0 0.0
    %4179 = vmatprep.subr.mxu0 0.0
    %4180 = vmatpush1.msra.mxu0 0.0
    %4181 = vmatprep.subr.mxu0 0.0
    %4182 = vmatpush1.msra.mxu0 0.0
    %4183 = vmatprep.subr.mxu0 0.0
    %4184 = vmatpush1.msra.mxu0 0.0
    %4185 = vmatprep.subr.mxu0 0.0
    %4186 = vmatpush1.msra.mxu0 0.0
    %4187 = vmatprep.subr.mxu0 0.0
    %4188 = vmatpush1.msra.mxu0 0.0
    %4189 = vmatprep.subr.mxu0 0.0
    %4190 = vmatpush1.msra.mxu0 0.0
    %4191 = vmatprep.subr.mxu0 0.0
    %4192 = vmatpush1.msra.mxu0 0.0
    %4193 = vmatprep.subr.mxu0 0.0
    %4194 = vmatpush1.msra.mxu0 %v4072
    %4195 = vmatprep.subr.mxu0 0.0
    %4196 = vmatpush1.msra.mxu0 %v4071
    %4197 = vmatprep.subr.mxu0 0.0
    %4198 = vmatpush2.msra.mxu0 0.0
    %4199 = vmatprep.subr.mxu0 0.0
    %4200 = vmatpush2.msra.mxu0 0.0
    %4201 = vmatprep.subr.mxu0 0.0
    %4202 = vmatpush2.msra.mxu0 0.0
    %4203 = vmatprep.subr.mxu0 0.0
    %4204 = vmatpush2.msra.mxu0 0.0
    %4205 = vmatprep.subr.mxu0 0.0
    %4206 = vmatpush2.msra.mxu0 0.0
    %4207 = vmatprep.subr.mxu0 0.0
    %4208 = vmatpush2.msra.mxu0 0.0
    %4209 = vmatprep.subr.mxu0 0.0
    %4210 = vmatpush2.msra.mxu0 0.0
    %4211 = vmatprep.subr.mxu0 0.0
    %4212 = vmatpush2.msra.mxu0 0.0
    %4213 = vmatprep.subr.mxu0 0.0
    %4214 = vmatpush2.msra.mxu0 0.0
    %4215 = vmatprep.subr.mxu0 0.0
    %4216 = vmatpush2.msra.mxu0 0.0
    %4217 = vmatprep.subr.mxu0 0.0
    %4218 = vmatpush2.msra.mxu0 0.0
    %4219 = vmatprep.subr.mxu0 0.0
    %4220 = vmatpush2.msra.mxu0 0.0
    %4221 = vmatprep.subr.mxu0 0.0
    %4222 = vmatpush2.msra.mxu0 0.0
    %4223 = vmatprep.subr.mxu0 0.0
    %4224 = vmatpush2.msra.mxu0 0.0
    %4225 = vmatprep.subr.mxu0 0.0
    %4226 = vmatpush2.msra.mxu0 0.0
    %4227 = vmatprep.subr.mxu0 0.0
    %4228 = vmatpush2.msra.mxu0 0.0
    %4229 = vmatprep.mubr.f32.mxu0 0.0
    %4230 = vmatmul.mubr.f32.gmra.mxu0 %v4163
    %v4231 = vpop.f32.mrf.mxu0
    %v4232 = vadd.f32 0.0, %v4231
    %v4233 = vpop.f32.mrf.mxu0
    %4234 = vdwg.mxu0
    %v4235 = vld [vmem:[%s37] sm:$0xff]
    %v4236 = vld [vmem:[%s37 + $0x8] sm:$0xff]
    %4237 = vset.pattern.permute.xlu0 0
    %4238 = vperm.xlu0 %4237, %v4235
    %v4239 = vpop.permute.xlu0 %4238
    %4240 = vset.pattern.permute.xlu0 0
    %4241 = vperm.xlu0 %4240, %v4236
    %v4242 = vpop.permute.xlu0 %4241
    %vm4243 = vcmp.eq.s32.totalorder %v263, %v4239
    %vm4244 = vcmp.eq.s32.totalorder %v263, %v4242
    %v4245 = vsel %vm4243, 1.0, 0.0
    %v4246 = vsel %vm4244, 1.0, 0.0
    %v4247 = vpack.c.bf16 %v4246, %v4245
    %v4248 = vld [vmem:[%s43] sm:$0xf]
    %v4249 = vld [vmem:[%s43 + $0x4] sm:$0xf]
    %v4250 = vld [vmem:[%s43 + $0x8] sm:$0xf]
    %v4251 = vld [vmem:[%s43 + $0xc] sm:$0xf]
    %v4252 = vld [vmem:[%s43 + $0x10] sm:$0xf]
    %v4253 = vld [vmem:[%s43 + $0x14] sm:$0xf]
    %v4254 = vld [vmem:[%s43 + $0x18] sm:$0xf]
    %v4255 = vld [vmem:[%s43 + $0x1c] sm:$0xf]
    %v4256 = vld [vmem:[%s43 + $0x20] sm:$0xf]
    %v4257 = vld [vmem:[%s43 + $0x24] sm:$0xf]
    %v4258 = vld [vmem:[%s43 + $0x28] sm:$0xf]
    %v4259 = vld [vmem:[%s43 + $0x2c] sm:$0xf]
    %v4260 = vld [vmem:[%s43 + $0x30] sm:$0xf]
    %v4261 = vld [vmem:[%s43 + $0x34] sm:$0xf]
    %v4262 = vld [vmem:[%s43 + $0x38] sm:$0xf]
    %v4263 = vld [vmem:[%s43 + $0x3c] sm:$0xf]
    %v4264 = vld [vmem:[%s45] sm:$0xff]
    %v4265 = vld [vmem:[%s45 + $0x8] sm:$0xff]
    %v4282 = vunpack.c.l.b16 %v4248
    %v4283 = vunpack.c.l.b16 %v4249
    %v4284 = vunpack.c.l.b16 %v4250
    %v4285 = vunpack.c.l.b16 %v4251
    %v4286 = vunpack.c.l.b16 %v4252
    %v4287 = vunpack.c.l.b16 %v4253
    %v4288 = vunpack.c.l.b16 %v4254
    %v4289 = vunpack.c.l.b16 %v4255
    %v4290 = vunpack.c.l.b16 %v4256
    %v4291 = vunpack.c.l.b16 %v4257
    %v4292 = vunpack.c.l.b16 %v4258
    %v4293 = vunpack.c.l.b16 %v4259
    %v4294 = vunpack.c.l.b16 %v4260
    %v4295 = vunpack.c.l.b16 %v4261
    %v4296 = vunpack.c.l.b16 %v4262
    %v4297 = vunpack.c.l.b16 %v4263
    %v4298 = vpack.c.b16 %v4283, %v4282
    %v4299 = vpack.c.b16 %v4285, %v4284
    %v4300 = vpack.c.b16 %v4287, %v4286
    %v4301 = vpack.c.b16 %v4289, %v4288
    %v4302 = vpack.c.b16 %v4291, %v4290
    %v4303 = vpack.c.b16 %v4293, %v4292
    %v4304 = vpack.c.b16 %v4295, %v4294
    %v4305 = vpack.c.b16 %v4297, %v4296
    %4314 = vmatprep.subr.bf16.mxu0 0
    %4315 = vmatpush1.bf16.msra.mxu0 %v4305
    %4316 = vmatprep.subr.bf16.mxu0 0
    %4317 = vmatpush1.bf16.msra.mxu0 %v4304
    %4318 = vmatprep.subr.bf16.mxu0 0
    %4319 = vmatpush1.bf16.msra.mxu0 %v4303
    %4320 = vmatprep.subr.bf16.mxu0 0
    %4321 = vmatpush1.bf16.msra.mxu0 %v4302
    %4322 = vmatprep.subr.bf16.mxu0 0
    %4323 = vmatpush1.bf16.msra.mxu0 %v4301
    %4324 = vmatprep.subr.bf16.mxu0 0
    %4325 = vmatpush1.bf16.msra.mxu0 %v4300
    %4326 = vmatprep.subr.bf16.mxu0 0
    %4327 = vmatpush1.bf16.msra.mxu0 %v4299
    %4328 = vmatprep.subr.bf16.mxu0 0
    %4329 = vmatpush1.bf16.msra.mxu0 %v4298
    %4330 = vmatprep.subr.bf16.mxu0 0
    %4331 = vmatpush2.bf16.msra.mxu0 0
    %4332 = vmatprep.subr.bf16.mxu0 0
    %4333 = vmatpush2.bf16.msra.mxu0 0
    %4334 = vmatprep.subr.bf16.mxu0 0
    %4335 = vmatpush2.bf16.msra.mxu0 0
    %4336 = vmatprep.subr.bf16.mxu0 0
    %4337 = vmatpush2.bf16.msra.mxu0 0
    %4338 = vmatprep.subr.bf16.mxu0 0
    %4339 = vmatpush2.bf16.msra.mxu0 0
    %4340 = vmatprep.subr.bf16.mxu0 0
    %4341 = vmatpush2.bf16.msra.mxu0 0
    %4342 = vmatprep.subr.bf16.mxu0 0
    %4343 = vmatpush2.bf16.msra.mxu0 0
    %4344 = vmatprep.subr.bf16.mxu0 0
    %4345 = vmatpush2.bf16.msra.mxu0 0
    %4346 = vmatprep.mubr.bf16.mxu0 0
    %4347 = vmatmul.mubr.bf16.gmra.mxu0 %v4247
    %v4348 = vpop.f32.mrf.mxu0
    %v4349 = vadd.f32 %v4264, %v4348
    %v4350 = vpop.f32.mrf.mxu0
    %v4351 = vpop.f32.mrf.mxu0
    %v4352 = vadd.f32 %v4265, %v4351
    %v4353 = vpop.f32.mrf.mxu0
    %4354 = vdwg.mxu0
    %v4355 = vld [vmem:[%s47] sm:$0x1]
    %v4356 = vld [vmem:[%s49] sm:$0x1]
    %4357 = vadd.xlane.f32.xlu0 %v4349
    %v4358 = vpop.xlane.xlu0 %4357
    %4359 = vadd.xlane.f32.xlu0 %v4352
    %v4360 = vpop.xlane.xlu0 %4359
    %v4361 = vmul.f32 %v4358, %v898
    %v4362 = vmul.f32 %v4360, %v898
    %v4363 = vsub.f32 %v4349, %v4361
    %v4364 = vsub.f32 %v4352, %v4362
    %v4365 = vmul.f32 %v4363, %v4363
    %v4366 = vmul.f32 %v4364, %v4364
    %4367 = vadd.xlane.f32.xlu0 %v4365
    %v4368 = vpop.xlane.xlu0 %4367
    %4369 = vadd.xlane.f32.xlu0 %v4366
    %v4370 = vpop.xlane.xlu0 %4369
    %v4371 = vmul.f32 %v4368, %v898
    %v4372 = vmul.f32 %v4370, %v898
    %v4373 = vadd.f32 %v4371, 1e-12
    %v4374 = vadd.f32 %v4372, 1e-12
    %v4375 = vrsqrt.pop %v4373
    %v4376 = vrsqrt.pop %v4374
    %v4377 = vmul.f32 %v4363, %v4375
    %v4378 = vmul.f32 %v4364, %v4376
    %v4380 = vlaneseq
    %v4381 = vshrl.u32 %v4380, 7
    %v4382 = vsub.s32 0, %v4381
    %v4383 = vrot.slane %v4355, %v4382
    %v4385 = vmul.f32 %v4377, %v4383
    %v4386 = vmul.f32 %v4378, %v4383
    %v4388 = vlaneseq
    %v4389 = vshrl.u32 %v4388, 7
    %v4390 = vsub.s32 0, %v4389
    %v4391 = vrot.slane %v4356, %v4390
    %v4393 = vadd.f32 %v4385, %v4391
    %v4394 = vadd.f32 %v4386, %v4391
    %v4395 = vld [vmem:[%s51] sm:$0xf]
    %v4396 = vld [vmem:[%s51 + $0x4] sm:$0xf]
    %v4397 = vld [vmem:[%s51 + $0x8] sm:$0xf]
    %v4398 = vld [vmem:[%s51 + $0xc] sm:$0xf]
    %v4399 = vld [vmem:[%s51 + $0x10] sm:$0xf]
    %v4400 = vld [vmem:[%s51 + $0x14] sm:$0xf]
    %v4401 = vld [vmem:[%s51 + $0x18] sm:$0xf]
    %v4402 = vld [vmem:[%s51 + $0x1c] sm:$0xf]
    %v4403 = vld [vmem:[%s51 + $0x20] sm:$0xf]
    %v4404 = vld [vmem:[%s51 + $0x24] sm:$0xf]
    %v4405 = vld [vmem:[%s51 + $0x28] sm:$0xf]
    %v4406 = vld [vmem:[%s51 + $0x2c] sm:$0xf]
    %v4407 = vld [vmem:[%s51 + $0x30] sm:$0xf]
    %v4408 = vld [vmem:[%s51 + $0x34] sm:$0xf]
    %v4409 = vld [vmem:[%s51 + $0x38] sm:$0xf]
    %v4410 = vld [vmem:[%s51 + $0x3c] sm:$0xf]
    %v4411 = vpack.c.bf16 %v4394, %v4393
    %v4412 = vld [vmem:[%s53] sm:$0x1]
    %v4414 = vlaneseq
    %v4415 = vshrl.u32 %v4414, 7
    %v4416 = vsub.s32 0, %v4415
    %v4417 = vrot.slane %v4412, %v4416
    %v4435 = vunpack.c.l.b16 %v4395
    %v4436 = vunpack.c.l.b16 %v4396
    %v4437 = vunpack.c.l.b16 %v4397
    %v4438 = vunpack.c.l.b16 %v4398
    %v4439 = vunpack.c.l.b16 %v4399
    %v4440 = vunpack.c.l.b16 %v4400
    %v4441 = vunpack.c.l.b16 %v4401
    %v4442 = vunpack.c.l.b16 %v4402
    %v4443 = vunpack.c.l.b16 %v4403
    %v4444 = vunpack.c.l.b16 %v4404
    %v4445 = vunpack.c.l.b16 %v4405
    %v4446 = vunpack.c.l.b16 %v4406
    %v4447 = vunpack.c.l.b16 %v4407
    %v4448 = vunpack.c.l.b16 %v4408
    %v4449 = vunpack.c.l.b16 %v4409
    %v4450 = vunpack.c.l.b16 %v4410
    %v4451 = vpack.c.b16 %v4436, %v4435
    %v4452 = vpack.c.b16 %v4438, %v4437
    %v4453 = vpack.c.b16 %v4440, %v4439
    %v4454 = vpack.c.b16 %v4442, %v4441
    %v4455 = vpack.c.b16 %v4444, %v4443
    %v4456 = vpack.c.b16 %v4446, %v4445
    %v4457 = vpack.c.b16 %v4448, %v4447
    %v4458 = vpack.c.b16 %v4450, %v4449
    %4467 = vmatprep.subr.bf16.mxu0 0
    %4468 = vmatpush1.bf16.msra.mxu0 %v4458
    %4469 = vmatprep.subr.bf16.mxu0 0
    %4470 = vmatpush1.bf16.msra.mxu0 %v4457
    %4471 = vmatprep.subr.bf16.mxu0 0
    %4472 = vmatpush1.bf16.msra.mxu0 %v4456
    %4473 = vmatprep.subr.bf16.mxu0 0
    %4474 = vmatpush1.bf16.msra.mxu0 %v4455
    %4475 = vmatprep.subr.bf16.mxu0 0
    %4476 = vmatpush1.bf16.msra.mxu0 %v4454
    %4477 = vmatprep.subr.bf16.mxu0 0
    %4478 = vmatpush1.bf16.msra.mxu0 %v4453
    %4479 = vmatprep.subr.bf16.mxu0 0
    %4480 = vmatpush1.bf16.msra.mxu0 %v4452
    %4481 = vmatprep.subr.bf16.mxu0 0
    %4482 = vmatpush1.bf16.msra.mxu0 %v4451
    %4483 = vmatprep.subr.bf16.mxu0 0
    %4484 = vmatpush2.bf16.msra.mxu0 0
    %4485 = vmatprep.subr.bf16.mxu0 0
    %4486 = vmatpush2.bf16.msra.mxu0 0
    %4487 = vmatprep.subr.bf16.mxu0 0
    %4488 = vmatpush2.bf16.msra.mxu0 0
    %4489 = vmatprep.subr.bf16.mxu0 0
    %4490 = vmatpush2.bf16.msra.mxu0 0
    %4491 = vmatprep.subr.bf16.mxu0 0
    %4492 = vmatpush2.bf16.msra.mxu0 0
    %4493 = vmatprep.subr.bf16.mxu0 0
    %4494 = vmatpush2.bf16.msra.mxu0 0
    %4495 = vmatprep.subr.bf16.mxu0 0
    %4496 = vmatpush2.bf16.msra.mxu0 0
    %4497 = vmatprep.subr.bf16.mxu0 0
    %4498 = vmatpush2.bf16.msra.mxu0 0
    %4499 = vmatprep.mubr.bf16.mxu0 0
    %4500 = vmatmul.mubr.bf16.gmra.mxu0 %v4411
    %v4501 = vpop.f32.mrf.mxu0
    %v4502 = vadd.f32 %v4417, %v4501
    %v4503 = vpop.f32.mrf.mxu0
    %v4504 = vpop.f32.mrf.mxu0
    %v4505 = vadd.f32 %v4417, %v4504
    %v4506 = vpop.f32.mrf.mxu0
    %4507 = vdwg.mxu0
    %v4508 = vld [vmem:[%s55] sm:$0xf]
    %v4509 = vld [vmem:[%s55 + $0x4] sm:$0xf]
    %v4510 = vld [vmem:[%s55 + $0x8] sm:$0xf]
    %v4511 = vld [vmem:[%s55 + $0xc] sm:$0xf]
    %v4512 = vld [vmem:[%s55 + $0x10] sm:$0xf]
    %v4513 = vld [vmem:[%s55 + $0x14] sm:$0xf]
    %v4514 = vld [vmem:[%s55 + $0x18] sm:$0xf]
    %v4515 = vld [vmem:[%s55 + $0x1c] sm:$0xf]
    %v4516 = vld [vmem:[%s55 + $0x20] sm:$0xf]
    %v4517 = vld [vmem:[%s55 + $0x24] sm:$0xf]
    %v4518 = vld [vmem:[%s55 + $0x28] sm:$0xf]
    %v4519 = vld [vmem:[%s55 + $0x2c] sm:$0xf]
    %v4520 = vld [vmem:[%s55 + $0x30] sm:$0xf]
    %v4521 = vld [vmem:[%s55 + $0x34] sm:$0xf]
    %v4522 = vld [vmem:[%s55 + $0x38] sm:$0xf]
    %v4523 = vld [vmem:[%s55 + $0x3c] sm:$0xf]
    %v4524 = vld [vmem:[%s57] sm:$0x1]
    %v4526 = vlaneseq
    %v4527 = vshrl.u32 %v4526, 7
    %v4528 = vsub.s32 0, %v4527
    %v4529 = vrot.slane %v4524, %v4528
    %v4547 = vunpack.c.l.b16 %v4508
    %v4548 = vunpack.c.l.b16 %v4509
    %v4549 = vunpack.c.l.b16 %v4510
    %v4550 = vunpack.c.l.b16 %v4511
    %v4551 = vunpack.c.l.b16 %v4512
    %v4552 = vunpack.c.l.b16 %v4513
    %v4553 = vunpack.c.l.b16 %v4514
    %v4554 = vunpack.c.l.b16 %v4515
    %v4555 = vunpack.c.l.b16 %v4516
    %v4556 = vunpack.c.l.b16 %v4517
    %v4557 = vunpack.c.l.b16 %v4518
    %v4558 = vunpack.c.l.b16 %v4519
    %v4559 = vunpack.c.l.b16 %v4520
    %v4560 = vunpack.c.l.b16 %v4521
    %v4561 = vunpack.c.l.b16 %v4522
    %v4562 = vunpack.c.l.b16 %v4523
    %v4563 = vpack.c.b16 %v4548, %v4547
    %v4564 = vpack.c.b16 %v4550, %v4549
    %v4565 = vpack.c.b16 %v4552, %v4551
    %v4566 = vpack.c.b16 %v4554, %v4553
    %v4567 = vpack.c.b16 %v4556, %v4555
    %v4568 = vpack.c.b16 %v4558, %v4557
    %v4569 = vpack.c.b16 %v4560, %v4559
    %v4570 = vpack.c.b16 %v4562, %v4561
    %4579 = vmatprep.subr.bf16.mxu0 0
    %4580 = vmatpush1.bf16.msra.mxu0 %v4570
    %4581 = vmatprep.subr.bf16.mxu0 0
    %4582 = vmatpush1.bf16.msra.mxu0 %v4569
    %4583 = vmatprep.subr.bf16.mxu0 0
    %4584 = vmatpush1.bf16.msra.mxu0 %v4568
    %4585 = vmatprep.subr.bf16.mxu0 0
    %4586 = vmatpush1.bf16.msra.mxu0 %v4567
    %4587 = vmatprep.subr.bf16.mxu0 0
    %4588 = vmatpush1.bf16.msra.mxu0 %v4566
    %4589 = vmatprep.subr.bf16.mxu0 0
    %4590 = vmatpush1.bf16.msra.mxu0 %v4565
    %4591 = vmatprep.subr.bf16.mxu0 0
    %4592 = vmatpush1.bf16.msra.mxu0 %v4564
    %4593 = vmatprep.subr.bf16.mxu0 0
    %4594 = vmatpush1.bf16.msra.mxu0 %v4563
    %4595 = vmatprep.subr.bf16.mxu0 0
    %4596 = vmatpush2.bf16.msra.mxu0 0
    %4597 = vmatprep.subr.bf16.mxu0 0
    %4598 = vmatpush2.bf16.msra.mxu0 0
    %4599 = vmatprep.subr.bf16.mxu0 0
    %4600 = vmatpush2.bf16.msra.mxu0 0
    %4601 = vmatprep.subr.bf16.mxu0 0
    %4602 = vmatpush2.bf16.msra.mxu0 0
    %4603 = vmatprep.subr.bf16.mxu0 0
    %4604 = vmatpush2.bf16.msra.mxu0 0
    %4605 = vmatprep.subr.bf16.mxu0 0
    %4606 = vmatpush2.bf16.msra.mxu0 0
    %4607 = vmatprep.subr.bf16.mxu0 0
    %4608 = vmatpush2.bf16.msra.mxu0 0
    %4609 = vmatprep.subr.bf16.mxu0 0
    %4610 = vmatpush2.bf16.msra.mxu0 0
    %4611 = vmatprep.mubr.bf16.mxu0 0
    %4612 = vmatmul.mubr.bf16.gmra.mxu0 %v4411
    %v4613 = vpop.f32.mrf.mxu0
    %v4614 = vadd.f32 %v4529, %v4613
    %v4615 = vpop.f32.mrf.mxu0
    %v4616 = vpop.f32.mrf.mxu0
    %v4617 = vadd.f32 %v4529, %v4616
    %v4618 = vpop.f32.mrf.mxu0
    %4619 = vdwg.mxu0
    %v4620 = vld [vmem:[%s59] sm:$0xf]
    %v4621 = vld [vmem:[%s59 + $0x4] sm:$0xf]
    %v4622 = vld [vmem:[%s59 + $0x8] sm:$0xf]
    %v4623 = vld [vmem:[%s59 + $0xc] sm:$0xf]
    %v4624 = vld [vmem:[%s59 + $0x10] sm:$0xf]
    %v4625 = vld [vmem:[%s59 + $0x14] sm:$0xf]
    %v4626 = vld [vmem:[%s59 + $0x18] sm:$0xf]
    %v4627 = vld [vmem:[%s59 + $0x1c] sm:$0xf]
    %v4628 = vld [vmem:[%s59 + $0x20] sm:$0xf]
    %v4629 = vld [vmem:[%s59 + $0x24] sm:$0xf]
    %v4630 = vld [vmem:[%s59 + $0x28] sm:$0xf]
    %v4631 = vld [vmem:[%s59 + $0x2c] sm:$0xf]
    %v4632 = vld [vmem:[%s59 + $0x30] sm:$0xf]
    %v4633 = vld [vmem:[%s59 + $0x34] sm:$0xf]
    %v4634 = vld [vmem:[%s59 + $0x38] sm:$0xf]
    %v4635 = vld [vmem:[%s59 + $0x3c] sm:$0xf]
    %v4636 = vld [vmem:[%s61] sm:$0x1]
    %v4638 = vlaneseq
    %v4639 = vshrl.u32 %v4638, 7
    %v4640 = vsub.s32 0, %v4639
    %v4641 = vrot.slane %v4636, %v4640
    %v4659 = vunpack.c.l.b16 %v4620
    %v4660 = vunpack.c.l.b16 %v4621
    %v4661 = vunpack.c.l.b16 %v4622
    %v4662 = vunpack.c.l.b16 %v4623
    %v4663 = vunpack.c.l.b16 %v4624
    %v4664 = vunpack.c.l.b16 %v4625
    %v4665 = vunpack.c.l.b16 %v4626
    %v4666 = vunpack.c.l.b16 %v4627
    %v4667 = vunpack.c.l.b16 %v4628
    %v4668 = vunpack.c.l.b16 %v4629
    %v4669 = vunpack.c.l.b16 %v4630
    %v4670 = vunpack.c.l.b16 %v4631
    %v4671 = vunpack.c.l.b16 %v4632
    %v4672 = vunpack.c.l.b16 %v4633
    %v4673 = vunpack.c.l.b16 %v4634
    %v4674 = vunpack.c.l.b16 %v4635
    %v4675 = vpack.c.b16 %v4660, %v4659
    %v4676 = vpack.c.b16 %v4662, %v4661
    %v4677 = vpack.c.b16 %v4664, %v4663
    %v4678 = vpack.c.b16 %v4666, %v4665
    %v4679 = vpack.c.b16 %v4668, %v4667
    %v4680 = vpack.c.b16 %v4670, %v4669
    %v4681 = vpack.c.b16 %v4672, %v4671
    %v4682 = vpack.c.b16 %v4674, %v4673
    %4691 = vmatprep.subr.bf16.mxu0 0
    %4692 = vmatpush1.bf16.msra.mxu0 %v4682
    %4693 = vmatprep.subr.bf16.mxu0 0
    %4694 = vmatpush1.bf16.msra.mxu0 %v4681
    %4695 = vmatprep.subr.bf16.mxu0 0
    %4696 = vmatpush1.bf16.msra.mxu0 %v4680
    %4697 = vmatprep.subr.bf16.mxu0 0
    %4698 = vmatpush1.bf16.msra.mxu0 %v4679
    %4699 = vmatprep.subr.bf16.mxu0 0
    %4700 = vmatpush1.bf16.msra.mxu0 %v4678
    %4701 = vmatprep.subr.bf16.mxu0 0
    %4702 = vmatpush1.bf16.msra.mxu0 %v4677
    %4703 = vmatprep.subr.bf16.mxu0 0
    %4704 = vmatpush1.bf16.msra.mxu0 %v4676
    %4705 = vmatprep.subr.bf16.mxu0 0
    %4706 = vmatpush1.bf16.msra.mxu0 %v4675
    %4707 = vmatprep.subr.bf16.mxu0 0
    %4708 = vmatpush2.bf16.msra.mxu0 0
    %4709 = vmatprep.subr.bf16.mxu0 0
    %4710 = vmatpush2.bf16.msra.mxu0 0
    %4711 = vmatprep.subr.bf16.mxu0 0
    %4712 = vmatpush2.bf16.msra.mxu0 0
    %4713 = vmatprep.subr.bf16.mxu0 0
    %4714 = vmatpush2.bf16.msra.mxu0 0
    %4715 = vmatprep.subr.bf16.mxu0 0
    %4716 = vmatpush2.bf16.msra.mxu0 0
    %4717 = vmatprep.subr.bf16.mxu0 0
    %4718 = vmatpush2.bf16.msra.mxu0 0
    %4719 = vmatprep.subr.bf16.mxu0 0
    %4720 = vmatpush2.bf16.msra.mxu0 0
    %4721 = vmatprep.subr.bf16.mxu0 0
    %4722 = vmatpush2.bf16.msra.mxu0 0
    %4723 = vmatprep.mubr.bf16.mxu0 0
    %4724 = vmatmul.mubr.bf16.gmra.mxu0 %v4411
    %v4725 = vpop.f32.mrf.mxu0
    %v4726 = vadd.f32 %v4641, %v4725
    %v4727 = vpop.f32.mrf.mxu0
    %v4728 = vpop.f32.mrf.mxu0
    %v4729 = vadd.f32 %v4641, %v4728
    %v4730 = vpop.f32.mrf.mxu0
    %4731 = vdwg.mxu0
    %v4732 = vld [vmem:[%s63] sm:$0xf]
    %v4733 = vld [vmem:[%s63 + $0x4] sm:$0xf]
    %v4734 = vld [vmem:[%s63 + $0x8] sm:$0xf]
    %v4735 = vld [vmem:[%s63 + $0xc] sm:$0xf]
    %v4736 = vld [vmem:[%s63 + $0x10] sm:$0xf]
    %v4737 = vld [vmem:[%s63 + $0x14] sm:$0xf]
    %v4738 = vld [vmem:[%s63 + $0x18] sm:$0xf]
    %v4739 = vld [vmem:[%s63 + $0x1c] sm:$0xf]
    %v4740 = vld [vmem:[%s63 + $0x20] sm:$0xf]
    %v4741 = vld [vmem:[%s63 + $0x24] sm:$0xf]
    %v4742 = vld [vmem:[%s63 + $0x28] sm:$0xf]
    %v4743 = vld [vmem:[%s63 + $0x2c] sm:$0xf]
    %v4744 = vld [vmem:[%s63 + $0x30] sm:$0xf]
    %v4745 = vld [vmem:[%s63 + $0x34] sm:$0xf]
    %v4746 = vld [vmem:[%s63 + $0x38] sm:$0xf]
    %v4747 = vld [vmem:[%s63 + $0x3c] sm:$0xf]
    %v4748 = vld [vmem:[%s65] sm:$0x1]
    %4751 = vrot.lane.b32.xlu0 %v4502, 96
    %v4752 = vpop.permute.xlu0 %4751
    %4753 = vrot.lane.b32.xlu0 %v4505, 96
    %v4754 = vpop.permute.xlu0 %4753
    %4757 = vrot.lane.b32.xlu0 %v4502, 64
    %v4758 = vpop.permute.xlu0 %4757
    %4759 = vrot.lane.b32.xlu0 %v4505, 64
    %v4760 = vpop.permute.xlu0 %4759
    %4763 = vrot.lane.b32.xlu0 %v4502, 32
    %v4764 = vpop.permute.xlu0 %4763
    %4765 = vrot.lane.b32.xlu0 %v4505, 32
    %v4766 = vpop.permute.xlu0 %4765
    %v4769 = vpack.c.bf16 %v4505, %v4502
    %v4770 = vpack.c.bf16 %v4754, %v4752
    %v4771 = vpack.c.bf16 %v4760, %v4758
    %v4772 = vpack.c.bf16 %v4766, %v4764
    %4775 = vrot.lane.b32.xlu0 %v4614, 96
    %v4776 = vpop.permute.xlu0 %4775
    %4777 = vrot.lane.b32.xlu0 %v4617, 96
    %v4778 = vpop.permute.xlu0 %4777
    %4781 = vrot.lane.b32.xlu0 %v4614, 64
    %v4782 = vpop.permute.xlu0 %4781
    %4783 = vrot.lane.b32.xlu0 %v4617, 64
    %v4784 = vpop.permute.xlu0 %4783
    %4787 = vrot.lane.b32.xlu0 %v4614, 32
    %v4788 = vpop.permute.xlu0 %4787
    %4789 = vrot.lane.b32.xlu0 %v4617, 32
    %v4790 = vpop.permute.xlu0 %4789
    %v4793 = vpack.c.bf16 %v4617, %v4614
    %v4794 = vpack.c.bf16 %v4778, %v4776
    %v4795 = vpack.c.bf16 %v4784, %v4782
    %v4796 = vpack.c.bf16 %v4790, %v4788
    %4799 = vrot.lane.b32.xlu0 %v4726, 96
    %v4800 = vpop.permute.xlu0 %4799
    %4801 = vrot.lane.b32.xlu0 %v4729, 96
    %v4802 = vpop.permute.xlu0 %4801
    %4805 = vrot.lane.b32.xlu0 %v4726, 64
    %v4806 = vpop.permute.xlu0 %4805
    %4807 = vrot.lane.b32.xlu0 %v4729, 64
    %v4808 = vpop.permute.xlu0 %4807
    %4811 = vrot.lane.b32.xlu0 %v4726, 32
    %v4812 = vpop.permute.xlu0 %4811
    %4813 = vrot.lane.b32.xlu0 %v4729, 32
    %v4814 = vpop.permute.xlu0 %4813
    %v4817 = vpack.c.bf16 %v4729, %v4726
    %v4818 = vpack.c.bf16 %v4802, %v4800
    %v4819 = vpack.c.bf16 %v4808, %v4806
    %v4820 = vpack.c.bf16 %v4814, %v4812
    %v4822 = vsel %vm1284, %v4769, 0
    %v4825 = vsel %vm1284, %v4770, 0
    %v4828 = vsel %vm1284, %v4771, 0
    %v4831 = vsel %vm1284, %v4772, 0
    %v4834 = vsel %vm1284, %v4793, 0
    %v4837 = vsel %vm1284, %v4794, 0
    %v4840 = vsel %vm1284, %v4795, 0
    %v4843 = vsel %vm1284, %v4796, 0
    %4845 = vmatprep.subr.bf16.mxu0 0
    %4846 = vmatpush1.bf16.xpose.msra.mxu0 0
    %4847 = vmatprep.subr.bf16.mxu0 0
    %4848 = vmatpush1.bf16.xpose.msra.mxu0 0
    %4849 = vmatprep.subr.bf16.mxu0 0
    %4850 = vmatpush1.bf16.xpose.msra.mxu0 0
    %4851 = vmatprep.subr.bf16.mxu0 0
    %4852 = vmatpush1.bf16.xpose.msra.mxu0 0
    %4853 = vmatprep.subr.bf16.mxu0 0
    %4854 = vmatpush1.bf16.xpose.msra.mxu0 %v4843
    %4855 = vmatprep.subr.bf16.mxu0 0
    %4856 = vmatpush1.bf16.xpose.msra.mxu0 %v4840
    %4857 = vmatprep.subr.bf16.mxu0 0
    %4858 = vmatpush1.bf16.xpose.msra.mxu0 %v4837
    %4859 = vmatprep.subr.bf16.mxu0 0
    %4860 = vmatpush1.bf16.xpose.msra.mxu0 %v4834
    %4861 = vmatprep.subr.bf16.mxu0 0
    %4862 = vmatpush2.bf16.xpose.msra.mxu0 0
    %4863 = vmatprep.subr.bf16.mxu0 0
    %4864 = vmatpush2.bf16.xpose.msra.mxu0 0
    %4865 = vmatprep.subr.bf16.mxu0 0
    %4866 = vmatpush2.bf16.xpose.msra.mxu0 0
    %4867 = vmatprep.subr.bf16.mxu0 0
    %4868 = vmatpush2.bf16.xpose.msra.mxu0 0
    %4869 = vmatprep.subr.bf16.mxu0 0
    %4870 = vmatpush2.bf16.xpose.msra.mxu0 0
    %4871 = vmatprep.subr.bf16.mxu0 0
    %4872 = vmatpush2.bf16.xpose.msra.mxu0 0
    %4873 = vmatprep.subr.bf16.mxu0 0
    %4874 = vmatpush2.bf16.xpose.msra.mxu0 0
    %4875 = vmatprep.subr.bf16.mxu0 0
    %4876 = vmatpush2.bf16.xpose.msra.mxu0 0
    %4877 = vmatprep.mubr.bf16.mxu0 0
    %4878 = vmatmul.mubr.bf16.gmra.mxu0 %v4822
    %v4879 = vpop.f32.mrf.mxu0
    %v4880 = vadd.f32 0.0, %v4879
    %v4881 = vpop.f32.mrf.mxu0
    %v4882 = vpop.f32.mrf.mxu0
    %v4883 = vadd.f32 0.0, %v4882
    %v4884 = vpop.f32.mrf.mxu0
    %4885 = vmatprep.mubr.bf16.mxu0 0
    %4886 = vmatmul.mubr.bf16.gmra.mxu0 %v4825
    %v4887 = vpop.f32.mrf.mxu0
    %v4888 = vadd.f32 0.0, %v4887
    %v4889 = vpop.f32.mrf.mxu0
    %v4890 = vpop.f32.mrf.mxu0
    %v4891 = vadd.f32 0.0, %v4890
    %v4892 = vpop.f32.mrf.mxu0
    %4893 = vmatprep.mubr.bf16.mxu0 0
    %4894 = vmatmul.mubr.bf16.gmra.mxu0 %v4828
    %v4895 = vpop.f32.mrf.mxu0
    %v4896 = vadd.f32 0.0, %v4895
    %v4897 = vpop.f32.mrf.mxu0
    %v4898 = vpop.f32.mrf.mxu0
    %v4899 = vadd.f32 0.0, %v4898
    %v4900 = vpop.f32.mrf.mxu0
    %4901 = vmatprep.mubr.bf16.mxu0 0
    %4902 = vmatmul.mubr.bf16.gmra.mxu0 %v4831
    %v4903 = vpop.f32.mrf.mxu0
    %v4904 = vadd.f32 0.0, %v4903
    %v4905 = vpop.f32.mrf.mxu0
    %v4906 = vpop.f32.mrf.mxu0
    %v4907 = vadd.f32 0.0, %v4906
    %v4908 = vpop.f32.mrf.mxu0
    %4909 = vdwg.mxu0
    %v4910 = vmul.f32 %v4880, 0.17677669
    %v4911 = vmul.f32 %v4883, 0.17677669
    %v4912 = vmul.f32 %v4888, 0.17677669
    %v4913 = vmul.f32 %v4891, 0.17677669
    %v4914 = vmul.f32 %v4896, 0.17677669
    %v4915 = vmul.f32 %v4899, 0.17677669
    %v4916 = vmul.f32 %v4904, 0.17677669
    %v4917 = vmul.f32 %v4907, 0.17677669
    %v4918 = vadd.f32 %v4910, %v339
    %v4919 = vadd.f32 %v4911, %v340
    %v4920 = vadd.f32 %v4912, %v341
    %v4921 = vadd.f32 %v4913, %v342
    %v4922 = vadd.f32 %v4914, %v343
    %v4923 = vadd.f32 %v4915, %v344
    %v4924 = vadd.f32 %v4916, %v345
    %v4925 = vadd.f32 %v4917, %v346
    %v4926 = vsel %vm1390, %v4918, -inf
    %4927 = vmax.xlane.f32.xlu0 %v4926
    %v4928 = vpop.xlane.xlu0 %4927
    %v4929 = vsel %vm1390, %v4919, -inf
    %4930 = vmax.xlane.f32.xlu0 %v4929
    %v4931 = vpop.xlane.xlu0 %4930
    %v4932 = vsel %vm1390, %v4920, -inf
    %4933 = vmax.xlane.f32.xlu0 %v4932
    %v4934 = vpop.xlane.xlu0 %4933
    %v4935 = vsel %vm1390, %v4921, -inf
    %4936 = vmax.xlane.f32.xlu0 %v4935
    %v4937 = vpop.xlane.xlu0 %4936
    %v4938 = vsel %vm1390, %v4922, -inf
    %4939 = vmax.xlane.f32.xlu0 %v4938
    %v4940 = vpop.xlane.xlu0 %4939
    %v4941 = vsel %vm1390, %v4923, -inf
    %4942 = vmax.xlane.f32.xlu0 %v4941
    %v4943 = vpop.xlane.xlu0 %4942
    %v4944 = vsel %vm1390, %v4924, -inf
    %4945 = vmax.xlane.f32.xlu0 %v4944
    %v4946 = vpop.xlane.xlu0 %4945
    %v4947 = vsel %vm1390, %v4925, -inf
    %4948 = vmax.xlane.f32.xlu0 %v4947
    %v4949 = vpop.xlane.xlu0 %4948
    %v4950 = vsub.f32 %v4918, %v4928
    %v4951 = vsub.f32 %v4919, %v4931
    %v4952 = vsub.f32 %v4920, %v4934
    %v4953 = vsub.f32 %v4921, %v4937
    %v4954 = vsub.f32 %v4922, %v4940
    %v4955 = vsub.f32 %v4923, %v4943
    %v4956 = vsub.f32 %v4924, %v4946
    %v4957 = vsub.f32 %v4925, %v4949
    %v4958 = vmul.f32 %v4950, 1.442695
    %v4959 = vpow.pop %v4958
    %v4960 = vmul.f32 %v4951, 1.442695
    %v4961 = vpow.pop %v4960
    %v4962 = vmul.f32 %v4952, 1.442695
    %v4963 = vpow.pop %v4962
    %v4964 = vmul.f32 %v4953, 1.442695
    %v4965 = vpow.pop %v4964
    %v4966 = vmul.f32 %v4954, 1.442695
    %v4967 = vpow.pop %v4966
    %v4968 = vmul.f32 %v4955, 1.442695
    %v4969 = vpow.pop %v4968
    %v4970 = vmul.f32 %v4956, 1.442695
    %v4971 = vpow.pop %v4970
    %v4972 = vmul.f32 %v4957, 1.442695
    %v4973 = vpow.pop %v4972
    %v4974 = vsel %vm1390, %v4959, 0.0
    %4975 = vadd.xlane.f32.xlu0 %v4974
    %v4976 = vpop.xlane.xlu0 %4975
    %v4977 = vsel %vm1390, %v4961, 0.0
    %4978 = vadd.xlane.f32.xlu0 %v4977
    %v4979 = vpop.xlane.xlu0 %4978
    %v4980 = vsel %vm1390, %v4963, 0.0
    %4981 = vadd.xlane.f32.xlu0 %v4980
    %v4982 = vpop.xlane.xlu0 %4981
    %v4983 = vsel %vm1390, %v4965, 0.0
    %4984 = vadd.xlane.f32.xlu0 %v4983
    %v4985 = vpop.xlane.xlu0 %4984
    %v4986 = vsel %vm1390, %v4967, 0.0
    %4987 = vadd.xlane.f32.xlu0 %v4986
    %v4988 = vpop.xlane.xlu0 %4987
    %v4989 = vsel %vm1390, %v4969, 0.0
    %4990 = vadd.xlane.f32.xlu0 %v4989
    %v4991 = vpop.xlane.xlu0 %4990
    %v4992 = vsel %vm1390, %v4971, 0.0
    %4993 = vadd.xlane.f32.xlu0 %v4992
    %v4994 = vpop.xlane.xlu0 %4993
    %v4995 = vsel %vm1390, %v4973, 0.0
    %4996 = vadd.xlane.f32.xlu0 %v4995
    %v4997 = vpop.xlane.xlu0 %4996
    %v4998 = vrcp.pop %v4976
    %v4999 = vrcp.pop %v4979
    %v5000 = vrcp.pop %v4982
    %v5001 = vrcp.pop %v4985
    %v5002 = vrcp.pop %v4988
    %v5003 = vrcp.pop %v4991
    %v5004 = vrcp.pop %v4994
    %v5005 = vrcp.pop %v4997
    %v5006 = vmul.f32 %v4959, %v4998
    %v5007 = vmul.f32 %v4961, %v4999
    %v5008 = vmul.f32 %v4963, %v5000
    %v5009 = vmul.f32 %v4965, %v5001
    %v5010 = vmul.f32 %v4967, %v5002
    %v5011 = vmul.f32 %v4969, %v5003
    %v5012 = vmul.f32 %v4971, %v5004
    %v5013 = vmul.f32 %v4973, %v5005
    %v5014 = vpack.c.bf16 %v5007, %v5006
    %v5015 = vpack.c.bf16 %v5009, %v5008
    %v5016 = vpack.c.bf16 %v5011, %v5010
    %v5017 = vpack.c.bf16 %v5013, %v5012
    %v5019 = vsel %vm1390, %v5014, 0
    %v5022 = vsel %vm1390, %v5015, 0
    %v5025 = vsel %vm1390, %v5016, 0
    %v5028 = vsel %vm1390, %v5017, 0
    %5030 = vmatprep.subr.bf16.mxu0 0
    %5031 = vmatpush1.bf16.msra.mxu0 0
    %5032 = vmatprep.subr.bf16.mxu0 0
    %5033 = vmatpush1.bf16.msra.mxu0 0
    %5034 = vmatprep.subr.bf16.mxu0 0
    %5035 = vmatpush1.bf16.msra.mxu0 0
    %5036 = vmatprep.subr.bf16.mxu0 0
    %5037 = vmatpush1.bf16.msra.mxu0 0
    %5038 = vmatprep.subr.bf16.mxu0 0
    %5039 = vmatpush1.bf16.msra.mxu0 %v4820
    %5040 = vmatprep.subr.bf16.mxu0 0
    %5041 = vmatpush1.bf16.msra.mxu0 %v4819
    %5042 = vmatprep.subr.bf16.mxu0 0
    %5043 = vmatpush1.bf16.msra.mxu0 %v4818
    %5044 = vmatprep.subr.bf16.mxu0 0
    %5045 = vmatpush1.bf16.msra.mxu0 %v4817
    %5046 = vmatprep.subr.bf16.mxu0 0
    %5047 = vmatpush2.bf16.msra.mxu0 0
    %5048 = vmatprep.subr.bf16.mxu0 0
    %5049 = vmatpush2.bf16.msra.mxu0 0
    %5050 = vmatprep.subr.bf16.mxu0 0
    %5051 = vmatpush2.bf16.msra.mxu0 0
    %5052 = vmatprep.subr.bf16.mxu0 0
    %5053 = vmatpush2.bf16.msra.mxu0 0
    %5054 = vmatprep.subr.bf16.mxu0 0
    %5055 = vmatpush2.bf16.msra.mxu0 0
    %5056 = vmatprep.subr.bf16.mxu0 0
    %5057 = vmatpush2.bf16.msra.mxu0 0
    %5058 = vmatprep.subr.bf16.mxu0 0
    %5059 = vmatpush2.bf16.msra.mxu0 0
    %5060 = vmatprep.subr.bf16.mxu0 0
    %5061 = vmatpush2.bf16.msra.mxu0 0
    %5062 = vmatprep.mubr.bf16.mxu0 0
    %5063 = vmatmul.mubr.bf16.gmra.mxu0 %v5019
    %v5064 = vpop.f32.mrf.mxu0
    %v5065 = vadd.f32 0.0, %v5064
    %v5066 = vpop.f32.mrf.mxu0
    %v5067 = vpop.f32.mrf.mxu0
    %v5068 = vadd.f32 0.0, %v5067
    %v5069 = vpop.f32.mrf.mxu0
    %5070 = vmatprep.mubr.bf16.mxu0 0
    %5071 = vmatmul.mubr.bf16.gmra.mxu0 %v5022
    %v5072 = vpop.f32.mrf.mxu0
    %v5073 = vadd.f32 0.0, %v5072
    %v5074 = vpop.f32.mrf.mxu0
    %v5075 = vpop.f32.mrf.mxu0
    %v5076 = vadd.f32 0.0, %v5075
    %v5077 = vpop.f32.mrf.mxu0
    %5078 = vmatprep.mubr.bf16.mxu0 0
    %5079 = vmatmul.mubr.bf16.gmra.mxu0 %v5025
    %v5080 = vpop.f32.mrf.mxu0
    %v5081 = vadd.f32 0.0, %v5080
    %v5082 = vpop.f32.mrf.mxu0
    %v5083 = vpop.f32.mrf.mxu0
    %v5084 = vadd.f32 0.0, %v5083
    %v5085 = vpop.f32.mrf.mxu0
    %5086 = vmatprep.mubr.bf16.mxu0 0
    %5087 = vmatmul.mubr.bf16.gmra.mxu0 %v5028
    %v5088 = vpop.f32.mrf.mxu0
    %v5089 = vadd.f32 0.0, %v5088
    %v5090 = vpop.f32.mrf.mxu0
    %v5091 = vpop.f32.mrf.mxu0
    %v5092 = vadd.f32 0.0, %v5091
    %v5093 = vpop.f32.mrf.mxu0
    %5094 = vdwg.mxu0
    %5097 = vrot.lane.b32.xlu0 %v5073, 32
    %v5098 = vpop.permute.xlu0 %5097
    %5099 = vrot.lane.b32.xlu0 %v5076, 32
    %v5100 = vpop.permute.xlu0 %5099
    %5105 = vrot.lane.b32.xlu0 %v5081, 64
    %v5106 = vpop.permute.xlu0 %5105
    %5107 = vrot.lane.b32.xlu0 %v5084, 64
    %v5108 = vpop.permute.xlu0 %5107
    %5113 = vrot.lane.b32.xlu0 %v5089, 96
    %v5114 = vpop.permute.xlu0 %5113
    %5115 = vrot.lane.b32.xlu0 %v5092, 96
    %v5116 = vpop.permute.xlu0 %5115
    %v5119 = vsel %vm1284, %v5065, %v5098
    %v5120 = vsel %vm1284, %v5068, %v5100
    %v5121 = vsel %vm1390, %v5119, %v5106
    %v5122 = vsel %vm1390, %v5120, %v5108
    %v5123 = vsel %vm1588, %v5121, %v5114
    %v5124 = vsel %vm1588, %v5122, %v5116
    %v5125 = vpack.c.bf16 %v5124, %v5123
    %v5127 = vlaneseq
    %v5128 = vshrl.u32 %v5127, 7
    %v5129 = vsub.s32 0, %v5128
    %v5130 = vrot.slane %v4748, %v5129
    %v5148 = vunpack.c.l.b16 %v4732
    %v5149 = vunpack.c.l.b16 %v4733
    %v5150 = vunpack.c.l.b16 %v4734
    %v5151 = vunpack.c.l.b16 %v4735
    %v5152 = vunpack.c.l.b16 %v4736
    %v5153 = vunpack.c.l.b16 %v4737
    %v5154 = vunpack.c.l.b16 %v4738
    %v5155 = vunpack.c.l.b16 %v4739
    %v5156 = vunpack.c.l.b16 %v4740
    %v5157 = vunpack.c.l.b16 %v4741
    %v5158 = vunpack.c.l.b16 %v4742
    %v5159 = vunpack.c.l.b16 %v4743
    %v5160 = vunpack.c.l.b16 %v4744
    %v5161 = vunpack.c.l.b16 %v4745
    %v5162 = vunpack.c.l.b16 %v4746
    %v5163 = vunpack.c.l.b16 %v4747
    %v5164 = vpack.c.b16 %v5149, %v5148
    %v5165 = vpack.c.b16 %v5151, %v5150
    %v5166 = vpack.c.b16 %v5153, %v5152
    %v5167 = vpack.c.b16 %v5155, %v5154
    %v5168 = vpack.c.b16 %v5157, %v5156
    %v5169 = vpack.c.b16 %v5159, %v5158
    %v5170 = vpack.c.b16 %v5161, %v5160
    %v5171 = vpack.c.b16 %v5163, %v5162
    %5180 = vmatprep.subr.bf16.mxu0 0
    %5181 = vmatpush1.bf16.msra.mxu0 %v5171
    %5182 = vmatprep.subr.bf16.mxu0 0
    %5183 = vmatpush1.bf16.msra.mxu0 %v5170
    %5184 = vmatprep.subr.bf16.mxu0 0
    %5185 = vmatpush1.bf16.msra.mxu0 %v5169
    %5186 = vmatprep.subr.bf16.mxu0 0
    %5187 = vmatpush1.bf16.msra.mxu0 %v5168
    %5188 = vmatprep.subr.bf16.mxu0 0
    %5189 = vmatpush1.bf16.msra.mxu0 %v5167
    %5190 = vmatprep.subr.bf16.mxu0 0
    %5191 = vmatpush1.bf16.msra.mxu0 %v5166
    %5192 = vmatprep.subr.bf16.mxu0 0
    %5193 = vmatpush1.bf16.msra.mxu0 %v5165
    %5194 = vmatprep.subr.bf16.mxu0 0
    %5195 = vmatpush1.bf16.msra.mxu0 %v5164
    %5196 = vmatprep.subr.bf16.mxu0 0
    %5197 = vmatpush2.bf16.msra.mxu0 0
    %5198 = vmatprep.subr.bf16.mxu0 0
    %5199 = vmatpush2.bf16.msra.mxu0 0
    %5200 = vmatprep.subr.bf16.mxu0 0
    %5201 = vmatpush2.bf16.msra.mxu0 0
    %5202 = vmatprep.subr.bf16.mxu0 0
    %5203 = vmatpush2.bf16.msra.mxu0 0
    %5204 = vmatprep.subr.bf16.mxu0 0
    %5205 = vmatpush2.bf16.msra.mxu0 0
    %5206 = vmatprep.subr.bf16.mxu0 0
    %5207 = vmatpush2.bf16.msra.mxu0 0
    %5208 = vmatprep.subr.bf16.mxu0 0
    %5209 = vmatpush2.bf16.msra.mxu0 0
    %5210 = vmatprep.subr.bf16.mxu0 0
    %5211 = vmatpush2.bf16.msra.mxu0 0
    %5212 = vmatprep.mubr.bf16.mxu0 0
    %5213 = vmatmul.mubr.bf16.gmra.mxu0 %v5125
    %v5214 = vpop.f32.mrf.mxu0
    %v5215 = vadd.f32 %v5130, %v5214
    %v5216 = vpop.f32.mrf.mxu0
    %v5217 = vpop.f32.mrf.mxu0
    %v5218 = vadd.f32 %v5130, %v5217
    %v5219 = vpop.f32.mrf.mxu0
    %5220 = vdwg.mxu0
    %v5221 = vadd.f32 %v4393, %v5215
    %v5222 = vadd.f32 %v4394, %v5218
    %v5223 = vld [vmem:[%s67] sm:$0x1]
    %v5224 = vld [vmem:[%s69] sm:$0x1]
    %5225 = vadd.xlane.f32.xlu0 %v5221
    %v5226 = vpop.xlane.xlu0 %5225
    %5227 = vadd.xlane.f32.xlu0 %v5222
    %v5228 = vpop.xlane.xlu0 %5227
    %v5229 = vmul.f32 %v5226, %v898
    %v5230 = vmul.f32 %v5228, %v898
    %v5231 = vsub.f32 %v5221, %v5229
    %v5232 = vsub.f32 %v5222, %v5230
    %v5233 = vmul.f32 %v5231, %v5231
    %v5234 = vmul.f32 %v5232, %v5232
    %5235 = vadd.xlane.f32.xlu0 %v5233
    %v5236 = vpop.xlane.xlu0 %5235
    %5237 = vadd.xlane.f32.xlu0 %v5234
    %v5238 = vpop.xlane.xlu0 %5237
    %v5239 = vmul.f32 %v5236, %v898
    %v5240 = vmul.f32 %v5238, %v898
    %v5241 = vadd.f32 %v5239, 1e-12
    %v5242 = vadd.f32 %v5240, 1e-12
    %v5243 = vrsqrt.pop %v5241
    %v5244 = vrsqrt.pop %v5242
    %v5245 = vmul.f32 %v5231, %v5243
    %v5246 = vmul.f32 %v5232, %v5244
    %v5248 = vlaneseq
    %v5249 = vshrl.u32 %v5248, 7
    %v5250 = vsub.s32 0, %v5249
    %v5251 = vrot.slane %v5223, %v5250
    %v5253 = vmul.f32 %v5245, %v5251
    %v5254 = vmul.f32 %v5246, %v5251
    %v5256 = vlaneseq
    %v5257 = vshrl.u32 %v5256, 7
    %v5258 = vsub.s32 0, %v5257
    %v5259 = vrot.slane %v5224, %v5258
    %v5261 = vadd.f32 %v5253, %v5259
    %v5262 = vadd.f32 %v5254, %v5259
    %v5263 = vld [vmem:[%s71] sm:$0xf]
    %v5264 = vld [vmem:[%s71 + $0x4] sm:$0xf]
    %v5265 = vld [vmem:[%s71 + $0x8] sm:$0xf]
    %v5266 = vld [vmem:[%s71 + $0xc] sm:$0xf]
    %v5267 = vld [vmem:[%s71 + $0x10] sm:$0xf]
    %v5268 = vld [vmem:[%s71 + $0x14] sm:$0xf]
    %v5269 = vld [vmem:[%s71 + $0x18] sm:$0xf]
    %v5270 = vld [vmem:[%s71 + $0x1c] sm:$0xf]
    %v5271 = vld [vmem:[%s71 + $0x20] sm:$0xf]
    %v5272 = vld [vmem:[%s71 + $0x24] sm:$0xf]
    %v5273 = vld [vmem:[%s71 + $0x28] sm:$0xf]
    %v5274 = vld [vmem:[%s71 + $0x2c] sm:$0xf]
    %v5275 = vld [vmem:[%s71 + $0x30] sm:$0xf]
    %v5276 = vld [vmem:[%s71 + $0x34] sm:$0xf]
    %v5277 = vld [vmem:[%s71 + $0x38] sm:$0xf]
    %v5278 = vld [vmem:[%s71 + $0x3c] sm:$0xf]
    %v5279 = vpack.c.bf16 %v5262, %v5261
    %v5280 = vld [vmem:[%s73] sm:$0x1]
    %v5282 = vlaneseq
    %v5283 = vshrl.u32 %v5282, 7
    %v5284 = vsub.s32 0, %v5283
    %v5285 = vrot.slane %v5280, %v5284
    %v5303 = vunpack.c.l.b16 %v5263
    %v5304 = vunpack.c.l.b16 %v5264
    %v5305 = vunpack.c.l.b16 %v5265
    %v5306 = vunpack.c.l.b16 %v5266
    %v5307 = vunpack.c.l.b16 %v5267
    %v5308 = vunpack.c.l.b16 %v5268
    %v5309 = vunpack.c.l.b16 %v5269
    %v5310 = vunpack.c.l.b16 %v5270
    %v5311 = vunpack.c.l.b16 %v5271
    %v5312 = vunpack.c.l.b16 %v5272
    %v5313 = vunpack.c.l.b16 %v5273
    %v5314 = vunpack.c.l.b16 %v5274
    %v5315 = vunpack.c.l.b16 %v5275
    %v5316 = vunpack.c.l.b16 %v5276
    %v5317 = vunpack.c.l.b16 %v5277
    %v5318 = vunpack.c.l.b16 %v5278
    %v5319 = vpack.c.b16 %v5304, %v5303
    %v5320 = vpack.c.b16 %v5306, %v5305
    %v5321 = vpack.c.b16 %v5308, %v5307
    %v5322 = vpack.c.b16 %v5310, %v5309
    %v5323 = vpack.c.b16 %v5312, %v5311
    %v5324 = vpack.c.b16 %v5314, %v5313
    %v5325 = vpack.c.b16 %v5316, %v5315
    %v5326 = vpack.c.b16 %v5318, %v5317
    %5335 = vmatprep.subr.bf16.mxu0 0
    %5336 = vmatpush1.bf16.msra.mxu0 %v5326
    %5337 = vmatprep.subr.bf16.mxu0 0
    %5338 = vmatpush1.bf16.msra.mxu0 %v5325
    %5339 = vmatprep.subr.bf16.mxu0 0
    %5340 = vmatpush1.bf16.msra.mxu0 %v5324
    %5341 = vmatprep.subr.bf16.mxu0 0
    %5342 = vmatpush1.bf16.msra.mxu0 %v5323
    %5343 = vmatprep.subr.bf16.mxu0 0
    %5344 = vmatpush1.bf16.msra.mxu0 %v5322
    %5345 = vmatprep.subr.bf16.mxu0 0
    %5346 = vmatpush1.bf16.msra.mxu0 %v5321
    %5347 = vmatprep.subr.bf16.mxu0 0
    %5348 = vmatpush1.bf16.msra.mxu0 %v5320
    %5349 = vmatprep.subr.bf16.mxu0 0
    %5350 = vmatpush1.bf16.msra.mxu0 %v5319
    %5351 = vmatprep.subr.bf16.mxu0 0
    %5352 = vmatpush2.bf16.msra.mxu0 0
    %5353 = vmatprep.subr.bf16.mxu0 0
    %5354 = vmatpush2.bf16.msra.mxu0 0
    %5355 = vmatprep.subr.bf16.mxu0 0
    %5356 = vmatpush2.bf16.msra.mxu0 0
    %5357 = vmatprep.subr.bf16.mxu0 0
    %5358 = vmatpush2.bf16.msra.mxu0 0
    %5359 = vmatprep.subr.bf16.mxu0 0
    %5360 = vmatpush2.bf16.msra.mxu0 0
    %5361 = vmatprep.subr.bf16.mxu0 0
    %5362 = vmatpush2.bf16.msra.mxu0 0
    %5363 = vmatprep.subr.bf16.mxu0 0
    %5364 = vmatpush2.bf16.msra.mxu0 0
    %5365 = vmatprep.subr.bf16.mxu0 0
    %5366 = vmatpush2.bf16.msra.mxu0 0
    %5367 = vmatprep.mubr.bf16.mxu0 0
    %5368 = vmatmul.mubr.bf16.gmra.mxu0 %v5279
    %v5369 = vpop.f32.mrf.mxu0
    %v5370 = vadd.f32 %v5285, %v5369
    %v5371 = vpop.f32.mrf.mxu0
    %v5372 = vpop.f32.mrf.mxu0
    %v5373 = vadd.f32 %v5285, %v5372
    %v5374 = vpop.f32.mrf.mxu0
    %5375 = vdwg.mxu0
    %v5376 = vld [vmem:[%s75] sm:$0xf]
    %v5377 = vld [vmem:[%s75 + $0x4] sm:$0xf]
    %v5378 = vld [vmem:[%s75 + $0x8] sm:$0xf]
    %v5379 = vld [vmem:[%s75 + $0xc] sm:$0xf]
    %v5380 = vld [vmem:[%s75 + $0x10] sm:$0xf]
    %v5381 = vld [vmem:[%s75 + $0x14] sm:$0xf]
    %v5382 = vld [vmem:[%s75 + $0x18] sm:$0xf]
    %v5383 = vld [vmem:[%s75 + $0x1c] sm:$0xf]
    %v5384 = vld [vmem:[%s75 + $0x20] sm:$0xf]
    %v5385 = vld [vmem:[%s75 + $0x24] sm:$0xf]
    %v5386 = vld [vmem:[%s75 + $0x28] sm:$0xf]
    %v5387 = vld [vmem:[%s75 + $0x2c] sm:$0xf]
    %v5388 = vld [vmem:[%s75 + $0x30] sm:$0xf]
    %v5389 = vld [vmem:[%s75 + $0x34] sm:$0xf]
    %v5390 = vld [vmem:[%s75 + $0x38] sm:$0xf]
    %v5391 = vld [vmem:[%s75 + $0x3c] sm:$0xf]
    %v5392 = vpack.c.bf16 %v4070, %v4069
    %v5393 = vld [vmem:[%s77] sm:$0x1]
    %v5395 = vlaneseq
    %v5396 = vshrl.u32 %v5395, 7
    %v5397 = vsub.s32 0, %v5396
    %v5398 = vrot.slane %v5393, %v5397
    %v5416 = vunpack.c.l.b16 %v5376
    %v5417 = vunpack.c.l.b16 %v5377
    %v5418 = vunpack.c.l.b16 %v5378
    %v5419 = vunpack.c.l.b16 %v5379
    %v5420 = vunpack.c.l.b16 %v5380
    %v5421 = vunpack.c.l.b16 %v5381
    %v5422 = vunpack.c.l.b16 %v5382
    %v5423 = vunpack.c.l.b16 %v5383
    %v5424 = vunpack.c.l.b16 %v5384
    %v5425 = vunpack.c.l.b16 %v5385
    %v5426 = vunpack.c.l.b16 %v5386
    %v5427 = vunpack.c.l.b16 %v5387
    %v5428 = vunpack.c.l.b16 %v5388
    %v5429 = vunpack.c.l.b16 %v5389
    %v5430 = vunpack.c.l.b16 %v5390
    %v5431 = vunpack.c.l.b16 %v5391
    %v5432 = vpack.c.b16 %v5417, %v5416
    %v5433 = vpack.c.b16 %v5419, %v5418
    %v5434 = vpack.c.b16 %v5421, %v5420
    %v5435 = vpack.c.b16 %v5423, %v5422
    %v5436 = vpack.c.b16 %v5425, %v5424
    %v5437 = vpack.c.b16 %v5427, %v5426
    %v5438 = vpack.c.b16 %v5429, %v5428
    %v5439 = vpack.c.b16 %v5431, %v5430
    %5448 = vmatprep.subr.bf16.mxu0 0
    %5449 = vmatpush1.bf16.msra.mxu0 %v5439
    %5450 = vmatprep.subr.bf16.mxu0 0
    %5451 = vmatpush1.bf16.msra.mxu0 %v5438
    %5452 = vmatprep.subr.bf16.mxu0 0
    %5453 = vmatpush1.bf16.msra.mxu0 %v5437
    %5454 = vmatprep.subr.bf16.mxu0 0
    %5455 = vmatpush1.bf16.msra.mxu0 %v5436
    %5456 = vmatprep.subr.bf16.mxu0 0
    %5457 = vmatpush1.bf16.msra.mxu0 %v5435
    %5458 = vmatprep.subr.bf16.mxu0 0
    %5459 = vmatpush1.bf16.msra.mxu0 %v5434
    %5460 = vmatprep.subr.bf16.mxu0 0
    %5461 = vmatpush1.bf16.msra.mxu0 %v5433
    %5462 = vmatprep.subr.bf16.mxu0 0
    %5463 = vmatpush1.bf16.msra.mxu0 %v5432
    %5464 = vmatprep.subr.bf16.mxu0 0
    %5465 = vmatpush2.bf16.msra.mxu0 0
    %5466 = vmatprep.subr.bf16.mxu0 0
    %5467 = vmatpush2.bf16.msra.mxu0 0
    %5468 = vmatprep.subr.bf16.mxu0 0
    %5469 = vmatpush2.bf16.msra.mxu0 0
    %5470 = vmatprep.subr.bf16.mxu0 0
    %5471 = vmatpush2.bf16.msra.mxu0 0
    %5472 = vmatprep.subr.bf16.mxu0 0
    %5473 = vmatpush2.bf16.msra.mxu0 0
    %5474 = vmatprep.subr.bf16.mxu0 0
    %5475 = vmatpush2.bf16.msra.mxu0 0
    %5476 = vmatprep.subr.bf16.mxu0 0
    %5477 = vmatpush2.bf16.msra.mxu0 0
    %5478 = vmatprep.subr.bf16.mxu0 0
    %5479 = vmatpush2.bf16.msra.mxu0 0
    %5480 = vmatprep.mubr.bf16.mxu0 0
    %5481 = vmatmul.mubr.bf16.gmra.mxu0 %v5392
    %v5482 = vpop.f32.mrf.mxu0
    %v5483 = vadd.f32 %v5398, %v5482
    %v5484 = vpop.f32.mrf.mxu0
    %v5485 = vpop.f32.mrf.mxu0
    %v5486 = vadd.f32 %v5398, %v5485
    %v5487 = vpop.f32.mrf.mxu0
    %5488 = vdwg.mxu0
    %v5489 = vld [vmem:[%s79] sm:$0xf]
    %v5490 = vld [vmem:[%s79 + $0x4] sm:$0xf]
    %v5491 = vld [vmem:[%s79 + $0x8] sm:$0xf]
    %v5492 = vld [vmem:[%s79 + $0xc] sm:$0xf]
    %v5493 = vld [vmem:[%s79 + $0x10] sm:$0xf]
    %v5494 = vld [vmem:[%s79 + $0x14] sm:$0xf]
    %v5495 = vld [vmem:[%s79 + $0x18] sm:$0xf]
    %v5496 = vld [vmem:[%s79 + $0x1c] sm:$0xf]
    %v5497 = vld [vmem:[%s79 + $0x20] sm:$0xf]
    %v5498 = vld [vmem:[%s79 + $0x24] sm:$0xf]
    %v5499 = vld [vmem:[%s79 + $0x28] sm:$0xf]
    %v5500 = vld [vmem:[%s79 + $0x2c] sm:$0xf]
    %v5501 = vld [vmem:[%s79 + $0x30] sm:$0xf]
    %v5502 = vld [vmem:[%s79 + $0x34] sm:$0xf]
    %v5503 = vld [vmem:[%s79 + $0x38] sm:$0xf]
    %v5504 = vld [vmem:[%s79 + $0x3c] sm:$0xf]
    %v5505 = vld [vmem:[%s81] sm:$0x1]
    %v5507 = vlaneseq
    %v5508 = vshrl.u32 %v5507, 7
    %v5509 = vsub.s32 0, %v5508
    %v5510 = vrot.slane %v5505, %v5509
    %v5528 = vunpack.c.l.b16 %v5489
    %v5529 = vunpack.c.l.b16 %v5490
    %v5530 = vunpack.c.l.b16 %v5491
    %v5531 = vunpack.c.l.b16 %v5492
    %v5532 = vunpack.c.l.b16 %v5493
    %v5533 = vunpack.c.l.b16 %v5494
    %v5534 = vunpack.c.l.b16 %v5495
    %v5535 = vunpack.c.l.b16 %v5496
    %v5536 = vunpack.c.l.b16 %v5497
    %v5537 = vunpack.c.l.b16 %v5498
    %v5538 = vunpack.c.l.b16 %v5499
    %v5539 = vunpack.c.l.b16 %v5500
    %v5540 = vunpack.c.l.b16 %v5501
    %v5541 = vunpack.c.l.b16 %v5502
    %v5542 = vunpack.c.l.b16 %v5503
    %v5543 = vunpack.c.l.b16 %v5504
    %v5544 = vpack.c.b16 %v5529, %v5528
    %v5545 = vpack.c.b16 %v5531, %v5530
    %v5546 = vpack.c.b16 %v5533, %v5532
    %v5547 = vpack.c.b16 %v5535, %v5534
    %v5548 = vpack.c.b16 %v5537, %v5536
    %v5549 = vpack.c.b16 %v5539, %v5538
    %v5550 = vpack.c.b16 %v5541, %v5540
    %v5551 = vpack.c.b16 %v5543, %v5542
    %5560 = vmatprep.subr.bf16.mxu0 0
    %5561 = vmatpush1.bf16.msra.mxu0 %v5551
    %5562 = vmatprep.subr.bf16.mxu0 0
    %5563 = vmatpush1.bf16.msra.mxu0 %v5550
    %5564 = vmatprep.subr.bf16.mxu0 0
    %5565 = vmatpush1.bf16.msra.mxu0 %v5549
    %5566 = vmatprep.subr.bf16.mxu0 0
    %5567 = vmatpush1.bf16.msra.mxu0 %v5548
    %5568 = vmatprep.subr.bf16.mxu0 0
    %5569 = vmatpush1.bf16.msra.mxu0 %v5547
    %5570 = vmatprep.subr.bf16.mxu0 0
    %5571 = vmatpush1.bf16.msra.mxu0 %v5546
    %5572 = vmatprep.subr.bf16.mxu0 0
    %5573 = vmatpush1.bf16.msra.mxu0 %v5545
    %5574 = vmatprep.subr.bf16.mxu0 0
    %5575 = vmatpush1.bf16.msra.mxu0 %v5544
    %5576 = vmatprep.subr.bf16.mxu0 0
    %5577 = vmatpush2.bf16.msra.mxu0 0
    %5578 = vmatprep.subr.bf16.mxu0 0
    %5579 = vmatpush2.bf16.msra.mxu0 0
    %5580 = vmatprep.subr.bf16.mxu0 0
    %5581 = vmatpush2.bf16.msra.mxu0 0
    %5582 = vmatprep.subr.bf16.mxu0 0
    %5583 = vmatpush2.bf16.msra.mxu0 0
    %5584 = vmatprep.subr.bf16.mxu0 0
    %5585 = vmatpush2.bf16.msra.mxu0 0
    %5586 = vmatprep.subr.bf16.mxu0 0
    %5587 = vmatpush2.bf16.msra.mxu0 0
    %5588 = vmatprep.subr.bf16.mxu0 0
    %5589 = vmatpush2.bf16.msra.mxu0 0
    %5590 = vmatprep.subr.bf16.mxu0 0
    %5591 = vmatpush2.bf16.msra.mxu0 0
    %5592 = vmatprep.mubr.bf16.mxu0 0
    %5593 = vmatmul.mubr.bf16.gmra.mxu0 %v5392
    %v5594 = vpop.f32.mrf.mxu0
    %v5595 = vadd.f32 %v5510, %v5594
    %v5596 = vpop.f32.mrf.mxu0
    %v5597 = vpop.f32.mrf.mxu0
    %v5598 = vadd.f32 %v5510, %v5597
    %v5599 = vpop.f32.mrf.mxu0
    %5600 = vdwg.mxu0
    %v5601 = vld [vmem:[%s83] sm:$0xf]
    %v5602 = vld [vmem:[%s83 + $0x4] sm:$0xf]
    %v5603 = vld [vmem:[%s83 + $0x8] sm:$0xf]
    %v5604 = vld [vmem:[%s83 + $0xc] sm:$0xf]
    %v5605 = vld [vmem:[%s83 + $0x10] sm:$0xf]
    %v5606 = vld [vmem:[%s83 + $0x14] sm:$0xf]
    %v5607 = vld [vmem:[%s83 + $0x18] sm:$0xf]
    %v5608 = vld [vmem:[%s83 + $0x1c] sm:$0xf]
    %v5609 = vld [vmem:[%s83 + $0x20] sm:$0xf]
    %v5610 = vld [vmem:[%s83 + $0x24] sm:$0xf]
    %v5611 = vld [vmem:[%s83 + $0x28] sm:$0xf]
    %v5612 = vld [vmem:[%s83 + $0x2c] sm:$0xf]
    %v5613 = vld [vmem:[%s83 + $0x30] sm:$0xf]
    %v5614 = vld [vmem:[%s83 + $0x34] sm:$0xf]
    %v5615 = vld [vmem:[%s83 + $0x38] sm:$0xf]
    %v5616 = vld [vmem:[%s83 + $0x3c] sm:$0xf]
    %v5617 = vld [vmem:[%s85] sm:$0x1]
    %5620 = vrot.lane.b32.xlu0 %v5370, 96
    %v5621 = vpop.permute.xlu0 %5620
    %5622 = vrot.lane.b32.xlu0 %v5373, 96
    %v5623 = vpop.permute.xlu0 %5622
    %5626 = vrot.lane.b32.xlu0 %v5370, 64
    %v5627 = vpop.permute.xlu0 %5626
    %5628 = vrot.lane.b32.xlu0 %v5373, 64
    %v5629 = vpop.permute.xlu0 %5628
    %5632 = vrot.lane.b32.xlu0 %v5370, 32
    %v5633 = vpop.permute.xlu0 %5632
    %5634 = vrot.lane.b32.xlu0 %v5373, 32
    %v5635 = vpop.permute.xlu0 %5634
    %v5638 = vpack.c.bf16 %v5373, %v5370
    %v5639 = vpack.c.bf16 %v5623, %v5621
    %v5640 = vpack.c.bf16 %v5629, %v5627
    %v5641 = vpack.c.bf16 %v5635, %v5633
    %5644 = vrot.lane.b32.xlu0 %v5483, 96
    %v5645 = vpop.permute.xlu0 %5644
    %5646 = vrot.lane.b32.xlu0 %v5486, 96
    %v5647 = vpop.permute.xlu0 %5646
    %5650 = vrot.lane.b32.xlu0 %v5483, 64
    %v5651 = vpop.permute.xlu0 %5650
    %5652 = vrot.lane.b32.xlu0 %v5486, 64
    %v5653 = vpop.permute.xlu0 %5652
    %5656 = vrot.lane.b32.xlu0 %v5483, 32
    %v5657 = vpop.permute.xlu0 %5656
    %5658 = vrot.lane.b32.xlu0 %v5486, 32
    %v5659 = vpop.permute.xlu0 %5658
    %v5662 = vpack.c.bf16 %v5486, %v5483
    %v5663 = vpack.c.bf16 %v5647, %v5645
    %v5664 = vpack.c.bf16 %v5653, %v5651
    %v5665 = vpack.c.bf16 %v5659, %v5657
    %5668 = vrot.lane.b32.xlu0 %v5595, 96
    %v5669 = vpop.permute.xlu0 %5668
    %5670 = vrot.lane.b32.xlu0 %v5598, 96
    %v5671 = vpop.permute.xlu0 %5670
    %5674 = vrot.lane.b32.xlu0 %v5595, 64
    %v5675 = vpop.permute.xlu0 %5674
    %5676 = vrot.lane.b32.xlu0 %v5598, 64
    %v5677 = vpop.permute.xlu0 %5676
    %5680 = vrot.lane.b32.xlu0 %v5595, 32
    %v5681 = vpop.permute.xlu0 %5680
    %5682 = vrot.lane.b32.xlu0 %v5598, 32
    %v5683 = vpop.permute.xlu0 %5682
    %v5686 = vpack.c.bf16 %v5598, %v5595
    %v5687 = vpack.c.bf16 %v5671, %v5669
    %v5688 = vpack.c.bf16 %v5677, %v5675
    %v5689 = vpack.c.bf16 %v5683, %v5681
    %v5691 = vsel %vm1284, %v5638, 0
    %v5694 = vsel %vm1284, %v5639, 0
    %v5697 = vsel %vm1284, %v5640, 0
    %v5700 = vsel %vm1284, %v5641, 0
    %v5703 = vsel %vm1284, %v5662, 0
    %v5706 = vsel %vm1284, %v5663, 0
    %v5709 = vsel %vm1284, %v5664, 0
    %v5712 = vsel %vm1284, %v5665, 0
    %5714 = vmatprep.subr.bf16.mxu0 0
    %5715 = vmatpush1.bf16.xpose.msra.mxu0 0
    %5716 = vmatprep.subr.bf16.mxu0 0
    %5717 = vmatpush1.bf16.xpose.msra.mxu0 0
    %5718 = vmatprep.subr.bf16.mxu0 0
    %5719 = vmatpush1.bf16.xpose.msra.mxu0 0
    %5720 = vmatprep.subr.bf16.mxu0 0
    %5721 = vmatpush1.bf16.xpose.msra.mxu0 0
    %5722 = vmatprep.subr.bf16.mxu0 0
    %5723 = vmatpush1.bf16.xpose.msra.mxu0 %v5712
    %5724 = vmatprep.subr.bf16.mxu0 0
    %5725 = vmatpush1.bf16.xpose.msra.mxu0 %v5709
    %5726 = vmatprep.subr.bf16.mxu0 0
    %5727 = vmatpush1.bf16.xpose.msra.mxu0 %v5706
    %5728 = vmatprep.subr.bf16.mxu0 0
    %5729 = vmatpush1.bf16.xpose.msra.mxu0 %v5703
    %5730 = vmatprep.subr.bf16.mxu0 0
    %5731 = vmatpush2.bf16.xpose.msra.mxu0 0
    %5732 = vmatprep.subr.bf16.mxu0 0
    %5733 = vmatpush2.bf16.xpose.msra.mxu0 0
    %5734 = vmatprep.subr.bf16.mxu0 0
    %5735 = vmatpush2.bf16.xpose.msra.mxu0 0
    %5736 = vmatprep.subr.bf16.mxu0 0
    %5737 = vmatpush2.bf16.xpose.msra.mxu0 0
    %5738 = vmatprep.subr.bf16.mxu0 0
    %5739 = vmatpush2.bf16.xpose.msra.mxu0 0
    %5740 = vmatprep.subr.bf16.mxu0 0
    %5741 = vmatpush2.bf16.xpose.msra.mxu0 0
    %5742 = vmatprep.subr.bf16.mxu0 0
    %5743 = vmatpush2.bf16.xpose.msra.mxu0 0
    %5744 = vmatprep.subr.bf16.mxu0 0
    %5745 = vmatpush2.bf16.xpose.msra.mxu0 0
    %5746 = vmatprep.mubr.bf16.mxu0 0
    %5747 = vmatmul.mubr.bf16.gmra.mxu0 %v5691
    %v5748 = vpop.f32.mrf.mxu0
    %v5749 = vadd.f32 0.0, %v5748
    %v5750 = vpop.f32.mrf.mxu0
    %v5751 = vpop.f32.mrf.mxu0
    %v5752 = vadd.f32 0.0, %v5751
    %v5753 = vpop.f32.mrf.mxu0
    %5754 = vmatprep.mubr.bf16.mxu0 0
    %5755 = vmatmul.mubr.bf16.gmra.mxu0 %v5694
    %v5756 = vpop.f32.mrf.mxu0
    %v5757 = vadd.f32 0.0, %v5756
    %v5758 = vpop.f32.mrf.mxu0
    %v5759 = vpop.f32.mrf.mxu0
    %v5760 = vadd.f32 0.0, %v5759
    %v5761 = vpop.f32.mrf.mxu0
    %5762 = vmatprep.mubr.bf16.mxu0 0
    %5763 = vmatmul.mubr.bf16.gmra.mxu0 %v5697
    %v5764 = vpop.f32.mrf.mxu0
    %v5765 = vadd.f32 0.0, %v5764
    %v5766 = vpop.f32.mrf.mxu0
    %v5767 = vpop.f32.mrf.mxu0
    %v5768 = vadd.f32 0.0, %v5767
    %v5769 = vpop.f32.mrf.mxu0
    %5770 = vmatprep.mubr.bf16.mxu0 0
    %5771 = vmatmul.mubr.bf16.gmra.mxu0 %v5700
    %v5772 = vpop.f32.mrf.mxu0
    %v5773 = vadd.f32 0.0, %v5772
    %v5774 = vpop.f32.mrf.mxu0
    %v5775 = vpop.f32.mrf.mxu0
    %v5776 = vadd.f32 0.0, %v5775
    %v5777 = vpop.f32.mrf.mxu0
    %5778 = vdwg.mxu0
    %v5779 = vmul.f32 %v5749, 0.17677669
    %v5780 = vmul.f32 %v5752, 0.17677669
    %v5781 = vmul.f32 %v5757, 0.17677669
    %v5782 = vmul.f32 %v5760, 0.17677669
    %v5783 = vmul.f32 %v5765, 0.17677669
    %v5784 = vmul.f32 %v5768, 0.17677669
    %v5785 = vmul.f32 %v5773, 0.17677669
    %v5786 = vmul.f32 %v5776, 0.17677669
    %v5787 = vadd.f32 %v5779, %v299
    %v5788 = vadd.f32 %v5780, %v300
    %v5789 = vadd.f32 %v5781, %v301
    %v5790 = vadd.f32 %v5782, %v302
    %v5791 = vadd.f32 %v5783, %v303
    %v5792 = vadd.f32 %v5784, %v304
    %v5793 = vadd.f32 %v5785, %v305
    %v5794 = vadd.f32 %v5786, %v306
    %v5795 = vsel %vm1390, %v5787, -inf
    %5796 = vmax.xlane.f32.xlu0 %v5795
    %v5797 = vpop.xlane.xlu0 %5796
    %v5798 = vsel %vm1390, %v5788, -inf
    %5799 = vmax.xlane.f32.xlu0 %v5798
    %v5800 = vpop.xlane.xlu0 %5799
    %v5801 = vsel %vm1390, %v5789, -inf
    %5802 = vmax.xlane.f32.xlu0 %v5801
    %v5803 = vpop.xlane.xlu0 %5802
    %v5804 = vsel %vm1390, %v5790, -inf
    %5805 = vmax.xlane.f32.xlu0 %v5804
    %v5806 = vpop.xlane.xlu0 %5805
    %v5807 = vsel %vm1390, %v5791, -inf
    %5808 = vmax.xlane.f32.xlu0 %v5807
    %v5809 = vpop.xlane.xlu0 %5808
    %v5810 = vsel %vm1390, %v5792, -inf
    %5811 = vmax.xlane.f32.xlu0 %v5810
    %v5812 = vpop.xlane.xlu0 %5811
    %v5813 = vsel %vm1390, %v5793, -inf
    %5814 = vmax.xlane.f32.xlu0 %v5813
    %v5815 = vpop.xlane.xlu0 %5814
    %v5816 = vsel %vm1390, %v5794, -inf
    %5817 = vmax.xlane.f32.xlu0 %v5816
    %v5818 = vpop.xlane.xlu0 %5817
    %v5819 = vsub.f32 %v5787, %v5797
    %v5820 = vsub.f32 %v5788, %v5800
    %v5821 = vsub.f32 %v5789, %v5803
    %v5822 = vsub.f32 %v5790, %v5806
    %v5823 = vsub.f32 %v5791, %v5809
    %v5824 = vsub.f32 %v5792, %v5812
    %v5825 = vsub.f32 %v5793, %v5815
    %v5826 = vsub.f32 %v5794, %v5818
    %v5827 = vmul.f32 %v5819, 1.442695
    %v5828 = vpow.pop %v5827
    %v5829 = vmul.f32 %v5820, 1.442695
    %v5830 = vpow.pop %v5829
    %v5831 = vmul.f32 %v5821, 1.442695
    %v5832 = vpow.pop %v5831
    %v5833 = vmul.f32 %v5822, 1.442695
    %v5834 = vpow.pop %v5833
    %v5835 = vmul.f32 %v5823, 1.442695
    %v5836 = vpow.pop %v5835
    %v5837 = vmul.f32 %v5824, 1.442695
    %v5838 = vpow.pop %v5837
    %v5839 = vmul.f32 %v5825, 1.442695
    %v5840 = vpow.pop %v5839
    %v5841 = vmul.f32 %v5826, 1.442695
    %v5842 = vpow.pop %v5841
    %v5843 = vsel %vm1390, %v5828, 0.0
    %5844 = vadd.xlane.f32.xlu0 %v5843
    %v5845 = vpop.xlane.xlu0 %5844
    %v5846 = vsel %vm1390, %v5830, 0.0
    %5847 = vadd.xlane.f32.xlu0 %v5846
    %v5848 = vpop.xlane.xlu0 %5847
    %v5849 = vsel %vm1390, %v5832, 0.0
    %5850 = vadd.xlane.f32.xlu0 %v5849
    %v5851 = vpop.xlane.xlu0 %5850
    %v5852 = vsel %vm1390, %v5834, 0.0
    %5853 = vadd.xlane.f32.xlu0 %v5852
    %v5854 = vpop.xlane.xlu0 %5853
    %v5855 = vsel %vm1390, %v5836, 0.0
    %5856 = vadd.xlane.f32.xlu0 %v5855
    %v5857 = vpop.xlane.xlu0 %5856
    %v5858 = vsel %vm1390, %v5838, 0.0
    %5859 = vadd.xlane.f32.xlu0 %v5858
    %v5860 = vpop.xlane.xlu0 %5859
    %v5861 = vsel %vm1390, %v5840, 0.0
    %5862 = vadd.xlane.f32.xlu0 %v5861
    %v5863 = vpop.xlane.xlu0 %5862
    %v5864 = vsel %vm1390, %v5842, 0.0
    %5865 = vadd.xlane.f32.xlu0 %v5864
    %v5866 = vpop.xlane.xlu0 %5865
    %v5867 = vrcp.pop %v5845
    %v5868 = vrcp.pop %v5848
    %v5869 = vrcp.pop %v5851
    %v5870 = vrcp.pop %v5854
    %v5871 = vrcp.pop %v5857
    %v5872 = vrcp.pop %v5860
    %v5873 = vrcp.pop %v5863
    %v5874 = vrcp.pop %v5866
    %v5875 = vmul.f32 %v5828, %v5867
    %v5876 = vmul.f32 %v5830, %v5868
    %v5877 = vmul.f32 %v5832, %v5869
    %v5878 = vmul.f32 %v5834, %v5870
    %v5879 = vmul.f32 %v5836, %v5871
    %v5880 = vmul.f32 %v5838, %v5872
    %v5881 = vmul.f32 %v5840, %v5873
    %v5882 = vmul.f32 %v5842, %v5874
    %v5883 = vpack.c.bf16 %v5876, %v5875
    %v5884 = vpack.c.bf16 %v5878, %v5877
    %v5885 = vpack.c.bf16 %v5880, %v5879
    %v5886 = vpack.c.bf16 %v5882, %v5881
    %v5888 = vsel %vm1390, %v5883, 0
    %v5891 = vsel %vm1390, %v5884, 0
    %v5894 = vsel %vm1390, %v5885, 0
    %v5897 = vsel %vm1390, %v5886, 0
    %5899 = vmatprep.subr.bf16.mxu0 0
    %5900 = vmatpush1.bf16.msra.mxu0 0
    %5901 = vmatprep.subr.bf16.mxu0 0
    %5902 = vmatpush1.bf16.msra.mxu0 0
    %5903 = vmatprep.subr.bf16.mxu0 0
    %5904 = vmatpush1.bf16.msra.mxu0 0
    %5905 = vmatprep.subr.bf16.mxu0 0
    %5906 = vmatpush1.bf16.msra.mxu0 0
    %5907 = vmatprep.subr.bf16.mxu0 0
    %5908 = vmatpush1.bf16.msra.mxu0 %v5689
    %5909 = vmatprep.subr.bf16.mxu0 0
    %5910 = vmatpush1.bf16.msra.mxu0 %v5688
    %5911 = vmatprep.subr.bf16.mxu0 0
    %5912 = vmatpush1.bf16.msra.mxu0 %v5687
    %5913 = vmatprep.subr.bf16.mxu0 0
    %5914 = vmatpush1.bf16.msra.mxu0 %v5686
    %5915 = vmatprep.subr.bf16.mxu0 0
    %5916 = vmatpush2.bf16.msra.mxu0 0
    %5917 = vmatprep.subr.bf16.mxu0 0
    %5918 = vmatpush2.bf16.msra.mxu0 0
    %5919 = vmatprep.subr.bf16.mxu0 0
    %5920 = vmatpush2.bf16.msra.mxu0 0
    %5921 = vmatprep.subr.bf16.mxu0 0
    %5922 = vmatpush2.bf16.msra.mxu0 0
    %5923 = vmatprep.subr.bf16.mxu0 0
    %5924 = vmatpush2.bf16.msra.mxu0 0
    %5925 = vmatprep.subr.bf16.mxu0 0
    %5926 = vmatpush2.bf16.msra.mxu0 0
    %5927 = vmatprep.subr.bf16.mxu0 0
    %5928 = vmatpush2.bf16.msra.mxu0 0
    %5929 = vmatprep.subr.bf16.mxu0 0
    %5930 = vmatpush2.bf16.msra.mxu0 0
    %5931 = vmatprep.mubr.bf16.mxu0 0
    %5932 = vmatmul.mubr.bf16.gmra.mxu0 %v5888
    %v5933 = vpop.f32.mrf.mxu0
    %v5934 = vadd.f32 0.0, %v5933
    %v5935 = vpop.f32.mrf.mxu0
    %v5936 = vpop.f32.mrf.mxu0
    %v5937 = vadd.f32 0.0, %v5936
    %v5938 = vpop.f32.mrf.mxu0
    %5939 = vmatprep.mubr.bf16.mxu0 0
    %5940 = vmatmul.mubr.bf16.gmra.mxu0 %v5891
    %v5941 = vpop.f32.mrf.mxu0
    %v5942 = vadd.f32 0.0, %v5941
    %v5943 = vpop.f32.mrf.mxu0
    %v5944 = vpop.f32.mrf.mxu0
    %v5945 = vadd.f32 0.0, %v5944
    %v5946 = vpop.f32.mrf.mxu0
    %5947 = vmatprep.mubr.bf16.mxu0 0
    %5948 = vmatmul.mubr.bf16.gmra.mxu0 %v5894
    %v5949 = vpop.f32.mrf.mxu0
    %v5950 = vadd.f32 0.0, %v5949
    %v5951 = vpop.f32.mrf.mxu0
    %v5952 = vpop.f32.mrf.mxu0
    %v5953 = vadd.f32 0.0, %v5952
    %v5954 = vpop.f32.mrf.mxu0
    %5955 = vmatprep.mubr.bf16.mxu0 0
    %5956 = vmatmul.mubr.bf16.gmra.mxu0 %v5897
    %v5957 = vpop.f32.mrf.mxu0
    %v5958 = vadd.f32 0.0, %v5957
    %v5959 = vpop.f32.mrf.mxu0
    %v5960 = vpop.f32.mrf.mxu0
    %v5961 = vadd.f32 0.0, %v5960
    %v5962 = vpop.f32.mrf.mxu0
    %5963 = vdwg.mxu0
    %5966 = vrot.lane.b32.xlu0 %v5942, 32
    %v5967 = vpop.permute.xlu0 %5966
    %5968 = vrot.lane.b32.xlu0 %v5945, 32
    %v5969 = vpop.permute.xlu0 %5968
    %5974 = vrot.lane.b32.xlu0 %v5950, 64
    %v5975 = vpop.permute.xlu0 %5974
    %5976 = vrot.lane.b32.xlu0 %v5953, 64
    %v5977 = vpop.permute.xlu0 %5976
    %5982 = vrot.lane.b32.xlu0 %v5958, 96
    %v5983 = vpop.permute.xlu0 %5982
    %5984 = vrot.lane.b32.xlu0 %v5961, 96
    %v5985 = vpop.permute.xlu0 %5984
    %v5988 = vsel %vm1284, %v5934, %v5967
    %v5989 = vsel %vm1284, %v5937, %v5969
    %v5990 = vsel %vm1390, %v5988, %v5975
    %v5991 = vsel %vm1390, %v5989, %v5977
    %v5992 = vsel %vm1588, %v5990, %v5983
    %v5993 = vsel %vm1588, %v5991, %v5985
    %v5994 = vpack.c.bf16 %v5993, %v5992
    %v5996 = vlaneseq
    %v5997 = vshrl.u32 %v5996, 7
    %v5998 = vsub.s32 0, %v5997
    %v5999 = vrot.slane %v5617, %v5998
    %v6017 = vunpack.c.l.b16 %v5601
    %v6018 = vunpack.c.l.b16 %v5602
    %v6019 = vunpack.c.l.b16 %v5603
    %v6020 = vunpack.c.l.b16 %v5604
    %v6021 = vunpack.c.l.b16 %v5605
    %v6022 = vunpack.c.l.b16 %v5606
    %v6023 = vunpack.c.l.b16 %v5607
    %v6024 = vunpack.c.l.b16 %v5608
    %v6025 = vunpack.c.l.b16 %v5609
    %v6026 = vunpack.c.l.b16 %v5610
    %v6027 = vunpack.c.l.b16 %v5611
    %v6028 = vunpack.c.l.b16 %v5612
    %v6029 = vunpack.c.l.b16 %v5613
    %v6030 = vunpack.c.l.b16 %v5614
    %v6031 = vunpack.c.l.b16 %v5615
    %v6032 = vunpack.c.l.b16 %v5616
    %v6033 = vpack.c.b16 %v6018, %v6017
    %v6034 = vpack.c.b16 %v6020, %v6019
    %v6035 = vpack.c.b16 %v6022, %v6021
    %v6036 = vpack.c.b16 %v6024, %v6023
    %v6037 = vpack.c.b16 %v6026, %v6025
    %v6038 = vpack.c.b16 %v6028, %v6027
    %v6039 = vpack.c.b16 %v6030, %v6029
    %v6040 = vpack.c.b16 %v6032, %v6031
    %6049 = vmatprep.subr.bf16.mxu0 0
    %6050 = vmatpush1.bf16.msra.mxu0 %v6040
    %6051 = vmatprep.subr.bf16.mxu0 0
    %6052 = vmatpush1.bf16.msra.mxu0 %v6039
    %6053 = vmatprep.subr.bf16.mxu0 0
    %6054 = vmatpush1.bf16.msra.mxu0 %v6038
    %6055 = vmatprep.subr.bf16.mxu0 0
    %6056 = vmatpush1.bf16.msra.mxu0 %v6037
    %6057 = vmatprep.subr.bf16.mxu0 0
    %6058 = vmatpush1.bf16.msra.mxu0 %v6036
    %6059 = vmatprep.subr.bf16.mxu0 0
    %6060 = vmatpush1.bf16.msra.mxu0 %v6035
    %6061 = vmatprep.subr.bf16.mxu0 0
    %6062 = vmatpush1.bf16.msra.mxu0 %v6034
    %6063 = vmatprep.subr.bf16.mxu0 0
    %6064 = vmatpush1.bf16.msra.mxu0 %v6033
    %6065 = vmatprep.subr.bf16.mxu0 0
    %6066 = vmatpush2.bf16.msra.mxu0 0
    %6067 = vmatprep.subr.bf16.mxu0 0
    %6068 = vmatpush2.bf16.msra.mxu0 0
    %6069 = vmatprep.subr.bf16.mxu0 0
    %6070 = vmatpush2.bf16.msra.mxu0 0
    %6071 = vmatprep.subr.bf16.mxu0 0
    %6072 = vmatpush2.bf16.msra.mxu0 0
    %6073 = vmatprep.subr.bf16.mxu0 0
    %6074 = vmatpush2.bf16.msra.mxu0 0
    %6075 = vmatprep.subr.bf16.mxu0 0
    %6076 = vmatpush2.bf16.msra.mxu0 0
    %6077 = vmatprep.subr.bf16.mxu0 0
    %6078 = vmatpush2.bf16.msra.mxu0 0
    %6079 = vmatprep.subr.bf16.mxu0 0
    %6080 = vmatpush2.bf16.msra.mxu0 0
    %6081 = vmatprep.mubr.bf16.mxu0 0
    %6082 = vmatmul.mubr.bf16.gmra.mxu0 %v5994
    %v6083 = vpop.f32.mrf.mxu0
    %v6084 = vadd.f32 %v5999, %v6083
    %v6085 = vpop.f32.mrf.mxu0
    %v6086 = vpop.f32.mrf.mxu0
    %v6087 = vadd.f32 %v5999, %v6086
    %v6088 = vpop.f32.mrf.mxu0
    %6089 = vdwg.mxu0
    %v6090 = vadd.f32 %v5261, %v6084
    %v6091 = vadd.f32 %v5262, %v6087
    %v6092 = vld [vmem:[%s87] sm:$0x1]
    %v6093 = vld [vmem:[%s89] sm:$0x1]
    %6094 = vadd.xlane.f32.xlu0 %v6090
    %v6095 = vpop.xlane.xlu0 %6094
    %6096 = vadd.xlane.f32.xlu0 %v6091
    %v6097 = vpop.xlane.xlu0 %6096
    %v6098 = vmul.f32 %v6095, %v898
    %v6099 = vmul.f32 %v6097, %v898
    %v6100 = vsub.f32 %v6090, %v6098
    %v6101 = vsub.f32 %v6091, %v6099
    %v6102 = vmul.f32 %v6100, %v6100
    %v6103 = vmul.f32 %v6101, %v6101
    %6104 = vadd.xlane.f32.xlu0 %v6102
    %v6105 = vpop.xlane.xlu0 %6104
    %6106 = vadd.xlane.f32.xlu0 %v6103
    %v6107 = vpop.xlane.xlu0 %6106
    %v6108 = vmul.f32 %v6105, %v898
    %v6109 = vmul.f32 %v6107, %v898
    %v6110 = vadd.f32 %v6108, 1e-12
    %v6111 = vadd.f32 %v6109, 1e-12
    %v6112 = vrsqrt.pop %v6110
    %v6113 = vrsqrt.pop %v6111
    %v6114 = vmul.f32 %v6100, %v6112
    %v6115 = vmul.f32 %v6101, %v6113
    %v6117 = vlaneseq
    %v6118 = vshrl.u32 %v6117, 7
    %v6119 = vsub.s32 0, %v6118
    %v6120 = vrot.slane %v6092, %v6119
    %v6122 = vmul.f32 %v6114, %v6120
    %v6123 = vmul.f32 %v6115, %v6120
    %v6125 = vlaneseq
    %v6126 = vshrl.u32 %v6125, 7
    %v6127 = vsub.s32 0, %v6126
    %v6128 = vrot.slane %v6093, %v6127
    %v6130 = vadd.f32 %v6122, %v6128
    %v6131 = vadd.f32 %v6123, %v6128
    %v6132 = vld [vmem:[%s91] sm:$0xff]
    %v6133 = vld [vmem:[%s91 + $0x8] sm:$0xff]
    %v6134 = vld [vmem:[%s91 + $0x10] sm:$0xff]
    %v6135 = vld [vmem:[%s91 + $0x18] sm:$0xff]
    %v6136 = vld [vmem:[%s91 + $0x20] sm:$0xff]
    %v6137 = vld [vmem:[%s91 + $0x28] sm:$0xff]
    %v6138 = vld [vmem:[%s91 + $0x30] sm:$0xff]
    %v6139 = vld [vmem:[%s91 + $0x38] sm:$0xff]
    %v6140 = vld [vmem:[%s91 + $0x40] sm:$0xff]
    %v6141 = vld [vmem:[%s91 + $0x48] sm:$0xff]
    %v6142 = vld [vmem:[%s91 + $0x50] sm:$0xff]
    %v6143 = vld [vmem:[%s91 + $0x58] sm:$0xff]
    %v6144 = vld [vmem:[%s91 + $0x60] sm:$0xff]
    %v6145 = vld [vmem:[%s91 + $0x68] sm:$0xff]
    %v6146 = vld [vmem:[%s91 + $0x70] sm:$0xff]
    %v6147 = vld [vmem:[%s91 + $0x78] sm:$0xff]
    %v6148 = vld [vmem:[%s91 + $0x80] sm:$0xff]
    %v6149 = vld [vmem:[%s91 + $0x88] sm:$0xff]
    %v6150 = vld [vmem:[%s91 + $0x90] sm:$0xff]
    %v6151 = vld [vmem:[%s91 + $0x98] sm:$0xff]
    %v6152 = vld [vmem:[%s91 + $0xa0] sm:$0xff]
    %v6153 = vld [vmem:[%s91 + $0xa8] sm:$0xff]
    %v6154 = vld [vmem:[%s91 + $0xb0] sm:$0xff]
    %v6155 = vld [vmem:[%s91 + $0xb8] sm:$0xff]
    %v6156 = vld [vmem:[%s91 + $0xc0] sm:$0xff]
    %v6157 = vld [vmem:[%s91 + $0xc8] sm:$0xff]
    %v6158 = vld [vmem:[%s91 + $0xd0] sm:$0xff]
    %v6159 = vld [vmem:[%s91 + $0xd8] sm:$0xff]
    %v6160 = vld [vmem:[%s91 + $0xe0] sm:$0xff]
    %v6161 = vld [vmem:[%s91 + $0xe8] sm:$0xff]
    %v6162 = vld [vmem:[%s91 + $0xf0] sm:$0xff]
    %v6163 = vld [vmem:[%s91 + $0xf8] sm:$0xff]
    %v6164 = vpack.c.bf16 %v6131, %v6130
    %v6165 = vld [vmem:[%s93] sm:$0xf]
    %v6167 = vlaneseq
    %v6168 = vshrl.u32 %v6167, 7
    %v6169 = vsub.s32 0, %v6168
    %v6170 = vrot.slane %v6165, %v6169
    %v6171 = vlaneseq
    %v6172 = vshrl.u32 %v6171, 7
    %v6173 = vsub.s32 1, %v6172
    %v6174 = vrot.slane %v6165, %v6173
    %v6175 = vlaneseq
    %v6176 = vshrl.u32 %v6175, 7
    %v6177 = vsub.s32 2, %v6176
    %v6178 = vrot.slane %v6165, %v6177
    %v6179 = vlaneseq
    %v6180 = vshrl.u32 %v6179, 7
    %v6181 = vsub.s32 3, %v6180
    %v6182 = vrot.slane %v6165, %v6181
    %v6219 = vunpack.c.l.b16 %v6132
    %v6220 = vunpack.c.h.b16 %v6132
    %v6221 = vunpack.c.l.b16 %v6133
    %v6222 = vunpack.c.h.b16 %v6133
    %v6223 = vunpack.c.l.b16 %v6134
    %v6224 = vunpack.c.h.b16 %v6134
    %v6225 = vunpack.c.l.b16 %v6135
    %v6226 = vunpack.c.h.b16 %v6135
    %v6227 = vunpack.c.l.b16 %v6136
    %v6228 = vunpack.c.h.b16 %v6136
    %v6229 = vunpack.c.l.b16 %v6137
    %v6230 = vunpack.c.h.b16 %v6137
    %v6231 = vunpack.c.l.b16 %v6138
    %v6232 = vunpack.c.h.b16 %v6138
    %v6233 = vunpack.c.l.b16 %v6139
    %v6234 = vunpack.c.h.b16 %v6139
    %v6235 = vunpack.c.l.b16 %v6140
    %v6236 = vunpack.c.h.b16 %v6140
    %v6237 = vunpack.c.l.b16 %v6141
    %v6238 = vunpack.c.h.b16 %v6141
    %v6239 = vunpack.c.l.b16 %v6142
    %v6240 = vunpack.c.h.b16 %v6142
    %v6241 = vunpack.c.l.b16 %v6143
    %v6242 = vunpack.c.h.b16 %v6143
    %v6243 = vunpack.c.l.b16 %v6144
    %v6244 = vunpack.c.h.b16 %v6144
    %v6245 = vunpack.c.l.b16 %v6145
    %v6246 = vunpack.c.h.b16 %v6145
    %v6247 = vunpack.c.l.b16 %v6146
    %v6248 = vunpack.c.h.b16 %v6146
    %v6249 = vunpack.c.l.b16 %v6147
    %v6250 = vunpack.c.h.b16 %v6147
    %v6251 = vunpack.c.l.b16 %v6148
    %v6252 = vunpack.c.h.b16 %v6148
    %v6253 = vunpack.c.l.b16 %v6149
    %v6254 = vunpack.c.h.b16 %v6149
    %v6255 = vunpack.c.l.b16 %v6150
    %v6256 = vunpack.c.h.b16 %v6150
    %v6257 = vunpack.c.l.b16 %v6151
    %v6258 = vunpack.c.h.b16 %v6151
    %v6259 = vunpack.c.l.b16 %v6152
    %v6260 = vunpack.c.h.b16 %v6152
    %v6261 = vunpack.c.l.b16 %v6153
    %v6262 = vunpack.c.h.b16 %v6153
    %v6263 = vunpack.c.l.b16 %v6154
    %v6264 = vunpack.c.h.b16 %v6154
    %v6265 = vunpack.c.l.b16 %v6155
    %v6266 = vunpack.c.h.b16 %v6155
    %v6267 = vunpack.c.l.b16 %v6156
    %v6268 = vunpack.c.h.b16 %v6156
    %v6269 = vunpack.c.l.b16 %v6157
    %v6270 = vunpack.c.h.b16 %v6157
    %v6271 = vunpack.c.l.b16 %v6158
    %v6272 = vunpack.c.h.b16 %v6158
    %v6273 = vunpack.c.l.b16 %v6159
    %v6274 = vunpack.c.h.b16 %v6159
    %v6275 = vunpack.c.l.b16 %v6160
    %v6276 = vunpack.c.h.b16 %v6160
    %v6277 = vunpack.c.l.b16 %v6161
    %v6278 = vunpack.c.h.b16 %v6161
    %v6279 = vunpack.c.l.b16 %v6162
    %v6280 = vunpack.c.h.b16 %v6162
    %v6281 = vunpack.c.l.b16 %v6163
    %v6282 = vunpack.c.h.b16 %v6163
    %v6283 = vpack.c.b16 %v6223, %v6219
    %v6284 = vpack.c.b16 %v6224, %v6220
    %v6285 = vpack.c.b16 %v6225, %v6221
    %v6286 = vpack.c.b16 %v6226, %v6222
    %v6287 = vpack.c.b16 %v6231, %v6227
    %v6288 = vpack.c.b16 %v6232, %v6228
    %v6289 = vpack.c.b16 %v6233, %v6229
    %v6290 = vpack.c.b16 %v6234, %v6230
    %v6291 = vpack.c.b16 %v6239, %v6235
    %v6292 = vpack.c.b16 %v6240, %v6236
    %v6293 = vpack.c.b16 %v6241, %v6237
    %v6294 = vpack.c.b16 %v6242, %v6238
    %v6295 = vpack.c.b16 %v6247, %v6243
    %v6296 = vpack.c.b16 %v6248, %v6244
    %v6297 = vpack.c.b16 %v6249, %v6245
    %v6298 = vpack.c.b16 %v6250, %v6246
    %v6299 = vpack.c.b16 %v6255, %v6251
    %v6300 = vpack.c.b16 %v6256, %v6252
    %v6301 = vpack.c.b16 %v6257, %v6253
    %v6302 = vpack.c.b16 %v6258, %v6254
    %v6303 = vpack.c.b16 %v6263, %v6259
    %v6304 = vpack.c.b16 %v6264, %v6260
    %v6305 = vpack.c.b16 %v6265, %v6261
    %v6306 = vpack.c.b16 %v6266, %v6262
    %v6307 = vpack.c.b16 %v6271, %v6267
    %v6308 = vpack.c.b16 %v6272, %v6268
    %v6309 = vpack.c.b16 %v6273, %v6269
    %v6310 = vpack.c.b16 %v6274, %v6270
    %v6311 = vpack.c.b16 %v6279, %v6275
    %v6312 = vpack.c.b16 %v6280, %v6276
    %v6313 = vpack.c.b16 %v6281, %v6277
    %v6314 = vpack.c.b16 %v6282, %v6278
    %6347 = vmatprep.subr.bf16.mxu0 %v6312
    %6348 = vmatpush1.bf16.msra.mxu0 %v6311
    %6349 = vmatprep.subr.bf16.mxu0 %v6308
    %6350 = vmatpush1.bf16.msra.mxu0 %v6307
    %6351 = vmatprep.subr.bf16.mxu0 %v6304
    %6352 = vmatpush1.bf16.msra.mxu0 %v6303
    %6353 = vmatprep.subr.bf16.mxu0 %v6300
    %6354 = vmatpush1.bf16.msra.mxu0 %v6299
    %6355 = vmatprep.subr.bf16.mxu0 %v6296
    %6356 = vmatpush1.bf16.msra.mxu0 %v6295
    %6357 = vmatprep.subr.bf16.mxu0 %v6292
    %6358 = vmatpush1.bf16.msra.mxu0 %v6291
    %6359 = vmatprep.subr.bf16.mxu0 %v6288
    %6360 = vmatpush1.bf16.msra.mxu0 %v6287
    %6361 = vmatprep.subr.bf16.mxu0 %v6284
    %6362 = vmatpush1.bf16.msra.mxu0 %v6283
    %6363 = vmatprep.subr.bf16.mxu0 0
    %6364 = vmatpush2.bf16.msra.mxu0 0
    %6365 = vmatprep.subr.bf16.mxu0 0
    %6366 = vmatpush2.bf16.msra.mxu0 0
    %6367 = vmatprep.subr.bf16.mxu0 0
    %6368 = vmatpush2.bf16.msra.mxu0 0
    %6369 = vmatprep.subr.bf16.mxu0 0
    %6370 = vmatpush2.bf16.msra.mxu0 0
    %6371 = vmatprep.subr.bf16.mxu0 0
    %6372 = vmatpush2.bf16.msra.mxu0 0
    %6373 = vmatprep.subr.bf16.mxu0 0
    %6374 = vmatpush2.bf16.msra.mxu0 0
    %6375 = vmatprep.subr.bf16.mxu0 0
    %6376 = vmatpush2.bf16.msra.mxu0 0
    %6377 = vmatprep.subr.bf16.mxu0 0
    %6378 = vmatpush2.bf16.msra.mxu0 0
    %6379 = vmatprep.mubr.bf16.mxu0 0
    %6380 = vmatmul.mubr.bf16.gmra.mxu0 %v6164
    %v6381 = vpop.f32.mrf.mxu0
    %v6382 = vadd.f32 %v6170, %v6381
    %v6383 = vpop.f32.mrf.mxu0
    %v6384 = vadd.f32 %v6174, %v6383
    %v6385 = vpop.f32.mrf.mxu0
    %v6386 = vadd.f32 %v6170, %v6385
    %v6387 = vpop.f32.mrf.mxu0
    %v6388 = vadd.f32 %v6174, %v6387
    %6389 = vdwg.mxu0
    %6390 = vmatprep.subr.bf16.mxu0 %v6314
    %6391 = vmatpush1.bf16.msra.mxu0 %v6313
    %6392 = vmatprep.subr.bf16.mxu0 %v6310
    %6393 = vmatpush1.bf16.msra.mxu0 %v6309
    %6394 = vmatprep.subr.bf16.mxu0 %v6306
    %6395 = vmatpush1.bf16.msra.mxu0 %v6305
    %6396 = vmatprep.subr.bf16.mxu0 %v6302
    %6397 = vmatpush1.bf16.msra.mxu0 %v6301
    %6398 = vmatprep.subr.bf16.mxu0 %v6298
    %6399 = vmatpush1.bf16.msra.mxu0 %v6297
    %6400 = vmatprep.subr.bf16.mxu0 %v6294
    %6401 = vmatpush1.bf16.msra.mxu0 %v6293
    %6402 = vmatprep.subr.bf16.mxu0 %v6290
    %6403 = vmatpush1.bf16.msra.mxu0 %v6289
    %6404 = vmatprep.subr.bf16.mxu0 %v6286
    %6405 = vmatpush1.bf16.msra.mxu0 %v6285
    %6406 = vmatprep.subr.bf16.mxu0 0
    %6407 = vmatpush2.bf16.msra.mxu0 0
    %6408 = vmatprep.subr.bf16.mxu0 0
    %6409 = vmatpush2.bf16.msra.mxu0 0
    %6410 = vmatprep.subr.bf16.mxu0 0
    %6411 = vmatpush2.bf16.msra.mxu0 0
    %6412 = vmatprep.subr.bf16.mxu0 0
    %6413 = vmatpush2.bf16.msra.mxu0 0
    %6414 = vmatprep.subr.bf16.mxu0 0
    %6415 = vmatpush2.bf16.msra.mxu0 0
    %6416 = vmatprep.subr.bf16.mxu0 0
    %6417 = vmatpush2.bf16.msra.mxu0 0
    %6418 = vmatprep.subr.bf16.mxu0 0
    %6419 = vmatpush2.bf16.msra.mxu0 0
    %6420 = vmatprep.subr.bf16.mxu0 0
    %6421 = vmatpush2.bf16.msra.mxu0 0
    %6422 = vmatprep.mubr.bf16.mxu0 0
    %6423 = vmatmul.mubr.bf16.gmra.mxu0 %v6164
    %v6424 = vpop.f32.mrf.mxu0
    %v6425 = vadd.f32 %v6178, %v6424
    %v6426 = vpop.f32.mrf.mxu0
    %v6427 = vadd.f32 %v6182, %v6426
    %v6428 = vpop.f32.mrf.mxu0
    %v6429 = vadd.f32 %v6178, %v6428
    %v6430 = vpop.f32.mrf.mxu0
    %v6431 = vadd.f32 %v6182, %v6430
    %6432 = vdwg.mxu0
    %v6433 = vmul.f32 %v6382, 0.5
    %v6434 = vmul.f32 %v6384, 0.5
    %v6435 = vmul.f32 %v6425, 0.5
    %v6436 = vmul.f32 %v6427, 0.5
    %v6437 = vmul.f32 %v6386, 0.5
    %v6438 = vmul.f32 %v6388, 0.5
    %v6439 = vmul.f32 %v6429, 0.5
    %v6440 = vmul.f32 %v6431, 0.5
    %v6441 = vmul.f32 %v6382, 0.044715
    %v6442 = vmul.f32 %v6384, 0.044715
    %v6443 = vmul.f32 %v6425, 0.044715
    %v6444 = vmul.f32 %v6427, 0.044715
    %v6445 = vmul.f32 %v6386, 0.044715
    %v6446 = vmul.f32 %v6388, 0.044715
    %v6447 = vmul.f32 %v6429, 0.044715
    %v6448 = vmul.f32 %v6431, 0.044715
    %v6449 = vmul.f32 %v6441, %v6382
    %v6450 = vmul.f32 %v6442, %v6384
    %v6451 = vmul.f32 %v6443, %v6425
    %v6452 = vmul.f32 %v6444, %v6427
    %v6453 = vmul.f32 %v6445, %v6386
    %v6454 = vmul.f32 %v6446, %v6388
    %v6455 = vmul.f32 %v6447, %v6429
    %v6456 = vmul.f32 %v6448, %v6431
    %v6457 = vmul.f32 %v6449, %v6382
    %v6458 = vmul.f32 %v6450, %v6384
    %v6459 = vmul.f32 %v6451, %v6425
    %v6460 = vmul.f32 %v6452, %v6427
    %v6461 = vmul.f32 %v6453, %v6386
    %v6462 = vmul.f32 %v6454, %v6388
    %v6463 = vmul.f32 %v6455, %v6429
    %v6464 = vmul.f32 %v6456, %v6431
    %v6465 = vadd.f32 %v6382, %v6457
    %v6466 = vadd.f32 %v6384, %v6458
    %v6467 = vadd.f32 %v6425, %v6459
    %v6468 = vadd.f32 %v6427, %v6460
    %v6469 = vadd.f32 %v6386, %v6461
    %v6470 = vadd.f32 %v6388, %v6462
    %v6471 = vadd.f32 %v6429, %v6463
    %v6472 = vadd.f32 %v6431, %v6464
    %v6473 = vmul.f32 %v6465, 0.7978846
    %v6474 = vmul.f32 %v6466, 0.7978846
    %v6475 = vmul.f32 %v6467, 0.7978846
    %v6476 = vmul.f32 %v6468, 0.7978846
    %v6477 = vmul.f32 %v6469, 0.7978846
    %v6478 = vmul.f32 %v6470, 0.7978846
    %v6479 = vmul.f32 %v6471, 0.7978846
    %v6480 = vmul.f32 %v6472, 0.7978846
    %v6481 = vtanh.pop %v6473
    %v6482 = vtanh.pop %v6474
    %v6483 = vtanh.pop %v6475
    %v6484 = vtanh.pop %v6476
    %v6485 = vtanh.pop %v6477
    %v6486 = vtanh.pop %v6478
    %v6487 = vtanh.pop %v6479
    %v6488 = vtanh.pop %v6480
    %v6489 = vadd.f32 %v6481, 1.0
    %v6490 = vadd.f32 %v6482, 1.0
    %v6491 = vadd.f32 %v6483, 1.0
    %v6492 = vadd.f32 %v6484, 1.0
    %v6493 = vadd.f32 %v6485, 1.0
    %v6494 = vadd.f32 %v6486, 1.0
    %v6495 = vadd.f32 %v6487, 1.0
    %v6496 = vadd.f32 %v6488, 1.0
    %v6497 = vmul.f32 %v6433, %v6489
    %v6498 = vmul.f32 %v6434, %v6490
    %v6499 = vmul.f32 %v6435, %v6491
    %v6500 = vmul.f32 %v6436, %v6492
    %v6501 = vmul.f32 %v6437, %v6493
    %v6502 = vmul.f32 %v6438, %v6494
    %v6503 = vmul.f32 %v6439, %v6495
    %v6504 = vmul.f32 %v6440, %v6496
    %v6505 = vld [vmem:[%s95] sm:$0xf]
    %v6506 = vld [vmem:[%s95 + $0x4] sm:$0xf]
    %v6507 = vld [vmem:[%s95 + $0x8] sm:$0xf]
    %v6508 = vld [vmem:[%s95 + $0xc] sm:$0xf]
    %v6509 = vld [vmem:[%s95 + $0x10] sm:$0xf]
    %v6510 = vld [vmem:[%s95 + $0x14] sm:$0xf]
    %v6511 = vld [vmem:[%s95 + $0x18] sm:$0xf]
    %v6512 = vld [vmem:[%s95 + $0x1c] sm:$0xf]
    %v6513 = vld [vmem:[%s95 + $0x20] sm:$0xf]
    %v6514 = vld [vmem:[%s95 + $0x24] sm:$0xf]
    %v6515 = vld [vmem:[%s95 + $0x28] sm:$0xf]
    %v6516 = vld [vmem:[%s95 + $0x2c] sm:$0xf]
    %v6517 = vld [vmem:[%s95 + $0x30] sm:$0xf]
    %v6518 = vld [vmem:[%s95 + $0x34] sm:$0xf]
    %v6519 = vld [vmem:[%s95 + $0x38] sm:$0xf]
    %v6520 = vld [vmem:[%s95 + $0x3c] sm:$0xf]
    %v6521 = vld [vmem:[%s95 + $0x40] sm:$0xf]
    %v6522 = vld [vmem:[%s95 + $0x44] sm:$0xf]
    %v6523 = vld [vmem:[%s95 + $0x48] sm:$0xf]
    %v6524 = vld [vmem:[%s95 + $0x4c] sm:$0xf]
    %v6525 = vld [vmem:[%s95 + $0x50] sm:$0xf]
    %v6526 = vld [vmem:[%s95 + $0x54] sm:$0xf]
    %v6527 = vld [vmem:[%s95 + $0x58] sm:$0xf]
    %v6528 = vld [vmem:[%s95 + $0x5c] sm:$0xf]
    %v6529 = vld [vmem:[%s95 + $0x60] sm:$0xf]
    %v6530 = vld [vmem:[%s95 + $0x64] sm:$0xf]
    %v6531 = vld [vmem:[%s95 + $0x68] sm:$0xf]
    %v6532 = vld [vmem:[%s95 + $0x6c] sm:$0xf]
    %v6533 = vld [vmem:[%s95 + $0x70] sm:$0xf]
    %v6534 = vld [vmem:[%s95 + $0x74] sm:$0xf]
    %v6535 = vld [vmem:[%s95 + $0x78] sm:$0xf]
    %v6536 = vld [vmem:[%s95 + $0x7c] sm:$0xf]
    %v6537 = vld [vmem:[%s95 + $0x80] sm:$0xf]
    %v6538 = vld [vmem:[%s95 + $0x84] sm:$0xf]
    %v6539 = vld [vmem:[%s95 + $0x88] sm:$0xf]
    %v6540 = vld [vmem:[%s95 + $0x8c] sm:$0xf]
    %v6541 = vld [vmem:[%s95 + $0x90] sm:$0xf]
    %v6542 = vld [vmem:[%s95 + $0x94] sm:$0xf]
    %v6543 = vld [vmem:[%s95 + $0x98] sm:$0xf]
    %v6544 = vld [vmem:[%s95 + $0x9c] sm:$0xf]
    %v6545 = vld [vmem:[%s95 + $0xa0] sm:$0xf]
    %v6546 = vld [vmem:[%s95 + $0xa4] sm:$0xf]
    %v6547 = vld [vmem:[%s95 + $0xa8] sm:$0xf]
    %v6548 = vld [vmem:[%s95 + $0xac] sm:$0xf]
    %v6549 = vld [vmem:[%s95 + $0xb0] sm:$0xf]
    %v6550 = vld [vmem:[%s95 + $0xb4] sm:$0xf]
    %v6551 = vld [vmem:[%s95 + $0xb8] sm:$0xf]
    %v6552 = vld [vmem:[%s95 + $0xbc] sm:$0xf]
    %v6553 = vld [vmem:[%s95 + $0xc0] sm:$0xf]
    %v6554 = vld [vmem:[%s95 + $0xc4] sm:$0xf]
    %v6555 = vld [vmem:[%s95 + $0xc8] sm:$0xf]
    %v6556 = vld [vmem:[%s95 + $0xcc] sm:$0xf]
    %v6557 = vld [vmem:[%s95 + $0xd0] sm:$0xf]
    %v6558 = vld [vmem:[%s95 + $0xd4] sm:$0xf]
    %v6559 = vld [vmem:[%s95 + $0xd8] sm:$0xf]
    %v6560 = vld [vmem:[%s95 + $0xdc] sm:$0xf]
    %v6561 = vld [vmem:[%s95 + $0xe0] sm:$0xf]
    %v6562 = vld [vmem:[%s95 + $0xe4] sm:$0xf]
    %v6563 = vld [vmem:[%s95 + $0xe8] sm:$0xf]
    %v6564 = vld [vmem:[%s95 + $0xec] sm:$0xf]
    %v6565 = vld [vmem:[%s95 + $0xf0] sm:$0xf]
    %v6566 = vld [vmem:[%s95 + $0xf4] sm:$0xf]
    %v6567 = vld [vmem:[%s95 + $0xf8] sm:$0xf]
    %v6568 = vld [vmem:[%s95 + $0xfc] sm:$0xf]
    %v6569 = vpack.c.bf16 %v6501, %v6497
    %v6570 = vpack.c.bf16 %v6502, %v6498
    %v6571 = vpack.c.bf16 %v6503, %v6499
    %v6572 = vpack.c.bf16 %v6504, %v6500
    %v6637 = vunpack.c.l.b16 %v6505
    %v6638 = vunpack.c.l.b16 %v6506
    %v6639 = vunpack.c.l.b16 %v6507
    %v6640 = vunpack.c.l.b16 %v6508
    %v6641 = vunpack.c.l.b16 %v6509
    %v6642 = vunpack.c.l.b16 %v6510
    %v6643 = vunpack.c.l.b16 %v6511
    %v6644 = vunpack.c.l.b16 %v6512
    %v6645 = vunpack.c.l.b16 %v6513
    %v6646 = vunpack.c.l.b16 %v6514
    %v6647 = vunpack.c.l.b16 %v6515
    %v6648 = vunpack.c.l.b16 %v6516
    %v6649 = vunpack.c.l.b16 %v6517
    %v6650 = vunpack.c.l.b16 %v6518
    %v6651 = vunpack.c.l.b16 %v6519
    %v6652 = vunpack.c.l.b16 %v6520
    %v6653 = vunpack.c.l.b16 %v6521
    %v6654 = vunpack.c.l.b16 %v6522
    %v6655 = vunpack.c.l.b16 %v6523
    %v6656 = vunpack.c.l.b16 %v6524
    %v6657 = vunpack.c.l.b16 %v6525
    %v6658 = vunpack.c.l.b16 %v6526
    %v6659 = vunpack.c.l.b16 %v6527
    %v6660 = vunpack.c.l.b16 %v6528
    %v6661 = vunpack.c.l.b16 %v6529
    %v6662 = vunpack.c.l.b16 %v6530
    %v6663 = vunpack.c.l.b16 %v6531
    %v6664 = vunpack.c.l.b16 %v6532
    %v6665 = vunpack.c.l.b16 %v6533
    %v6666 = vunpack.c.l.b16 %v6534
    %v6667 = vunpack.c.l.b16 %v6535
    %v6668 = vunpack.c.l.b16 %v6536
    %v6669 = vunpack.c.l.b16 %v6537
    %v6670 = vunpack.c.l.b16 %v6538
    %v6671 = vunpack.c.l.b16 %v6539
    %v6672 = vunpack.c.l.b16 %v6540
    %v6673 = vunpack.c.l.b16 %v6541
    %v6674 = vunpack.c.l.b16 %v6542
    %v6675 = vunpack.c.l.b16 %v6543
    %v6676 = vunpack.c.l.b16 %v6544
    %v6677 = vunpack.c.l.b16 %v6545
    %v6678 = vunpack.c.l.b16 %v6546
    %v6679 = vunpack.c.l.b16 %v6547
    %v6680 = vunpack.c.l.b16 %v6548
    %v6681 = vunpack.c.l.b16 %v6549
    %v6682 = vunpack.c.l.b16 %v6550
    %v6683 = vunpack.c.l.b16 %v6551
    %v6684 = vunpack.c.l.b16 %v6552
    %v6685 = vunpack.c.l.b16 %v6553
    %v6686 = vunpack.c.l.b16 %v6554
    %v6687 = vunpack.c.l.b16 %v6555
    %v6688 = vunpack.c.l.b16 %v6556
    %v6689 = vunpack.c.l.b16 %v6557
    %v6690 = vunpack.c.l.b16 %v6558
    %v6691 = vunpack.c.l.b16 %v6559
    %v6692 = vunpack.c.l.b16 %v6560
    %v6693 = vunpack.c.l.b16 %v6561
    %v6694 = vunpack.c.l.b16 %v6562
    %v6695 = vunpack.c.l.b16 %v6563
    %v6696 = vunpack.c.l.b16 %v6564
    %v6697 = vunpack.c.l.b16 %v6565
    %v6698 = vunpack.c.l.b16 %v6566
    %v6699 = vunpack.c.l.b16 %v6567
    %v6700 = vunpack.c.l.b16 %v6568
    %v6701 = vpack.c.b16 %v6638, %v6637
    %v6702 = vpack.c.b16 %v6640, %v6639
    %v6703 = vpack.c.b16 %v6642, %v6641
    %v6704 = vpack.c.b16 %v6644, %v6643
    %v6705 = vpack.c.b16 %v6646, %v6645
    %v6706 = vpack.c.b16 %v6648, %v6647
    %v6707 = vpack.c.b16 %v6650, %v6649
    %v6708 = vpack.c.b16 %v6652, %v6651
    %v6709 = vpack.c.b16 %v6654, %v6653
    %v6710 = vpack.c.b16 %v6656, %v6655
    %v6711 = vpack.c.b16 %v6658, %v6657
    %v6712 = vpack.c.b16 %v6660, %v6659
    %v6713 = vpack.c.b16 %v6662, %v6661
    %v6714 = vpack.c.b16 %v6664, %v6663
    %v6715 = vpack.c.b16 %v6666, %v6665
    %v6716 = vpack.c.b16 %v6668, %v6667
    %v6717 = vpack.c.b16 %v6670, %v6669
    %v6718 = vpack.c.b16 %v6672, %v6671
    %v6719 = vpack.c.b16 %v6674, %v6673
    %v6720 = vpack.c.b16 %v6676, %v6675
    %v6721 = vpack.c.b16 %v6678, %v6677
    %v6722 = vpack.c.b16 %v6680, %v6679
    %v6723 = vpack.c.b16 %v6682, %v6681
    %v6724 = vpack.c.b16 %v6684, %v6683
    %v6725 = vpack.c.b16 %v6686, %v6685
    %v6726 = vpack.c.b16 %v6688, %v6687
    %v6727 = vpack.c.b16 %v6690, %v6689
    %v6728 = vpack.c.b16 %v6692, %v6691
    %v6729 = vpack.c.b16 %v6694, %v6693
    %v6730 = vpack.c.b16 %v6696, %v6695
    %v6731 = vpack.c.b16 %v6698, %v6697
    %v6732 = vpack.c.b16 %v6700, %v6699
    %6765 = vmatprep.subr.bf16.mxu0 0
    %6766 = vmatpush1.bf16.msra.mxu0 %v6708
    %6767 = vmatprep.subr.bf16.mxu0 0
    %6768 = vmatpush1.bf16.msra.mxu0 %v6707
    %6769 = vmatprep.subr.bf16.mxu0 0
    %6770 = vmatpush1.bf16.msra.mxu0 %v6706
    %6771 = vmatprep.subr.bf16.mxu0 0
    %6772 = vmatpush1.bf16.msra.mxu0 %v6705
    %6773 = vmatprep.subr.bf16.mxu0 0
    %6774 = vmatpush1.bf16.msra.mxu0 %v6704
    %6775 = vmatprep.subr.bf16.mxu0 0
    %6776 = vmatpush1.bf16.msra.mxu0 %v6703
    %6777 = vmatprep.subr.bf16.mxu0 0
    %6778 = vmatpush1.bf16.msra.mxu0 %v6702
    %6779 = vmatprep.subr.bf16.mxu0 0
    %6780 = vmatpush1.bf16.msra.mxu0 %v6701
    %6781 = vmatprep.subr.bf16.mxu0 0
    %6782 = vmatpush2.bf16.msra.mxu0 %v6716
    %6783 = vmatprep.subr.bf16.mxu0 0
    %6784 = vmatpush2.bf16.msra.mxu0 %v6715
    %6785 = vmatprep.subr.bf16.mxu0 0
    %6786 = vmatpush2.bf16.msra.mxu0 %v6714
    %6787 = vmatprep.subr.bf16.mxu0 0
    %6788 = vmatpush2.bf16.msra.mxu0 %v6713
    %6789 = vmatprep.subr.bf16.mxu0 0
    %6790 = vmatpush2.bf16.msra.mxu0 %v6712
    %6791 = vmatprep.subr.bf16.mxu0 0
    %6792 = vmatpush2.bf16.msra.mxu0 %v6711
    %6793 = vmatprep.subr.bf16.mxu0 0
    %6794 = vmatpush2.bf16.msra.mxu0 %v6710
    %6795 = vmatprep.subr.bf16.mxu0 0
    %6796 = vmatpush2.bf16.msra.mxu0 %v6709
    %6797 = vmatprep.mubr.bf16.mxu0 %v6570
    %6798 = vmatmul.mubr.bf16.gmra.mxu0 %v6569
    %v6799 = vpop.f32.mrf.mxu0
    %v6800 = vadd.f32 0.0, %v6799
    %v6801 = vpop.f32.mrf.mxu0
    %v6802 = vpop.f32.mrf.mxu0
    %v6803 = vadd.f32 0.0, %v6802
    %v6804 = vpop.f32.mrf.mxu0
    %6805 = vdwg.mxu0
    %6806 = vmatprep.subr.bf16.mxu0 0
    %6807 = vmatpush1.bf16.msra.mxu0 %v6724
    %6808 = vmatprep.subr.bf16.mxu0 0
    %6809 = vmatpush1.bf16.msra.mxu0 %v6723
    %6810 = vmatprep.subr.bf16.mxu0 0
    %6811 = vmatpush1.bf16.msra.mxu0 %v6722
    %6812 = vmatprep.subr.bf16.mxu0 0
    %6813 = vmatpush1.bf16.msra.mxu0 %v6721
    %6814 = vmatprep.subr.bf16.mxu0 0
    %6815 = vmatpush1.bf16.msra.mxu0 %v6720
    %6816 = vmatprep.subr.bf16.mxu0 0
    %6817 = vmatpush1.bf16.msra.mxu0 %v6719
    %6818 = vmatprep.subr.bf16.mxu0 0
    %6819 = vmatpush1.bf16.msra.mxu0 %v6718
    %6820 = vmatprep.subr.bf16.mxu0 0
    %6821 = vmatpush1.bf16.msra.mxu0 %v6717
    %6822 = vmatprep.subr.bf16.mxu0 0
    %6823 = vmatpush2.bf16.msra.mxu0 %v6732
    %6824 = vmatprep.subr.bf16.mxu0 0
    %6825 = vmatpush2.bf16.msra.mxu0 %v6731
    %6826 = vmatprep.subr.bf16.mxu0 0
    %6827 = vmatpush2.bf16.msra.mxu0 %v6730
    %6828 = vmatprep.subr.bf16.mxu0 0
    %6829 = vmatpush2.bf16.msra.mxu0 %v6729
    %6830 = vmatprep.subr.bf16.mxu0 0
    %6831 = vmatpush2.bf16.msra.mxu0 %v6728
    %6832 = vmatprep.subr.bf16.mxu0 0
    %6833 = vmatpush2.bf16.msra.mxu0 %v6727
    %6834 = vmatprep.subr.bf16.mxu0 0
    %6835 = vmatpush2.bf16.msra.mxu0 %v6726
    %6836 = vmatprep.subr.bf16.mxu0 0
    %6837 = vmatpush2.bf16.msra.mxu0 %v6725
    %6838 = vmatprep.mubr.bf16.mxu0 %v6572
    %6839 = vmatmul.mubr.bf16.gmra.mxu0 %v6571
    %v6840 = vpop.f32.mrf.mxu0
    %v6841 = vadd.f32 %v6800, %v6840
    %v6842 = vpop.f32.mrf.mxu0
    %v6843 = vpop.f32.mrf.mxu0
    %v6844 = vadd.f32 %v6803, %v6843
    %v6845 = vpop.f32.mrf.mxu0
    %6846 = vdwg.mxu0
    %v6847 = vadd.f32 %v6130, %v6841
    %v6848 = vadd.f32 %v6131, %v6844
    %v6849 = vld [vmem:[%s97] sm:$0x1]
    %v6851 = vlaneseq
    %v6852 = vshrl.u32 %v6851, 7
    %v6853 = vsub.s32 0, %v6852
    %v6854 = vrot.slane %v6849, %v6853
    %v6856 = vadd.f32 %v6847, %v6854
    %v6857 = vadd.f32 %v6848, %v6854
    %v6858 = vld [vmem:[%s99] sm:$0x1]
    %v6859 = vld [vmem:[%s101] sm:$0x1]
    %6860 = vadd.xlane.f32.xlu0 %v6856
    %v6861 = vpop.xlane.xlu0 %6860
    %6862 = vadd.xlane.f32.xlu0 %v6857
    %v6863 = vpop.xlane.xlu0 %6862
    %v6864 = vmul.f32 %v6861, %v898
    %v6865 = vmul.f32 %v6863, %v898
    %v6866 = vsub.f32 %v6856, %v6864
    %v6867 = vsub.f32 %v6857, %v6865
    %v6868 = vmul.f32 %v6866, %v6866
    %v6869 = vmul.f32 %v6867, %v6867
    %6870 = vadd.xlane.f32.xlu0 %v6868
    %v6871 = vpop.xlane.xlu0 %6870
    %6872 = vadd.xlane.f32.xlu0 %v6869
    %v6873 = vpop.xlane.xlu0 %6872
    %v6874 = vmul.f32 %v6871, %v898
    %v6875 = vmul.f32 %v6873, %v898
    %v6876 = vadd.f32 %v6874, 1e-12
    %v6877 = vadd.f32 %v6875, 1e-12
    %v6878 = vrsqrt.pop %v6876
    %v6879 = vrsqrt.pop %v6877
    %v6880 = vmul.f32 %v6866, %v6878
    %v6881 = vmul.f32 %v6867, %v6879
    %v6883 = vlaneseq
    %v6884 = vshrl.u32 %v6883, 7
    %v6885 = vsub.s32 0, %v6884
    %v6886 = vrot.slane %v6858, %v6885
    %v6888 = vmul.f32 %v6880, %v6886
    %v6889 = vmul.f32 %v6881, %v6886
    %v6891 = vlaneseq
    %v6892 = vshrl.u32 %v6891, 7
    %v6893 = vsub.s32 0, %v6892
    %v6894 = vrot.slane %v6859, %v6893
    %v6896 = vadd.f32 %v6888, %v6894
    %v6897 = vadd.f32 %v6889, %v6894
    %6898 = vst [vmem:[#allocation2] sm:$0xff] %v6896
    %6899 = vst [vmem:[#allocation2 + $0x8] sm:$0xff] %v6897
    %s6900 = scalar_lea.vmem %s51, 64
    %v6901 = vld [vmem:[%s6900] sm:$0xf]
    %v6902 = vld [vmem:[%s6900 + $0x4] sm:$0xf]
    %v6903 = vld [vmem:[%s6900 + $0x8] sm:$0xf]
    %v6904 = vld [vmem:[%s6900 + $0xc] sm:$0xf]
    %v6905 = vld [vmem:[%s6900 + $0x10] sm:$0xf]
    %v6906 = vld [vmem:[%s6900 + $0x14] sm:$0xf]
    %v6907 = vld [vmem:[%s6900 + $0x18] sm:$0xf]
    %v6908 = vld [vmem:[%s6900 + $0x1c] sm:$0xf]
    %v6909 = vld [vmem:[%s6900 + $0x20] sm:$0xf]
    %v6910 = vld [vmem:[%s6900 + $0x24] sm:$0xf]
    %v6911 = vld [vmem:[%s6900 + $0x28] sm:$0xf]
    %v6912 = vld [vmem:[%s6900 + $0x2c] sm:$0xf]
    %v6913 = vld [vmem:[%s6900 + $0x30] sm:$0xf]
    %v6914 = vld [vmem:[%s6900 + $0x34] sm:$0xf]
    %v6915 = vld [vmem:[%s6900 + $0x38] sm:$0xf]
    %v6916 = vld [vmem:[%s6900 + $0x3c] sm:$0xf]
    %v6917 = vpack.c.bf16 %v6897, %v6896
    %s6918 = scalar_lea.vmem %s53, 1
    %v6919 = vld [vmem:[%s6918] sm:$0x1]
    %v6921 = vlaneseq
    %v6922 = vshrl.u32 %v6921, 7
    %v6923 = vsub.s32 0, %v6922
    %v6924 = vrot.slane %v6919, %v6923
    %v6942 = vunpack.c.l.b16 %v6901
    %v6943 = vunpack.c.l.b16 %v6902
    %v6944 = vunpack.c.l.b16 %v6903
    %v6945 = vunpack.c.l.b16 %v6904
    %v6946 = vunpack.c.l.b16 %v6905
    %v6947 = vunpack.c.l.b16 %v6906
    %v6948 = vunpack.c.l.b16 %v6907
    %v6949 = vunpack.c.l.b16 %v6908
    %v6950 = vunpack.c.l.b16 %v6909
    %v6951 = vunpack.c.l.b16 %v6910
    %v6952 = vunpack.c.l.b16 %v6911
    %v6953 = vunpack.c.l.b16 %v6912
    %v6954 = vunpack.c.l.b16 %v6913
    %v6955 = vunpack.c.l.b16 %v6914
    %v6956 = vunpack.c.l.b16 %v6915
    %v6957 = vunpack.c.l.b16 %v6916
    %v6958 = vpack.c.b16 %v6943, %v6942
    %v6959 = vpack.c.b16 %v6945, %v6944
    %v6960 = vpack.c.b16 %v6947, %v6946
    %v6961 = vpack.c.b16 %v6949, %v6948
    %v6962 = vpack.c.b16 %v6951, %v6950
    %v6963 = vpack.c.b16 %v6953, %v6952
    %v6964 = vpack.c.b16 %v6955, %v6954
    %v6965 = vpack.c.b16 %v6957, %v6956
    %6974 = vmatprep.subr.bf16.mxu0 0
    %6975 = vmatpush1.bf16.msra.mxu0 %v6965
    %6976 = vmatprep.subr.bf16.mxu0 0
    %6977 = vmatpush1.bf16.msra.mxu0 %v6964
    %6978 = vmatprep.subr.bf16.mxu0 0
    %6979 = vmatpush1.bf16.msra.mxu0 %v6963
    %6980 = vmatprep.subr.bf16.mxu0 0
    %6981 = vmatpush1.bf16.msra.mxu0 %v6962
    %6982 = vmatprep.subr.bf16.mxu0 0
    %6983 = vmatpush1.bf16.msra.mxu0 %v6961
    %6984 = vmatprep.subr.bf16.mxu0 0
    %6985 = vmatpush1.bf16.msra.mxu0 %v6960
    %6986 = vmatprep.subr.bf16.mxu0 0
    %6987 = vmatpush1.bf16.msra.mxu0 %v6959
    %6988 = vmatprep.subr.bf16.mxu0 0
    %6989 = vmatpush1.bf16.msra.mxu0 %v6958
    %6990 = vmatprep.subr.bf16.mxu0 0
    %6991 = vmatpush2.bf16.msra.mxu0 0
    %6992 = vmatprep.subr.bf16.mxu0 0
    %6993 = vmatpush2.bf16.msra.mxu0 0
    %6994 = vmatprep.subr.bf16.mxu0 0
    %6995 = vmatpush2.bf16.msra.mxu0 0
    %6996 = vmatprep.subr.bf16.mxu0 0
    %6997 = vmatpush2.bf16.msra.mxu0 0
    %6998 = vmatprep.subr.bf16.mxu0 0
    %6999 = vmatpush2.bf16.msra.mxu0 0
    %7000 = vmatprep.subr.bf16.mxu0 0
    %7001 = vmatpush2.bf16.msra.mxu0 0
    %7002 = vmatprep.subr.bf16.mxu0 0
    %7003 = vmatpush2.bf16.msra.mxu0 0
    %7004 = vmatprep.subr.bf16.mxu0 0
    %7005 = vmatpush2.bf16.msra.mxu0 0
    %7006 = vmatprep.mubr.bf16.mxu0 0
    %7007 = vmatmul.mubr.bf16.gmra.mxu0 %v6917
    %v7008 = vpop.f32.mrf.mxu0
    %v7009 = vadd.f32 %v6924, %v7008
    %v7010 = vpop.f32.mrf.mxu0
    %v7011 = vpop.f32.mrf.mxu0
    %v7012 = vadd.f32 %v6924, %v7011
    %v7013 = vpop.f32.mrf.mxu0
    %7014 = vdwg.mxu0
    %s7015 = scalar_lea.vmem %s55, 64
    %v7016 = vld [vmem:[%s7015] sm:$0xf]
    %v7017 = vld [vmem:[%s7015 + $0x4] sm:$0xf]
    %v7018 = vld [vmem:[%s7015 + $0x8] sm:$0xf]
    %v7019 = vld [vmem:[%s7015 + $0xc] sm:$0xf]
    %v7020 = vld [vmem:[%s7015 + $0x10] sm:$0xf]
    %v7021 = vld [vmem:[%s7015 + $0x14] sm:$0xf]
    %v7022 = vld [vmem:[%s7015 + $0x18] sm:$0xf]
    %v7023 = vld [vmem:[%s7015 + $0x1c] sm:$0xf]
    %v7024 = vld [vmem:[%s7015 + $0x20] sm:$0xf]
    %v7025 = vld [vmem:[%s7015 + $0x24] sm:$0xf]
    %v7026 = vld [vmem:[%s7015 + $0x28] sm:$0xf]
    %v7027 = vld [vmem:[%s7015 + $0x2c] sm:$0xf]
    %v7028 = vld [vmem:[%s7015 + $0x30] sm:$0xf]
    %v7029 = vld [vmem:[%s7015 + $0x34] sm:$0xf]
    %v7030 = vld [vmem:[%s7015 + $0x38] sm:$0xf]
    %v7031 = vld [vmem:[%s7015 + $0x3c] sm:$0xf]
    %s7032 = scalar_lea.vmem %s57, 1
    %v7033 = vld [vmem:[%s7032] sm:$0x1]
    %v7035 = vlaneseq
    %v7036 = vshrl.u32 %v7035, 7
    %v7037 = vsub.s32 0, %v7036
    %v7038 = vrot.slane %v7033, %v7037
    %v7056 = vunpack.c.l.b16 %v7016
    %v7057 = vunpack.c.l.b16 %v7017
    %v7058 = vunpack.c.l.b16 %v7018
    %v7059 = vunpack.c.l.b16 %v7019
    %v7060 = vunpack.c.l.b16 %v7020
    %v7061 = vunpack.c.l.b16 %v7021
    %v7062 = vunpack.c.l.b16 %v7022
    %v7063 = vunpack.c.l.b16 %v7023
    %v7064 = vunpack.c.l.b16 %v7024
    %v7065 = vunpack.c.l.b16 %v7025
    %v7066 = vunpack.c.l.b16 %v7026
    %v7067 = vunpack.c.l.b16 %v7027
    %v7068 = vunpack.c.l.b16 %v7028
    %v7069 = vunpack.c.l.b16 %v7029
    %v7070 = vunpack.c.l.b16 %v7030
    %v7071 = vunpack.c.l.b16 %v7031
    %v7072 = vpack.c.b16 %v7057, %v7056
    %v7073 = vpack.c.b16 %v7059, %v7058
    %v7074 = vpack.c.b16 %v7061, %v7060
    %v7075 = vpack.c.b16 %v7063, %v7062
    %v7076 = vpack.c.b16 %v7065, %v7064
    %v7077 = vpack.c.b16 %v7067, %v7066
    %v7078 = vpack.c.b16 %v7069, %v7068
    %v7079 = vpack.c.b16 %v7071, %v7070
    %7088 = vmatprep.subr.bf16.mxu0 0
    %7089 = vmatpush1.bf16.msra.mxu0 %v7079
    %7090 = vmatprep.subr.bf16.mxu0 0
    %7091 = vmatpush1.bf16.msra.mxu0 %v7078
    %7092 = vmatprep.subr.bf16.mxu0 0
    %7093 = vmatpush1.bf16.msra.mxu0 %v7077
    %7094 = vmatprep.subr.bf16.mxu0 0
    %7095 = vmatpush1.bf16.msra.mxu0 %v7076
    %7096 = vmatprep.subr.bf16.mxu0 0
    %7097 = vmatpush1.bf16.msra.mxu0 %v7075
    %7098 = vmatprep.subr.bf16.mxu0 0
    %7099 = vmatpush1.bf16.msra.mxu0 %v7074
    %7100 = vmatprep.subr.bf16.mxu0 0
    %7101 = vmatpush1.bf16.msra.mxu0 %v7073
    %7102 = vmatprep.subr.bf16.mxu0 0
    %7103 = vmatpush1.bf16.msra.mxu0 %v7072
    %7104 = vmatprep.subr.bf16.mxu0 0
    %7105 = vmatpush2.bf16.msra.mxu0 0
    %7106 = vmatprep.subr.bf16.mxu0 0
    %7107 = vmatpush2.bf16.msra.mxu0 0
    %7108 = vmatprep.subr.bf16.mxu0 0
    %7109 = vmatpush2.bf16.msra.mxu0 0
    %7110 = vmatprep.subr.bf16.mxu0 0
    %7111 = vmatpush2.bf16.msra.mxu0 0
    %7112 = vmatprep.subr.bf16.mxu0 0
    %7113 = vmatpush2.bf16.msra.mxu0 0
    %7114 = vmatprep.subr.bf16.mxu0 0
    %7115 = vmatpush2.bf16.msra.mxu0 0
    %7116 = vmatprep.subr.bf16.mxu0 0
    %7117 = vmatpush2.bf16.msra.mxu0 0
    %7118 = vmatprep.subr.bf16.mxu0 0
    %7119 = vmatpush2.bf16.msra.mxu0 0
    %7120 = vmatprep.mubr.bf16.mxu0 0
    %7121 = vmatmul.mubr.bf16.gmra.mxu0 %v6917
    %v7122 = vpop.f32.mrf.mxu0
    %v7123 = vadd.f32 %v7038, %v7122
    %v7124 = vpop.f32.mrf.mxu0
    %v7125 = vpop.f32.mrf.mxu0
    %v7126 = vadd.f32 %v7038, %v7125
    %v7127 = vpop.f32.mrf.mxu0
    %7128 = vdwg.mxu0
    %s7129 = scalar_lea.vmem %s59, 64
    %v7130 = vld [vmem:[%s7129] sm:$0xf]
    %v7131 = vld [vmem:[%s7129 + $0x4] sm:$0xf]
    %v7132 = vld [vmem:[%s7129 + $0x8] sm:$0xf]
    %v7133 = vld [vmem:[%s7129 + $0xc] sm:$0xf]
    %v7134 = vld [vmem:[%s7129 + $0x10] sm:$0xf]
    %v7135 = vld [vmem:[%s7129 + $0x14] sm:$0xf]
    %v7136 = vld [vmem:[%s7129 + $0x18] sm:$0xf]
    %v7137 = vld [vmem:[%s7129 + $0x1c] sm:$0xf]
    %v7138 = vld [vmem:[%s7129 + $0x20] sm:$0xf]
    %v7139 = vld [vmem:[%s7129 + $0x24] sm:$0xf]
    %v7140 = vld [vmem:[%s7129 + $0x28] sm:$0xf]
    %v7141 = vld [vmem:[%s7129 + $0x2c] sm:$0xf]
    %v7142 = vld [vmem:[%s7129 + $0x30] sm:$0xf]
    %v7143 = vld [vmem:[%s7129 + $0x34] sm:$0xf]
    %v7144 = vld [vmem:[%s7129 + $0x38] sm:$0xf]
    %v7145 = vld [vmem:[%s7129 + $0x3c] sm:$0xf]
    %s7146 = scalar_lea.vmem %s61, 1
    %v7147 = vld [vmem:[%s7146] sm:$0x1]
    %v7149 = vlaneseq
    %v7150 = vshrl.u32 %v7149, 7
    %v7151 = vsub.s32 0, %v7150
    %v7152 = vrot.slane %v7147, %v7151
    %v7170 = vunpack.c.l.b16 %v7130
    %v7171 = vunpack.c.l.b16 %v7131
    %v7172 = vunpack.c.l.b16 %v7132
    %v7173 = vunpack.c.l.b16 %v7133
    %v7174 = vunpack.c.l.b16 %v7134
    %v7175 = vunpack.c.l.b16 %v7135
    %v7176 = vunpack.c.l.b16 %v7136
    %v7177 = vunpack.c.l.b16 %v7137
    %v7178 = vunpack.c.l.b16 %v7138
    %v7179 = vunpack.c.l.b16 %v7139
    %v7180 = vunpack.c.l.b16 %v7140
    %v7181 = vunpack.c.l.b16 %v7141
    %v7182 = vunpack.c.l.b16 %v7142
    %v7183 = vunpack.c.l.b16 %v7143
    %v7184 = vunpack.c.l.b16 %v7144
    %v7185 = vunpack.c.l.b16 %v7145
    %v7186 = vpack.c.b16 %v7171, %v7170
    %v7187 = vpack.c.b16 %v7173, %v7172
    %v7188 = vpack.c.b16 %v7175, %v7174
    %v7189 = vpack.c.b16 %v7177, %v7176
    %v7190 = vpack.c.b16 %v7179, %v7178
    %v7191 = vpack.c.b16 %v7181, %v7180
    %v7192 = vpack.c.b16 %v7183, %v7182
    %v7193 = vpack.c.b16 %v7185, %v7184
    %7202 = vmatprep.subr.bf16.mxu0 0
    %7203 = vmatpush1.bf16.msra.mxu0 %v7193
    %7204 = vmatprep.subr.bf16.mxu0 0
    %7205 = vmatpush1.bf16.msra.mxu0 %v7192
    %7206 = vmatprep.subr.bf16.mxu0 0
    %7207 = vmatpush1.bf16.msra.mxu0 %v7191
    %7208 = vmatprep.subr.bf16.mxu0 0
    %7209 = vmatpush1.bf16.msra.mxu0 %v7190
    %7210 = vmatprep.subr.bf16.mxu0 0
    %7211 = vmatpush1.bf16.msra.mxu0 %v7189
    %7212 = vmatprep.subr.bf16.mxu0 0
    %7213 = vmatpush1.bf16.msra.mxu0 %v7188
    %7214 = vmatprep.subr.bf16.mxu0 0
    %7215 = vmatpush1.bf16.msra.mxu0 %v7187
    %7216 = vmatprep.subr.bf16.mxu0 0
    %7217 = vmatpush1.bf16.msra.mxu0 %v7186
    %7218 = vmatprep.subr.bf16.mxu0 0
    %7219 = vmatpush2.bf16.msra.mxu0 0
    %7220 = vmatprep.subr.bf16.mxu0 0
    %7221 = vmatpush2.bf16.msra.mxu0 0
    %7222 = vmatprep.subr.bf16.mxu0 0
    %7223 = vmatpush2.bf16.msra.mxu0 0
    %7224 = vmatprep.subr.bf16.mxu0 0
    %7225 = vmatpush2.bf16.msra.mxu0 0
    %7226 = vmatprep.subr.bf16.mxu0 0
    %7227 = vmatpush2.bf16.msra.mxu0 0
    %7228 = vmatprep.subr.bf16.mxu0 0
    %7229 = vmatpush2.bf16.msra.mxu0 0
    %7230 = vmatprep.subr.bf16.mxu0 0
    %7231 = vmatpush2.bf16.msra.mxu0 0
    %7232 = vmatprep.subr.bf16.mxu0 0
    %7233 = vmatpush2.bf16.msra.mxu0 0
    %7234 = vmatprep.mubr.bf16.mxu0 0
    %7235 = vmatmul.mubr.bf16.gmra.mxu0 %v6917
    %v7236 = vpop.f32.mrf.mxu0
    %v7237 = vadd.f32 %v7152, %v7236
    %v7238 = vpop.f32.mrf.mxu0
    %v7239 = vpop.f32.mrf.mxu0
    %v7240 = vadd.f32 %v7152, %v7239
    %v7241 = vpop.f32.mrf.mxu0
    %7242 = vdwg.mxu0
    %s7243 = scalar_lea.vmem %s63, 64
    %v7244 = vld [vmem:[%s7243] sm:$0xf]
    %v7245 = vld [vmem:[%s7243 + $0x4] sm:$0xf]
    %v7246 = vld [vmem:[%s7243 + $0x8] sm:$0xf]
    %v7247 = vld [vmem:[%s7243 + $0xc] sm:$0xf]
    %v7248 = vld [vmem:[%s7243 + $0x10] sm:$0xf]
    %v7249 = vld [vmem:[%s7243 + $0x14] sm:$0xf]
    %v7250 = vld [vmem:[%s7243 + $0x18] sm:$0xf]
    %v7251 = vld [vmem:[%s7243 + $0x1c] sm:$0xf]
    %v7252 = vld [vmem:[%s7243 + $0x20] sm:$0xf]
    %v7253 = vld [vmem:[%s7243 + $0x24] sm:$0xf]
    %v7254 = vld [vmem:[%s7243 + $0x28] sm:$0xf]
    %v7255 = vld [vmem:[%s7243 + $0x2c] sm:$0xf]
    %v7256 = vld [vmem:[%s7243 + $0x30] sm:$0xf]
    %v7257 = vld [vmem:[%s7243 + $0x34] sm:$0xf]
    %v7258 = vld [vmem:[%s7243 + $0x38] sm:$0xf]
    %v7259 = vld [vmem:[%s7243 + $0x3c] sm:$0xf]
    %s7260 = scalar_lea.vmem %s65, 1
    %v7261 = vld [vmem:[%s7260] sm:$0x1]
    %7264 = vrot.lane.b32.xlu0 %v7009, 96
    %v7265 = vpop.permute.xlu0 %7264
    %7266 = vrot.lane.b32.xlu0 %v7012, 96
    %v7267 = vpop.permute.xlu0 %7266
    %7270 = vrot.lane.b32.xlu0 %v7009, 64
    %v7271 = vpop.permute.xlu0 %7270
    %7272 = vrot.lane.b32.xlu0 %v7012, 64
    %v7273 = vpop.permute.xlu0 %7272
    %7276 = vrot.lane.b32.xlu0 %v7009, 32
    %v7277 = vpop.permute.xlu0 %7276
    %7278 = vrot.lane.b32.xlu0 %v7012, 32
    %v7279 = vpop.permute.xlu0 %7278
    %v7282 = vpack.c.bf16 %v7012, %v7009
    %v7283 = vpack.c.bf16 %v7267, %v7265
    %v7284 = vpack.c.bf16 %v7273, %v7271
    %v7285 = vpack.c.bf16 %v7279, %v7277
    %7288 = vrot.lane.b32.xlu0 %v7123, 96
    %v7289 = vpop.permute.xlu0 %7288
    %7290 = vrot.lane.b32.xlu0 %v7126, 96
    %v7291 = vpop.permute.xlu0 %7290
    %7294 = vrot.lane.b32.xlu0 %v7123, 64
    %v7295 = vpop.permute.xlu0 %7294
    %7296 = vrot.lane.b32.xlu0 %v7126, 64
    %v7297 = vpop.permute.xlu0 %7296
    %7300 = vrot.lane.b32.xlu0 %v7123, 32
    %v7301 = vpop.permute.xlu0 %7300
    %7302 = vrot.lane.b32.xlu0 %v7126, 32
    %v7303 = vpop.permute.xlu0 %7302
    %v7306 = vpack.c.bf16 %v7126, %v7123
    %v7307 = vpack.c.bf16 %v7291, %v7289
    %v7308 = vpack.c.bf16 %v7297, %v7295
    %v7309 = vpack.c.bf16 %v7303, %v7301
    %7312 = vrot.lane.b32.xlu0 %v7237, 96
    %v7313 = vpop.permute.xlu0 %7312
    %7314 = vrot.lane.b32.xlu0 %v7240, 96
    %v7315 = vpop.permute.xlu0 %7314
    %7318 = vrot.lane.b32.xlu0 %v7237, 64
    %v7319 = vpop.permute.xlu0 %7318
    %7320 = vrot.lane.b32.xlu0 %v7240, 64
    %v7321 = vpop.permute.xlu0 %7320
    %7324 = vrot.lane.b32.xlu0 %v7237, 32
    %v7325 = vpop.permute.xlu0 %7324
    %7326 = vrot.lane.b32.xlu0 %v7240, 32
    %v7327 = vpop.permute.xlu0 %7326
    %v7330 = vpack.c.bf16 %v7240, %v7237
    %v7331 = vpack.c.bf16 %v7315, %v7313
    %v7332 = vpack.c.bf16 %v7321, %v7319
    %v7333 = vpack.c.bf16 %v7327, %v7325
    %v7335 = vsel %vm1284, %v7282, 0
    %v7338 = vsel %vm1284, %v7283, 0
    %v7341 = vsel %vm1284, %v7284, 0
    %v7344 = vsel %vm1284, %v7285, 0
    %v7347 = vsel %vm1284, %v7306, 0
    %v7350 = vsel %vm1284, %v7307, 0
    %v7353 = vsel %vm1284, %v7308, 0
    %v7356 = vsel %vm1284, %v7309, 0
    %7358 = vmatprep.subr.bf16.mxu0 0
    %7359 = vmatpush1.bf16.xpose.msra.mxu0 0
    %7360 = vmatprep.subr.bf16.mxu0 0
    %7361 = vmatpush1.bf16.xpose.msra.mxu0 0
    %7362 = vmatprep.subr.bf16.mxu0 0
    %7363 = vmatpush1.bf16.xpose.msra.mxu0 0
    %7364 = vmatprep.subr.bf16.mxu0 0
    %7365 = vmatpush1.bf16.xpose.msra.mxu0 0
    %7366 = vmatprep.subr.bf16.mxu0 0
    %7367 = vmatpush1.bf16.xpose.msra.mxu0 %v7356
    %7368 = vmatprep.subr.bf16.mxu0 0
    %7369 = vmatpush1.bf16.xpose.msra.mxu0 %v7353
    %7370 = vmatprep.subr.bf16.mxu0 0
    %7371 = vmatpush1.bf16.xpose.msra.mxu0 %v7350
    %7372 = vmatprep.subr.bf16.mxu0 0
    %7373 = vmatpush1.bf16.xpose.msra.mxu0 %v7347
    %7374 = vmatprep.subr.bf16.mxu0 0
    %7375 = vmatpush2.bf16.xpose.msra.mxu0 0
    %7376 = vmatprep.subr.bf16.mxu0 0
    %7377 = vmatpush2.bf16.xpose.msra.mxu0 0
    %7378 = vmatprep.subr.bf16.mxu0 0
    %7379 = vmatpush2.bf16.xpose.msra.mxu0 0
    %7380 = vmatprep.subr.bf16.mxu0 0
    %7381 = vmatpush2.bf16.xpose.msra.mxu0 0
    %7382 = vmatprep.subr.bf16.mxu0 0
    %7383 = vmatpush2.bf16.xpose.msra.mxu0 0
    %7384 = vmatprep.subr.bf16.mxu0 0
    %7385 = vmatpush2.bf16.xpose.msra.mxu0 0
    %7386 = vmatprep.subr.bf16.mxu0 0
    %7387 = vmatpush2.bf16.xpose.msra.mxu0 0
    %7388 = vmatprep.subr.bf16.mxu0 0
    %7389 = vmatpush2.bf16.xpose.msra.mxu0 0
    %7390 = vmatprep.mubr.bf16.mxu0 0
    %7391 = vmatmul.mubr.bf16.gmra.mxu0 %v7335
    %v7392 = vpop.f32.mrf.mxu0
    %v7393 = vadd.f32 0.0, %v7392
    %v7394 = vpop.f32.mrf.mxu0
    %v7395 = vpop.f32.mrf.mxu0
    %v7396 = vadd.f32 0.0, %v7395
    %v7397 = vpop.f32.mrf.mxu0
    %7398 = vmatprep.mubr.bf16.mxu0 0
    %7399 = vmatmul.mubr.bf16.gmra.mxu0 %v7338
    %v7400 = vpop.f32.mrf.mxu0
    %v7401 = vadd.f32 0.0, %v7400
    %v7402 = vpop.f32.mrf.mxu0
    %v7403 = vpop.f32.mrf.mxu0
    %v7404 = vadd.f32 0.0, %v7403
    %v7405 = vpop.f32.mrf.mxu0
    %7406 = vmatprep.mubr.bf16.mxu0 0
    %7407 = vmatmul.mubr.bf16.gmra.mxu0 %v7341
    %v7408 = vpop.f32.mrf.mxu0
    %v7409 = vadd.f32 0.0, %v7408
    %v7410 = vpop.f32.mrf.mxu0
    %v7411 = vpop.f32.mrf.mxu0
    %v7412 = vadd.f32 0.0, %v7411
    %v7413 = vpop.f32.mrf.mxu0
    %7414 = vmatprep.mubr.bf16.mxu0 0
    %7415 = vmatmul.mubr.bf16.gmra.mxu0 %v7344
    %v7416 = vpop.f32.mrf.mxu0
    %v7417 = vadd.f32 0.0, %v7416
    %v7418 = vpop.f32.mrf.mxu0
    %v7419 = vpop.f32.mrf.mxu0
    %v7420 = vadd.f32 0.0, %v7419
    %v7421 = vpop.f32.mrf.mxu0
    %7422 = vdwg.mxu0
    %v7423 = vmul.f32 %v7393, 0.17677669
    %v7424 = vmul.f32 %v7396, 0.17677669
    %v7425 = vmul.f32 %v7401, 0.17677669
    %v7426 = vmul.f32 %v7404, 0.17677669
    %v7427 = vmul.f32 %v7409, 0.17677669
    %v7428 = vmul.f32 %v7412, 0.17677669
    %v7429 = vmul.f32 %v7417, 0.17677669
    %v7430 = vmul.f32 %v7420, 0.17677669
    %v7431 = vadd.f32 %v7423, %v339
    %v7432 = vadd.f32 %v7424, %v340
    %v7433 = vadd.f32 %v7425, %v341
    %v7434 = vadd.f32 %v7426, %v342
    %v7435 = vadd.f32 %v7427, %v343
    %v7436 = vadd.f32 %v7428, %v344
    %v7437 = vadd.f32 %v7429, %v345
    %v7438 = vadd.f32 %v7430, %v346
    %v7439 = vsel %vm1390, %v7431, -inf
    %7440 = vmax.xlane.f32.xlu0 %v7439
    %v7441 = vpop.xlane.xlu0 %7440
    %v7442 = vsel %vm1390, %v7432, -inf
    %7443 = vmax.xlane.f32.xlu0 %v7442
    %v7444 = vpop.xlane.xlu0 %7443
    %v7445 = vsel %vm1390, %v7433, -inf
    %7446 = vmax.xlane.f32.xlu0 %v7445
    %v7447 = vpop.xlane.xlu0 %7446
    %v7448 = vsel %vm1390, %v7434, -inf
    %7449 = vmax.xlane.f32.xlu0 %v7448
    %v7450 = vpop.xlane.xlu0 %7449
    %v7451 = vsel %vm1390, %v7435, -inf
    %7452 = vmax.xlane.f32.xlu0 %v7451
    %v7453 = vpop.xlane.xlu0 %7452
    %v7454 = vsel %vm1390, %v7436, -inf
    %7455 = vmax.xlane.f32.xlu0 %v7454
    %v7456 = vpop.xlane.xlu0 %7455
    %v7457 = vsel %vm1390, %v7437, -inf
    %7458 = vmax.xlane.f32.xlu0 %v7457
    %v7459 = vpop.xlane.xlu0 %7458
    %v7460 = vsel %vm1390, %v7438, -inf
    %7461 = vmax.xlane.f32.xlu0 %v7460
    %v7462 = vpop.xlane.xlu0 %7461
    %v7463 = vsub.f32 %v7431, %v7441
    %v7464 = vsub.f32 %v7432, %v7444
    %v7465 = vsub.f32 %v7433, %v7447
    %v7466 = vsub.f32 %v7434, %v7450
    %v7467 = vsub.f32 %v7435, %v7453
    %v7468 = vsub.f32 %v7436, %v7456
    %v7469 = vsub.f32 %v7437, %v7459
    %v7470 = vsub.f32 %v7438, %v7462
    %v7471 = vmul.f32 %v7463, 1.442695
    %v7472 = vpow.pop %v7471
    %v7473 = vmul.f32 %v7464, 1.442695
    %v7474 = vpow.pop %v7473
    %v7475 = vmul.f32 %v7465, 1.442695
    %v7476 = vpow.pop %v7475
    %v7477 = vmul.f32 %v7466, 1.442695
    %v7478 = vpow.pop %v7477
    %v7479 = vmul.f32 %v7467, 1.442695
    %v7480 = vpow.pop %v7479
    %v7481 = vmul.f32 %v7468, 1.442695
    %v7482 = vpow.pop %v7481
    %v7483 = vmul.f32 %v7469, 1.442695
    %v7484 = vpow.pop %v7483
    %v7485 = vmul.f32 %v7470, 1.442695
    %v7486 = vpow.pop %v7485
    %v7487 = vsel %vm1390, %v7472, 0.0
    %7488 = vadd.xlane.f32.xlu0 %v7487
    %v7489 = vpop.xlane.xlu0 %7488
    %v7490 = vsel %vm1390, %v7474, 0.0
    %7491 = vadd.xlane.f32.xlu0 %v7490
    %v7492 = vpop.xlane.xlu0 %7491
    %v7493 = vsel %vm1390, %v7476, 0.0
    %7494 = vadd.xlane.f32.xlu0 %v7493
    %v7495 = vpop.xlane.xlu0 %7494
    %v7496 = vsel %vm1390, %v7478, 0.0
    %7497 = vadd.xlane.f32.xlu0 %v7496
    %v7498 = vpop.xlane.xlu0 %7497
    %v7499 = vsel %vm1390, %v7480, 0.0
    %7500 = vadd.xlane.f32.xlu0 %v7499
    %v7501 = vpop.xlane.xlu0 %7500
    %v7502 = vsel %vm1390, %v7482, 0.0
    %7503 = vadd.xlane.f32.xlu0 %v7502
    %v7504 = vpop.xlane.xlu0 %7503
    %v7505 = vsel %vm1390, %v7484, 0.0
    %7506 = vadd.xlane.f32.xlu0 %v7505
    %v7507 = vpop.xlane.xlu0 %7506
    %v7508 = vsel %vm1390, %v7486, 0.0
    %7509 = vadd.xlane.f32.xlu0 %v7508
    %v7510 = vpop.xlane.xlu0 %7509
    %v7511 = vrcp.pop %v7489
    %v7512 = vrcp.pop %v7492
    %v7513 = vrcp.pop %v7495
    %v7514 = vrcp.pop %v7498
    %v7515 = vrcp.pop %v7501
    %v7516 = vrcp.pop %v7504
    %v7517 = vrcp.pop %v7507
    %v7518 = vrcp.pop %v7510
    %v7519 = vmul.f32 %v7472, %v7511
    %v7520 = vmul.f32 %v7474, %v7512
    %v7521 = vmul.f32 %v7476, %v7513
    %v7522 = vmul.f32 %v7478, %v7514
    %v7523 = vmul.f32 %v7480, %v7515
    %v7524 = vmul.f32 %v7482, %v7516
    %v7525 = vmul.f32 %v7484, %v7517
    %v7526 = vmul.f32 %v7486, %v7518
    %v7527 = vpack.c.bf16 %v7520, %v7519
    %v7528 = vpack.c.bf16 %v7522, %v7521
    %v7529 = vpack.c.bf16 %v7524, %v7523
    %v7530 = vpack.c.bf16 %v7526, %v7525
    %v7532 = vsel %vm1390, %v7527, 0
    %v7535 = vsel %vm1390, %v7528, 0
    %v7538 = vsel %vm1390, %v7529, 0
    %v7541 = vsel %vm1390, %v7530, 0
    %7543 = vmatprep.subr.bf16.mxu0 0
    %7544 = vmatpush1.bf16.msra.mxu0 0
    %7545 = vmatprep.subr.bf16.mxu0 0
    %7546 = vmatpush1.bf16.msra.mxu0 0
    %7547 = vmatprep.subr.bf16.mxu0 0
    %7548 = vmatpush1.bf16.msra.mxu0 0
    %7549 = vmatprep.subr.bf16.mxu0 0
    %7550 = vmatpush1.bf16.msra.mxu0 0
    %7551 = vmatprep.subr.bf16.mxu0 0
    %7552 = vmatpush1.bf16.msra.mxu0 %v7333
    %7553 = vmatprep.subr.bf16.mxu0 0
    %7554 = vmatpush1.bf16.msra.mxu0 %v7332
    %7555 = vmatprep.subr.bf16.mxu0 0
    %7556 = vmatpush1.bf16.msra.mxu0 %v7331
    %7557 = vmatprep.subr.bf16.mxu0 0
    %7558 = vmatpush1.bf16.msra.mxu0 %v7330
    %7559 = vmatprep.subr.bf16.mxu0 0
    %7560 = vmatpush2.bf16.msra.mxu0 0
    %7561 = vmatprep.subr.bf16.mxu0 0
    %7562 = vmatpush2.bf16.msra.mxu0 0
    %7563 = vmatprep.subr.bf16.mxu0 0
    %7564 = vmatpush2.bf16.msra.mxu0 0
    %7565 = vmatprep.subr.bf16.mxu0 0
    %7566 = vmatpush2.bf16.msra.mxu0 0
    %7567 = vmatprep.subr.bf16.mxu0 0
    %7568 = vmatpush2.bf16.msra.mxu0 0
    %7569 = vmatprep.subr.bf16.mxu0 0
    %7570 = vmatpush2.bf16.msra.mxu0 0
    %7571 = vmatprep.subr.bf16.mxu0 0
    %7572 = vmatpush2.bf16.msra.mxu0 0
    %7573 = vmatprep.subr.bf16.mxu0 0
    %7574 = vmatpush2.bf16.msra.mxu0 0
    %7575 = vmatprep.mubr.bf16.mxu0 0
    %7576 = vmatmul.mubr.bf16.gmra.mxu0 %v7532
    %v7577 = vpop.f32.mrf.mxu0
    %v7578 = vadd.f32 0.0, %v7577
    %v7579 = vpop.f32.mrf.mxu0
    %v7580 = vpop.f32.mrf.mxu0
    %v7581 = vadd.f32 0.0, %v7580
    %v7582 = vpop.f32.mrf.mxu0
    %7583 = vmatprep.mubr.bf16.mxu0 0
    %7584 = vmatmul.mubr.bf16.gmra.mxu0 %v7535
    %v7585 = vpop.f32.mrf.mxu0
    %v7586 = vadd.f32 0.0, %v7585
    %v7587 = vpop.f32.mrf.mxu0
    %v7588 = vpop.f32.mrf.mxu0
    %v7589 = vadd.f32 0.0, %v7588
    %v7590 = vpop.f32.mrf.mxu0
    %7591 = vmatprep.mubr.bf16.mxu0 0
    %7592 = vmatmul.mubr.bf16.gmra.mxu0 %v7538
    %v7593 = vpop.f32.mrf.mxu0
    %v7594 = vadd.f32 0.0, %v7593
    %v7595 = vpop.f32.mrf.mxu0
    %v7596 = vpop.f32.mrf.mxu0
    %v7597 = vadd.f32 0.0, %v7596
    %v7598 = vpop.f32.mrf.mxu0
    %7599 = vmatprep.mubr.bf16.mxu0 0
    %7600 = vmatmul.mubr.bf16.gmra.mxu0 %v7541
    %v7601 = vpop.f32.mrf.mxu0
    %v7602 = vadd.f32 0.0, %v7601
    %v7603 = vpop.f32.mrf.mxu0
    %v7604 = vpop.f32.mrf.mxu0
    %v7605 = vadd.f32 0.0, %v7604
    %v7606 = vpop.f32.mrf.mxu0
    %7607 = vdwg.mxu0
    %7610 = vrot.lane.b32.xlu0 %v7586, 32
    %v7611 = vpop.permute.xlu0 %7610
    %7612 = vrot.lane.b32.xlu0 %v7589, 32
    %v7613 = vpop.permute.xlu0 %7612
    %7618 = vrot.lane.b32.xlu0 %v7594, 64
    %v7619 = vpop.permute.xlu0 %7618
    %7620 = vrot.lane.b32.xlu0 %v7597, 64
    %v7621 = vpop.permute.xlu0 %7620
    %7626 = vrot.lane.b32.xlu0 %v7602, 96
    %v7627 = vpop.permute.xlu0 %7626
    %7628 = vrot.lane.b32.xlu0 %v7605, 96
    %v7629 = vpop.permute.xlu0 %7628
    %v7632 = vsel %vm1284, %v7578, %v7611
    %v7633 = vsel %vm1284, %v7581, %v7613
    %v7634 = vsel %vm1390, %v7632, %v7619
    %v7635 = vsel %vm1390, %v7633, %v7621
    %v7636 = vsel %vm1588, %v7634, %v7627
    %v7637 = vsel %vm1588, %v7635, %v7629
    %v7638 = vpack.c.bf16 %v7637, %v7636
    %v7640 = vlaneseq
    %v7641 = vshrl.u32 %v7640, 7
    %v7642 = vsub.s32 0, %v7641
    %v7643 = vrot.slane %v7261, %v7642
    %v7661 = vunpack.c.l.b16 %v7244
    %v7662 = vunpack.c.l.b16 %v7245
    %v7663 = vunpack.c.l.b16 %v7246
    %v7664 = vunpack.c.l.b16 %v7247
    %v7665 = vunpack.c.l.b16 %v7248
    %v7666 = vunpack.c.l.b16 %v7249
    %v7667 = vunpack.c.l.b16 %v7250
    %v7668 = vunpack.c.l.b16 %v7251
    %v7669 = vunpack.c.l.b16 %v7252
    %v7670 = vunpack.c.l.b16 %v7253
    %v7671 = vunpack.c.l.b16 %v7254
    %v7672 = vunpack.c.l.b16 %v7255
    %v7673 = vunpack.c.l.b16 %v7256
    %v7674 = vunpack.c.l.b16 %v7257
    %v7675 = vunpack.c.l.b16 %v7258
    %v7676 = vunpack.c.l.b16 %v7259
    %v7677 = vpack.c.b16 %v7662, %v7661
    %v7678 = vpack.c.b16 %v7664, %v7663
    %v7679 = vpack.c.b16 %v7666, %v7665
    %v7680 = vpack.c.b16 %v7668, %v7667
    %v7681 = vpack.c.b16 %v7670, %v7669
    %v7682 = vpack.c.b16 %v7672, %v7671
    %v7683 = vpack.c.b16 %v7674, %v7673
    %v7684 = vpack.c.b16 %v7676, %v7675
    %7693 = vmatprep.subr.bf16.mxu0 0
    %7694 = vmatpush1.bf16.msra.mxu0 %v7684
    %7695 = vmatprep.subr.bf16.mxu0 0
    %7696 = vmatpush1.bf16.msra.mxu0 %v7683
    %7697 = vmatprep.subr.bf16.mxu0 0
    %7698 = vmatpush1.bf16.msra.mxu0 %v7682
    %7699 = vmatprep.subr.bf16.mxu0 0
    %7700 = vmatpush1.bf16.msra.mxu0 %v7681
    %7701 = vmatprep.subr.bf16.mxu0 0
    %7702 = vmatpush1.bf16.msra.mxu0 %v7680
    %7703 = vmatprep.subr.bf16.mxu0 0
    %7704 = vmatpush1.bf16.msra.mxu0 %v7679
    %7705 = vmatprep.subr.bf16.mxu0 0
    %7706 = vmatpush1.bf16.msra.mxu0 %v7678
    %7707 = vmatprep.subr.bf16.mxu0 0
    %7708 = vmatpush1.bf16.msra.mxu0 %v7677
    %7709 = vmatprep.subr.bf16.mxu0 0
    %7710 = vmatpush2.bf16.msra.mxu0 0
    %7711 = vmatprep.subr.bf16.mxu0 0
    %7712 = vmatpush2.bf16.msra.mxu0 0
    %7713 = vmatprep.subr.bf16.mxu0 0
    %7714 = vmatpush2.bf16.msra.mxu0 0
    %7715 = vmatprep.subr.bf16.mxu0 0
    %7716 = vmatpush2.bf16.msra.mxu0 0
    %7717 = vmatprep.subr.bf16.mxu0 0
    %7718 = vmatpush2.bf16.msra.mxu0 0
    %7719 = vmatprep.subr.bf16.mxu0 0
    %7720 = vmatpush2.bf16.msra.mxu0 0
    %7721 = vmatprep.subr.bf16.mxu0 0
    %7722 = vmatpush2.bf16.msra.mxu0 0
    %7723 = vmatprep.subr.bf16.mxu0 0
    %7724 = vmatpush2.bf16.msra.mxu0 0
    %7725 = vmatprep.mubr.bf16.mxu0 0
    %7726 = vmatmul.mubr.bf16.gmra.mxu0 %v7638
    %v7727 = vpop.f32.mrf.mxu0
    %v7728 = vadd.f32 %v7643, %v7727
    %v7729 = vpop.f32.mrf.mxu0
    %v7730 = vpop.f32.mrf.mxu0
    %v7731 = vadd.f32 %v7643, %v7730
    %v7732 = vpop.f32.mrf.mxu0
    %7733 = vdwg.mxu0
    %v7734 = vadd.f32 %v6896, %v7728
    %v7735 = vadd.f32 %v6897, %v7731
    %s7736 = scalar_lea.vmem %s67, 1
    %v7737 = vld [vmem:[%s7736] sm:$0x1]
    %s7738 = scalar_lea.vmem %s69, 1
    %v7739 = vld [vmem:[%s7738] sm:$0x1]
    %7740 = vadd.xlane.f32.xlu0 %v7734
    %v7741 = vpop.xlane.xlu0 %7740
    %7742 = vadd.xlane.f32.xlu0 %v7735
    %v7743 = vpop.xlane.xlu0 %7742
    %v7744 = vmul.f32 %v7741, %v898
    %v7745 = vmul.f32 %v7743, %v898
    %v7746 = vsub.f32 %v7734, %v7744
    %v7747 = vsub.f32 %v7735, %v7745
    %v7748 = vmul.f32 %v7746, %v7746
    %v7749 = vmul.f32 %v7747, %v7747
    %7750 = vadd.xlane.f32.xlu0 %v7748
    %v7751 = vpop.xlane.xlu0 %7750
    %7752 = vadd.xlane.f32.xlu0 %v7749
    %v7753 = vpop.xlane.xlu0 %7752
    %v7754 = vmul.f32 %v7751, %v898
    %v7755 = vmul.f32 %v7753, %v898
    %v7756 = vadd.f32 %v7754, 1e-12
    %v7757 = vadd.f32 %v7755, 1e-12
    %v7758 = vrsqrt.pop %v7756
    %v7759 = vrsqrt.pop %v7757
    %v7760 = vmul.f32 %v7746, %v7758
    %v7761 = vmul.f32 %v7747, %v7759
    %v7763 = vlaneseq
    %v7764 = vshrl.u32 %v7763, 7
    %v7765 = vsub.s32 0, %v7764
    %v7766 = vrot.slane %v7737, %v7765
    %v7768 = vmul.f32 %v7760, %v7766
    %v7769 = vmul.f32 %v7761, %v7766
    %v7771 = vlaneseq
    %v7772 = vshrl.u32 %v7771, 7
    %v7773 = vsub.s32 0, %v7772
    %v7774 = vrot.slane %v7739, %v7773
    %v7776 = vadd.f32 %v7768, %v7774
    %v7777 = vadd.f32 %v7769, %v7774
    %s7778 = scalar_lea.vmem %s71, 64
    %v7779 = vld [vmem:[%s7778] sm:$0xf]
    %v7780 = vld [vmem:[%s7778 + $0x4] sm:$0xf]
    %v7781 = vld [vmem:[%s7778 + $0x8] sm:$0xf]
    %v7782 = vld [vmem:[%s7778 + $0xc] sm:$0xf]
    %v7783 = vld [vmem:[%s7778 + $0x10] sm:$0xf]
    %v7784 = vld [vmem:[%s7778 + $0x14] sm:$0xf]
    %v7785 = vld [vmem:[%s7778 + $0x18] sm:$0xf]
    %v7786 = vld [vmem:[%s7778 + $0x1c] sm:$0xf]
    %v7787 = vld [vmem:[%s7778 + $0x20] sm:$0xf]
    %v7788 = vld [vmem:[%s7778 + $0x24] sm:$0xf]
    %v7789 = vld [vmem:[%s7778 + $0x28] sm:$0xf]
    %v7790 = vld [vmem:[%s7778 + $0x2c] sm:$0xf]
    %v7791 = vld [vmem:[%s7778 + $0x30] sm:$0xf]
    %v7792 = vld [vmem:[%s7778 + $0x34] sm:$0xf]
    %v7793 = vld [vmem:[%s7778 + $0x38] sm:$0xf]
    %v7794 = vld [vmem:[%s7778 + $0x3c] sm:$0xf]
    %v7795 = vpack.c.bf16 %v7777, %v7776
    %s7796 = scalar_lea.vmem %s73, 1
    %v7797 = vld [vmem:[%s7796] sm:$0x1]
    %v7799 = vlaneseq
    %v7800 = vshrl.u32 %v7799, 7
    %v7801 = vsub.s32 0, %v7800
    %v7802 = vrot.slane %v7797, %v7801
    %v7820 = vunpack.c.l.b16 %v7779
    %v7821 = vunpack.c.l.b16 %v7780
    %v7822 = vunpack.c.l.b16 %v7781
    %v7823 = vunpack.c.l.b16 %v7782
    %v7824 = vunpack.c.l.b16 %v7783
    %v7825 = vunpack.c.l.b16 %v7784
    %v7826 = vunpack.c.l.b16 %v7785
    %v7827 = vunpack.c.l.b16 %v7786
    %v7828 = vunpack.c.l.b16 %v7787
    %v7829 = vunpack.c.l.b16 %v7788
    %v7830 = vunpack.c.l.b16 %v7789
    %v7831 = vunpack.c.l.b16 %v7790
    %v7832 = vunpack.c.l.b16 %v7791
    %v7833 = vunpack.c.l.b16 %v7792
    %v7834 = vunpack.c.l.b16 %v7793
    %v7835 = vunpack.c.l.b16 %v7794
    %v7836 = vpack.c.b16 %v7821, %v7820
    %v7837 = vpack.c.b16 %v7823, %v7822
    %v7838 = vpack.c.b16 %v7825, %v7824
    %v7839 = vpack.c.b16 %v7827, %v7826
    %v7840 = vpack.c.b16 %v7829, %v7828
    %v7841 = vpack.c.b16 %v7831, %v7830
    %v7842 = vpack.c.b16 %v7833, %v7832
    %v7843 = vpack.c.b16 %v7835, %v7834
    %7852 = vmatprep.subr.bf16.mxu0 0
    %7853 = vmatpush1.bf16.msra.mxu0 %v7843
    %7854 = vmatprep.subr.bf16.mxu0 0
    %7855 = vmatpush1.bf16.msra.mxu0 %v7842
    %7856 = vmatprep.subr.bf16.mxu0 0
    %7857 = vmatpush1.bf16.msra.mxu0 %v7841
    %7858 = vmatprep.subr.bf16.mxu0 0
    %7859 = vmatpush1.bf16.msra.mxu0 %v7840
    %7860 = vmatprep.subr.bf16.mxu0 0
    %7861 = vmatpush1.bf16.msra.mxu0 %v7839
    %7862 = vmatprep.subr.bf16.mxu0 0
    %7863 = vmatpush1.bf16.msra.mxu0 %v7838
    %7864 = vmatprep.subr.bf16.mxu0 0
    %7865 = vmatpush1.bf16.msra.mxu0 %v7837
    %7866 = vmatprep.subr.bf16.mxu0 0
    %7867 = vmatpush1.bf16.msra.mxu0 %v7836
    %7868 = vmatprep.subr.bf16.mxu0 0
    %7869 = vmatpush2.bf16.msra.mxu0 0
    %7870 = vmatprep.subr.bf16.mxu0 0
    %7871 = vmatpush2.bf16.msra.mxu0 0
    %7872 = vmatprep.subr.bf16.mxu0 0
    %7873 = vmatpush2.bf16.msra.mxu0 0
    %7874 = vmatprep.subr.bf16.mxu0 0
    %7875 = vmatpush2.bf16.msra.mxu0 0
    %7876 = vmatprep.subr.bf16.mxu0 0
    %7877 = vmatpush2.bf16.msra.mxu0 0
    %7878 = vmatprep.subr.bf16.mxu0 0
    %7879 = vmatpush2.bf16.msra.mxu0 0
    %7880 = vmatprep.subr.bf16.mxu0 0
    %7881 = vmatpush2.bf16.msra.mxu0 0
    %7882 = vmatprep.subr.bf16.mxu0 0
    %7883 = vmatpush2.bf16.msra.mxu0 0
    %7884 = vmatprep.mubr.bf16.mxu0 0
    %7885 = vmatmul.mubr.bf16.gmra.mxu0 %v7795
    %v7886 = vpop.f32.mrf.mxu0
    %v7887 = vadd.f32 %v7802, %v7886
    %v7888 = vpop.f32.mrf.mxu0
    %v7889 = vpop.f32.mrf.mxu0
    %v7890 = vadd.f32 %v7802, %v7889
    %v7891 = vpop.f32.mrf.mxu0
    %7892 = vdwg.mxu0
    %s7893 = scalar_lea.vmem %s75, 64
    %v7894 = vld [vmem:[%s7893] sm:$0xf]
    %v7895 = vld [vmem:[%s7893 + $0x4] sm:$0xf]
    %v7896 = vld [vmem:[%s7893 + $0x8] sm:$0xf]
    %v7897 = vld [vmem:[%s7893 + $0xc] sm:$0xf]
    %v7898 = vld [vmem:[%s7893 + $0x10] sm:$0xf]
    %v7899 = vld [vmem:[%s7893 + $0x14] sm:$0xf]
    %v7900 = vld [vmem:[%s7893 + $0x18] sm:$0xf]
    %v7901 = vld [vmem:[%s7893 + $0x1c] sm:$0xf]
    %v7902 = vld [vmem:[%s7893 + $0x20] sm:$0xf]
    %v7903 = vld [vmem:[%s7893 + $0x24] sm:$0xf]
    %v7904 = vld [vmem:[%s7893 + $0x28] sm:$0xf]
    %v7905 = vld [vmem:[%s7893 + $0x2c] sm:$0xf]
    %v7906 = vld [vmem:[%s7893 + $0x30] sm:$0xf]
    %v7907 = vld [vmem:[%s7893 + $0x34] sm:$0xf]
    %v7908 = vld [vmem:[%s7893 + $0x38] sm:$0xf]
    %v7909 = vld [vmem:[%s7893 + $0x3c] sm:$0xf]
    %s7910 = scalar_lea.vmem %s77, 1
    %v7911 = vld [vmem:[%s7910] sm:$0x1]
    %v7913 = vlaneseq
    %v7914 = vshrl.u32 %v7913, 7
    %v7915 = vsub.s32 0, %v7914
    %v7916 = vrot.slane %v7911, %v7915
    %v7934 = vunpack.c.l.b16 %v7894
    %v7935 = vunpack.c.l.b16 %v7895
    %v7936 = vunpack.c.l.b16 %v7896
    %v7937 = vunpack.c.l.b16 %v7897
    %v7938 = vunpack.c.l.b16 %v7898
    %v7939 = vunpack.c.l.b16 %v7899
    %v7940 = vunpack.c.l.b16 %v7900
    %v7941 = vunpack.c.l.b16 %v7901
    %v7942 = vunpack.c.l.b16 %v7902
    %v7943 = vunpack.c.l.b16 %v7903
    %v7944 = vunpack.c.l.b16 %v7904
    %v7945 = vunpack.c.l.b16 %v7905
    %v7946 = vunpack.c.l.b16 %v7906
    %v7947 = vunpack.c.l.b16 %v7907
    %v7948 = vunpack.c.l.b16 %v7908
    %v7949 = vunpack.c.l.b16 %v7909
    %v7950 = vpack.c.b16 %v7935, %v7934
    %v7951 = vpack.c.b16 %v7937, %v7936
    %v7952 = vpack.c.b16 %v7939, %v7938
    %v7953 = vpack.c.b16 %v7941, %v7940
    %v7954 = vpack.c.b16 %v7943, %v7942
    %v7955 = vpack.c.b16 %v7945, %v7944
    %v7956 = vpack.c.b16 %v7947, %v7946
    %v7957 = vpack.c.b16 %v7949, %v7948
    %7966 = vmatprep.subr.bf16.mxu0 0
    %7967 = vmatpush1.bf16.msra.mxu0 %v7957
    %7968 = vmatprep.subr.bf16.mxu0 0
    %7969 = vmatpush1.bf16.msra.mxu0 %v7956
    %7970 = vmatprep.subr.bf16.mxu0 0
    %7971 = vmatpush1.bf16.msra.mxu0 %v7955
    %7972 = vmatprep.subr.bf16.mxu0 0
    %7973 = vmatpush1.bf16.msra.mxu0 %v7954
    %7974 = vmatprep.subr.bf16.mxu0 0
    %7975 = vmatpush1.bf16.msra.mxu0 %v7953
    %7976 = vmatprep.subr.bf16.mxu0 0
    %7977 = vmatpush1.bf16.msra.mxu0 %v7952
    %7978 = vmatprep.subr.bf16.mxu0 0
    %7979 = vmatpush1.bf16.msra.mxu0 %v7951
    %7980 = vmatprep.subr.bf16.mxu0 0
    %7981 = vmatpush1.bf16.msra.mxu0 %v7950
    %7982 = vmatprep.subr.bf16.mxu0 0
    %7983 = vmatpush2.bf16.msra.mxu0 0
    %7984 = vmatprep.subr.bf16.mxu0 0
    %7985 = vmatpush2.bf16.msra.mxu0 0
    %7986 = vmatprep.subr.bf16.mxu0 0
    %7987 = vmatpush2.bf16.msra.mxu0 0
    %7988 = vmatprep.subr.bf16.mxu0 0
    %7989 = vmatpush2.bf16.msra.mxu0 0
    %7990 = vmatprep.subr.bf16.mxu0 0
    %7991 = vmatpush2.bf16.msra.mxu0 0
    %7992 = vmatprep.subr.bf16.mxu0 0
    %7993 = vmatpush2.bf16.msra.mxu0 0
    %7994 = vmatprep.subr.bf16.mxu0 0
    %7995 = vmatpush2.bf16.msra.mxu0 0
    %7996 = vmatprep.subr.bf16.mxu0 0
    %7997 = vmatpush2.bf16.msra.mxu0 0
    %7998 = vmatprep.mubr.bf16.mxu0 0
    %7999 = vmatmul.mubr.bf16.gmra.mxu0 %v5392
    %v8000 = vpop.f32.mrf.mxu0
    %v8001 = vadd.f32 %v7916, %v8000
    %v8002 = vpop.f32.mrf.mxu0
    %v8003 = vpop.f32.mrf.mxu0
    %v8004 = vadd.f32 %v7916, %v8003
    %v8005 = vpop.f32.mrf.mxu0
    %8006 = vdwg.mxu0
    %s8007 = scalar_lea.vmem %s79, 64
    %v8008 = vld [vmem:[%s8007] sm:$0xf]
    %v8009 = vld [vmem:[%s8007 + $0x4] sm:$0xf]
    %v8010 = vld [vmem:[%s8007 + $0x8] sm:$0xf]
    %v8011 = vld [vmem:[%s8007 + $0xc] sm:$0xf]
    %v8012 = vld [vmem:[%s8007 + $0x10] sm:$0xf]
    %v8013 = vld [vmem:[%s8007 + $0x14] sm:$0xf]
    %v8014 = vld [vmem:[%s8007 + $0x18] sm:$0xf]
    %v8015 = vld [vmem:[%s8007 + $0x1c] sm:$0xf]
    %v8016 = vld [vmem:[%s8007 + $0x20] sm:$0xf]
    %v8017 = vld [vmem:[%s8007 + $0x24] sm:$0xf]
    %v8018 = vld [vmem:[%s8007 + $0x28] sm:$0xf]
    %v8019 = vld [vmem:[%s8007 + $0x2c] sm:$0xf]
    %v8020 = vld [vmem:[%s8007 + $0x30] sm:$0xf]
    %v8021 = vld [vmem:[%s8007 + $0x34] sm:$0xf]
    %v8022 = vld [vmem:[%s8007 + $0x38] sm:$0xf]
    %v8023 = vld [vmem:[%s8007 + $0x3c] sm:$0xf]
    %s8024 = scalar_lea.vmem %s81, 1
    %v8025 = vld [vmem:[%s8024] sm:$0x1]
    %v8027 = vlaneseq
    %v8028 = vshrl.u32 %v8027, 7
    %v8029 = vsub.s32 0, %v8028
    %v8030 = vrot.slane %v8025, %v8029
    %v8048 = vunpack.c.l.b16 %v8008
    %v8049 = vunpack.c.l.b16 %v8009
    %v8050 = vunpack.c.l.b16 %v8010
    %v8051 = vunpack.c.l.b16 %v8011
    %v8052 = vunpack.c.l.b16 %v8012
    %v8053 = vunpack.c.l.b16 %v8013
    %v8054 = vunpack.c.l.b16 %v8014
    %v8055 = vunpack.c.l.b16 %v8015
    %v8056 = vunpack.c.l.b16 %v8016
    %v8057 = vunpack.c.l.b16 %v8017
    %v8058 = vunpack.c.l.b16 %v8018
    %v8059 = vunpack.c.l.b16 %v8019
    %v8060 = vunpack.c.l.b16 %v8020
    %v8061 = vunpack.c.l.b16 %v8021
    %v8062 = vunpack.c.l.b16 %v8022
    %v8063 = vunpack.c.l.b16 %v8023
    %v8064 = vpack.c.b16 %v8049, %v8048
    %v8065 = vpack.c.b16 %v8051, %v8050
    %v8066 = vpack.c.b16 %v8053, %v8052
    %v8067 = vpack.c.b16 %v8055, %v8054
    %v8068 = vpack.c.b16 %v8057, %v8056
    %v8069 = vpack.c.b16 %v8059, %v8058
    %v8070 = vpack.c.b16 %v8061, %v8060
    %v8071 = vpack.c.b16 %v8063, %v8062
    %8080 = vmatprep.subr.bf16.mxu0 0
    %8081 = vmatpush1.bf16.msra.mxu0 %v8071
    %8082 = vmatprep.subr.bf16.mxu0 0
    %8083 = vmatpush1.bf16.msra.mxu0 %v8070
    %8084 = vmatprep.subr.bf16.mxu0 0
    %8085 = vmatpush1.bf16.msra.mxu0 %v8069
    %8086 = vmatprep.subr.bf16.mxu0 0
    %8087 = vmatpush1.bf16.msra.mxu0 %v8068
    %8088 = vmatprep.subr.bf16.mxu0 0
    %8089 = vmatpush1.bf16.msra.mxu0 %v8067
    %8090 = vmatprep.subr.bf16.mxu0 0
    %8091 = vmatpush1.bf16.msra.mxu0 %v8066
    %8092 = vmatprep.subr.bf16.mxu0 0
    %8093 = vmatpush1.bf16.msra.mxu0 %v8065
    %8094 = vmatprep.subr.bf16.mxu0 0
    %8095 = vmatpush1.bf16.msra.mxu0 %v8064
    %8096 = vmatprep.subr.bf16.mxu0 0
    %8097 = vmatpush2.bf16.msra.mxu0 0
    %8098 = vmatprep.subr.bf16.mxu0 0
    %8099 = vmatpush2.bf16.msra.mxu0 0
    %8100 = vmatprep.subr.bf16.mxu0 0
    %8101 = vmatpush2.bf16.msra.mxu0 0
    %8102 = vmatprep.subr.bf16.mxu0 0
    %8103 = vmatpush2.bf16.msra.mxu0 0
    %8104 = vmatprep.subr.bf16.mxu0 0
    %8105 = vmatpush2.bf16.msra.mxu0 0
    %8106 = vmatprep.subr.bf16.mxu0 0
    %8107 = vmatpush2.bf16.msra.mxu0 0
    %8108 = vmatprep.subr.bf16.mxu0 0
    %8109 = vmatpush2.bf16.msra.mxu0 0
    %8110 = vmatprep.subr.bf16.mxu0 0
    %8111 = vmatpush2.bf16.msra.mxu0 0
    %8112 = vmatprep.mubr.bf16.mxu0 0
    %8113 = vmatmul.mubr.bf16.gmra.mxu0 %v5392
    %v8114 = vpop.f32.mrf.mxu0
    %v8115 = vadd.f32 %v8030, %v8114
    %v8116 = vpop.f32.mrf.mxu0
    %v8117 = vpop.f32.mrf.mxu0
    %v8118 = vadd.f32 %v8030, %v8117
    %v8119 = vpop.f32.mrf.mxu0
    %8120 = vdwg.mxu0
    %s8121 = scalar_lea.vmem %s83, 64
    %v8122 = vld [vmem:[%s8121] sm:$0xf]
    %v8123 = vld [vmem:[%s8121 + $0x4] sm:$0xf]
    %v8124 = vld [vmem:[%s8121 + $0x8] sm:$0xf]
    %v8125 = vld [vmem:[%s8121 + $0xc] sm:$0xf]
    %v8126 = vld [vmem:[%s8121 + $0x10] sm:$0xf]
    %v8127 = vld [vmem:[%s8121 + $0x14] sm:$0xf]
    %v8128 = vld [vmem:[%s8121 + $0x18] sm:$0xf]
    %v8129 = vld [vmem:[%s8121 + $0x1c] sm:$0xf]
    %v8130 = vld [vmem:[%s8121 + $0x20] sm:$0xf]
    %v8131 = vld [vmem:[%s8121 + $0x24] sm:$0xf]
    %v8132 = vld [vmem:[%s8121 + $0x28] sm:$0xf]
    %v8133 = vld [vmem:[%s8121 + $0x2c] sm:$0xf]
    %v8134 = vld [vmem:[%s8121 + $0x30] sm:$0xf]
    %v8135 = vld [vmem:[%s8121 + $0x34] sm:$0xf]
    %v8136 = vld [vmem:[%s8121 + $0x38] sm:$0xf]
    %v8137 = vld [vmem:[%s8121 + $0x3c] sm:$0xf]
    %s8138 = scalar_lea.vmem %s85, 1
    %v8139 = vld [vmem:[%s8138] sm:$0x1]
    %8142 = vrot.lane.b32.xlu0 %v7887, 96
    %v8143 = vpop.permute.xlu0 %8142
    %8144 = vrot.lane.b32.xlu0 %v7890, 96
    %v8145 = vpop.permute.xlu0 %8144
    %8148 = vrot.lane.b32.xlu0 %v7887, 64
    %v8149 = vpop.permute.xlu0 %8148
    %8150 = vrot.lane.b32.xlu0 %v7890, 64
    %v8151 = vpop.permute.xlu0 %8150
    %8154 = vrot.lane.b32.xlu0 %v7887, 32
    %v8155 = vpop.permute.xlu0 %8154
    %8156 = vrot.lane.b32.xlu0 %v7890, 32
    %v8157 = vpop.permute.xlu0 %8156
    %v8160 = vpack.c.bf16 %v7890, %v7887
    %v8161 = vpack.c.bf16 %v8145, %v8143
    %v8162 = vpack.c.bf16 %v8151, %v8149
    %v8163 = vpack.c.bf16 %v8157, %v8155
    %8166 = vrot.lane.b32.xlu0 %v8001, 96
    %v8167 = vpop.permute.xlu0 %8166
    %8168 = vrot.lane.b32.xlu0 %v8004, 96
    %v8169 = vpop.permute.xlu0 %8168
    %8172 = vrot.lane.b32.xlu0 %v8001, 64
    %v8173 = vpop.permute.xlu0 %8172
    %8174 = vrot.lane.b32.xlu0 %v8004, 64
    %v8175 = vpop.permute.xlu0 %8174
    %8178 = vrot.lane.b32.xlu0 %v8001, 32
    %v8179 = vpop.permute.xlu0 %8178
    %8180 = vrot.lane.b32.xlu0 %v8004, 32
    %v8181 = vpop.permute.xlu0 %8180
    %v8184 = vpack.c.bf16 %v8004, %v8001
    %v8185 = vpack.c.bf16 %v8169, %v8167
    %v8186 = vpack.c.bf16 %v8175, %v8173
    %v8187 = vpack.c.bf16 %v8181, %v8179
    %8190 = vrot.lane.b32.xlu0 %v8115, 96
    %v8191 = vpop.permute.xlu0 %8190
    %8192 = vrot.lane.b32.xlu0 %v8118, 96
    %v8193 = vpop.permute.xlu0 %8192
    %8196 = vrot.lane.b32.xlu0 %v8115, 64
    %v8197 = vpop.permute.xlu0 %8196
    %8198 = vrot.lane.b32.xlu0 %v8118, 64
    %v8199 = vpop.permute.xlu0 %8198
    %8202 = vrot.lane.b32.xlu0 %v8115, 32
    %v8203 = vpop.permute.xlu0 %8202
    %8204 = vrot.lane.b32.xlu0 %v8118, 32
    %v8205 = vpop.permute.xlu0 %8204
    %v8208 = vpack.c.bf16 %v8118, %v8115
    %v8209 = vpack.c.bf16 %v8193, %v8191
    %v8210 = vpack.c.bf16 %v8199, %v8197
    %v8211 = vpack.c.bf16 %v8205, %v8203
    %v8213 = vsel %vm1284, %v8160, 0
    %v8216 = vsel %vm1284, %v8161, 0
    %v8219 = vsel %vm1284, %v8162, 0
    %v8222 = vsel %vm1284, %v8163, 0
    %v8225 = vsel %vm1284, %v8184, 0
    %v8228 = vsel %vm1284, %v8185, 0
    %v8231 = vsel %vm1284, %v8186, 0
    %v8234 = vsel %vm1284, %v8187, 0
    %8236 = vmatprep.subr.bf16.mxu0 0
    %8237 = vmatpush1.bf16.xpose.msra.mxu0 0
    %8238 = vmatprep.subr.bf16.mxu0 0
    %8239 = vmatpush1.bf16.xpose.msra.mxu0 0
    %8240 = vmatprep.subr.bf16.mxu0 0
    %8241 = vmatpush1.bf16.xpose.msra.mxu0 0
    %8242 = vmatprep.subr.bf16.mxu0 0
    %8243 = vmatpush1.bf16.xpose.msra.mxu0 0
    %8244 = vmatprep.subr.bf16.mxu0 0
    %8245 = vmatpush1.bf16.xpose.msra.mxu0 %v8234
    %8246 = vmatprep.subr.bf16.mxu0 0
    %8247 = vmatpush1.bf16.xpose.msra.mxu0 %v8231
    %8248 = vmatprep.subr.bf16.mxu0 0
    %8249 = vmatpush1.bf16.xpose.msra.mxu0 %v8228
    %8250 = vmatprep.subr.bf16.mxu0 0
    %8251 = vmatpush1.bf16.xpose.msra.mxu0 %v8225
    %8252 = vmatprep.subr.bf16.mxu0 0
    %8253 = vmatpush2.bf16.xpose.msra.mxu0 0
    %8254 = vmatprep.subr.bf16.mxu0 0
    %8255 = vmatpush2.bf16.xpose.msra.mxu0 0
    %8256 = vmatprep.subr.bf16.mxu0 0
    %8257 = vmatpush2.bf16.xpose.msra.mxu0 0
    %8258 = vmatprep.subr.bf16.mxu0 0
    %8259 = vmatpush2.bf16.xpose.msra.mxu0 0
    %8260 = vmatprep.subr.bf16.mxu0 0
    %8261 = vmatpush2.bf16.xpose.msra.mxu0 0
    %8262 = vmatprep.subr.bf16.mxu0 0
    %8263 = vmatpush2.bf16.xpose.msra.mxu0 0
    %8264 = vmatprep.subr.bf16.mxu0 0
    %8265 = vmatpush2.bf16.xpose.msra.mxu0 0
    %8266 = vmatprep.subr.bf16.mxu0 0
    %8267 = vmatpush2.bf16.xpose.msra.mxu0 0
    %8268 = vmatprep.mubr.bf16.mxu0 0
    %8269 = vmatmul.mubr.bf16.gmra.mxu0 %v8213
    %v8270 = vpop.f32.mrf.mxu0
    %v8271 = vadd.f32 0.0, %v8270
    %v8272 = vpop.f32.mrf.mxu0
    %v8273 = vpop.f32.mrf.mxu0
    %v8274 = vadd.f32 0.0, %v8273
    %v8275 = vpop.f32.mrf.mxu0
    %8276 = vmatprep.mubr.bf16.mxu0 0
    %8277 = vmatmul.mubr.bf16.gmra.mxu0 %v8216
    %v8278 = vpop.f32.mrf.mxu0
    %v8279 = vadd.f32 0.0, %v8278
    %v8280 = vpop.f32.mrf.mxu0
    %v8281 = vpop.f32.mrf.mxu0
    %v8282 = vadd.f32 0.0, %v8281
    %v8283 = vpop.f32.mrf.mxu0
    %8284 = vmatprep.mubr.bf16.mxu0 0
    %8285 = vmatmul.mubr.bf16.gmra.mxu0 %v8219
    %v8286 = vpop.f32.mrf.mxu0
    %v8287 = vadd.f32 0.0, %v8286
    %v8288 = vpop.f32.mrf.mxu0
    %v8289 = vpop.f32.mrf.mxu0
    %v8290 = vadd.f32 0.0, %v8289
    %v8291 = vpop.f32.mrf.mxu0
    %8292 = vmatprep.mubr.bf16.mxu0 0
    %8293 = vmatmul.mubr.bf16.gmra.mxu0 %v8222
    %v8294 = vpop.f32.mrf.mxu0
    %v8295 = vadd.f32 0.0, %v8294
    %v8296 = vpop.f32.mrf.mxu0
    %v8297 = vpop.f32.mrf.mxu0
    %v8298 = vadd.f32 0.0, %v8297
    %v8299 = vpop.f32.mrf.mxu0
    %8300 = vdwg.mxu0
    %v8301 = vmul.f32 %v8271, 0.17677669
    %v8302 = vmul.f32 %v8274, 0.17677669
    %v8303 = vmul.f32 %v8279, 0.17677669
    %v8304 = vmul.f32 %v8282, 0.17677669
    %v8305 = vmul.f32 %v8287, 0.17677669
    %v8306 = vmul.f32 %v8290, 0.17677669
    %v8307 = vmul.f32 %v8295, 0.17677669
    %v8308 = vmul.f32 %v8298, 0.17677669
    %v8309 = vadd.f32 %v8301, %v299
    %v8310 = vadd.f32 %v8302, %v300
    %v8311 = vadd.f32 %v8303, %v301
    %v8312 = vadd.f32 %v8304, %v302
    %v8313 = vadd.f32 %v8305, %v303
    %v8314 = vadd.f32 %v8306, %v304
    %v8315 = vadd.f32 %v8307, %v305
    %v8316 = vadd.f32 %v8308, %v306
    %v8317 = vsel %vm1390, %v8309, -inf
    %8318 = vmax.xlane.f32.xlu0 %v8317
    %v8319 = vpop.xlane.xlu0 %8318
    %v8320 = vsel %vm1390, %v8310, -inf
    %8321 = vmax.xlane.f32.xlu0 %v8320
    %v8322 = vpop.xlane.xlu0 %8321
    %v8323 = vsel %vm1390, %v8311, -inf
    %8324 = vmax.xlane.f32.xlu0 %v8323
    %v8325 = vpop.xlane.xlu0 %8324
    %v8326 = vsel %vm1390, %v8312, -inf
    %8327 = vmax.xlane.f32.xlu0 %v8326
    %v8328 = vpop.xlane.xlu0 %8327
    %v8329 = vsel %vm1390, %v8313, -inf
    %8330 = vmax.xlane.f32.xlu0 %v8329
    %v8331 = vpop.xlane.xlu0 %8330
    %v8332 = vsel %vm1390, %v8314, -inf
    %8333 = vmax.xlane.f32.xlu0 %v8332
    %v8334 = vpop.xlane.xlu0 %8333
    %v8335 = vsel %vm1390, %v8315, -inf
    %8336 = vmax.xlane.f32.xlu0 %v8335
    %v8337 = vpop.xlane.xlu0 %8336
    %v8338 = vsel %vm1390, %v8316, -inf
    %8339 = vmax.xlane.f32.xlu0 %v8338
    %v8340 = vpop.xlane.xlu0 %8339
    %v8341 = vsub.f32 %v8309, %v8319
    %v8342 = vsub.f32 %v8310, %v8322
    %v8343 = vsub.f32 %v8311, %v8325
    %v8344 = vsub.f32 %v8312, %v8328
    %v8345 = vsub.f32 %v8313, %v8331
    %v8346 = vsub.f32 %v8314, %v8334
    %v8347 = vsub.f32 %v8315, %v8337
    %v8348 = vsub.f32 %v8316, %v8340
    %v8349 = vmul.f32 %v8341, 1.442695
    %v8350 = vpow.pop %v8349
    %v8351 = vmul.f32 %v8342, 1.442695
    %v8352 = vpow.pop %v8351
    %v8353 = vmul.f32 %v8343, 1.442695
    %v8354 = vpow.pop %v8353
    %v8355 = vmul.f32 %v8344, 1.442695
    %v8356 = vpow.pop %v8355
    %v8357 = vmul.f32 %v8345, 1.442695
    %v8358 = vpow.pop %v8357
    %v8359 = vmul.f32 %v8346, 1.442695
    %v8360 = vpow.pop %v8359
    %v8361 = vmul.f32 %v8347, 1.442695
    %v8362 = vpow.pop %v8361
    %v8363 = vmul.f32 %v8348, 1.442695
    %v8364 = vpow.pop %v8363
    %v8365 = vsel %vm1390, %v8350, 0.0
    %8366 = vadd.xlane.f32.xlu0 %v8365
    %v8367 = vpop.xlane.xlu0 %8366
    %v8368 = vsel %vm1390, %v8352, 0.0
    %8369 = vadd.xlane.f32.xlu0 %v8368
    %v8370 = vpop.xlane.xlu0 %8369
    %v8371 = vsel %vm1390, %v8354, 0.0
    %8372 = vadd.xlane.f32.xlu0 %v8371
    %v8373 = vpop.xlane.xlu0 %8372
    %v8374 = vsel %vm1390, %v8356, 0.0
    %8375 = vadd.xlane.f32.xlu0 %v8374
    %v8376 = vpop.xlane.xlu0 %8375
    %v8377 = vsel %vm1390, %v8358, 0.0
    %8378 = vadd.xlane.f32.xlu0 %v8377
    %v8379 = vpop.xlane.xlu0 %8378
    %v8380 = vsel %vm1390, %v8360, 0.0
    %8381 = vadd.xlane.f32.xlu0 %v8380
    %v8382 = vpop.xlane.xlu0 %8381
    %v8383 = vsel %vm1390, %v8362, 0.0
    %8384 = vadd.xlane.f32.xlu0 %v8383
    %v8385 = vpop.xlane.xlu0 %8384
    %v8386 = vsel %vm1390, %v8364, 0.0
    %8387 = vadd.xlane.f32.xlu0 %v8386
    %v8388 = vpop.xlane.xlu0 %8387
    %v8389 = vrcp.pop %v8367
    %v8390 = vrcp.pop %v8370
    %v8391 = vrcp.pop %v8373
    %v8392 = vrcp.pop %v8376
    %v8393 = vrcp.pop %v8379
    %v8394 = vrcp.pop %v8382
    %v8395 = vrcp.pop %v8385
    %v8396 = vrcp.pop %v8388
    %v8397 = vmul.f32 %v8350, %v8389
    %v8398 = vmul.f32 %v8352, %v8390
    %v8399 = vmul.f32 %v8354, %v8391
    %v8400 = vmul.f32 %v8356, %v8392
    %v8401 = vmul.f32 %v8358, %v8393
    %v8402 = vmul.f32 %v8360, %v8394
    %v8403 = vmul.f32 %v8362, %v8395
    %v8404 = vmul.f32 %v8364, %v8396
    %v8405 = vpack.c.bf16 %v8398, %v8397
    %v8406 = vpack.c.bf16 %v8400, %v8399
    %v8407 = vpack.c.bf16 %v8402, %v8401
    %v8408 = vpack.c.bf16 %v8404, %v8403
    %v8410 = vsel %vm1390, %v8405, 0
    %v8413 = vsel %vm1390, %v8406, 0
    %v8416 = vsel %vm1390, %v8407, 0
    %v8419 = vsel %vm1390, %v8408, 0
    %8421 = vmatprep.subr.bf16.mxu0 0
    %8422 = vmatpush1.bf16.msra.mxu0 0
    %8423 = vmatprep.subr.bf16.mxu0 0
    %8424 = vmatpush1.bf16.msra.mxu0 0
    %8425 = vmatprep.subr.bf16.mxu0 0
    %8426 = vmatpush1.bf16.msra.mxu0 0
    %8427 = vmatprep.subr.bf16.mxu0 0
    %8428 = vmatpush1.bf16.msra.mxu0 0
    %8429 = vmatprep.subr.bf16.mxu0 0
    %8430 = vmatpush1.bf16.msra.mxu0 %v8211
    %8431 = vmatprep.subr.bf16.mxu0 0
    %8432 = vmatpush1.bf16.msra.mxu0 %v8210
    %8433 = vmatprep.subr.bf16.mxu0 0
    %8434 = vmatpush1.bf16.msra.mxu0 %v8209
    %8435 = vmatprep.subr.bf16.mxu0 0
    %8436 = vmatpush1.bf16.msra.mxu0 %v8208
    %8437 = vmatprep.subr.bf16.mxu0 0
    %8438 = vmatpush2.bf16.msra.mxu0 0
    %8439 = vmatprep.subr.bf16.mxu0 0
    %8440 = vmatpush2.bf16.msra.mxu0 0
    %8441 = vmatprep.subr.bf16.mxu0 0
    %8442 = vmatpush2.bf16.msra.mxu0 0
    %8443 = vmatprep.subr.bf16.mxu0 0
    %8444 = vmatpush2.bf16.msra.mxu0 0
    %8445 = vmatprep.subr.bf16.mxu0 0
    %8446 = vmatpush2.bf16.msra.mxu0 0
    %8447 = vmatprep.subr.bf16.mxu0 0
    %8448 = vmatpush2.bf16.msra.mxu0 0
    %8449 = vmatprep.subr.bf16.mxu0 0
    %8450 = vmatpush2.bf16.msra.mxu0 0
    %8451 = vmatprep.subr.bf16.mxu0 0
    %8452 = vmatpush2.bf16.msra.mxu0 0
    %8453 = vmatprep.mubr.bf16.mxu0 0
    %8454 = vmatmul.mubr.bf16.gmra.mxu0 %v8410
    %v8455 = vpop.f32.mrf.mxu0
    %v8456 = vadd.f32 0.0, %v8455
    %v8457 = vpop.f32.mrf.mxu0
    %v8458 = vpop.f32.mrf.mxu0
    %v8459 = vadd.f32 0.0, %v8458
    %v8460 = vpop.f32.mrf.mxu0
    %8461 = vmatprep.mubr.bf16.mxu0 0
    %8462 = vmatmul.mubr.bf16.gmra.mxu0 %v8413
    %v8463 = vpop.f32.mrf.mxu0
    %v8464 = vadd.f32 0.0, %v8463
    %v8465 = vpop.f32.mrf.mxu0
    %v8466 = vpop.f32.mrf.mxu0
    %v8467 = vadd.f32 0.0, %v8466
    %v8468 = vpop.f32.mrf.mxu0
    %8469 = vmatprep.mubr.bf16.mxu0 0
    %8470 = vmatmul.mubr.bf16.gmra.mxu0 %v8416
    %v8471 = vpop.f32.mrf.mxu0
    %v8472 = vadd.f32 0.0, %v8471
    %v8473 = vpop.f32.mrf.mxu0
    %v8474 = vpop.f32.mrf.mxu0
    %v8475 = vadd.f32 0.0, %v8474
    %v8476 = vpop.f32.mrf.mxu0
    %8477 = vmatprep.mubr.bf16.mxu0 0
    %8478 = vmatmul.mubr.bf16.gmra.mxu0 %v8419
    %v8479 = vpop.f32.mrf.mxu0
    %v8480 = vadd.f32 0.0, %v8479
    %v8481 = vpop.f32.mrf.mxu0
    %v8482 = vpop.f32.mrf.mxu0
    %v8483 = vadd.f32 0.0, %v8482
    %v8484 = vpop.f32.mrf.mxu0
    %8485 = vdwg.mxu0
    %8488 = vrot.lane.b32.xlu0 %v8464, 32
    %v8489 = vpop.permute.xlu0 %8488
    %8490 = vrot.lane.b32.xlu0 %v8467, 32
    %v8491 = vpop.permute.xlu0 %8490
    %8496 = vrot.lane.b32.xlu0 %v8472, 64
    %v8497 = vpop.permute.xlu0 %8496
    %8498 = vrot.lane.b32.xlu0 %v8475, 64
    %v8499 = vpop.permute.xlu0 %8498
    %8504 = vrot.lane.b32.xlu0 %v8480, 96
    %v8505 = vpop.permute.xlu0 %8504
    %8506 = vrot.lane.b32.xlu0 %v8483, 96
    %v8507 = vpop.permute.xlu0 %8506
    %v8510 = vsel %vm1284, %v8456, %v8489
    %v8511 = vsel %vm1284, %v8459, %v8491
    %v8512 = vsel %vm1390, %v8510, %v8497
    %v8513 = vsel %vm1390, %v8511, %v8499
    %v8514 = vsel %vm1588, %v8512, %v8505
    %v8515 = vsel %vm1588, %v8513, %v8507
    %v8516 = vpack.c.bf16 %v8515, %v8514
    %v8518 = vlaneseq
    %v8519 = vshrl.u32 %v8518, 7
    %v8520 = vsub.s32 0, %v8519
    %v8521 = vrot.slane %v8139, %v8520
    %v8539 = vunpack.c.l.b16 %v8122
    %v8540 = vunpack.c.l.b16 %v8123
    %v8541 = vunpack.c.l.b16 %v8124
    %v8542 = vunpack.c.l.b16 %v8125
    %v8543 = vunpack.c.l.b16 %v8126
    %v8544 = vunpack.c.l.b16 %v8127
    %v8545 = vunpack.c.l.b16 %v8128
    %v8546 = vunpack.c.l.b16 %v8129
    %v8547 = vunpack.c.l.b16 %v8130
    %v8548 = vunpack.c.l.b16 %v8131
    %v8549 = vunpack.c.l.b16 %v8132
    %v8550 = vunpack.c.l.b16 %v8133
    %v8551 = vunpack.c.l.b16 %v8134
    %v8552 = vunpack.c.l.b16 %v8135
    %v8553 = vunpack.c.l.b16 %v8136
    %v8554 = vunpack.c.l.b16 %v8137
    %v8555 = vpack.c.b16 %v8540, %v8539
    %v8556 = vpack.c.b16 %v8542, %v8541
    %v8557 = vpack.c.b16 %v8544, %v8543
    %v8558 = vpack.c.b16 %v8546, %v8545
    %v8559 = vpack.c.b16 %v8548, %v8547
    %v8560 = vpack.c.b16 %v8550, %v8549
    %v8561 = vpack.c.b16 %v8552, %v8551
    %v8562 = vpack.c.b16 %v8554, %v8553
    %8571 = vmatprep.subr.bf16.mxu0 0
    %8572 = vmatpush1.bf16.msra.mxu0 %v8562
    %8573 = vmatprep.subr.bf16.mxu0 0
    %8574 = vmatpush1.bf16.msra.mxu0 %v8561
    %8575 = vmatprep.subr.bf16.mxu0 0
    %8576 = vmatpush1.bf16.msra.mxu0 %v8560
    %8577 = vmatprep.subr.bf16.mxu0 0
    %8578 = vmatpush1.bf16.msra.mxu0 %v8559
    %8579 = vmatprep.subr.bf16.mxu0 0
    %8580 = vmatpush1.bf16.msra.mxu0 %v8558
    %8581 = vmatprep.subr.bf16.mxu0 0
    %8582 = vmatpush1.bf16.msra.mxu0 %v8557
    %8583 = vmatprep.subr.bf16.mxu0 0
    %8584 = vmatpush1.bf16.msra.mxu0 %v8556
    %8585 = vmatprep.subr.bf16.mxu0 0
    %8586 = vmatpush1.bf16.msra.mxu0 %v8555
    %8587 = vmatprep.subr.bf16.mxu0 0
    %8588 = vmatpush2.bf16.msra.mxu0 0
    %8589 = vmatprep.subr.bf16.mxu0 0
    %8590 = vmatpush2.bf16.msra.mxu0 0
    %8591 = vmatprep.subr.bf16.mxu0 0
    %8592 = vmatpush2.bf16.msra.mxu0 0
    %8593 = vmatprep.subr.bf16.mxu0 0
    %8594 = vmatpush2.bf16.msra.mxu0 0
    %8595 = vmatprep.subr.bf16.mxu0 0
    %8596 = vmatpush2.bf16.msra.mxu0 0
    %8597 = vmatprep.subr.bf16.mxu0 0
    %8598 = vmatpush2.bf16.msra.mxu0 0
    %8599 = vmatprep.subr.bf16.mxu0 0
    %8600 = vmatpush2.bf16.msra.mxu0 0
    %8601 = vmatprep.subr.bf16.mxu0 0
    %8602 = vmatpush2.bf16.msra.mxu0 0
    %8603 = vmatprep.mubr.bf16.mxu0 0
    %8604 = vmatmul.mubr.bf16.gmra.mxu0 %v8516
    %v8605 = vpop.f32.mrf.mxu0
    %v8606 = vadd.f32 %v8521, %v8605
    %v8607 = vpop.f32.mrf.mxu0
    %v8608 = vpop.f32.mrf.mxu0
    %v8609 = vadd.f32 %v8521, %v8608
    %v8610 = vpop.f32.mrf.mxu0
    %8611 = vdwg.mxu0
    %v8612 = vadd.f32 %v7776, %v8606
    %v8613 = vadd.f32 %v7777, %v8609
    %s8614 = scalar_lea.vmem %s87, 1
    %v8615 = vld [vmem:[%s8614] sm:$0x1]
    %s8616 = scalar_lea.vmem %s89, 1
    %v8617 = vld [vmem:[%s8616] sm:$0x1]
    %8618 = vadd.xlane.f32.xlu0 %v8612
    %v8619 = vpop.xlane.xlu0 %8618
    %8620 = vadd.xlane.f32.xlu0 %v8613
    %v8621 = vpop.xlane.xlu0 %8620
    %v8622 = vmul.f32 %v8619, %v898
    %v8623 = vmul.f32 %v8621, %v898
    %v8624 = vsub.f32 %v8612, %v8622
    %v8625 = vsub.f32 %v8613, %v8623
    %v8626 = vmul.f32 %v8624, %v8624
    %v8627 = vmul.f32 %v8625, %v8625
    %8628 = vadd.xlane.f32.xlu0 %v8626
    %v8629 = vpop.xlane.xlu0 %8628
    %8630 = vadd.xlane.f32.xlu0 %v8627
    %v8631 = vpop.xlane.xlu0 %8630
    %v8632 = vmul.f32 %v8629, %v898
    %v8633 = vmul.f32 %v8631, %v898
    %v8634 = vadd.f32 %v8632, 1e-12
    %v8635 = vadd.f32 %v8633, 1e-12
    %v8636 = vrsqrt.pop %v8634
    %v8637 = vrsqrt.pop %v8635
    %v8638 = vmul.f32 %v8624, %v8636
    %v8639 = vmul.f32 %v8625, %v8637
    %v8641 = vlaneseq
    %v8642 = vshrl.u32 %v8641, 7
    %v8643 = vsub.s32 0, %v8642
    %v8644 = vrot.slane %v8615, %v8643
    %v8646 = vmul.f32 %v8638, %v8644
    %v8647 = vmul.f32 %v8639, %v8644
    %v8649 = vlaneseq
    %v8650 = vshrl.u32 %v8649, 7
    %v8651 = vsub.s32 0, %v8650
    %v8652 = vrot.slane %v8617, %v8651
    %v8654 = vadd.f32 %v8646, %v8652
    %v8655 = vadd.f32 %v8647, %v8652
    %s8656 = scalar_lea.vmem %s91, 256
    %v8657 = vld [vmem:[%s8656] sm:$0xff]
    %v8658 = vld [vmem:[%s8656 + $0x8] sm:$0xff]
    %v8659 = vld [vmem:[%s8656 + $0x10] sm:$0xff]
    %v8660 = vld [vmem:[%s8656 + $0x18] sm:$0xff]
    %v8661 = vld [vmem:[%s8656 + $0x20] sm:$0xff]
    %v8662 = vld [vmem:[%s8656 + $0x28] sm:$0xff]
    %v8663 = vld [vmem:[%s8656 + $0x30] sm:$0xff]
    %v8664 = vld [vmem:[%s8656 + $0x38] sm:$0xff]
    %v8665 = vld [vmem:[%s8656 + $0x40] sm:$0xff]
    %v8666 = vld [vmem:[%s8656 + $0x48] sm:$0xff]
    %v8667 = vld [vmem:[%s8656 + $0x50] sm:$0xff]
    %v8668 = vld [vmem:[%s8656 + $0x58] sm:$0xff]
    %v8669 = vld [vmem:[%s8656 + $0x60] sm:$0xff]
    %v8670 = vld [vmem:[%s8656 + $0x68] sm:$0xff]
    %v8671 = vld [vmem:[%s8656 + $0x70] sm:$0xff]
    %v8672 = vld [vmem:[%s8656 + $0x78] sm:$0xff]
    %v8673 = vld [vmem:[%s8656 + $0x80] sm:$0xff]
    %v8674 = vld [vmem:[%s8656 + $0x88] sm:$0xff]
    %v8675 = vld [vmem:[%s8656 + $0x90] sm:$0xff]
    %v8676 = vld [vmem:[%s8656 + $0x98] sm:$0xff]
    %v8677 = vld [vmem:[%s8656 + $0xa0] sm:$0xff]
    %v8678 = vld [vmem:[%s8656 + $0xa8] sm:$0xff]
    %v8679 = vld [vmem:[%s8656 + $0xb0] sm:$0xff]
    %v8680 = vld [vmem:[%s8656 + $0xb8] sm:$0xff]
    %v8681 = vld [vmem:[%s8656 + $0xc0] sm:$0xff]
    %v8682 = vld [vmem:[%s8656 + $0xc8] sm:$0xff]
    %v8683 = vld [vmem:[%s8656 + $0xd0] sm:$0xff]
    %v8684 = vld [vmem:[%s8656 + $0xd8] sm:$0xff]
    %v8685 = vld [vmem:[%s8656 + $0xe0] sm:$0xff]
    %v8686 = vld [vmem:[%s8656 + $0xe8] sm:$0xff]
    %v8687 = vld [vmem:[%s8656 + $0xf0] sm:$0xff]
    %v8688 = vld [vmem:[%s8656 + $0xf8] sm:$0xff]
    %v8689 = vpack.c.bf16 %v8655, %v8654
    %s8690 = scalar_lea.vmem %s93, 4
    %v8691 = vld [vmem:[%s8690] sm:$0xf]
    %v8693 = vlaneseq
    %v8694 = vshrl.u32 %v8693, 7
    %v8695 = vsub.s32 0, %v8694
    %v8696 = vrot.slane %v8691, %v8695
    %v8697 = vlaneseq
    %v8698 = vshrl.u32 %v8697, 7
    %v8699 = vsub.s32 1, %v8698
    %v8700 = vrot.slane %v8691, %v8699
    %v8701 = vlaneseq
    %v8702 = vshrl.u32 %v8701, 7
    %v8703 = vsub.s32 2, %v8702
    %v8704 = vrot.slane %v8691, %v8703
    %v8705 = vlaneseq
    %v8706 = vshrl.u32 %v8705, 7
    %v8707 = vsub.s32 3, %v8706
    %v8708 = vrot.slane %v8691, %v8707
    %v8745 = vunpack.c.l.b16 %v8657
    %v8746 = vunpack.c.h.b16 %v8657
    %v8747 = vunpack.c.l.b16 %v8658
    %v8748 = vunpack.c.h.b16 %v8658
    %v8749 = vunpack.c.l.b16 %v8659
    %v8750 = vunpack.c.h.b16 %v8659
    %v8751 = vunpack.c.l.b16 %v8660
    %v8752 = vunpack.c.h.b16 %v8660
    %v8753 = vunpack.c.l.b16 %v8661
    %v8754 = vunpack.c.h.b16 %v8661
    %v8755 = vunpack.c.l.b16 %v8662
    %v8756 = vunpack.c.h.b16 %v8662
    %v8757 = vunpack.c.l.b16 %v8663
    %v8758 = vunpack.c.h.b16 %v8663
    %v8759 = vunpack.c.l.b16 %v8664
    %v8760 = vunpack.c.h.b16 %v8664
    %v8761 = vunpack.c.l.b16 %v8665
    %v8762 = vunpack.c.h.b16 %v8665
    %v8763 = vunpack.c.l.b16 %v8666
    %v8764 = vunpack.c.h.b16 %v8666
    %v8765 = vunpack.c.l.b16 %v8667
    %v8766 = vunpack.c.h.b16 %v8667
    %v8767 = vunpack.c.l.b16 %v8668
    %v8768 = vunpack.c.h.b16 %v8668
    %v8769 = vunpack.c.l.b16 %v8669
    %v8770 = vunpack.c.h.b16 %v8669
    %v8771 = vunpack.c.l.b16 %v8670
    %v8772 = vunpack.c.h.b16 %v8670
    %v8773 = vunpack.c.l.b16 %v8671
    %v8774 = vunpack.c.h.b16 %v8671
    %v8775 = vunpack.c.l.b16 %v8672
    %v8776 = vunpack.c.h.b16 %v8672
    %v8777 = vunpack.c.l.b16 %v8673
    %v8778 = vunpack.c.h.b16 %v8673
    %v8779 = vunpack.c.l.b16 %v8674
    %v8780 = vunpack.c.h.b16 %v8674
    %v8781 = vunpack.c.l.b16 %v8675
    %v8782 = vunpack.c.h.b16 %v8675
    %v8783 = vunpack.c.l.b16 %v8676
    %v8784 = vunpack.c.h.b16 %v8676
    %v8785 = vunpack.c.l.b16 %v8677
    %v8786 = vunpack.c.h.b16 %v8677
    %v8787 = vunpack.c.l.b16 %v8678
    %v8788 = vunpack.c.h.b16 %v8678
    %v8789 = vunpack.c.l.b16 %v8679
    %v8790 = vunpack.c.h.b16 %v8679
    %v8791 = vunpack.c.l.b16 %v8680
    %v8792 = vunpack.c.h.b16 %v8680
    %v8793 = vunpack.c.l.b16 %v8681
    %v8794 = vunpack.c.h.b16 %v8681
    %v8795 = vunpack.c.l.b16 %v8682
    %v8796 = vunpack.c.h.b16 %v8682
    %v8797 = vunpack.c.l.b16 %v8683
    %v8798 = vunpack.c.h.b16 %v8683
    %v8799 = vunpack.c.l.b16 %v8684
    %v8800 = vunpack.c.h.b16 %v8684
    %v8801 = vunpack.c.l.b16 %v8685
    %v8802 = vunpack.c.h.b16 %v8685
    %v8803 = vunpack.c.l.b16 %v8686
    %v8804 = vunpack.c.h.b16 %v8686
    %v8805 = vunpack.c.l.b16 %v8687
    %v8806 = vunpack.c.h.b16 %v8687
    %v8807 = vunpack.c.l.b16 %v8688
    %v8808 = vunpack.c.h.b16 %v8688
    %v8809 = vpack.c.b16 %v8749, %v8745
    %v8810 = vpack.c.b16 %v8750, %v8746
    %v8811 = vpack.c.b16 %v8751, %v8747
    %v8812 = vpack.c.b16 %v8752, %v8748
    %v8813 = vpack.c.b16 %v8757, %v8753
    %v8814 = vpack.c.b16 %v8758, %v8754
    %v8815 = vpack.c.b16 %v8759, %v8755
    %v8816 = vpack.c.b16 %v8760, %v8756
    %v8817 = vpack.c.b16 %v8765, %v8761
    %v8818 = vpack.c.b16 %v8766, %v8762
    %v8819 = vpack.c.b16 %v8767, %v8763
    %v8820 = vpack.c.b16 %v8768, %v8764
    %v8821 = vpack.c.b16 %v8773, %v8769
    %v8822 = vpack.c.b16 %v8774, %v8770
    %v8823 = vpack.c.b16 %v8775, %v8771
    %v8824 = vpack.c.b16 %v8776, %v8772
    %v8825 = vpack.c.b16 %v8781, %v8777
    %v8826 = vpack.c.b16 %v8782, %v8778
    %v8827 = vpack.c.b16 %v8783, %v8779
    %v8828 = vpack.c.b16 %v8784, %v8780
    %v8829 = vpack.c.b16 %v8789, %v8785
    %v8830 = vpack.c.b16 %v8790, %v8786
    %v8831 = vpack.c.b16 %v8791, %v8787
    %v8832 = vpack.c.b16 %v8792, %v8788
    %v8833 = vpack.c.b16 %v8797, %v8793
    %v8834 = vpack.c.b16 %v8798, %v8794
    %v8835 = vpack.c.b16 %v8799, %v8795
    %v8836 = vpack.c.b16 %v8800, %v8796
    %v8837 = vpack.c.b16 %v8805, %v8801
    %v8838 = vpack.c.b16 %v8806, %v8802
    %v8839 = vpack.c.b16 %v8807, %v8803
    %v8840 = vpack.c.b16 %v8808, %v8804
    %8873 = vmatprep.subr.bf16.mxu0 %v8838
    %8874 = vmatpush1.bf16.msra.mxu0 %v8837
    %8875 = vmatprep.subr.bf16.mxu0 %v8834
    %8876 = vmatpush1.bf16.msra.mxu0 %v8833
    %8877 = vmatprep.subr.bf16.mxu0 %v8830
    %8878 = vmatpush1.bf16.msra.mxu0 %v8829
    %8879 = vmatprep.subr.bf16.mxu0 %v8826
    %8880 = vmatpush1.bf16.msra.mxu0 %v8825
    %8881 = vmatprep.subr.bf16.mxu0 %v8822
    %8882 = vmatpush1.bf16.msra.mxu0 %v8821
    %8883 = vmatprep.subr.bf16.mxu0 %v8818
    %8884 = vmatpush1.bf16.msra.mxu0 %v8817
    %8885 = vmatprep.subr.bf16.mxu0 %v8814
    %8886 = vmatpush1.bf16.msra.mxu0 %v8813
    %8887 = vmatprep.subr.bf16.mxu0 %v8810
    %8888 = vmatpush1.bf16.msra.mxu0 %v8809
    %8889 = vmatprep.subr.bf16.mxu0 0
    %8890 = vmatpush2.bf16.msra.mxu0 0
    %8891 = vmatprep.subr.bf16.mxu0 0
    %8892 = vmatpush2.bf16.msra.mxu0 0
    %8893 = vmatprep.subr.bf16.mxu0 0
    %8894 = vmatpush2.bf16.msra.mxu0 0
    %8895 = vmatprep.subr.bf16.mxu0 0
    %8896 = vmatpush2.bf16.msra.mxu0 0
    %8897 = vmatprep.subr.bf16.mxu0 0
    %8898 = vmatpush2.bf16.msra.mxu0 0
    %8899 = vmatprep.subr.bf16.mxu0 0
    %8900 = vmatpush2.bf16.msra.mxu0 0
    %8901 = vmatprep.subr.bf16.mxu0 0
    %8902 = vmatpush2.bf16.msra.mxu0 0
    %8903 = vmatprep.subr.bf16.mxu0 0
    %8904 = vmatpush2.bf16.msra.mxu0 0
    %8905 = vmatprep.mubr.bf16.mxu0 0
    %8906 = vmatmul.mubr.bf16.gmra.mxu0 %v8689
    %v8907 = vpop.f32.mrf.mxu0
    %v8908 = vadd.f32 %v8696, %v8907
    %v8909 = vpop.f32.mrf.mxu0
    %v8910 = vadd.f32 %v8700, %v8909
    %v8911 = vpop.f32.mrf.mxu0
    %v8912 = vadd.f32 %v8696, %v8911
    %v8913 = vpop.f32.mrf.mxu0
    %v8914 = vadd.f32 %v8700, %v8913
    %8915 = vdwg.mxu0
    %8916 = vmatprep.subr.bf16.mxu0 %v8840
    %8917 = vmatpush1.bf16.msra.mxu0 %v8839
    %8918 = vmatprep.subr.bf16.mxu0 %v8836
    %8919 = vmatpush1.bf16.msra.mxu0 %v8835
    %8920 = vmatprep.subr.bf16.mxu0 %v8832
    %8921 = vmatpush1.bf16.msra.mxu0 %v8831
    %8922 = vmatprep.subr.bf16.mxu0 %v8828
    %8923 = vmatpush1.bf16.msra.mxu0 %v8827
    %8924 = vmatprep.subr.bf16.mxu0 %v8824
    %8925 = vmatpush1.bf16.msra.mxu0 %v8823
    %8926 = vmatprep.subr.bf16.mxu0 %v8820
    %8927 = vmatpush1.bf16.msra.mxu0 %v8819
    %8928 = vmatprep.subr.bf16.mxu0 %v8816
    %8929 = vmatpush1.bf16.msra.mxu0 %v8815
    %8930 = vmatprep.subr.bf16.mxu0 %v8812
    %8931 = vmatpush1.bf16.msra.mxu0 %v8811
    %8932 = vmatprep.subr.bf16.mxu0 0
    %8933 = vmatpush2.bf16.msra.mxu0 0
    %8934 = vmatprep.subr.bf16.mxu0 0
    %8935 = vmatpush2.bf16.msra.mxu0 0
    %8936 = vmatprep.subr.bf16.mxu0 0
    %8937 = vmatpush2.bf16.msra.mxu0 0
    %8938 = vmatprep.subr.bf16.mxu0 0
    %8939 = vmatpush2.bf16.msra.mxu0 0
    %8940 = vmatprep.subr.bf16.mxu0 0
    %8941 = vmatpush2.bf16.msra.mxu0 0
    %8942 = vmatprep.subr.bf16.mxu0 0
    %8943 = vmatpush2.bf16.msra.mxu0 0
    %8944 = vmatprep.subr.bf16.mxu0 0
    %8945 = vmatpush2.bf16.msra.mxu0 0
    %8946 = vmatprep.subr.bf16.mxu0 0
    %8947 = vmatpush2.bf16.msra.mxu0 0
    %8948 = vmatprep.mubr.bf16.mxu0 0
    %8949 = vmatmul.mubr.bf16.gmra.mxu0 %v8689
    %v8950 = vpop.f32.mrf.mxu0
    %v8951 = vadd.f32 %v8704, %v8950
    %v8952 = vpop.f32.mrf.mxu0
    %v8953 = vadd.f32 %v8708, %v8952
    %v8954 = vpop.f32.mrf.mxu0
    %v8955 = vadd.f32 %v8704, %v8954
    %v8956 = vpop.f32.mrf.mxu0
    %v8957 = vadd.f32 %v8708, %v8956
    %8958 = vdwg.mxu0
    %v8959 = vmul.f32 %v8908, 0.5
    %v8960 = vmul.f32 %v8910, 0.5
    %v8961 = vmul.f32 %v8951, 0.5
    %v8962 = vmul.f32 %v8953, 0.5
    %v8963 = vmul.f32 %v8912, 0.5
    %v8964 = vmul.f32 %v8914, 0.5
    %v8965 = vmul.f32 %v8955, 0.5
    %v8966 = vmul.f32 %v8957, 0.5
    %v8967 = vmul.f32 %v8908, 0.044715
    %v8968 = vmul.f32 %v8910, 0.044715
    %v8969 = vmul.f32 %v8951, 0.044715
    %v8970 = vmul.f32 %v8953, 0.044715
    %v8971 = vmul.f32 %v8912, 0.044715
    %v8972 = vmul.f32 %v8914, 0.044715
    %v8973 = vmul.f32 %v8955, 0.044715
    %v8974 = vmul.f32 %v8957, 0.044715
    %v8975 = vmul.f32 %v8967, %v8908
    %v8976 = vmul.f32 %v8968, %v8910
    %v8977 = vmul.f32 %v8969, %v8951
    %v8978 = vmul.f32 %v8970, %v8953
    %v8979 = vmul.f32 %v8971, %v8912
    %v8980 = vmul.f32 %v8972, %v8914
    %v8981 = vmul.f32 %v8973, %v8955
    %v8982 = vmul.f32 %v8974, %v8957
    %v8983 = vmul.f32 %v8975, %v8908
    %v8984 = vmul.f32 %v8976, %v8910
    %v8985 = vmul.f32 %v8977, %v8951
    %v8986 = vmul.f32 %v8978, %v8953
    %v8987 = vmul.f32 %v8979, %v8912
    %v8988 = vmul.f32 %v8980, %v8914
    %v8989 = vmul.f32 %v8981, %v8955
    %v8990 = vmul.f32 %v8982, %v8957
    %v8991 = vadd.f32 %v8908, %v8983
    %v8992 = vadd.f32 %v8910, %v8984
    %v8993 = vadd.f32 %v8951, %v8985
    %v8994 = vadd.f32 %v8953, %v8986
    %v8995 = vadd.f32 %v8912, %v8987
    %v8996 = vadd.f32 %v8914, %v8988
    %v8997 = vadd.f32 %v8955, %v8989
    %v8998 = vadd.f32 %v8957, %v8990
    %v8999 = vmul.f32 %v8991, 0.7978846
    %v9000 = vmul.f32 %v8992, 0.7978846
    %v9001 = vmul.f32 %v8993, 0.7978846
    %v9002 = vmul.f32 %v8994, 0.7978846
    %v9003 = vmul.f32 %v8995, 0.7978846
    %v9004 = vmul.f32 %v8996, 0.7978846
    %v9005 = vmul.f32 %v8997, 0.7978846
    %v9006 = vmul.f32 %v8998, 0.7978846
    %v9007 = vtanh.pop %v8999
    %v9008 = vtanh.pop %v9000
    %v9009 = vtanh.pop %v9001
    %v9010 = vtanh.pop %v9002
    %v9011 = vtanh.pop %v9003
    %v9012 = vtanh.pop %v9004
    %v9013 = vtanh.pop %v9005
    %v9014 = vtanh.pop %v9006
    %v9015 = vadd.f32 %v9007, 1.0
    %v9016 = vadd.f32 %v9008, 1.0
    %v9017 = vadd.f32 %v9009, 1.0
    %v9018 = vadd.f32 %v9010, 1.0
    %v9019 = vadd.f32 %v9011, 1.0
    %v9020 = vadd.f32 %v9012, 1.0
    %v9021 = vadd.f32 %v9013, 1.0
    %v9022 = vadd.f32 %v9014, 1.0
    %v9023 = vmul.f32 %v8959, %v9015
    %v9024 = vmul.f32 %v8960, %v9016
    %v9025 = vmul.f32 %v8961, %v9017
    %v9026 = vmul.f32 %v8962, %v9018
    %v9027 = vmul.f32 %v8963, %v9019
    %v9028 = vmul.f32 %v8964, %v9020
    %v9029 = vmul.f32 %v8965, %v9021
    %v9030 = vmul.f32 %v8966, %v9022
    %s9031 = scalar_lea.vmem %s95, 256
    %v9032 = vld [vmem:[%s9031] sm:$0xf]
    %v9033 = vld [vmem:[%s9031 + $0x4] sm:$0xf]
    %v9034 = vld [vmem:[%s9031 + $0x8] sm:$0xf]
    %v9035 = vld [vmem:[%s9031 + $0xc] sm:$0xf]
    %v9036 = vld [vmem:[%s9031 + $0x10] sm:$0xf]
    %v9037 = vld [vmem:[%s9031 + $0x14] sm:$0xf]
    %v9038 = vld [vmem:[%s9031 + $0x18] sm:$0xf]
    %v9039 = vld [vmem:[%s9031 + $0x1c] sm:$0xf]
    %v9040 = vld [vmem:[%s9031 + $0x20] sm:$0xf]
    %v9041 = vld [vmem:[%s9031 + $0x24] sm:$0xf]
    %v9042 = vld [vmem:[%s9031 + $0x28] sm:$0xf]
    %v9043 = vld [vmem:[%s9031 + $0x2c] sm:$0xf]
    %v9044 = vld [vmem:[%s9031 + $0x30] sm:$0xf]
    %v9045 = vld [vmem:[%s9031 + $0x34] sm:$0xf]
    %v9046 = vld [vmem:[%s9031 + $0x38] sm:$0xf]
    %v9047 = vld [vmem:[%s9031 + $0x3c] sm:$0xf]
    %v9048 = vld [vmem:[%s9031 + $0x40] sm:$0xf]
    %v9049 = vld [vmem:[%s9031 + $0x44] sm:$0xf]
    %v9050 = vld [vmem:[%s9031 + $0x48] sm:$0xf]
    %v9051 = vld [vmem:[%s9031 + $0x4c] sm:$0xf]
    %v9052 = vld [vmem:[%s9031 + $0x50] sm:$0xf]
    %v9053 = vld [vmem:[%s9031 + $0x54] sm:$0xf]
    %v9054 = vld [vmem:[%s9031 + $0x58] sm:$0xf]
    %v9055 = vld [vmem:[%s9031 + $0x5c] sm:$0xf]
    %v9056 = vld [vmem:[%s9031 + $0x60] sm:$0xf]
    %v9057 = vld [vmem:[%s9031 + $0x64] sm:$0xf]
    %v9058 = vld [vmem:[%s9031 + $0x68] sm:$0xf]
    %v9059 = vld [vmem:[%s9031 + $0x6c] sm:$0xf]
    %v9060 = vld [vmem:[%s9031 + $0x70] sm:$0xf]
    %v9061 = vld [vmem:[%s9031 + $0x74] sm:$0xf]
    %v9062 = vld [vmem:[%s9031 + $0x78] sm:$0xf]
    %v9063 = vld [vmem:[%s9031 + $0x7c] sm:$0xf]
    %v9064 = vld [vmem:[%s9031 + $0x80] sm:$0xf]
    %v9065 = vld [vmem:[%s9031 + $0x84] sm:$0xf]
    %v9066 = vld [vmem:[%s9031 + $0x88] sm:$0xf]
    %v9067 = vld [vmem:[%s9031 + $0x8c] sm:$0xf]
    %v9068 = vld [vmem:[%s9031 + $0x90] sm:$0xf]
    %v9069 = vld [vmem:[%s9031 + $0x94] sm:$0xf]
    %v9070 = vld [vmem:[%s9031 + $0x98] sm:$0xf]
    %v9071 = vld [vmem:[%s9031 + $0x9c] sm:$0xf]
    %v9072 = vld [vmem:[%s9031 + $0xa0] sm:$0xf]
    %v9073 = vld [vmem:[%s9031 + $0xa4] sm:$0xf]
    %v9074 = vld [vmem:[%s9031 + $0xa8] sm:$0xf]
    %v9075 = vld [vmem:[%s9031 + $0xac] sm:$0xf]
    %v9076 = vld [vmem:[%s9031 + $0xb0] sm:$0xf]
    %v9077 = vld [vmem:[%s9031 + $0xb4] sm:$0xf]
    %v9078 = vld [vmem:[%s9031 + $0xb8] sm:$0xf]
    %v9079 = vld [vmem:[%s9031 + $0xbc] sm:$0xf]
    %v9080 = vld [vmem:[%s9031 + $0xc0] sm:$0xf]
    %v9081 = vld [vmem:[%s9031 + $0xc4] sm:$0xf]
    %v9082 = vld [vmem:[%s9031 + $0xc8] sm:$0xf]
    %v9083 = vld [vmem:[%s9031 + $0xcc] sm:$0xf]
    %v9084 = vld [vmem:[%s9031 + $0xd0] sm:$0xf]
    %v9085 = vld [vmem:[%s9031 + $0xd4] sm:$0xf]
    %v9086 = vld [vmem:[%s9031 + $0xd8] sm:$0xf]
    %v9087 = vld [vmem:[%s9031 + $0xdc] sm:$0xf]
    %v9088 = vld [vmem:[%s9031 + $0xe0] sm:$0xf]
    %v9089 = vld [vmem:[%s9031 + $0xe4] sm:$0xf]
    %v9090 = vld [vmem:[%s9031 + $0xe8] sm:$0xf]
    %v9091 = vld [vmem:[%s9031 + $0xec] sm:$0xf]
    %v9092 = vld [vmem:[%s9031 + $0xf0] sm:$0xf]
    %v9093 = vld [vmem:[%s9031 + $0xf4] sm:$0xf]
    %v9094 = vld [vmem:[%s9031 + $0xf8] sm:$0xf]
    %v9095 = vld [vmem:[%s9031 + $0xfc] sm:$0xf]
    %v9096 = vpack.c.bf16 %v9027, %v9023
    %v9097 = vpack.c.bf16 %v9028, %v9024
    %v9098 = vpack.c.bf16 %v9029, %v9025
    %v9099 = vpack.c.bf16 %v9030, %v9026
    %v9164 = vunpack.c.l.b16 %v9032
    %v9165 = vunpack.c.l.b16 %v9033
    %v9166 = vunpack.c.l.b16 %v9034
    %v9167 = vunpack.c.l.b16 %v9035
    %v9168 = vunpack.c.l.b16 %v9036
    %v9169 = vunpack.c.l.b16 %v9037
    %v9170 = vunpack.c.l.b16 %v9038
    %v9171 = vunpack.c.l.b16 %v9039
    %v9172 = vunpack.c.l.b16 %v9040
    %v9173 = vunpack.c.l.b16 %v9041
    %v9174 = vunpack.c.l.b16 %v9042
    %v9175 = vunpack.c.l.b16 %v9043
    %v9176 = vunpack.c.l.b16 %v9044
    %v9177 = vunpack.c.l.b16 %v9045
    %v9178 = vunpack.c.l.b16 %v9046
    %v9179 = vunpack.c.l.b16 %v9047
    %v9180 = vunpack.c.l.b16 %v9048
    %v9181 = vunpack.c.l.b16 %v9049
    %v9182 = vunpack.c.l.b16 %v9050
    %v9183 = vunpack.c.l.b16 %v9051
    %v9184 = vunpack.c.l.b16 %v9052
    %v9185 = vunpack.c.l.b16 %v9053
    %v9186 = vunpack.c.l.b16 %v9054
    %v9187 = vunpack.c.l.b16 %v9055
    %v9188 = vunpack.c.l.b16 %v9056
    %v9189 = vunpack.c.l.b16 %v9057
    %v9190 = vunpack.c.l.b16 %v9058
    %v9191 = vunpack.c.l.b16 %v9059
    %v9192 = vunpack.c.l.b16 %v9060
    %v9193 = vunpack.c.l.b16 %v9061
    %v9194 = vunpack.c.l.b16 %v9062
    %v9195 = vunpack.c.l.b16 %v9063
    %v9196 = vunpack.c.l.b16 %v9064
    %v9197 = vunpack.c.l.b16 %v9065
    %v9198 = vunpack.c.l.b16 %v9066
    %v9199 = vunpack.c.l.b16 %v9067
    %v9200 = vunpack.c.l.b16 %v9068
    %v9201 = vunpack.c.l.b16 %v9069
    %v9202 = vunpack.c.l.b16 %v9070
    %v9203 = vunpack.c.l.b16 %v9071
    %v9204 = vunpack.c.l.b16 %v9072
    %v9205 = vunpack.c.l.b16 %v9073
    %v9206 = vunpack.c.l.b16 %v9074
    %v9207 = vunpack.c.l.b16 %v9075
    %v9208 = vunpack.c.l.b16 %v9076
    %v9209 = vunpack.c.l.b16 %v9077
    %v9210 = vunpack.c.l.b16 %v9078
    %v9211 = vunpack.c.l.b16 %v9079
    %v9212 = vunpack.c.l.b16 %v9080
    %v9213 = vunpack.c.l.b16 %v9081
    %v9214 = vunpack.c.l.b16 %v9082
    %v9215 = vunpack.c.l.b16 %v9083
    %v9216 = vunpack.c.l.b16 %v9084
    %v9217 = vunpack.c.l.b16 %v9085
    %v9218 = vunpack.c.l.b16 %v9086
    %v9219 = vunpack.c.l.b16 %v9087
    %v9220 = vunpack.c.l.b16 %v9088
    %v9221 = vunpack.c.l.b16 %v9089
    %v9222 = vunpack.c.l.b16 %v9090
    %v9223 = vunpack.c.l.b16 %v9091
    %v9224 = vunpack.c.l.b16 %v9092
    %v9225 = vunpack.c.l.b16 %v9093
    %v9226 = vunpack.c.l.b16 %v9094
    %v9227 = vunpack.c.l.b16 %v9095
    %v9228 = vpack.c.b16 %v9165, %v9164
    %v9229 = vpack.c.b16 %v9167, %v9166
    %v9230 = vpack.c.b16 %v9169, %v9168
    %v9231 = vpack.c.b16 %v9171, %v9170
    %v9232 = vpack.c.b16 %v9173, %v9172
    %v9233 = vpack.c.b16 %v9175, %v9174
    %v9234 = vpack.c.b16 %v9177, %v9176
    %v9235 = vpack.c.b16 %v9179, %v9178
    %v9236 = vpack.c.b16 %v9181, %v9180
    %v9237 = vpack.c.b16 %v9183, %v9182
    %v9238 = vpack.c.b16 %v9185, %v9184
    %v9239 = vpack.c.b16 %v9187, %v9186
    %v9240 = vpack.c.b16 %v9189, %v9188
    %v9241 = vpack.c.b16 %v9191, %v9190
    %v9242 = vpack.c.b16 %v9193, %v9192
    %v9243 = vpack.c.b16 %v9195, %v9194
    %v9244 = vpack.c.b16 %v9197, %v9196
    %v9245 = vpack.c.b16 %v9199, %v9198
    %v9246 = vpack.c.b16 %v9201, %v9200
    %v9247 = vpack.c.b16 %v9203, %v9202
    %v9248 = vpack.c.b16 %v9205, %v9204
    %v9249 = vpack.c.b16 %v9207, %v9206
    %v9250 = vpack.c.b16 %v9209, %v9208
    %v9251 = vpack.c.b16 %v9211, %v9210
    %v9252 = vpack.c.b16 %v9213, %v9212
    %v9253 = vpack.c.b16 %v9215, %v9214
    %v9254 = vpack.c.b16 %v9217, %v9216
    %v9255 = vpack.c.b16 %v9219, %v9218
    %v9256 = vpack.c.b16 %v9221, %v9220
    %v9257 = vpack.c.b16 %v9223, %v9222
    %v9258 = vpack.c.b16 %v9225, %v9224
    %v9259 = vpack.c.b16 %v9227, %v9226
    %9292 = vmatprep.subr.bf16.mxu0 0
    %9293 = vmatpush1.bf16.msra.mxu0 %v9235
    %9294 = vmatprep.subr.bf16.mxu0 0
    %9295 = vmatpush1.bf16.msra.mxu0 %v9234
    %9296 = vmatprep.subr.bf16.mxu0 0
    %9297 = vmatpush1.bf16.msra.mxu0 %v9233
    %9298 = vmatprep.subr.bf16.mxu0 0
    %9299 = vmatpush1.bf16.msra.mxu0 %v9232
    %9300 = vmatprep.subr.bf16.mxu0 0
    %9301 = vmatpush1.bf16.msra.mxu0 %v9231
    %9302 = vmatprep.subr.bf16.mxu0 0
    %9303 = vmatpush1.bf16.msra.mxu0 %v9230
    %9304 = vmatprep.subr.bf16.mxu0 0
    %9305 = vmatpush1.bf16.msra.mxu0 %v9229
    %9306 = vmatprep.subr.bf16.mxu0 0
    %9307 = vmatpush1.bf16.msra.mxu0 %v9228
    %9308 = vmatprep.subr.bf16.mxu0 0
    %9309 = vmatpush2.bf16.msra.mxu0 %v9243
    %9310 = vmatprep.subr.bf16.mxu0 0
    %9311 = vmatpush2.bf16.msra.mxu0 %v9242
    %9312 = vmatprep.subr.bf16.mxu0 0
    %9313 = vmatpush2.bf16.msra.mxu0 %v9241
    %9314 = vmatprep.subr.bf16.mxu0 0
    %9315 = vmatpush2.bf16.msra.mxu0 %v9240
    %9316 = vmatprep.subr.bf16.mxu0 0
    %9317 = vmatpush2.bf16.msra.mxu0 %v9239
    %9318 = vmatprep.subr.bf16.mxu0 0
    %9319 = vmatpush2.bf16.msra.mxu0 %v9238
    %9320 = vmatprep.subr.bf16.mxu0 0
    %9321 = vmatpush2.bf16.msra.mxu0 %v9237
    %9322 = vmatprep.subr.bf16.mxu0 0
    %9323 = vmatpush2.bf16.msra.mxu0 %v9236
    %9324 = vmatprep.mubr.bf16.mxu0 %v9097
    %9325 = vmatmul.mubr.bf16.gmra.mxu0 %v9096
    %v9326 = vpop.f32.mrf.mxu0
    %v9327 = vadd.f32 0.0, %v9326
    %v9328 = vpop.f32.mrf.mxu0
    %v9329 = vpop.f32.mrf.mxu0
    %v9330 = vadd.f32 0.0, %v9329
    %v9331 = vpop.f32.mrf.mxu0
    %9332 = vdwg.mxu0
    %9333 = vmatprep.subr.bf16.mxu0 0
    %9334 = vmatpush1.bf16.msra.mxu0 %v9251
    %9335 = vmatprep.subr.bf16.mxu0 0
    %9336 = vmatpush1.bf16.msra.mxu0 %v9250
    %9337 = vmatprep.subr.bf16.mxu0 0
    %9338 = vmatpush1.bf16.msra.mxu0 %v9249
    %9339 = vmatprep.subr.bf16.mxu0 0
    %9340 = vmatpush1.bf16.msra.mxu0 %v9248
    %9341 = vmatprep.subr.bf16.mxu0 0
    %9342 = vmatpush1.bf16.msra.mxu0 %v9247
    %9343 = vmatprep.subr.bf16.mxu0 0
    %9344 = vmatpush1.bf16.msra.mxu0 %v9246
    %9345 = vmatprep.subr.bf16.mxu0 0
    %9346 = vmatpush1.bf16.msra.mxu0 %v9245
    %9347 = vmatprep.subr.bf16.mxu0 0
    %9348 = vmatpush1.bf16.msra.mxu0 %v9244
    %9349 = vmatprep.subr.bf16.mxu0 0
    %9350 = vmatpush2.bf16.msra.mxu0 %v9259
    %9351 = vmatprep.subr.bf16.mxu0 0
    %9352 = vmatpush2.bf16.msra.mxu0 %v9258
    %9353 = vmatprep.subr.bf16.mxu0 0
    %9354 = vmatpush2.bf16.msra.mxu0 %v9257
    %9355 = vmatprep.subr.bf16.mxu0 0
    %9356 = vmatpush2.bf16.msra.mxu0 %v9256
    %9357 = vmatprep.subr.bf16.mxu0 0
    %9358 = vmatpush2.bf16.msra.mxu0 %v9255
    %9359 = vmatprep.subr.bf16.mxu0 0
    %9360 = vmatpush2.bf16.msra.mxu0 %v9254
    %9361 = vmatprep.subr.bf16.mxu0 0
    %9362 = vmatpush2.bf16.msra.mxu0 %v9253
    %9363 = vmatprep.subr.bf16.mxu0 0
    %9364 = vmatpush2.bf16.msra.mxu0 %v9252
    %9365 = vmatprep.mubr.bf16.mxu0 %v9099
    %9366 = vmatmul.mubr.bf16.gmra.mxu0 %v9098
    %v9367 = vpop.f32.mrf.mxu0
    %v9368 = vadd.f32 %v9327, %v9367
    %v9369 = vpop.f32.mrf.mxu0
    %v9370 = vpop.f32.mrf.mxu0
    %v9371 = vadd.f32 %v9330, %v9370
    %v9372 = vpop.f32.mrf.mxu0
    %9373 = vdwg.mxu0
    %v9374 = vadd.f32 %v8654, %v9368
    %v9375 = vadd.f32 %v8655, %v9371
    %s9376 = scalar_lea.vmem %s97, 1
    %v9377 = vld [vmem:[%s9376] sm:$0x1]
    %v9379 = vlaneseq
    %v9380 = vshrl.u32 %v9379, 7
    %v9381 = vsub.s32 0, %v9380
    %v9382 = vrot.slane %v9377, %v9381
    %v9384 = vadd.f32 %v9374, %v9382
    %v9385 = vadd.f32 %v9375, %v9382
    %s9386 = scalar_lea.vmem %s99, 1
    %v9387 = vld [vmem:[%s9386] sm:$0x1]
    %s9388 = scalar_lea.vmem %s101, 1
    %v9389 = vld [vmem:[%s9388] sm:$0x1]
    %9390 = vadd.xlane.f32.xlu0 %v9384
    %v9391 = vpop.xlane.xlu0 %9390
    %9392 = vadd.xlane.f32.xlu0 %v9385
    %v9393 = vpop.xlane.xlu0 %9392
    %v9394 = vmul.f32 %v9391, %v898
    %v9395 = vmul.f32 %v9393, %v898
    %v9396 = vsub.f32 %v9384, %v9394
    %v9397 = vsub.f32 %v9385, %v9395
    %v9398 = vmul.f32 %v9396, %v9396
    %v9399 = vmul.f32 %v9397, %v9397
    %9400 = vadd.xlane.f32.xlu0 %v9398
    %v9401 = vpop.xlane.xlu0 %9400
    %9402 = vadd.xlane.f32.xlu0 %v9399
    %v9403 = vpop.xlane.xlu0 %9402
    %v9404 = vmul.f32 %v9401, %v898
    %v9405 = vmul.f32 %v9403, %v898
    %v9406 = vadd.f32 %v9404, 1e-12
    %v9407 = vadd.f32 %v9405, 1e-12
    %v9408 = vrsqrt.pop %v9406
    %v9409 = vrsqrt.pop %v9407
    %v9410 = vmul.f32 %v9396, %v9408
    %v9411 = vmul.f32 %v9397, %v9409
    %v9413 = vlaneseq
    %v9414 = vshrl.u32 %v9413, 7
    %v9415 = vsub.s32 0, %v9414
    %v9416 = vrot.slane %v9387, %v9415
    %v9418 = vmul.f32 %v9410, %v9416
    %v9419 = vmul.f32 %v9411, %v9416
    %v9421 = vlaneseq
    %v9422 = vshrl.u32 %v9421, 7
    %v9423 = vsub.s32 0, %v9422
    %v9424 = vrot.slane %v9389, %v9423
    %v9426 = vadd.f32 %v9418, %v9424
    %v9427 = vadd.f32 %v9419, %v9424
    %s9428 = scalar_lea.vmem [#allocation2], 16
    %9429 = vst [vmem:[%s9428] sm:$0xff] %v9426
    %9430 = vst [vmem:[%s9428 + $0x8] sm:$0xff] %v9427
    %v9431 = vld [vmem:[%s103] sm:$0xf]
    %v9432 = vld [vmem:[%s103 + $0x4] sm:$0xf]
    %v9433 = vld [vmem:[%s103 + $0x8] sm:$0xf]
    %v9434 = vld [vmem:[%s103 + $0xc] sm:$0xf]
    %v9435 = vld [vmem:[%s103 + $0x10] sm:$0xf]
    %v9436 = vld [vmem:[%s103 + $0x14] sm:$0xf]
    %v9437 = vld [vmem:[%s103 + $0x18] sm:$0xf]
    %v9438 = vld [vmem:[%s103 + $0x1c] sm:$0xf]
    %v9439 = vld [vmem:[%s103 + $0x20] sm:$0xf]
    %v9440 = vld [vmem:[%s103 + $0x24] sm:$0xf]
    %v9441 = vld [vmem:[%s103 + $0x28] sm:$0xf]
    %v9442 = vld [vmem:[%s103 + $0x2c] sm:$0xf]
    %v9443 = vld [vmem:[%s103 + $0x30] sm:$0xf]
    %v9444 = vld [vmem:[%s103 + $0x34] sm:$0xf]
    %v9445 = vld [vmem:[%s103 + $0x38] sm:$0xf]
    %v9446 = vld [vmem:[%s103 + $0x3c] sm:$0xf]
    %v9447 = vpack.c.bf16 %v9427, %v9426
    %v9448 = vld [vmem:[%s105] sm:$0x1]
    %v9450 = vlaneseq
    %v9451 = vshrl.u32 %v9450, 7
    %v9452 = vsub.s32 0, %v9451
    %v9453 = vrot.slane %v9448, %v9452
    %v9471 = vunpack.c.l.b16 %v9431
    %v9472 = vunpack.c.l.b16 %v9432
    %v9473 = vunpack.c.l.b16 %v9433
    %v9474 = vunpack.c.l.b16 %v9434
    %v9475 = vunpack.c.l.b16 %v9435
    %v9476 = vunpack.c.l.b16 %v9436
    %v9477 = vunpack.c.l.b16 %v9437
    %v9478 = vunpack.c.l.b16 %v9438
    %v9479 = vunpack.c.l.b16 %v9439
    %v9480 = vunpack.c.l.b16 %v9440
    %v9481 = vunpack.c.l.b16 %v9441
    %v9482 = vunpack.c.l.b16 %v9442
    %v9483 = vunpack.c.l.b16 %v9443
    %v9484 = vunpack.c.l.b16 %v9444
    %v9485 = vunpack.c.l.b16 %v9445
    %v9486 = vunpack.c.l.b16 %v9446
    %v9487 = vpack.c.b16 %v9472, %v9471
    %v9488 = vpack.c.b16 %v9474, %v9473
    %v9489 = vpack.c.b16 %v9476, %v9475
    %v9490 = vpack.c.b16 %v9478, %v9477
    %v9491 = vpack.c.b16 %v9480, %v9479
    %v9492 = vpack.c.b16 %v9482, %v9481
    %v9493 = vpack.c.b16 %v9484, %v9483
    %v9494 = vpack.c.b16 %v9486, %v9485
    %9503 = vmatprep.subr.bf16.mxu0 0
    %9504 = vmatpush1.bf16.msra.mxu0 %v9494
    %9505 = vmatprep.subr.bf16.mxu0 0
    %9506 = vmatpush1.bf16.msra.mxu0 %v9493
    %9507 = vmatprep.subr.bf16.mxu0 0
    %9508 = vmatpush1.bf16.msra.mxu0 %v9492
    %9509 = vmatprep.subr.bf16.mxu0 0
    %9510 = vmatpush1.bf16.msra.mxu0 %v9491
    %9511 = vmatprep.subr.bf16.mxu0 0
    %9512 = vmatpush1.bf16.msra.mxu0 %v9490
    %9513 = vmatprep.subr.bf16.mxu0 0
    %9514 = vmatpush1.bf16.msra.mxu0 %v9489
    %9515 = vmatprep.subr.bf16.mxu0 0
    %9516 = vmatpush1.bf16.msra.mxu0 %v9488
    %9517 = vmatprep.subr.bf16.mxu0 0
    %9518 = vmatpush1.bf16.msra.mxu0 %v9487
    %9519 = vmatprep.subr.bf16.mxu0 0
    %9520 = vmatpush2.bf16.msra.mxu0 0
    %9521 = vmatprep.subr.bf16.mxu0 0
    %9522 = vmatpush2.bf16.msra.mxu0 0
    %9523 = vmatprep.subr.bf16.mxu0 0
    %9524 = vmatpush2.bf16.msra.mxu0 0
    %9525 = vmatprep.subr.bf16.mxu0 0
    %9526 = vmatpush2.bf16.msra.mxu0 0
    %9527 = vmatprep.subr.bf16.mxu0 0
    %9528 = vmatpush2.bf16.msra.mxu0 0
    %9529 = vmatprep.subr.bf16.mxu0 0
    %9530 = vmatpush2.bf16.msra.mxu0 0
    %9531 = vmatprep.subr.bf16.mxu0 0
    %9532 = vmatpush2.bf16.msra.mxu0 0
    %9533 = vmatprep.subr.bf16.mxu0 0
    %9534 = vmatpush2.bf16.msra.mxu0 0
    %9535 = vmatprep.mubr.bf16.mxu0 0
    %9536 = vmatmul.mubr.bf16.gmra.mxu0 %v9447
    %v9537 = vpop.f32.mrf.mxu0
    %v9538 = vadd.f32 %v9453, %v9537
    %v9539 = vpop.f32.mrf.mxu0
    %v9540 = vpop.f32.mrf.mxu0
    %v9541 = vadd.f32 %v9453, %v9540
    %v9542 = vpop.f32.mrf.mxu0
    %9543 = vdwg.mxu0
    %v9544 = vmul.f32 %v9538, 0.5
    %v9545 = vmul.f32 %v9541, 0.5
    %v9546 = vmul.f32 %v9538, 0.044715
    %v9547 = vmul.f32 %v9541, 0.044715
    %v9548 = vmul.f32 %v9546, %v9538
    %v9549 = vmul.f32 %v9547, %v9541
    %v9550 = vmul.f32 %v9548, %v9538
    %v9551 = vmul.f32 %v9549, %v9541
    %v9552 = vadd.f32 %v9538, %v9550
    %v9553 = vadd.f32 %v9541, %v9551
    %v9554 = vmul.f32 %v9552, 0.7978846
    %v9555 = vmul.f32 %v9553, 0.7978846
    %v9556 = vtanh.pop %v9554
    %v9557 = vtanh.pop %v9555
    %v9558 = vadd.f32 %v9556, 1.0
    %v9559 = vadd.f32 %v9557, 1.0
    %v9560 = vmul.f32 %v9544, %v9558
    %v9561 = vmul.f32 %v9545, %v9559
    %v9562 = vld [vmem:[%s107] sm:$0x1]
    %v9563 = vld [vmem:[%s109] sm:$0x1]
    %9564 = vadd.xlane.f32.xlu0 %v9560
    %v9565 = vpop.xlane.xlu0 %9564
    %9566 = vadd.xlane.f32.xlu0 %v9561
    %v9567 = vpop.xlane.xlu0 %9566
    %v9568 = vmul.f32 %v9565, %v898
    %v9569 = vmul.f32 %v9567, %v898
    %v9570 = vsub.f32 %v9560, %v9568
    %v9571 = vsub.f32 %v9561, %v9569
    %v9572 = vmul.f32 %v9570, %v9570
    %v9573 = vmul.f32 %v9571, %v9571
    %9574 = vadd.xlane.f32.xlu0 %v9572
    %v9575 = vpop.xlane.xlu0 %9574
    %9576 = vadd.xlane.f32.xlu0 %v9573
    %v9577 = vpop.xlane.xlu0 %9576
    %v9578 = vmul.f32 %v9575, %v898
    %v9579 = vmul.f32 %v9577, %v898
    %v9580 = vadd.f32 %v9578, 1e-12
    %v9581 = vadd.f32 %v9579, 1e-12
    %v9582 = vrsqrt.pop %v9580
    %v9583 = vrsqrt.pop %v9581
    %v9584 = vmul.f32 %v9570, %v9582
    %v9585 = vmul.f32 %v9571, %v9583
    %v9587 = vlaneseq
    %v9588 = vshrl.u32 %v9587, 7
    %v9589 = vsub.s32 0, %v9588
    %v9590 = vrot.slane %v9562, %v9589
    %v9592 = vmul.f32 %v9584, %v9590
    %v9593 = vmul.f32 %v9585, %v9590
    %v9595 = vlaneseq
    %v9596 = vshrl.u32 %v9595, 7
    %v9597 = vsub.s32 0, %v9596
    %v9598 = vrot.slane %v9563, %v9597
    %v9600 = vadd.f32 %v9592, %v9598
    %v9601 = vadd.f32 %v9593, %v9598
    %v9602 = vld [vmem:[%s111] sm:$0xf]
    %v9603 = vld [vmem:[%s111 + $0x4] sm:$0xf]
    %v9604 = vld [vmem:[%s111 + $0x8] sm:$0xf]
    %v9605 = vld [vmem:[%s111 + $0xc] sm:$0xf]
    %v9606 = vld [vmem:[%s111 + $0x10] sm:$0xf]
    %v9607 = vld [vmem:[%s111 + $0x14] sm:$0xf]
    %v9608 = vld [vmem:[%s111 + $0x18] sm:$0xf]
    %v9609 = vld [vmem:[%s111 + $0x1c] sm:$0xf]
    %v9610 = vld [vmem:[%s111 + $0x20] sm:$0xf]
    %v9611 = vld [vmem:[%s111 + $0x24] sm:$0xf]
    %v9612 = vld [vmem:[%s111 + $0x28] sm:$0xf]
    %v9613 = vld [vmem:[%s111 + $0x2c] sm:$0xf]
    %v9614 = vld [vmem:[%s111 + $0x30] sm:$0xf]
    %v9615 = vld [vmem:[%s111 + $0x34] sm:$0xf]
    %v9616 = vld [vmem:[%s111 + $0x38] sm:$0xf]
    %v9617 = vld [vmem:[%s111 + $0x3c] sm:$0xf]
    %v9618 = vpack.c.bf16 %v9601, %v9600
    %v9619 = vld [vmem:[%s113] sm:$0x1]
    %v9621 = vlaneseq
    %v9622 = vshrl.u32 %v9621, 7
    %v9623 = vsub.s32 0, %v9622
    %v9624 = vrot.slane %v9619, %v9623
    %v9642 = vunpack.c.l.b16 %v9602
    %v9643 = vunpack.c.l.b16 %v9603
    %v9644 = vunpack.c.l.b16 %v9604
    %v9645 = vunpack.c.l.b16 %v9605
    %v9646 = vunpack.c.l.b16 %v9606
    %v9647 = vunpack.c.l.b16 %v9607
    %v9648 = vunpack.c.l.b16 %v9608
    %v9649 = vunpack.c.l.b16 %v9609
    %v9650 = vunpack.c.l.b16 %v9610
    %v9651 = vunpack.c.l.b16 %v9611
    %v9652 = vunpack.c.l.b16 %v9612
    %v9653 = vunpack.c.l.b16 %v9613
    %v9654 = vunpack.c.l.b16 %v9614
    %v9655 = vunpack.c.l.b16 %v9615
    %v9656 = vunpack.c.l.b16 %v9616
    %v9657 = vunpack.c.l.b16 %v9617
    %v9658 = vpack.c.b16 %v9643, %v9642
    %v9659 = vpack.c.b16 %v9645, %v9644
    %v9660 = vpack.c.b16 %v9647, %v9646
    %v9661 = vpack.c.b16 %v9649, %v9648
    %v9662 = vpack.c.b16 %v9651, %v9650
    %v9663 = vpack.c.b16 %v9653, %v9652
    %v9664 = vpack.c.b16 %v9655, %v9654
    %v9665 = vpack.c.b16 %v9657, %v9656
    %9674 = vmatprep.subr.bf16.mxu0 0
    %9675 = vmatpush1.bf16.msra.mxu0 %v9665
    %9676 = vmatprep.subr.bf16.mxu0 0
    %9677 = vmatpush1.bf16.msra.mxu0 %v9664
    %9678 = vmatprep.subr.bf16.mxu0 0
    %9679 = vmatpush1.bf16.msra.mxu0 %v9663
    %9680 = vmatprep.subr.bf16.mxu0 0
    %9681 = vmatpush1.bf16.msra.mxu0 %v9662
    %9682 = vmatprep.subr.bf16.mxu0 0
    %9683 = vmatpush1.bf16.msra.mxu0 %v9661
    %9684 = vmatprep.subr.bf16.mxu0 0
    %9685 = vmatpush1.bf16.msra.mxu0 %v9660
    %9686 = vmatprep.subr.bf16.mxu0 0
    %9687 = vmatpush1.bf16.msra.mxu0 %v9659
    %9688 = vmatprep.subr.bf16.mxu0 0
    %9689 = vmatpush1.bf16.msra.mxu0 %v9658
    %9690 = vmatprep.subr.bf16.mxu0 0
    %9691 = vmatpush2.bf16.msra.mxu0 0
    %9692 = vmatprep.subr.bf16.mxu0 0
    %9693 = vmatpush2.bf16.msra.mxu0 0
    %9694 = vmatprep.subr.bf16.mxu0 0
    %9695 = vmatpush2.bf16.msra.mxu0 0
    %9696 = vmatprep.subr.bf16.mxu0 0
    %9697 = vmatpush2.bf16.msra.mxu0 0
    %9698 = vmatprep.subr.bf16.mxu0 0
    %9699 = vmatpush2.bf16.msra.mxu0 0
    %9700 = vmatprep.subr.bf16.mxu0 0
    %9701 = vmatpush2.bf16.msra.mxu0 0
    %9702 = vmatprep.subr.bf16.mxu0 0
    %9703 = vmatpush2.bf16.msra.mxu0 0
    %9704 = vmatprep.subr.bf16.mxu0 0
    %9705 = vmatpush2.bf16.msra.mxu0 0
    %9706 = vmatprep.mubr.bf16.mxu0 0
    %9707 = vmatmul.mubr.bf16.gmra.mxu0 %v9618
    %v9708 = vpop.f32.mrf.mxu0
    %v9709 = vadd.f32 %v9624, %v9708
    %v9710 = vpop.f32.mrf.mxu0
    %v9711 = vpop.f32.mrf.mxu0
    %v9712 = vadd.f32 %v9624, %v9711
    %v9713 = vpop.f32.mrf.mxu0
    %9714 = vdwg.mxu0
    %9715 = vst [vmem:[#allocation5] sm:$0xff] %v9709
    %9716 = vst [vmem:[#allocation5 + $0x8] sm:$0xff] %v9712
    %9717 = vmax.xlane.f32.xlu0 %v9709
    %v9718 = vpop.xlane.xlu0 %9717
    %9719 = vmax.xlane.f32.xlu0 %v9712
    %v9720 = vpop.xlane.xlu0 %9719
    %v9721 = vsub.f32 %v9709, %v9718
    %v9722 = vsub.f32 %v9712, %v9720
    %v9723 = vmul.f32 %v9721, 1.442695
    %v9724 = vpow.pop %v9723
    %v9725 = vmul.f32 %v9722, 1.442695
    %v9726 = vpow.pop %v9725
    %9727 = vadd.xlane.f32.xlu0 %v9724
    %v9728 = vpop.xlane.xlu0 %9727
    %9729 = vadd.xlane.f32.xlu0 %v9726
    %v9730 = vpop.xlane.xlu0 %9729
    %v9731 = vlog2.pop %v9728
    %v9732 = vmul.f32 %v9731, 0.6931472
    %v9733 = vlog2.pop %v9730
    %v9734 = vmul.f32 %v9733, 0.6931472
    %v9735 = vsub.f32 %v9721, %v9732
    %v9736 = vsub.f32 %v9722, %v9734
    %v9737 = vld [vmem:[%s39] sm:$0xff]
    %v9738 = vld [vmem:[%s39 + $0x8] sm:$0xff]
    %vm9739 = vcmp.ne.s32.totalorder %v9737, 4294967196
    %vm9740 = vcmp.ne.s32.totalorder %v9738, 4294967196
    %v9741 = vsel %vm9739, %v9737, 0
    %v9742 = vsel %vm9740, %v9738, 0
    %9743 = vset.pattern.permute.xlu0 0
    %9744 = vperm.xlu0 %9743, %v9741
    %v9745 = vpop.permute.xlu0 %9744
    %9746 = vset.pattern.permute.xlu0 0
    %9747 = vperm.xlu0 %9746, %v9742
    %v9748 = vpop.permute.xlu0 %9747
    %vm9749 = vcmp.eq.s32.totalorder %v263, %v9745
    %vm9750 = vcmp.eq.s32.totalorder %v263, %v9748
    %v9751 = vsel %vm9749, 0.9, 0.0
    %v9752 = vsel %vm9750, 0.9, 0.0
    %v9753 = vadd.f32 %v9751, 0.00078125
    %v9754 = vadd.f32 %v9752, 0.00078125
    %v9755 = vmul.f32 %v9753, %v9735
    %v9756 = vmul.f32 %v9754, %v9736
    %9757 = vadd.xlane.f32.xlu0 %v9755
    %v9758 = vpop.xlane.xlu0 %9757
    %9759 = vadd.xlane.f32.xlu0 %v9756
    %v9760 = vpop.xlane.xlu0 %9759
    %v9761 = vsub.f32 0.0, %v9758
    %v9762 = vsub.f32 0.0, %v9760
    %v9763 = vsel %vm9739, %v9761, 0.0
    %v9764 = vsel %vm9740, %v9762, 0.0
    %vm9765 = vcmask 7168
    %v9766 = vsel %vm9765, %v9763, 0.0
    %v9767 = vsel %vm9765, %v9764, 0.0
    %v9768 = vadd.f32 %v9766, %v9767
    %9769 = vadd.xlane.f32.xlu0 %v9768
    %v9770 = vpop.xlane.xlu0 %9769
    %v9771 = vrot.slane %v9770, 4
    %v9772 = vadd.f32 %v9770, %v9771
    %v9773 = vrot.slane %v9772, 2
    %v9774 = vadd.f32 %v9772, %v9773
    %v9775 = vrot.slane %v9774, 1
    %v9776 = vadd.f32 %v9774, %v9775
    %s9777 = vtos %v9776
    %v9778 = vsel %vm9739, 1, 0
    %v9779 = vsel %vm9740, 1, 0
    %v9780 = vcvt.s32.f32 %v9778
    %v9781 = vcvt.s32.f32 %v9779
    %v9782 = vsel %vm9765, %v9780, 0.0
    %v9783 = vsel %vm9765, %v9781, 0.0
    %v9784 = vadd.f32 %v9782, %v9783
    %9785 = vadd.xlane.f32.xlu0 %v9784
    %v9786 = vpop.xlane.xlu0 %9785
    %v9787 = vrot.slane %v9786, 4
    %v9788 = vadd.f32 %v9786, %v9787
    %v9789 = vrot.slane %v9788, 2
    %v9790 = vadd.f32 %v9788, %v9789
    %v9791 = vrot.slane %v9790, 1
    %v9792 = vadd.f32 %v9790, %v9791
    %s9793 = vtos %v9792
    %s9794 = smax.f32 %s9793, 1.0
    %v9795 = vstv %s9794
    %v9796 = vrcp.pop %v9795
    %s9797 = vtos %v9796
    %s9798 = smul.f32 %s9777, %s9797
    %s9799 = scalar_lea.smem [#allocation7], 0
    %9800 = sst [smem:[%s9799]] %s9798
    %v9802 = vrot.slane %v9427, 7
    %v9804 = vsel %vm4076, %v9426, %v9802
    %v9805 = vld [vmem:[%s115] sm:$0xf]
    %v9806 = vld [vmem:[%s115 + $0x4] sm:$0xf]
    %v9807 = vld [vmem:[%s115 + $0x8] sm:$0xf]
    %v9808 = vld [vmem:[%s115 + $0xc] sm:$0xf]
    %v9809 = vld [vmem:[%s115 + $0x10] sm:$0xf]
    %v9810 = vld [vmem:[%s115 + $0x14] sm:$0xf]
    %v9811 = vld [vmem:[%s115 + $0x18] sm:$0xf]
    %v9812 = vld [vmem:[%s115 + $0x1c] sm:$0xf]
    %v9813 = vld [vmem:[%s115 + $0x20] sm:$0xf]
    %v9814 = vld [vmem:[%s115 + $0x24] sm:$0xf]
    %v9815 = vld [vmem:[%s115 + $0x28] sm:$0xf]
    %v9816 = vld [vmem:[%s115 + $0x2c] sm:$0xf]
    %v9817 = vld [vmem:[%s115 + $0x30] sm:$0xf]
    %v9818 = vld [vmem:[%s115 + $0x34] sm:$0xf]
    %v9819 = vld [vmem:[%s115 + $0x38] sm:$0xf]
    %v9820 = vld [vmem:[%s115 + $0x3c] sm:$0xf]
    %v9821 = vpack.c.bf16 %v9804, %v9804
    %v9822 = vld [vmem:[%s117] sm:$0x1]
    %v9824 = vlaneseq
    %v9825 = vshrl.u32 %v9824, 7
    %v9826 = vsub.s32 0, %v9825
    %v9827 = vrot.slane %v9822, %v9826
    %v9845 = vunpack.c.l.b16 %v9805
    %v9846 = vunpack.c.l.b16 %v9806
    %v9847 = vunpack.c.l.b16 %v9807
    %v9848 = vunpack.c.l.b16 %v9808
    %v9849 = vunpack.c.l.b16 %v9809
    %v9850 = vunpack.c.l.b16 %v9810
    %v9851 = vunpack.c.l.b16 %v9811
    %v9852 = vunpack.c.l.b16 %v9812
    %v9853 = vunpack.c.l.b16 %v9813
    %v9854 = vunpack.c.l.b16 %v9814
    %v9855 = vunpack.c.l.b16 %v9815
    %v9856 = vunpack.c.l.b16 %v9816
    %v9857 = vunpack.c.l.b16 %v9817
    %v9858 = vunpack.c.l.b16 %v9818
    %v9859 = vunpack.c.l.b16 %v9819
    %v9860 = vunpack.c.l.b16 %v9820
    %v9861 = vpack.c.b16 %v9846, %v9845
    %v9862 = vpack.c.b16 %v9848, %v9847
    %v9863 = vpack.c.b16 %v9850, %v9849
    %v9864 = vpack.c.b16 %v9852, %v9851
    %v9865 = vpack.c.b16 %v9854, %v9853
    %v9866 = vpack.c.b16 %v9856, %v9855
    %v9867 = vpack.c.b16 %v9858, %v9857
    %v9868 = vpack.c.b16 %v9860, %v9859
    %9877 = vmatprep.subr.bf16.mxu0 0
    %9878 = vmatpush1.bf16.msra.mxu0 %v9868
    %9879 = vmatprep.subr.bf16.mxu0 0
    %9880 = vmatpush1.bf16.msra.mxu0 %v9867
    %9881 = vmatprep.subr.bf16.mxu0 0
    %9882 = vmatpush1.bf16.msra.mxu0 %v9866
    %9883 = vmatprep.subr.bf16.mxu0 0
    %9884 = vmatpush1.bf16.msra.mxu0 %v9865
    %9885 = vmatprep.subr.bf16.mxu0 0
    %9886 = vmatpush1.bf16.msra.mxu0 %v9864
    %9887 = vmatprep.subr.bf16.mxu0 0
    %9888 = vmatpush1.bf16.msra.mxu0 %v9863
    %9889 = vmatprep.subr.bf16.mxu0 0
    %9890 = vmatpush1.bf16.msra.mxu0 %v9862
    %9891 = vmatprep.subr.bf16.mxu0 0
    %9892 = vmatpush1.bf16.msra.mxu0 %v9861
    %9893 = vmatprep.subr.bf16.mxu0 0
    %9894 = vmatpush2.bf16.msra.mxu0 0
    %9895 = vmatprep.subr.bf16.mxu0 0
    %9896 = vmatpush2.bf16.msra.mxu0 0
    %9897 = vmatprep.subr.bf16.mxu0 0
    %9898 = vmatpush2.bf16.msra.mxu0 0
    %9899 = vmatprep.subr.bf16.mxu0 0
    %9900 = vmatpush2.bf16.msra.mxu0 0
    %9901 = vmatprep.subr.bf16.mxu0 0
    %9902 = vmatpush2.bf16.msra.mxu0 0
    %9903 = vmatprep.subr.bf16.mxu0 0
    %9904 = vmatpush2.bf16.msra.mxu0 0
    %9905 = vmatprep.subr.bf16.mxu0 0
    %9906 = vmatpush2.bf16.msra.mxu0 0
    %9907 = vmatprep.subr.bf16.mxu0 0
    %9908 = vmatpush2.bf16.msra.mxu0 0
    %9909 = vmatprep.mubr.bf16.mxu0 0
    %9910 = vmatmul.mubr.bf16.gmra.mxu0 %v9821
    %v9911 = vpop.f32.mrf.mxu0
    %v9912 = vadd.f32 %v9827, %v9911
    %v9913 = vpop.f32.mrf.mxu0
    %v9914 = vpop.f32.mrf.mxu0
    %v9915 = vpop.f32.mrf.mxu0
    %9916 = vdwg.mxu0
    %v9917 = vmul.f32 %v4232, %v4232
    %vm9918 = vcmask 1041408
    %v9919 = vsel %vm9918, %v9917, 0.0
    %9920 = vadd.xlane.f32.xlu0 %v9919
    %v9921 = vpop.xlane.xlu0 %9920
    %v9922 = vrsqrt.pop %v9921
    %v9923 = vmul.f32 %v9921, %v9922
    %vm9924 = vcmp.eq.f32.partialorder %v9921, inf
    %v9925 = vsel %vm9924, %v9921, %v9923
    %vm9926 = vcmp.eq.f32.partialorder %v9921, 0.0
    %v9927 = vand.u32 %v9921, 2147483648
    %v9928 = vsel %vm9926, %v9927, %v9925
    %v9929 = vadd.f32 %v9928, 1e-10
    %v9930 = vrcp.pop %v9929
    %v9931 = vmul.f32 %v4232, %v9930
    %v9932 = vmul.f32 %v9912, %v9912
    %v9933 = vsel %vm9918, %v9932, 0.0
    %9934 = vadd.xlane.f32.xlu0 %v9933
    %v9935 = vpop.xlane.xlu0 %9934
    %v9936 = vrsqrt.pop %v9935
    %v9937 = vmul.f32 %v9935, %v9936
    %vm9938 = vcmp.eq.f32.partialorder %v9935, inf
    %v9939 = vsel %vm9938, %v9935, %v9937
    %vm9940 = vcmp.eq.f32.partialorder %v9935, 0.0
    %v9941 = vand.u32 %v9935, 2147483648
    %v9942 = vsel %vm9940, %v9941, %v9939
    %v9943 = vadd.f32 %v9942, 1e-10
    %v9944 = vrcp.pop %v9943
    %v9945 = vmul.f32 %v9912, %v9944
    %v9946 = vmul.f32 %v9931, %v9945
    %v9947 = vsel %vm9918, %v9946, 0.0
    %9948 = vadd.xlane.f32.xlu0 %v9947
    %v9949 = vpop.xlane.xlu0 %9948
    %v9950 = vmul.f32 %v9931, %v9931
    %v9951 = vsel %vm9918, %v9950, 0.0
    %9952 = vadd.xlane.f32.xlu0 %v9951
    %v9953 = vpop.xlane.xlu0 %9952
    %v9954 = vrsqrt.pop %v9953
    %v9955 = vmul.f32 %v9953, %v9954
    %vm9956 = vcmp.eq.f32.partialorder %v9953, inf
    %v9957 = vsel %vm9956, %v9953, %v9955
    %vm9958 = vcmp.eq.f32.partialorder %v9953, 0.0
    %v9959 = vand.u32 %v9953, 2147483648
    %v9960 = vsel %vm9958, %v9959, %v9957
    %v9961 = vmul.f32 %v9945, %v9945
    %v9962 = vsel %vm9918, %v9961, 0.0
    %9963 = vadd.xlane.f32.xlu0 %v9962
    %v9964 = vpop.xlane.xlu0 %9963
    %v9965 = vrsqrt.pop %v9964
    %v9966 = vmul.f32 %v9964, %v9965
    %vm9967 = vcmp.eq.f32.partialorder %v9964, inf
    %v9968 = vsel %vm9967, %v9964, %v9966
    %vm9969 = vcmp.eq.f32.partialorder %v9964, 0.0
    %v9970 = vand.u32 %v9964, 2147483648
    %v9971 = vsel %vm9969, %v9970, %v9968
    %v9972 = vmul.f32 %v9960, %v9971
    %v9973 = vmax.f32 %v9972, 1e-08
    %v9974 = vrcp.pop %v9973
    %v9975 = vmul.f32 %v9949, %v9974
    %v9976 = vsub.f32 1.0, %v9975
    %vm9977 = vcmask 1024
    %v9978 = vsel %vm9977, %v9976, 0.0
    %9979 = vadd.xlane.f32.xlu0 %v9978
    %v9980 = vpop.xlane.xlu0 %9979
    %v9981 = vrot.slane %v9980, 4
    %v9982 = vadd.f32 %v9980, %v9981
    %v9983 = vrot.slane %v9982, 2
    %v9984 = vadd.f32 %v9982, %v9983
    %v9985 = vrot.slane %v9984, 1
    %v9986 = vadd.f32 %v9984, %v9985
    %s9987 = vtos %v9986
    %v9988 = vrcp.pop 2.0
    %s9989 = vtos %v9988
    %s9990 = smul.f32 %s9987, %s9989
    %s9991 = scalar_lea.smem [#allocation7], 1
    %9992 = sst [smem:[%s9991]] %s9990
    // Predicated region
    $region238: #{blip_decoder_forward.1} parent=1 // pred_check
      _
    $region239: #{blip_decoder_forward.1} parent=1 // pred_check_branch
      %9994 = sbr.rel (0) target = $region241
    $region240: #{blip_decoder_forward.1} parent=1 // pred_region
      _
    $region241: #{blip_decoder_forward.1} parent=1 // pred_fallthru
      _
    // Predicated region
    $region242: #{blip_decoder_forward.1} parent=1 // pred_check
      _
    $region243: #{blip_decoder_forward.1} parent=1 // pred_check_branch
      %9996 = sbr.rel (0) target = $region245
    $region244: #{blip_decoder_forward.1} parent=1 // pred_region
      %s9998 = ssub.s32 512, 512
      %9999 = vsyncadd [#allocation3], %s9998
      %s10000 = sshll.u32 [#allocation2], 4
      %s10001 = int_to_ptr.vmem [resolvable:$true] %s10000
      %10006 = dma.vmem_to_hbm [thread:$0]  %s10001, 512, %s121, [#allocation3], 128, 128, 8
    $region245: #{blip_decoder_forward.1} parent=1 // pred_fallthru
      _
    // Predicated region
    $region246: #{blip_decoder_forward.1} parent=1 // pred_check
      _
    $region247: #{blip_decoder_forward.1} parent=1 // pred_check_branch
      %10008 = sbr.rel (0) target = $region249
    $region248: #{blip_decoder_forward.1} parent=1 // pred_region
      %s10010 = ssub.s32 256, 256
      %10011 = vsyncadd [#allocation6], %s10010
      %s10012 = sshll.u32 [#allocation5], 4
      %s10013 = int_to_ptr.vmem [resolvable:$true] %s10012
      %10018 = dma.vmem_to_hbm [thread:$0]  %s10013, 256, %s123, [#allocation6], 128, 128, 8
    $region249: #{blip_decoder_forward.1} parent=1 // pred_fallthru
      _
    // Predicated region
    $region250: #{blip_decoder_forward.1} parent=1 // pred_check
      _
    $region251: #{blip_decoder_forward.1} parent=1 // pred_check_branch
      %10020 = sbr.rel (0) target = $region253
    $region252: #{blip_decoder_forward.1} parent=1 // pred_region
      %s10022 = ssub.s32 16, 16
      %10023 = vsyncadd [#allocation4], %s10022
      %s10025 = sshll.u32 %s125, 4
      %s10026 = int_to_ptr.vmem [resolvable:$true] %s10025
      %10028 = dma.smem_to_vmem [#allocation7], 16, %s10026, [#allocation4]
    $region253: #{blip_decoder_forward.1} parent=1 // pred_fallthru
      _
    // Predicated region
    $region254: #{blip_decoder_forward.1} parent=1 // pred_check
      _
    $region255: #{blip_decoder_forward.1} parent=1 // pred_check_branch
      %10030 = sbr.rel (0) target = $region257
    $region256: #{blip_decoder_forward.1} parent=1 // pred_region
      _
    $region257: #{blip_decoder_forward.1} parent=1 // pred_fallthru
      _
    // Predicated region
    $region258: #{blip_decoder_forward.1} parent=1 // pred_check
      _
    $region259: #{blip_decoder_forward.1} parent=1 // pred_check_branch
      %10032 = sbr.rel (0) target = $region261
    $region260: #{blip_decoder_forward.1} parent=1 // pred_region
      %10033 = dma.done [#allocation3], 512
    $region261: #{blip_decoder_forward.1} parent=1 // pred_fallthru
      _
    // Predicated region
    $region262: #{blip_decoder_forward.1} parent=1 // pred_check
      _
    $region263: #{blip_decoder_forward.1} parent=1 // pred_check_branch
      %10035 = sbr.rel (0) target = $region265
    $region264: #{blip_decoder_forward.1} parent=1 // pred_region
      %10036 = dma.done [#allocation6], 256
    $region265: #{blip_decoder_forward.1} parent=1 // pred_fallthru
      _
    // Predicated region
    $region266: #{blip_decoder_forward.1} parent=1 // pred_check
      _
    $region267: #{blip_decoder_forward.1} parent=1 // pred_check_branch
      %10038 = sbr.rel (0) target = $region269
    $region268: #{blip_decoder_forward.1} parent=1 // pred_region
      %10039 = dma.done [#allocation4], 16
    $region269: #{blip_decoder_forward.1} parent=1 // pred_fallthru
      _
    %10040 = sfence
    %10041 = vsyncpa [#allocation3], 1
    %10042 = vsyncpa [#allocation6], 1
    %10043 = vsyncpa [#allocation4], 1

</llo_original>
